<compile_context>
chip_gen: v7x
topology: tpu7x:2x2x1
jax: 0.10.0
libtpu: 0.0.40
codegen_flags: <defaults>
</compile_context>

<pallas_src>
import jax
import jax.numpy as jnp
from jax.experimental import pallas as pl
from jax.experimental.pallas import tpu as pltpu

SELU_ALPHA = 1.6732632423543772
SELU_SCALE = 1.0507009873554805

CONV_K = 7            # conv kernel size
CONV_POS = 49         # 7x7 output positions (16x16 input, stride 2, pad 2)
POS_PAD = 56          # positions padded per image so tb*56 reshapes tile-aligned
KDIM = 147            # 7*7*3 patch length
KDIM_AUG = 148        # + 1 ones-column that carries the conv bias
CH_PAD = 128          # conv channels / output feats padded 32 -> full lane width


def _selu(x):
    return SELU_SCALE * jnp.where(x > 0, x, SELU_ALPHA * (jnp.exp(x) - 1.0))


def _round_up(x, m):
    return ((x + m - 1) // m) * m


# ----------------------------------------------------------------------------
# Fused kernel: conv-as-matmul (+bias via ones column) + ReLU + avg-pool
# (sublane-sum) + 3-layer MLP with SELU. One grid step per tb images; all
# weights resident across the grid via constant index_maps.
# ----------------------------------------------------------------------------
def fused_kernel(p_ref, wc_ref, w1_ref, b1_ref, w2_ref, b2_ref,
                 w3_ref, b3_ref, o_ref):
    # p_ref:  (tb*56, 148) bf16  im2col patches; col 147 = 1 on real positions,
    #                            padded positions / padded batch rows all-zero.
    # wc_ref: (148, 128)   bf16  conv weight (cin,kh,kw)-flattened; row 147 = bias.
    # w1:(32,6144) w2:(6144,256) w3:(256,128) bf16; b*: f32 (1, out) rows.
    # o_ref:  (tb, 128)    f32   lane-dense output slab (cols 32.. stay zero).
    tb = o_ref.shape[0]

    # Conv2d(3->32, k=7, s=2, p=2) as one matmul over all tb*56 patch rows.
    # Bias is folded into row 147 of wc, so padded rows stay exactly zero.
    y = jnp.dot(p_ref[...], wc_ref[...], preferred_element_type=jnp.float32)
    y = jnp.maximum(y, 0.0)                                     # ReLU

    # avg_pool2d(k=7): mean over the 49 real positions. (tb*56,128)->(tb,56,128)
    # is a tile-aligned split (56 % 8 == 0); the sum is a cheap sublane reduce.
    feats = jnp.sum(y.reshape(tb, POS_PAD, CH_PAD), axis=1) * (1.0 / CONV_POS)

    # dens1 -> SELU -> dropout(identity) -> dens2 -> SELU -> dropout -> dens3
    h = jnp.dot(feats[:, :32].astype(jnp.bfloat16), w1_ref[...],
                preferred_element_type=jnp.float32) + b1_ref[...]
    h = _selu(h)
    # TODO(synk): F.dropout(p=0.25) is eval-mode identity here; training-mode
    # RNG dropout (mask + 1/(1-p) scaling) is not implemented.
    h = jnp.dot(h.astype(jnp.bfloat16), w2_ref[...],
                preferred_element_type=jnp.float32) + b2_ref[...]
    h = _selu(h)
    o_ref[...] = jnp.dot(h.astype(jnp.bfloat16), w3_ref[...],
                         preferred_element_type=jnp.float32) + b3_ref[...]


def fused_forward_call(patches2d, params, n_pad, tb):
    rows = tb * POS_PAD
    const = lambda i: (0, 0)
    return pl.pallas_call(
        fused_kernel,
        out_shape=jax.ShapeDtypeStruct((n_pad, CH_PAD), jnp.float32),
        grid=(n_pad // tb,),
        in_specs=[
            pl.BlockSpec((rows, KDIM_AUG), lambda i: (i, 0)),   # patches (per tile)
            pl.BlockSpec((KDIM_AUG, CH_PAD), const),            # conv weight (+bias row)
            pl.BlockSpec((32, 6144), const),                    # w1 (unpadded K)
            pl.BlockSpec((1, 6144), const),                     # b1
            pl.BlockSpec((6144, 256), const),                   # w2
            pl.BlockSpec((1, 256), const),                      # b2
            pl.BlockSpec((256, CH_PAD), const),                 # w3
            pl.BlockSpec((1, CH_PAD), const),                   # b3
        ],
        out_specs=pl.BlockSpec((tb, CH_PAD), lambda i: (i, 0)),
        compiler_params=pltpu.CompilerParams(
            dimension_semantics=("parallel",),
            vmem_limit_bytes=48 * 1024 * 1024,   # safe on v7x's 64 MiB physical VMEM
        ),
    )(patches2d, params["wc"], params["w1"], params["b1"],
      params["w2"], params["b2"], params["w3"], params["b3"])


# ----------------------------------------------------------------------------
# Wrapper glue: im2col via one fused XLA op + layout padding (no matmuls here).
# ----------------------------------------------------------------------------
def build_patches(x_nchw, n_pad):
    """im2col for Conv2d(k=7, s=2, p=2) on 16x16 input -> (n_pad*56, 148) bf16.

    Column 147 is a constant 1 on real positions (folds the conv bias into the
    conv weight matrix); the 7 padded positions per image and padded batch rows
    are all-zero, so ReLU(conv) is exactly 0 there. Patch flatten order is
    (cin, kh, kw) — the channel-major ordering of conv_general_dilated_patches.
    """
    # TODO(synk): for very large batches, DMA raw (tb,20,20,3) image tiles and
    # extract the 7x7 windows in-kernel to shrink the HBM input stream further.
    n = x_nchw.shape[0]
    p = jax.lax.conv_general_dilated_patches(
        x_nchw.astype(jnp.float32),
        filter_shape=(CONV_K, CONV_K),
        window_strides=(2, 2),
        padding=((2, 2), (2, 2)),
        dimension_numbers=("NCHW", "OIHW", "NCHW"))             # (n, 147, 7, 7)
    p = jnp.transpose(p, (0, 2, 3, 1)).reshape(n, CONV_POS, KDIM)
    ones = jnp.ones((n, CONV_POS, 1), jnp.float32)
    p = jnp.concatenate([p, ones], axis=-1)                     # (n, 49, 148)
    p = jnp.pad(p, ((0, n_pad - n), (0, POS_PAD - CONV_POS), (0, 0)))
    return p.reshape(n_pad * POS_PAD, KDIM_AUG).astype(jnp.bfloat16)


def _choose_tiling(n):
    """Pick (tb, n_pad): up to 128 images/step, >=2 steps when possible (v7x)."""
    if n <= 8:
        return 8, 8
    steps = max(2, -(-n // 128))
    tb = min(128, _round_up(-(-n // steps), 8))
    return tb, steps * tb


def init_params(key):
    """PyTorch-style uniform(+-1/sqrt(fan_in)) init, stored pre-padded and
    pre-transposed for the kernel; matmul weights kept in bf16."""
    ks = jax.random.split(key, 8)
    fan_c = 3 * CONV_K * CONV_K
    bnd_c = (1.0 / fan_c) ** 0.5
    # Conv weight in (cin, kh, kw, cout) layout to match the patch flattening.
    wc = jax.random.uniform(ks[0], (3, CONV_K, CONV_K, 32), jnp.float32, -bnd_c, bnd_c)
    bc = jax.random.uniform(ks[1], (32,), jnp.float32, -bnd_c, bnd_c)
    wc_aug = jnp.zeros((KDIM_AUG, CH_PAD), jnp.float32)
    wc_aug = wc_aug.at[:KDIM, :32].set(wc.reshape(KDIM, 32))
    wc_aug = wc_aug.at[KDIM, :32].set(bc)          # bias row, hit by the ones column
    params = {"wc": wc_aug.astype(jnp.bfloat16)}

    def linear(kw, kb, fin, fout, fin_pad, fout_pad):
        bnd = (1.0 / fin) ** 0.5
        w = jax.random.uniform(kw, (fin, fout), jnp.float32, -bnd, bnd)
        b = jax.random.uniform(kb, (fout,), jnp.float32, -bnd, bnd)
        wp = jnp.zeros((fin_pad, fout_pad), jnp.float32).at[:fin, :fout].set(w)
        bp = jnp.zeros((1, fout_pad), jnp.float32).at[0, :fout].set(b)
        return wp.astype(jnp.bfloat16), bp

    params["w1"], params["b1"] = linear(ks[2], ks[3], 32, 6144, 32, 6144)
    params["w2"], params["b2"] = linear(ks[4], ks[5], 6144, 256, 6144, 256)
    params["w3"], params["b3"] = linear(ks[6], ks[7], 256, 32, 256, CH_PAD)
    return params


@jax.jit
def mydensenet_forward(x_nchw, params):
    n = x_nchw.shape[0]
    tb, n_pad = _choose_tiling(n)
    patches = build_patches(x_nchw, n_pad)       # layout glue only
    out = fused_forward_call(patches, params, n_pad, tb)
    return out[:n, :32]


# ----------------------------------------------------------------------------
# Pure-JAX reference with matching (bf16 weights, f32 accumulate) numerics.
# ----------------------------------------------------------------------------
def reference_forward(x_nchw, params):
    f32 = jnp.float32
    cast = lambda v: v.astype(jnp.bfloat16).astype(f32)
    x = cast(x_nchw)
    wc = params["wc"].astype(f32)
    w = wc[:KDIM, :32].reshape(3, CONV_K, CONV_K, 32)   # (cin, kh, kw, cout)
    w_oihw = jnp.transpose(w, (3, 0, 1, 2))
    bc = wc[KDIM, :32]
    y = jax.lax.conv_general_dilated(
        x, w_oihw, window_strides=(2, 2), padding=((2, 2), (2, 2)),
        dimension_numbers=("NCHW", "OIHW", "NCHW"))
    y = jnp.maximum(y + bc.reshape(1, 32, 1, 1), 0.0)
    feats = jnp.mean(y, axis=(2, 3))
    h = cast(feats) @ params["w1"].astype(f32) + params["b1"][0]
    h = _selu(h)
    h = cast(h) @ params["w2"].astype(f32) + params["b2"][0]
    h = _selu(h)
    return cast(h) @ params["w3"].astype(f32)[:, :32] + params["b3"][0, :32]


if __name__ == "__main__":
    key = jax.random.PRNGKey(0)
    pkey, xkey = jax.random.split(key)
    params = init_params(pkey)
    # NCHW input; 16x16 so conv(s=2,k=7,p=2) -> 7x7, avg_pool(7) -> 1x1 -> 32 feats.
    x = jax.random.normal(xkey, (2, 3, 16, 16), jnp.float32)
    out = mydensenet_forward(x, params)
    jax.block_until_ready(out)
    assert out.shape == (2, 32) and out.dtype == jnp.float32
    ref = reference_forward(x, params)
    assert jnp.allclose(out, ref, atol=2e-2, rtol=2e-2), (
        f"max abs diff {jnp.max(jnp.abs(out - ref))}")
    print("KERNEL_OK")
</pallas_src>

<mosaic_0001>
module attributes {stable_mosaic.version = 11 : i64} {
  func.func @fused_kernel(%arg0: i32, %arg1: memref<448x148xbf16, #tpu.memory_space<vmem>>, %arg2: memref<148x128xbf16, #tpu.memory_space<vmem>>, %arg3: memref<32x6144xbf16, #tpu.memory_space<vmem>>, %arg4: memref<1x6144xf32, #tpu.memory_space<vmem>>, %arg5: memref<6144x256xbf16, #tpu.memory_space<vmem>>, %arg6: memref<1x256xf32, #tpu.memory_space<vmem>>, %arg7: memref<256x128xbf16, #tpu.memory_space<vmem>>, %arg8: memref<1x128xf32, #tpu.memory_space<vmem>>, %arg9: memref<8x128xf32, #tpu.memory_space<vmem>>) attributes {dimension_semantics = [#tpu.dimension_semantics<parallel>], iteration_bounds = array<i64: 1>, scalar_prefetch = 0 : i64, scratch_operands = 0 : i64, tpu.core_type = #tpu.core_type<tc>, window_params = [{transform_indices = @transform_0, window_bounds = array<i64: 448, 148>}, {pipeline_mode = #tpu.pipeline_mode<synchronous>, transform_indices = @transform_1, window_bounds = array<i64: 148, 128>}, {pipeline_mode = #tpu.pipeline_mode<synchronous>, transform_indices = @transform_2, window_bounds = array<i64: 32, 6144>}, {pipeline_mode = #tpu.pipeline_mode<synchronous>, transform_indices = @transform_3, window_bounds = array<i64: 1, 6144>}, {pipeline_mode = #tpu.pipeline_mode<synchronous>, transform_indices = @transform_4, window_bounds = array<i64: 6144, 256>}, {pipeline_mode = #tpu.pipeline_mode<synchronous>, transform_indices = @transform_5, window_bounds = array<i64: 1, 256>}, {pipeline_mode = #tpu.pipeline_mode<synchronous>, transform_indices = @transform_6, window_bounds = array<i64: 256, 128>}, {pipeline_mode = #tpu.pipeline_mode<synchronous>, transform_indices = @transform_7, window_bounds = array<i64: 1, 128>}, {transform_indices = @transform_8, window_bounds = array<i64: 8, 128>}]} {
    %c0 = arith.constant 0 : index
    %c0_0 = arith.constant 0 : index
    %0 = vector.load %arg1[%c0, %c0_0] : memref<448x148xbf16, #tpu.memory_space<vmem>>, vector<448x148xbf16>
    %c0_1 = arith.constant 0 : index
    %c0_2 = arith.constant 0 : index
    %1 = vector.load %arg2[%c0_1, %c0_2] : memref<148x128xbf16, #tpu.memory_space<vmem>>, vector<148x128xbf16>
    %cst = arith.constant dense<0.000000e+00> : vector<448x128xf32>
    %2 = tpu.matmul %0, %1, %cst {dimension_numbers = #tpu.dot_dimension_numbers<[1], [0], [0], [1], [0, 0, 1, 1], [], []>} : vector<448x148xbf16>, vector<148x128xbf16>, vector<448x128xf32> -> vector<448x128xf32>
    %cst_3 = arith.constant 0.000000e+00 : f32
    %3 = vector.broadcast %cst_3 : f32 to vector<448x128xf32>
    %4 = arith.maximumf %2, %3 : vector<448x128xf32>
    %5 = vector.shape_cast %4 : vector<448x128xf32> to vector<8x56x128xf32>
    %cst_4 = arith.constant dense<0.000000e+00> : vector<8x128xf32>
    %6 = vector.multi_reduction <add>, %5, %cst_4 [1] : vector<8x56x128xf32> to vector<8x128xf32>
    %cst_5 = arith.constant 0.0204081628 : f32
    %7 = vector.broadcast %cst_5 : f32 to vector<8x128xf32>
    %8 = arith.mulf %6, %7 : vector<8x128xf32>
    %9 = vector.extract_strided_slice %8 {offsets = [0, 0], sizes = [8, 32], strides = [1, 1]} : vector<8x128xf32> to vector<8x32xf32>
    %10 = arith.truncf %9 : vector<8x32xf32> to vector<8x32xbf16>
    %c0_6 = arith.constant 0 : index
    %c0_7 = arith.constant 0 : index
    %11 = vector.load %arg3[%c0_6, %c0_7] : memref<32x6144xbf16, #tpu.memory_space<vmem>>, vector<32x6144xbf16>
    %cst_8 = arith.constant dense<0.000000e+00> : vector<8x6144xf32>
    %12 = tpu.matmul %10, %11, %cst_8 {dimension_numbers = #tpu.dot_dimension_numbers<[1], [0], [0], [1], [0, 0, 1, 1], [], []>} : vector<8x32xbf16>, vector<32x6144xbf16>, vector<8x6144xf32> -> vector<8x6144xf32>
    %c0_9 = arith.constant 0 : index
    %c0_10 = arith.constant 0 : index
    %13 = vector.load %arg4[%c0_9, %c0_10] : memref<1x6144xf32, #tpu.memory_space<vmem>>, vector<1x6144xf32>
    %14 = vector.broadcast %13 : vector<1x6144xf32> to vector<8x6144xf32>
    %15 = arith.addf %12, %14 : vector<8x6144xf32>
    %cst_11 = arith.constant 0.000000e+00 : f32
    %16 = vector.broadcast %cst_11 : f32 to vector<8x6144xf32>
    %17 = arith.cmpf ogt, %15, %16 : vector<8x6144xf32>
    %18 = math.exp %15 : vector<8x6144xf32>
    %cst_12 = arith.constant 1.000000e+00 : f32
    %19 = vector.broadcast %cst_12 : f32 to vector<8x6144xf32>
    %20 = arith.subf %18, %19 : vector<8x6144xf32>
    %cst_13 = arith.constant 1.67326319 : f32
    %21 = vector.broadcast %cst_13 : f32 to vector<8x6144xf32>
    %22 = arith.mulf %21, %20 : vector<8x6144xf32>
    %23 = arith.select %17, %15, %22 : vector<8x6144xi1>, vector<8x6144xf32>
    %cst_14 = arith.constant 1.05070102 : f32
    %24 = vector.broadcast %cst_14 : f32 to vector<8x6144xf32>
    %25 = arith.mulf %24, %23 : vector<8x6144xf32>
    %26 = arith.truncf %25 : vector<8x6144xf32> to vector<8x6144xbf16>
    %c0_15 = arith.constant 0 : index
    %c0_16 = arith.constant 0 : index
    %27 = vector.load %arg5[%c0_15, %c0_16] : memref<6144x256xbf16, #tpu.memory_space<vmem>>, vector<6144x256xbf16>
    %cst_17 = arith.constant dense<0.000000e+00> : vector<8x256xf32>
    %28 = tpu.matmul %26, %27, %cst_17 {dimension_numbers = #tpu.dot_dimension_numbers<[1], [0], [0], [1], [0, 0, 1, 1], [], []>} : vector<8x6144xbf16>, vector<6144x256xbf16>, vector<8x256xf32> -> vector<8x256xf32>
    %c0_18 = arith.constant 0 : index
    %c0_19 = arith.constant 0 : index
    %29 = vector.load %arg6[%c0_18, %c0_19] : memref<1x256xf32, #tpu.memory_space<vmem>>, vector<1x256xf32>
    %30 = vector.broadcast %29 : vector<1x256xf32> to vector<8x256xf32>
    %31 = arith.addf %28, %30 : vector<8x256xf32>
    %cst_20 = arith.constant 0.000000e+00 : f32
    %32 = vector.broadcast %cst_20 : f32 to vector<8x256xf32>
    %33 = arith.cmpf ogt, %31, %32 : vector<8x256xf32>
    %34 = math.exp %31 : vector<8x256xf32>
    %cst_21 = arith.constant 1.000000e+00 : f32
    %35 = vector.broadcast %cst_21 : f32 to vector<8x256xf32>
    %36 = arith.subf %34, %35 : vector<8x256xf32>
    %cst_22 = arith.constant 1.67326319 : f32
    %37 = vector.broadcast %cst_22 : f32 to vector<8x256xf32>
    %38 = arith.mulf %37, %36 : vector<8x256xf32>
    %39 = arith.select %33, %31, %38 : vector<8x256xi1>, vector<8x256xf32>
    %cst_23 = arith.constant 1.05070102 : f32
    %40 = vector.broadcast %cst_23 : f32 to vector<8x256xf32>
    %41 = arith.mulf %40, %39 : vector<8x256xf32>
    %42 = arith.truncf %41 : vector<8x256xf32> to vector<8x256xbf16>
    %c0_24 = arith.constant 0 : index
    %c0_25 = arith.constant 0 : index
    %43 = vector.load %arg7[%c0_24, %c0_25] : memref<256x128xbf16, #tpu.memory_space<vmem>>, vector<256x128xbf16>
    %cst_26 = arith.constant dense<0.000000e+00> : vector<8x128xf32>
    %44 = tpu.matmul %42, %43, %cst_26 {dimension_numbers = #tpu.dot_dimension_numbers<[1], [0], [0], [1], [0, 0, 1, 1], [], []>} : vector<8x256xbf16>, vector<256x128xbf16>, vector<8x128xf32> -> vector<8x128xf32>
    %c0_27 = arith.constant 0 : index
    %c0_28 = arith.constant 0 : index
    %45 = vector.load %arg8[%c0_27, %c0_28] : memref<1x128xf32, #tpu.memory_space<vmem>>, vector<1x128xf32>
    %46 = vector.broadcast %45 : vector<1x128xf32> to vector<8x128xf32>
    %47 = arith.addf %44, %46 : vector<8x128xf32>
    %c0_29 = arith.constant 0 : index
    %c0_30 = arith.constant 0 : index
    %48 = vector.load %arg9[%c0_29, %c0_30] : memref<8x128xf32, #tpu.memory_space<vmem>>, vector<8x128xf32>
    tpu.vector_store %arg9[%c0_29, %c0_30], %47 {strides = array<i32>} : memref<8x128xf32, #tpu.memory_space<vmem>>, vector<8x128xf32>,
    return
  }
  func.func @transform_0(%arg0: i32) -> (i32, i32) {
    %c0_i32 = arith.constant 0 : i32
    %c0_i32_0 = arith.constant 0 : i32
    return %arg0, %c0_i32 : i32, i32
  }
  func.func @transform_1(%arg0: i32) -> (i32, i32) {
    %c0_i32 = arith.constant 0 : i32
    %c0_i32_0 = arith.constant 0 : i32
    %c0_i32_1 = arith.constant 0 : i32
    return %c0_i32, %c0_i32_0 : i32, i32
  }
  func.func @transform_2(%arg0: i32) -> (i32, i32) {
    %c0_i32 = arith.constant 0 : i32
    %c0_i32_0 = arith.constant 0 : i32
    %c0_i32_1 = arith.constant 0 : i32
    return %c0_i32, %c0_i32_0 : i32, i32
  }
  func.func @transform_3(%arg0: i32) -> (i32, i32) {
    %c0_i32 = arith.constant 0 : i32
    %c0_i32_0 = arith.constant 0 : i32
    %c0_i32_1 = arith.constant 0 : i32
    return %c0_i32, %c0_i32_0 : i32, i32
  }
  func.func @transform_4(%arg0: i32) -> (i32, i32) {
    %c0_i32 = arith.constant 0 : i32
    %c0_i32_0 = arith.constant 0 : i32
    %c0_i32_1 = arith.constant 0 : i32
    return %c0_i32, %c0_i32_0 : i32, i32
  }
  func.func @transform_5(%arg0: i32) -> (i32, i32) {
    %c0_i32 = arith.constant 0 : i32
    %c0_i32_0 = arith.constant 0 : i32
    %c0_i32_1 = arith.constant 0 : i32
    return %c0_i32, %c0_i32_0 : i32, i32
  }
  func.func @transform_6(%arg0: i32) -> (i32, i32) {
    %c0_i32 = arith.constant 0 : i32
    %c0_i32_0 = arith.constant 0 : i32
    %c0_i32_1 = arith.constant 0 : i32
    return %c0_i32, %c0_i32_0 : i32, i32
  }
  func.func @transform_7(%arg0: i32) -> (i32, i32) {
    %c0_i32 = arith.constant 0 : i32
    %c0_i32_0 = arith.constant 0 : i32
    %c0_i32_1 = arith.constant 0 : i32
    return %c0_i32, %c0_i32_0 : i32, i32
  }
  func.func @transform_8(%arg0: i32) -> (i32, i32) {
    %c0_i32 = arith.constant 0 : i32
    %c0_i32_0 = arith.constant 0 : i32
    return %arg0, %c0_i32 : i32, i32
  }
}

</mosaic_0001>

<llo_original>
// kernel: mydensenet_forward.1
$region0: #{mydensenet_forward.1}
  #allocation0 [shape = 'u32[]', space=smem, size = 0x4, offset = 0x4, fixed_abs, tag = 'smem constant byte address 0x4 - core index']
  #allocation1 [shape = 'u32[144,128]{1,0:T(1,128)}', space=vmem, size = 0x12000, scoped, tag = 'internal scratch']
  %s0 = inlined_call_operand.vmem [shape: bf16[448,148], index: 0, kind: input, shape index: {}]
  %s1 = inlined_call_operand.hbm [shape: bf16[148,128], index: 1, kind: input, shape index: {}]
  %s2 = inlined_call_operand.hbm [shape: bf16[32,6144], index: 2, kind: input, shape index: {}]
  %s3 = inlined_call_operand.hbm [shape: f32[1,6144], index: 3, kind: input, shape index: {}]
  %s4 = inlined_call_operand.hbm [shape: bf16[6144,256], index: 4, kind: input, shape index: {}]
  %s5 = inlined_call_operand.hbm [shape: f32[1,256], index: 5, kind: input, shape index: {}]
  %s6 = inlined_call_operand.hbm [shape: bf16[256,128], index: 6, kind: input, shape index: {}]
  %s7 = inlined_call_operand.hbm [shape: f32[1,128], index: 7, kind: input, shape index: {}]
  %s8 = inlined_call_operand.vmem [shape: f32[8,128], index: 8, kind: output, shape index: {}]
  %s9 = sld [smem:[#allocation0]]
  $region70: #{mydensenet_forward.1} parent=0
    _
  %s11 = ssub.s32 1, %s9
  %s12 = scalar_select 0, %s11, %s9
  $region1: #{mydensenet_forward.1} parent=0
    #allocation2 [shape = 'u8[38912]{0}', space=vmem, size = 0x9800, scoped, tag = 'input window, operand 1, single buffered']
    #allocation3 [shape = 's32[1]{0}', space=sflag, size = 0x4, scoped, tag = 'scoped memory for mydensenet_forward.1']
    #allocation4 [shape = 'u8[393216]{0}', space=vmem, size = 0x60000, scoped, tag = 'input window, operand 2, single buffered']
    #allocation5 [shape = 's32[1]{0}', space=sflag, size = 0x4, scoped, tag = 'scoped memory for mydensenet_forward.1']
    #allocation6 [shape = 'u8[24576]{0}', space=vmem, size = 0x6000, scoped, tag = 'input window, operand 3, single buffered']
    #allocation7 [shape = 'u8[3145728]{0}', space=vmem, size = 0x300000, scoped, tag = 'input window, operand 4, single buffered']
    #allocation8 [shape = 's32[1]{0}', space=sflag, size = 0x4, scoped, tag = 'scoped memory for mydensenet_forward.1']
    #allocation9 [shape = 'u8[1024]{0}', space=vmem, size = 0x400, scoped, tag = 'input window, operand 5, single buffered']
    #allocation10 [shape = 'u8[65536]{0}', space=vmem, size = 0x10000, scoped, tag = 'input window, operand 6, single buffered']
    #allocation11 [shape = 's32[1]{0}', space=sflag, size = 0x4, scoped, tag = 'scoped memory for mydensenet_forward.1']
    #allocation12 [shape = 'u8[512]{0}', space=vmem, size = 0x400, scoped, tag = 'input window, operand 7, single buffered']
    %13 = vsyncpa [#allocation3], 0
    %14 = vsyncpa [#allocation5], 0
    %15 = vsyncpa [#allocation8], 0
    %16 = vsyncpa [#allocation11], 0
    // Predicated region
    $region2: #{mydensenet_forward.1} parent=1 // pred_check
      _
    $region3: #{mydensenet_forward.1} parent=1 // pred_check_branch
      %18 = sbr.rel (0) target = $region5
    $region4: #{mydensenet_forward.1} parent=1 // pred_region
      _
    $region5: #{mydensenet_forward.1} parent=1 // pred_fallthru
      _
    // Predicated region
    $region6: #{mydensenet_forward.1} parent=1 // pred_check
      _
    $region7: #{mydensenet_forward.1} parent=1 // pred_check_branch
      %20 = sbr.rel (0) target = $region9
    $region8: #{mydensenet_forward.1} parent=1 // pred_region
      %s22 = ssub.s32 1216, 1216
      %23 = vsyncadd [#allocation3], %s22
      %s24 = sshll.u32 [#allocation2], 4
      %s25 = int_to_ptr.vmem [resolvable:$true] %s24
      %30 = dma.hbm_to_vmem [thread:$0]  %s1, 1216, %s25, [#allocation3], 64, 64, 4
    $region9: #{mydensenet_forward.1} parent=1 // pred_fallthru
      _
    // Predicated region
    $region10: #{mydensenet_forward.1} parent=1 // pred_check
      _
    $region11: #{mydensenet_forward.1} parent=1 // pred_check_branch
      %32 = sbr.rel (0) target = $region13
    $region12: #{mydensenet_forward.1} parent=1 // pred_region
      %s34 = ssub.s32 12288, 12288
      %35 = vsyncadd [#allocation5], %s34
      %s36 = sshll.u32 [#allocation4], 4
      %s37 = int_to_ptr.vmem [resolvable:$true] %s36
      %42 = dma.hbm_to_vmem [thread:$0]  %s2, 12288, %s37, [#allocation5], 3072, 3072, 192
    $region13: #{mydensenet_forward.1} parent=1 // pred_fallthru
      _
    // Predicated region
    $region14: #{mydensenet_forward.1} parent=1 // pred_check
      _
    $region15: #{mydensenet_forward.1} parent=1 // pred_check_branch
      %44 = sbr.rel (0) target = $region17
    $region16: #{mydensenet_forward.1} parent=1 // pred_region
      %s46 = ssub.s32 768, 768
      %47 = vsyncadd [#allocation5], %s46
      %s49 = sshll.u32 [#allocation6], 4
      %s50 = int_to_ptr.vmem [resolvable:$true] %s49
      %52 = dma.hbm_to_vmem [thread:$0]  %s3, 768, %s50, [#allocation5]
    $region17: #{mydensenet_forward.1} parent=1 // pred_fallthru
      _
    // Predicated region
    $region18: #{mydensenet_forward.1} parent=1 // pred_check
      _
    $region19: #{mydensenet_forward.1} parent=1 // pred_check_branch
      %54 = sbr.rel (0) target = $region21
    $region20: #{mydensenet_forward.1} parent=1 // pred_region
      %s56 = ssub.s32 98304, 98304
      %57 = vsyncadd [#allocation8], %s56
      %s58 = sshll.u32 [#allocation7], 4
      %s59 = int_to_ptr.vmem [resolvable:$true] %s58
      %64 = dma.hbm_to_vmem [thread:$0]  %s4, 98304, %s59, [#allocation8], 128, 128, 8
    $region21: #{mydensenet_forward.1} parent=1 // pred_fallthru
      _
    // Predicated region
    $region22: #{mydensenet_forward.1} parent=1 // pred_check
      _
    $region23: #{mydensenet_forward.1} parent=1 // pred_check_branch
      %66 = sbr.rel (0) target = $region25
    $region24: #{mydensenet_forward.1} parent=1 // pred_region
      %s68 = ssub.s32 32, 32
      %69 = vsyncadd [#allocation8], %s68
      %s71 = sshll.u32 [#allocation9], 4
      %s72 = int_to_ptr.vmem [resolvable:$true] %s71
      %74 = dma.hbm_to_vmem [thread:$0]  %s5, 32, %s72, [#allocation8]
    $region25: #{mydensenet_forward.1} parent=1 // pred_fallthru
      _
    // Predicated region
    $region26: #{mydensenet_forward.1} parent=1 // pred_check
      _
    $region27: #{mydensenet_forward.1} parent=1 // pred_check_branch
      %76 = sbr.rel (0) target = $region29
    $region28: #{mydensenet_forward.1} parent=1 // pred_region
      %s78 = ssub.s32 2048, 2048
      %79 = vsyncadd [#allocation11], %s78
      %s80 = sshll.u32 [#allocation10], 4
      %s81 = int_to_ptr.vmem [resolvable:$true] %s80
      %86 = dma.hbm_to_vmem [thread:$0]  %s6, 2048, %s81, [#allocation11], 64, 64, 4
    $region29: #{mydensenet_forward.1} parent=1 // pred_fallthru
      _
    // Predicated region
    $region30: #{mydensenet_forward.1} parent=1 // pred_check
      _
    $region31: #{mydensenet_forward.1} parent=1 // pred_check_branch
      %88 = sbr.rel (0) target = $region33
    $region32: #{mydensenet_forward.1} parent=1 // pred_region
      %s90 = ssub.s32 16, 16
      %91 = vsyncadd [#allocation11], %s90
      %s93 = sshll.u32 [#allocation12], 4
      %s94 = int_to_ptr.vmem [resolvable:$true] %s93
      %96 = dma.hbm_to_vmem [thread:$0]  %s7, 16, %s94, [#allocation11]
    $region33: #{mydensenet_forward.1} parent=1 // pred_fallthru
      _
    // Predicated region
    $region34: #{mydensenet_forward.1} parent=1 // pred_check
      _
    $region35: #{mydensenet_forward.1} parent=1 // pred_check_branch
      %98 = sbr.rel (0) target = $region37
    $region36: #{mydensenet_forward.1} parent=1 // pred_region
      %99 = dma.done [#allocation3], 1216
    $region37: #{mydensenet_forward.1} parent=1 // pred_fallthru
      _
    // Predicated region
    $region38: #{mydensenet_forward.1} parent=1 // pred_check
      _
    $region39: #{mydensenet_forward.1} parent=1 // pred_check_branch
      %101 = sbr.rel (0) target = $region41
    $region40: #{mydensenet_forward.1} parent=1 // pred_region
      %102 = dma.done [#allocation5], 12288
    $region41: #{mydensenet_forward.1} parent=1 // pred_fallthru
      _
    // Predicated region
    $region42: #{mydensenet_forward.1} parent=1 // pred_check
      _
    $region43: #{mydensenet_forward.1} parent=1 // pred_check_branch
      %104 = sbr.rel (0) target = $region45
    $region44: #{mydensenet_forward.1} parent=1 // pred_region
      %105 = dma.done [#allocation5], 768
    $region45: #{mydensenet_forward.1} parent=1 // pred_fallthru
      _
    // Predicated region
    $region46: #{mydensenet_forward.1} parent=1 // pred_check
      _
    $region47: #{mydensenet_forward.1} parent=1 // pred_check_branch
      %107 = sbr.rel (0) target = $region49
    $region48: #{mydensenet_forward.1} parent=1 // pred_region
      %108 = dma.done [#allocation8], 98304
    $region49: #{mydensenet_forward.1} parent=1 // pred_fallthru
      _
    // Predicated region
    $region50: #{mydensenet_forward.1} parent=1 // pred_check
      _
    $region51: #{mydensenet_forward.1} parent=1 // pred_check_branch
      %110 = sbr.rel (0) target = $region53
    $region52: #{mydensenet_forward.1} parent=1 // pred_region
      %111 = dma.done [#allocation8], 32
    $region53: #{mydensenet_forward.1} parent=1 // pred_fallthru
      _
    // Predicated region
    $region54: #{mydensenet_forward.1} parent=1 // pred_check
      _
    $region55: #{mydensenet_forward.1} parent=1 // pred_check_branch
      %113 = sbr.rel (0) target = $region57
    $region56: #{mydensenet_forward.1} parent=1 // pred_region
      %114 = dma.done [#allocation11], 2048
    $region57: #{mydensenet_forward.1} parent=1 // pred_fallthru
      _
    // Predicated region
    $region58: #{mydensenet_forward.1} parent=1 // pred_check
      _
    $region59: #{mydensenet_forward.1} parent=1 // pred_check_branch
      %116 = sbr.rel (0) target = $region61
    $region60: #{mydensenet_forward.1} parent=1 // pred_region
      %117 = dma.done [#allocation11], 16
    $region61: #{mydensenet_forward.1} parent=1 // pred_fallthru
      _
    %v119 = vld [vmem:[%s0] sm:$0xff]
    %v120 = vld [vmem:[%s0 + $0x8] sm:$0xff]
    %v121 = vld [vmem:[%s0 + $0x10] sm:$0xff]
    %v122 = vld [vmem:[%s0 + $0x18] sm:$0xff]
    %v123 = vld [vmem:[%s0 + $0x20] sm:$0xff]
    %v124 = vld [vmem:[%s0 + $0x28] sm:$0xff]
    %v125 = vld [vmem:[%s0 + $0x30] sm:$0xff]
    %v126 = vld [vmem:[%s0 + $0x38] sm:$0xff]
    %v127 = vld [vmem:[%s0 + $0x40] sm:$0xff]
    %v128 = vld [vmem:[%s0 + $0x48] sm:$0xff]
    %v129 = vld [vmem:[%s0 + $0x50] sm:$0xff]
    %v130 = vld [vmem:[%s0 + $0x58] sm:$0xff]
    %v131 = vld [vmem:[%s0 + $0x60] sm:$0xff]
    %v132 = vld [vmem:[%s0 + $0x68] sm:$0xff]
    %v133 = vld [vmem:[%s0 + $0x70] sm:$0xff]
    %v134 = vld [vmem:[%s0 + $0x78] sm:$0xff]
    %v135 = vld [vmem:[%s0 + $0x80] sm:$0xff]
    %v136 = vld [vmem:[%s0 + $0x88] sm:$0xff]
    %v137 = vld [vmem:[%s0 + $0x90] sm:$0xff]
    %v138 = vld [vmem:[%s0 + $0x98] sm:$0xff]
    %v139 = vld [vmem:[%s0 + $0xa0] sm:$0xff]
    %v140 = vld [vmem:[%s0 + $0xa8] sm:$0xff]
    %v141 = vld [vmem:[%s0 + $0xb0] sm:$0xff]
    %v142 = vld [vmem:[%s0 + $0xb8] sm:$0xff]
    %v143 = vld [vmem:[%s0 + $0xc0] sm:$0xff]
    %v144 = vld [vmem:[%s0 + $0xc8] sm:$0xff]
    %v145 = vld [vmem:[%s0 + $0xd0] sm:$0xff]
    %v146 = vld [vmem:[%s0 + $0xd8] sm:$0xff]
    %v147 = vld [vmem:[%s0 + $0xe0] sm:$0xff]
    %v148 = vld [vmem:[%s0 + $0xe8] sm:$0xff]
    %v149 = vld [vmem:[%s0 + $0xf0] sm:$0xff]
    %v150 = vld [vmem:[%s0 + $0xf8] sm:$0xff]
    %v151 = vld [vmem:[%s0 + $0x100] sm:$0xff]
    %v152 = vld [vmem:[%s0 + $0x108] sm:$0xff]
    %v153 = vld [vmem:[%s0 + $0x110] sm:$0xff]
    %v154 = vld [vmem:[%s0 + $0x118] sm:$0xff]
    %v155 = vld [vmem:[%s0 + $0x120] sm:$0xff]
    %v156 = vld [vmem:[%s0 + $0x128] sm:$0xff]
    %v157 = vld [vmem:[%s0 + $0x130] sm:$0xff]
    %v158 = vld [vmem:[%s0 + $0x138] sm:$0xff]
    %v159 = vld [vmem:[%s0 + $0x140] sm:$0xff]
    %v160 = vld [vmem:[%s0 + $0x148] sm:$0xff]
    %v161 = vld [vmem:[%s0 + $0x150] sm:$0xff]
    %v162 = vld [vmem:[%s0 + $0x158] sm:$0xff]
    %v163 = vld [vmem:[%s0 + $0x160] sm:$0xff]
    %v164 = vld [vmem:[%s0 + $0x168] sm:$0xff]
    %v165 = vld [vmem:[%s0 + $0x170] sm:$0xff]
    %v166 = vld [vmem:[%s0 + $0x178] sm:$0xff]
    %v167 = vld [vmem:[%s0 + $0x180] sm:$0xff]
    %v168 = vld [vmem:[%s0 + $0x188] sm:$0xff]
    %v169 = vld [vmem:[%s0 + $0x190] sm:$0xff]
    %v170 = vld [vmem:[%s0 + $0x198] sm:$0xff]
    %v171 = vld [vmem:[%s0 + $0x1a0] sm:$0xff]
    %v172 = vld [vmem:[%s0 + $0x1a8] sm:$0xff]
    %v173 = vld [vmem:[%s0 + $0x1b0] sm:$0xff]
    %v174 = vld [vmem:[%s0 + $0x1b8] sm:$0xff]
    %v175 = vld [vmem:[#allocation2] sm:$0xf]
    %v176 = vld [vmem:[#allocation2 + $0x4] sm:$0xf]
    %v177 = vld [vmem:[#allocation2 + $0x8] sm:$0xf]
    %v178 = vld [vmem:[#allocation2 + $0xc] sm:$0xf]
    %v179 = vld [vmem:[#allocation2 + $0x10] sm:$0xf]
    %v180 = vld [vmem:[#allocation2 + $0x14] sm:$0xf]
    %v181 = vld [vmem:[#allocation2 + $0x18] sm:$0xf]
    %v182 = vld [vmem:[#allocation2 + $0x1c] sm:$0xf]
    %v183 = vld [vmem:[#allocation2 + $0x20] sm:$0xf]
    %v184 = vld [vmem:[#allocation2 + $0x24] sm:$0xf]
    %v185 = vld [vmem:[#allocation2 + $0x28] sm:$0xf]
    %v186 = vld [vmem:[#allocation2 + $0x2c] sm:$0xf]
    %v187 = vld [vmem:[#allocation2 + $0x30] sm:$0xf]
    %v188 = vld [vmem:[#allocation2 + $0x34] sm:$0xf]
    %v189 = vld [vmem:[#allocation2 + $0x38] sm:$0xf]
    %v190 = vld [vmem:[#allocation2 + $0x3c] sm:$0xf]
    %v191 = vld [vmem:[#allocation2 + $0x40] sm:$0xf]
    %v192 = vld [vmem:[#allocation2 + $0x44] sm:$0xf]
    %v193 = vld [vmem:[#allocation2 + $0x48] sm:$0x3]
    %v250 = vunpack.c.l.b16 %v119
    %v251 = vunpack.c.h.b16 %v119
    %v252 = vunpack.c.l.b16 %v120
    %v253 = vunpack.c.h.b16 %v120
    %v254 = vunpack.c.l.b16 %v121
    %v255 = vunpack.c.h.b16 %v121
    %v256 = vunpack.c.l.b16 %v122
    %v257 = vunpack.c.h.b16 %v122
    %v258 = vunpack.c.l.b16 %v123
    %v259 = vunpack.c.h.b16 %v123
    %v260 = vunpack.c.l.b16 %v124
    %v261 = vunpack.c.h.b16 %v124
    %v262 = vunpack.c.l.b16 %v125
    %v263 = vunpack.c.h.b16 %v125
    %v264 = vunpack.c.l.b16 %v126
    %v265 = vunpack.c.h.b16 %v126
    %v266 = vunpack.c.l.b16 %v127
    %v267 = vunpack.c.h.b16 %v127
    %v268 = vunpack.c.l.b16 %v128
    %v269 = vunpack.c.h.b16 %v128
    %v270 = vunpack.c.l.b16 %v129
    %v271 = vunpack.c.h.b16 %v129
    %v272 = vunpack.c.l.b16 %v130
    %v273 = vunpack.c.h.b16 %v130
    %v274 = vunpack.c.l.b16 %v131
    %v275 = vunpack.c.h.b16 %v131
    %v276 = vunpack.c.l.b16 %v132
    %v277 = vunpack.c.h.b16 %v132
    %v278 = vunpack.c.l.b16 %v133
    %v279 = vunpack.c.h.b16 %v133
    %v280 = vunpack.c.l.b16 %v134
    %v281 = vunpack.c.h.b16 %v134
    %v282 = vunpack.c.l.b16 %v135
    %v283 = vunpack.c.h.b16 %v135
    %v284 = vunpack.c.l.b16 %v136
    %v285 = vunpack.c.h.b16 %v136
    %v286 = vunpack.c.l.b16 %v137
    %v287 = vunpack.c.h.b16 %v137
    %v288 = vunpack.c.l.b16 %v138
    %v289 = vunpack.c.h.b16 %v138
    %v290 = vunpack.c.l.b16 %v139
    %v291 = vunpack.c.h.b16 %v139
    %v292 = vunpack.c.l.b16 %v140
    %v293 = vunpack.c.h.b16 %v140
    %v294 = vunpack.c.l.b16 %v141
    %v295 = vunpack.c.h.b16 %v141
    %v296 = vunpack.c.l.b16 %v142
    %v297 = vunpack.c.h.b16 %v142
    %v298 = vunpack.c.l.b16 %v143
    %v299 = vunpack.c.h.b16 %v143
    %v300 = vunpack.c.l.b16 %v144
    %v301 = vunpack.c.h.b16 %v144
    %v302 = vunpack.c.l.b16 %v145
    %v303 = vunpack.c.h.b16 %v145
    %v304 = vunpack.c.l.b16 %v146
    %v305 = vunpack.c.h.b16 %v146
    %v306 = vunpack.c.l.b16 %v147
    %v307 = vunpack.c.h.b16 %v147
    %v308 = vunpack.c.l.b16 %v148
    %v309 = vunpack.c.h.b16 %v148
    %v310 = vunpack.c.l.b16 %v149
    %v311 = vunpack.c.h.b16 %v149
    %v312 = vunpack.c.l.b16 %v150
    %v313 = vunpack.c.h.b16 %v150
    %v314 = vunpack.c.l.b16 %v151
    %v315 = vunpack.c.h.b16 %v151
    %v316 = vunpack.c.l.b16 %v152
    %v317 = vunpack.c.h.b16 %v152
    %v318 = vunpack.c.l.b16 %v153
    %v319 = vunpack.c.h.b16 %v153
    %v320 = vunpack.c.l.b16 %v154
    %v321 = vunpack.c.h.b16 %v154
    %v322 = vunpack.c.l.b16 %v155
    %v323 = vunpack.c.h.b16 %v155
    %v324 = vunpack.c.l.b16 %v156
    %v325 = vunpack.c.h.b16 %v156
    %v326 = vunpack.c.l.b16 %v157
    %v327 = vunpack.c.h.b16 %v157
    %v328 = vunpack.c.l.b16 %v158
    %v329 = vunpack.c.h.b16 %v158
    %v330 = vunpack.c.l.b16 %v159
    %v331 = vunpack.c.h.b16 %v159
    %v332 = vunpack.c.l.b16 %v160
    %v333 = vunpack.c.h.b16 %v160
    %v334 = vunpack.c.l.b16 %v161
    %v335 = vunpack.c.h.b16 %v161
    %v336 = vunpack.c.l.b16 %v162
    %v337 = vunpack.c.h.b16 %v162
    %v338 = vunpack.c.l.b16 %v163
    %v339 = vunpack.c.h.b16 %v163
    %v340 = vunpack.c.l.b16 %v164
    %v341 = vunpack.c.h.b16 %v164
    %v342 = vunpack.c.l.b16 %v165
    %v343 = vunpack.c.h.b16 %v165
    %v344 = vunpack.c.l.b16 %v166
    %v345 = vunpack.c.h.b16 %v166
    %v346 = vunpack.c.l.b16 %v167
    %v347 = vunpack.c.h.b16 %v167
    %v348 = vunpack.c.l.b16 %v168
    %v349 = vunpack.c.h.b16 %v168
    %v350 = vunpack.c.l.b16 %v169
    %v351 = vunpack.c.h.b16 %v169
    %v352 = vunpack.c.l.b16 %v170
    %v353 = vunpack.c.h.b16 %v170
    %v354 = vunpack.c.l.b16 %v171
    %v355 = vunpack.c.h.b16 %v171
    %v356 = vunpack.c.l.b16 %v172
    %v357 = vunpack.c.h.b16 %v172
    %v358 = vunpack.c.l.b16 %v173
    %v359 = vunpack.c.h.b16 %v173
    %v360 = vunpack.c.l.b16 %v174
    %v361 = vunpack.c.h.b16 %v174
    %v362 = vpack.c.b16 %v252, %v250
    %v363 = vpack.c.b16 %v253, %v251
    %v364 = vpack.c.b16 %v256, %v254
    %v365 = vpack.c.b16 %v257, %v255
    %v366 = vpack.c.b16 %v260, %v258
    %v367 = vpack.c.b16 %v261, %v259
    %v368 = vpack.c.b16 %v264, %v262
    %v369 = vpack.c.b16 %v265, %v263
    %v370 = vpack.c.b16 %v268, %v266
    %v371 = vpack.c.b16 %v269, %v267
    %v372 = vpack.c.b16 %v272, %v270
    %v373 = vpack.c.b16 %v273, %v271
    %v374 = vpack.c.b16 %v276, %v274
    %v375 = vpack.c.b16 %v277, %v275
    %v376 = vpack.c.b16 %v280, %v278
    %v377 = vpack.c.b16 %v281, %v279
    %v378 = vpack.c.b16 %v284, %v282
    %v379 = vpack.c.b16 %v285, %v283
    %v380 = vpack.c.b16 %v288, %v286
    %v381 = vpack.c.b16 %v289, %v287
    %v382 = vpack.c.b16 %v292, %v290
    %v383 = vpack.c.b16 %v293, %v291
    %v384 = vpack.c.b16 %v296, %v294
    %v385 = vpack.c.b16 %v297, %v295
    %v386 = vpack.c.b16 %v300, %v298
    %v387 = vpack.c.b16 %v301, %v299
    %v388 = vpack.c.b16 %v304, %v302
    %v389 = vpack.c.b16 %v305, %v303
    %v390 = vpack.c.b16 %v308, %v306
    %v391 = vpack.c.b16 %v309, %v307
    %v392 = vpack.c.b16 %v312, %v310
    %v393 = vpack.c.b16 %v313, %v311
    %v394 = vpack.c.b16 %v316, %v314
    %v395 = vpack.c.b16 %v317, %v315
    %v396 = vpack.c.b16 %v320, %v318
    %v397 = vpack.c.b16 %v321, %v319
    %v398 = vpack.c.b16 %v324, %v322
    %v399 = vpack.c.b16 %v325, %v323
    %v400 = vpack.c.b16 %v328, %v326
    %v401 = vpack.c.b16 %v329, %v327
    %v402 = vpack.c.b16 %v332, %v330
    %v403 = vpack.c.b16 %v333, %v331
    %v404 = vpack.c.b16 %v336, %v334
    %v405 = vpack.c.b16 %v337, %v335
    %v406 = vpack.c.b16 %v340, %v338
    %v407 = vpack.c.b16 %v341, %v339
    %v408 = vpack.c.b16 %v344, %v342
    %v409 = vpack.c.b16 %v345, %v343
    %v410 = vpack.c.b16 %v348, %v346
    %v411 = vpack.c.b16 %v349, %v347
    %v412 = vpack.c.b16 %v352, %v350
    %v413 = vpack.c.b16 %v353, %v351
    %v414 = vpack.c.b16 %v356, %v354
    %v415 = vpack.c.b16 %v357, %v355
    %v416 = vpack.c.b16 %v360, %v358
    %v417 = vpack.c.b16 %v361, %v359
    %v465 = vunpack.c.l.b16 %v175
    %v466 = vunpack.c.l.b16 %v176
    %v467 = vunpack.c.l.b16 %v177
    %v468 = vunpack.c.l.b16 %v178
    %v469 = vunpack.c.l.b16 %v179
    %v470 = vunpack.c.l.b16 %v180
    %v471 = vunpack.c.l.b16 %v181
    %v472 = vunpack.c.l.b16 %v182
    %v473 = vunpack.c.l.b16 %v183
    %v474 = vunpack.c.l.b16 %v184
    %v475 = vunpack.c.l.b16 %v185
    %v476 = vunpack.c.l.b16 %v186
    %v477 = vunpack.c.l.b16 %v187
    %v478 = vunpack.c.l.b16 %v188
    %v479 = vunpack.c.l.b16 %v189
    %v480 = vunpack.c.l.b16 %v190
    %v481 = vunpack.c.l.b16 %v191
    %v482 = vunpack.c.l.b16 %v192
    %v483 = vunpack.c.l.b16 %v193
    %v484 = vpack.c.b16 %v466, %v465
    %v485 = vpack.c.b16 %v468, %v467
    %v486 = vpack.c.b16 %v470, %v469
    %v487 = vpack.c.b16 %v472, %v471
    %v488 = vpack.c.b16 %v474, %v473
    %v489 = vpack.c.b16 %v476, %v475
    %v490 = vpack.c.b16 %v478, %v477
    %v491 = vpack.c.b16 %v480, %v479
    %v492 = vpack.c.b16 %v482, %v481
    %v493 = vpack.c.b16 %v483, %v483
    %vm503 = vcmask 162816
    %v505 = vsel %vm503, %v363, 0
    %v508 = vsel %vm503, %v365, 0
    %v511 = vsel %vm503, %v367, 0
    %v514 = vsel %vm503, %v369, 0
    %v517 = vsel %vm503, %v371, 0
    %v520 = vsel %vm503, %v373, 0
    %v523 = vsel %vm503, %v375, 0
    %v526 = vsel %vm503, %v377, 0
    %v529 = vsel %vm503, %v379, 0
    %v532 = vsel %vm503, %v381, 0
    %v535 = vsel %vm503, %v383, 0
    %v538 = vsel %vm503, %v385, 0
    %v541 = vsel %vm503, %v387, 0
    %v544 = vsel %vm503, %v389, 0
    %v547 = vsel %vm503, %v391, 0
    %v550 = vsel %vm503, %v393, 0
    %v553 = vsel %vm503, %v395, 0
    %v556 = vsel %vm503, %v397, 0
    %v559 = vsel %vm503, %v399, 0
    %v562 = vsel %vm503, %v401, 0
    %v565 = vsel %vm503, %v403, 0
    %v568 = vsel %vm503, %v405, 0
    %v571 = vsel %vm503, %v407, 0
    %v574 = vsel %vm503, %v409, 0
    %v577 = vsel %vm503, %v411, 0
    %v580 = vsel %vm503, %v413, 0
    %v583 = vsel %vm503, %v415, 0
    %v586 = vsel %vm503, %v417, 0
    %vm588 = vcmask 1041408
    %v590 = vsel %vm588, %v493, 0
    %592 = vmatprep.subr.bf16.mxu0 0
    %593 = vmatpush1.bf16.msra.mxu0 %v484
    %594 = vmatprep.subr.bf16.mxu0 0
    %595 = vmatpush1.bf16.msra.mxu0 %v485
    %596 = vmatprep.subr.bf16.mxu0 0
    %597 = vmatpush1.bf16.msra.mxu0 %v486
    %598 = vmatprep.subr.bf16.mxu0 0
    %599 = vmatpush1.bf16.msra.mxu0 %v487
    %600 = vmatprep.subr.bf16.mxu0 0
    %601 = vmatpush1.bf16.msra.mxu0 %v488
    %602 = vmatprep.subr.bf16.mxu0 0
    %603 = vmatpush1.bf16.msra.mxu0 %v489
    %604 = vmatprep.subr.bf16.mxu0 0
    %605 = vmatpush1.bf16.msra.mxu0 %v490
    %606 = vmatprep.subr.bf16.mxu0 0
    %607 = vmatpush1.bf16.msra.mxu0 %v491
    %608 = vmatprep.subr.bf16.mxu0 0
    %609 = vmatpush1.bf16.msra.mxu0 %v492
    %610 = vmatprep.subr.bf16.mxu0 0
    %611 = vmatpush1.bf16.msra.mxu0 %v590
    %612 = vmatprep.subr.bf16.mxu0 0
    %613 = vmatpush1.bf16.msra.mxu0 0
    %614 = vmatprep.subr.bf16.mxu0 0
    %615 = vmatpush1.bf16.msra.mxu0 0
    %616 = vmatprep.subr.bf16.mxu0 0
    %617 = vmatpush1.bf16.msra.mxu0 0
    %618 = vmatprep.subr.bf16.mxu0 0
    %619 = vmatpush1.bf16.msra.mxu0 0
    %620 = vmatprep.subr.bf16.mxu0 0
    %621 = vmatpush1.bf16.msra.mxu0 0
    %622 = vmatprep.subr.bf16.mxu0 0
    %623 = vmatpush1.bf16.msra.mxu0 0
    %624 = vmatprep.mubr.bf16.mxu0 %v505
    %625 = vmatmul.mubr.bf16.gmra.mrb[0].mxu0 %v362
    %v626 = vpop.f32.mrb[0].mxu0
    %v627 = vadd.f32 0.0, %v626
    %v628 = vpop.f32.mrb[0].mxu0
    %v629 = vpop.f32.mrb[0].mxu0
    %v630 = vadd.f32 0.0, %v629
    %v631 = vpop.f32.mrb[0].mxu0
    %632 = vmatprep.mubr.bf16.mxu0 %v508
    %633 = vmatmul.mubr.bf16.gmra.mrb[0].mxu0 %v364
    %v634 = vpop.f32.mrb[0].mxu0
    %v635 = vadd.f32 0.0, %v634
    %v636 = vpop.f32.mrb[0].mxu0
    %v637 = vpop.f32.mrb[0].mxu0
    %v638 = vadd.f32 0.0, %v637
    %v639 = vpop.f32.mrb[0].mxu0
    %640 = vmatprep.mubr.bf16.mxu0 %v511
    %641 = vmatmul.mubr.bf16.gmra.mrb[0].mxu0 %v366
    %v642 = vpop.f32.mrb[0].mxu0
    %v643 = vadd.f32 0.0, %v642
    %v644 = vpop.f32.mrb[0].mxu0
    %v645 = vpop.f32.mrb[0].mxu0
    %v646 = vadd.f32 0.0, %v645
    %v647 = vpop.f32.mrb[0].mxu0
    %648 = vmatprep.mubr.bf16.mxu0 %v514
    %649 = vmatmul.mubr.bf16.gmra.mrb[0].mxu0 %v368
    %v650 = vpop.f32.mrb[0].mxu0
    %v651 = vadd.f32 0.0, %v650
    %v652 = vpop.f32.mrb[0].mxu0
    %v653 = vpop.f32.mrb[0].mxu0
    %v654 = vadd.f32 0.0, %v653
    %v655 = vpop.f32.mrb[0].mxu0
    %656 = vmatprep.mubr.bf16.mxu0 %v517
    %657 = vmatmul.mubr.bf16.gmra.mrb[0].mxu0 %v370
    %v658 = vpop.f32.mrb[0].mxu0
    %v659 = vadd.f32 0.0, %v658
    %v660 = vpop.f32.mrb[0].mxu0
    %v661 = vpop.f32.mrb[0].mxu0
    %v662 = vadd.f32 0.0, %v661
    %v663 = vpop.f32.mrb[0].mxu0
    %664 = vmatprep.mubr.bf16.mxu0 %v520
    %665 = vmatmul.mubr.bf16.gmra.mrb[0].mxu0 %v372
    %v666 = vpop.f32.mrb[0].mxu0
    %v667 = vadd.f32 0.0, %v666
    %v668 = vpop.f32.mrb[0].mxu0
    %v669 = vpop.f32.mrb[0].mxu0
    %v670 = vadd.f32 0.0, %v669
    %v671 = vpop.f32.mrb[0].mxu0
    %672 = vmatprep.mubr.bf16.mxu0 %v523
    %673 = vmatmul.mubr.bf16.gmra.mrb[0].mxu0 %v374
    %v674 = vpop.f32.mrb[0].mxu0
    %v675 = vadd.f32 0.0, %v674
    %v676 = vpop.f32.mrb[0].mxu0
    %v677 = vpop.f32.mrb[0].mxu0
    %v678 = vadd.f32 0.0, %v677
    %v679 = vpop.f32.mrb[0].mxu0
    %680 = vmatprep.mubr.bf16.mxu0 %v526
    %681 = vmatmul.mubr.bf16.gmra.mrb[0].mxu0 %v376
    %v682 = vpop.f32.mrb[0].mxu0
    %v683 = vadd.f32 0.0, %v682
    %v684 = vpop.f32.mrb[0].mxu0
    %v685 = vpop.f32.mrb[0].mxu0
    %v686 = vadd.f32 0.0, %v685
    %v687 = vpop.f32.mrb[0].mxu0
    %688 = vmatprep.mubr.bf16.mxu0 %v529
    %689 = vmatmul.mubr.bf16.gmra.mrb[0].mxu0 %v378
    %v690 = vpop.f32.mrb[0].mxu0
    %v691 = vadd.f32 0.0, %v690
    %v692 = vpop.f32.mrb[0].mxu0
    %v693 = vpop.f32.mrb[0].mxu0
    %v694 = vadd.f32 0.0, %v693
    %v695 = vpop.f32.mrb[0].mxu0
    %696 = vmatprep.mubr.bf16.mxu0 %v532
    %697 = vmatmul.mubr.bf16.gmra.mrb[0].mxu0 %v380
    %v698 = vpop.f32.mrb[0].mxu0
    %v699 = vadd.f32 0.0, %v698
    %v700 = vpop.f32.mrb[0].mxu0
    %v701 = vpop.f32.mrb[0].mxu0
    %v702 = vadd.f32 0.0, %v701
    %v703 = vpop.f32.mrb[0].mxu0
    %704 = vmatprep.mubr.bf16.mxu0 %v535
    %705 = vmatmul.mubr.bf16.gmra.mrb[0].mxu0 %v382
    %v706 = vpop.f32.mrb[0].mxu0
    %v707 = vadd.f32 0.0, %v706
    %v708 = vpop.f32.mrb[0].mxu0
    %v709 = vpop.f32.mrb[0].mxu0
    %v710 = vadd.f32 0.0, %v709
    %v711 = vpop.f32.mrb[0].mxu0
    %712 = vmatprep.mubr.bf16.mxu0 %v538
    %713 = vmatmul.mubr.bf16.gmra.mrb[0].mxu0 %v384
    %v714 = vpop.f32.mrb[0].mxu0
    %v715 = vadd.f32 0.0, %v714
    %v716 = vpop.f32.mrb[0].mxu0
    %v717 = vpop.f32.mrb[0].mxu0
    %v718 = vadd.f32 0.0, %v717
    %v719 = vpop.f32.mrb[0].mxu0
    %720 = vmatprep.mubr.bf16.mxu0 %v541
    %721 = vmatmul.mubr.bf16.gmra.mrb[0].mxu0 %v386
    %v722 = vpop.f32.mrb[0].mxu0
    %v723 = vadd.f32 0.0, %v722
    %v724 = vpop.f32.mrb[0].mxu0
    %v725 = vpop.f32.mrb[0].mxu0
    %v726 = vadd.f32 0.0, %v725
    %v727 = vpop.f32.mrb[0].mxu0
    %728 = vmatprep.mubr.bf16.mxu0 %v544
    %729 = vmatmul.mubr.bf16.gmra.mrb[0].mxu0 %v388
    %v730 = vpop.f32.mrb[0].mxu0
    %v731 = vadd.f32 0.0, %v730
    %v732 = vpop.f32.mrb[0].mxu0
    %v733 = vpop.f32.mrb[0].mxu0
    %v734 = vadd.f32 0.0, %v733
    %v735 = vpop.f32.mrb[0].mxu0
    %736 = vmatprep.mubr.bf16.mxu0 %v547
    %737 = vmatmul.mubr.bf16.gmra.mrb[0].mxu0 %v390
    %v738 = vpop.f32.mrb[0].mxu0
    %v739 = vadd.f32 0.0, %v738
    %v740 = vpop.f32.mrb[0].mxu0
    %v741 = vpop.f32.mrb[0].mxu0
    %v742 = vadd.f32 0.0, %v741
    %v743 = vpop.f32.mrb[0].mxu0
    %744 = vmatprep.mubr.bf16.mxu0 %v550
    %745 = vmatmul.mubr.bf16.gmra.mrb[0].mxu0 %v392
    %v746 = vpop.f32.mrb[0].mxu0
    %v747 = vadd.f32 0.0, %v746
    %v748 = vpop.f32.mrb[0].mxu0
    %v749 = vpop.f32.mrb[0].mxu0
    %v750 = vadd.f32 0.0, %v749
    %v751 = vpop.f32.mrb[0].mxu0
    %752 = vmatprep.mubr.bf16.mxu0 %v553
    %753 = vmatmul.mubr.bf16.gmra.mrb[0].mxu0 %v394
    %v754 = vpop.f32.mrb[0].mxu0
    %v755 = vadd.f32 0.0, %v754
    %v756 = vpop.f32.mrb[0].mxu0
    %v757 = vpop.f32.mrb[0].mxu0
    %v758 = vadd.f32 0.0, %v757
    %v759 = vpop.f32.mrb[0].mxu0
    %760 = vmatprep.mubr.bf16.mxu0 %v556
    %761 = vmatmul.mubr.bf16.gmra.mrb[0].mxu0 %v396
    %v762 = vpop.f32.mrb[0].mxu0
    %v763 = vadd.f32 0.0, %v762
    %v764 = vpop.f32.mrb[0].mxu0
    %v765 = vpop.f32.mrb[0].mxu0
    %v766 = vadd.f32 0.0, %v765
    %v767 = vpop.f32.mrb[0].mxu0
    %768 = vmatprep.mubr.bf16.mxu0 %v559
    %769 = vmatmul.mubr.bf16.gmra.mrb[0].mxu0 %v398
    %v770 = vpop.f32.mrb[0].mxu0
    %v771 = vadd.f32 0.0, %v770
    %v772 = vpop.f32.mrb[0].mxu0
    %v773 = vpop.f32.mrb[0].mxu0
    %v774 = vadd.f32 0.0, %v773
    %v775 = vpop.f32.mrb[0].mxu0
    %776 = vmatprep.mubr.bf16.mxu0 %v562
    %777 = vmatmul.mubr.bf16.gmra.mrb[0].mxu0 %v400
    %v778 = vpop.f32.mrb[0].mxu0
    %v779 = vadd.f32 0.0, %v778
    %v780 = vpop.f32.mrb[0].mxu0
    %v781 = vpop.f32.mrb[0].mxu0
    %v782 = vadd.f32 0.0, %v781
    %v783 = vpop.f32.mrb[0].mxu0
    %784 = vmatprep.mubr.bf16.mxu0 %v565
    %785 = vmatmul.mubr.bf16.gmra.mrb[0].mxu0 %v402
    %v786 = vpop.f32.mrb[0].mxu0
    %v787 = vadd.f32 0.0, %v786
    %v788 = vpop.f32.mrb[0].mxu0
    %v789 = vpop.f32.mrb[0].mxu0
    %v790 = vadd.f32 0.0, %v789
    %v791 = vpop.f32.mrb[0].mxu0
    %792 = vmatprep.mubr.bf16.mxu0 %v568
    %793 = vmatmul.mubr.bf16.gmra.mrb[0].mxu0 %v404
    %v794 = vpop.f32.mrb[0].mxu0
    %v795 = vadd.f32 0.0, %v794
    %v796 = vpop.f32.mrb[0].mxu0
    %v797 = vpop.f32.mrb[0].mxu0
    %v798 = vadd.f32 0.0, %v797
    %v799 = vpop.f32.mrb[0].mxu0
    %800 = vmatprep.mubr.bf16.mxu0 %v571
    %801 = vmatmul.mubr.bf16.gmra.mrb[0].mxu0 %v406
    %v802 = vpop.f32.mrb[0].mxu0
    %v803 = vadd.f32 0.0, %v802
    %v804 = vpop.f32.mrb[0].mxu0
    %v805 = vpop.f32.mrb[0].mxu0
    %v806 = vadd.f32 0.0, %v805
    %v807 = vpop.f32.mrb[0].mxu0
    %808 = vmatprep.mubr.bf16.mxu0 %v574
    %809 = vmatmul.mubr.bf16.gmra.mrb[0].mxu0 %v408
    %v810 = vpop.f32.mrb[0].mxu0
    %v811 = vadd.f32 0.0, %v810
    %v812 = vpop.f32.mrb[0].mxu0
    %v813 = vpop.f32.mrb[0].mxu0
    %v814 = vadd.f32 0.0, %v813
    %v815 = vpop.f32.mrb[0].mxu0
    %816 = vmatprep.mubr.bf16.mxu0 %v577
    %817 = vmatmul.mubr.bf16.gmra.mrb[0].mxu0 %v410
    %v818 = vpop.f32.mrb[0].mxu0
    %v819 = vadd.f32 0.0, %v818
    %v820 = vpop.f32.mrb[0].mxu0
    %v821 = vpop.f32.mrb[0].mxu0
    %v822 = vadd.f32 0.0, %v821
    %v823 = vpop.f32.mrb[0].mxu0
    %824 = vmatprep.mubr.bf16.mxu0 %v580
    %825 = vmatmul.mubr.bf16.gmra.mrb[0].mxu0 %v412
    %v826 = vpop.f32.mrb[0].mxu0
    %v827 = vadd.f32 0.0, %v826
    %v828 = vpop.f32.mrb[0].mxu0
    %v829 = vpop.f32.mrb[0].mxu0
    %v830 = vadd.f32 0.0, %v829
    %v831 = vpop.f32.mrb[0].mxu0
    %832 = vmatprep.mubr.bf16.mxu0 %v583
    %833 = vmatmul.mubr.bf16.gmra.mrb[0].mxu0 %v414
    %v834 = vpop.f32.mrb[0].mxu0
    %v835 = vadd.f32 0.0, %v834
    %v836 = vpop.f32.mrb[0].mxu0
    %v837 = vpop.f32.mrb[0].mxu0
    %v838 = vadd.f32 0.0, %v837
    %v839 = vpop.f32.mrb[0].mxu0
    %840 = vmatprep.mubr.bf16.mxu0 %v586
    %841 = vmatmul.mubr.bf16.gmra.mrb[0].mxu0 %v416
    %v842 = vpop.f32.mrb[0].mxu0
    %v843 = vadd.f32 0.0, %v842
    %v844 = vpop.f32.mrb[0].mxu0
    %v845 = vpop.f32.mrb[0].mxu0
    %v846 = vadd.f32 0.0, %v845
    %v847 = vpop.f32.mrb[0].mxu0
    %848 = vdwg.mxu0
    %v849 = vmax.f32 %v627, 0.0
    %v850 = vmax.f32 %v630, 0.0
    %v851 = vmax.f32 %v635, 0.0
    %v852 = vmax.f32 %v638, 0.0
    %v853 = vmax.f32 %v643, 0.0
    %v854 = vmax.f32 %v646, 0.0
    %v855 = vmax.f32 %v651, 0.0
    %v856 = vmax.f32 %v654, 0.0
    %v857 = vmax.f32 %v659, 0.0
    %v858 = vmax.f32 %v662, 0.0
    %v859 = vmax.f32 %v667, 0.0
    %v860 = vmax.f32 %v670, 0.0
    %v861 = vmax.f32 %v675, 0.0
    %v862 = vmax.f32 %v678, 0.0
    %v863 = vmax.f32 %v683, 0.0
    %v864 = vmax.f32 %v686, 0.0
    %v865 = vmax.f32 %v691, 0.0
    %v866 = vmax.f32 %v694, 0.0
    %v867 = vmax.f32 %v699, 0.0
    %v868 = vmax.f32 %v702, 0.0
    %v869 = vmax.f32 %v707, 0.0
    %v870 = vmax.f32 %v710, 0.0
    %v871 = vmax.f32 %v715, 0.0
    %v872 = vmax.f32 %v718, 0.0
    %v873 = vmax.f32 %v723, 0.0
    %v874 = vmax.f32 %v726, 0.0
    %v875 = vmax.f32 %v731, 0.0
    %v876 = vmax.f32 %v734, 0.0
    %v877 = vmax.f32 %v739, 0.0
    %v878 = vmax.f32 %v742, 0.0
    %v879 = vmax.f32 %v747, 0.0
    %v880 = vmax.f32 %v750, 0.0
    %v881 = vmax.f32 %v755, 0.0
    %v882 = vmax.f32 %v758, 0.0
    %v883 = vmax.f32 %v763, 0.0
    %v884 = vmax.f32 %v766, 0.0
    %v885 = vmax.f32 %v771, 0.0
    %v886 = vmax.f32 %v774, 0.0
    %v887 = vmax.f32 %v779, 0.0
    %v888 = vmax.f32 %v782, 0.0
    %v889 = vmax.f32 %v787, 0.0
    %v890 = vmax.f32 %v790, 0.0
    %v891 = vmax.f32 %v795, 0.0
    %v892 = vmax.f32 %v798, 0.0
    %v893 = vmax.f32 %v803, 0.0
    %v894 = vmax.f32 %v806, 0.0
    %v895 = vmax.f32 %v811, 0.0
    %v896 = vmax.f32 %v814, 0.0
    %v897 = vmax.f32 %v819, 0.0
    %v898 = vmax.f32 %v822, 0.0
    %v899 = vmax.f32 %v827, 0.0
    %v900 = vmax.f32 %v830, 0.0
    %v901 = vmax.f32 %v835, 0.0
    %v902 = vmax.f32 %v838, 0.0
    %v903 = vmax.f32 %v843, 0.0
    %v904 = vmax.f32 %v846, 0.0
    %v905 = vadd.f32 %v849, %v850
    %v906 = vadd.f32 %v905, %v851
    %v907 = vadd.f32 %v906, %v852
    %v908 = vadd.f32 %v907, %v853
    %v909 = vadd.f32 %v908, %v854
    %v910 = vadd.f32 %v909, %v855
    %v911 = vrot.slane %v910, 4
    %v912 = vadd.f32 %v910, %v911
    %v913 = vrot.slane %v912, 2
    %v914 = vadd.f32 %v912, %v913
    %v915 = vrot.slane %v914, 1
    %v916 = vadd.f32 %v914, %v915
    %v917 = vadd.f32 %v856, %v857
    %v918 = vadd.f32 %v917, %v858
    %v919 = vadd.f32 %v918, %v859
    %v920 = vadd.f32 %v919, %v860
    %v921 = vadd.f32 %v920, %v861
    %v922 = vadd.f32 %v921, %v862
    %v923 = vrot.slane %v922, 4
    %v924 = vadd.f32 %v922, %v923
    %v925 = vrot.slane %v924, 2
    %v926 = vadd.f32 %v924, %v925
    %v927 = vrot.slane %v926, 1
    %v928 = vadd.f32 %v926, %v927
    %v929 = vadd.f32 %v863, %v864
    %v930 = vadd.f32 %v929, %v865
    %v931 = vadd.f32 %v930, %v866
    %v932 = vadd.f32 %v931, %v867
    %v933 = vadd.f32 %v932, %v868
    %v934 = vadd.f32 %v933, %v869
    %v935 = vrot.slane %v934, 4
    %v936 = vadd.f32 %v934, %v935
    %v937 = vrot.slane %v936, 2
    %v938 = vadd.f32 %v936, %v937
    %v939 = vrot.slane %v938, 1
    %v940 = vadd.f32 %v938, %v939
    %v941 = vadd.f32 %v870, %v871
    %v942 = vadd.f32 %v941, %v872
    %v943 = vadd.f32 %v942, %v873
    %v944 = vadd.f32 %v943, %v874
    %v945 = vadd.f32 %v944, %v875
    %v946 = vadd.f32 %v945, %v876
    %v947 = vrot.slane %v946, 4
    %v948 = vadd.f32 %v946, %v947
    %v949 = vrot.slane %v948, 2
    %v950 = vadd.f32 %v948, %v949
    %v951 = vrot.slane %v950, 1
    %v952 = vadd.f32 %v950, %v951
    %v953 = vadd.f32 %v877, %v878
    %v954 = vadd.f32 %v953, %v879
    %v955 = vadd.f32 %v954, %v880
    %v956 = vadd.f32 %v955, %v881
    %v957 = vadd.f32 %v956, %v882
    %v958 = vadd.f32 %v957, %v883
    %v959 = vrot.slane %v958, 4
    %v960 = vadd.f32 %v958, %v959
    %v961 = vrot.slane %v960, 2
    %v962 = vadd.f32 %v960, %v961
    %v963 = vrot.slane %v962, 1
    %v964 = vadd.f32 %v962, %v963
    %v965 = vadd.f32 %v884, %v885
    %v966 = vadd.f32 %v965, %v886
    %v967 = vadd.f32 %v966, %v887
    %v968 = vadd.f32 %v967, %v888
    %v969 = vadd.f32 %v968, %v889
    %v970 = vadd.f32 %v969, %v890
    %v971 = vrot.slane %v970, 4
    %v972 = vadd.f32 %v970, %v971
    %v973 = vrot.slane %v972, 2
    %v974 = vadd.f32 %v972, %v973
    %v975 = vrot.slane %v974, 1
    %v976 = vadd.f32 %v974, %v975
    %v977 = vadd.f32 %v891, %v892
    %v978 = vadd.f32 %v977, %v893
    %v979 = vadd.f32 %v978, %v894
    %v980 = vadd.f32 %v979, %v895
    %v981 = vadd.f32 %v980, %v896
    %v982 = vadd.f32 %v981, %v897
    %v983 = vrot.slane %v982, 4
    %v984 = vadd.f32 %v982, %v983
    %v985 = vrot.slane %v984, 2
    %v986 = vadd.f32 %v984, %v985
    %v987 = vrot.slane %v986, 1
    %v988 = vadd.f32 %v986, %v987
    %v989 = vadd.f32 %v898, %v899
    %v990 = vadd.f32 %v989, %v900
    %v991 = vadd.f32 %v990, %v901
    %v992 = vadd.f32 %v991, %v902
    %v993 = vadd.f32 %v992, %v903
    %v994 = vadd.f32 %v993, %v904
    %v995 = vrot.slane %v994, 4
    %v996 = vadd.f32 %v994, %v995
    %v997 = vrot.slane %v996, 2
    %v998 = vadd.f32 %v996, %v997
    %v999 = vrot.slane %v998, 1
    %v1000 = vadd.f32 %v998, %v999
    %v1001 = vmul.f32 %v916, 0.020408163
    %v1002 = vmul.f32 %v928, 0.020408163
    %v1003 = vmul.f32 %v940, 0.020408163
    %v1004 = vmul.f32 %v952, 0.020408163
    %v1005 = vmul.f32 %v964, 0.020408163
    %v1006 = vmul.f32 %v976, 0.020408163
    %v1007 = vmul.f32 %v988, 0.020408163
    %v1008 = vmul.f32 %v1000, 0.020408163
    %v1009 = vpack.c.bf16 %v1001, %v1001
    %v1010 = vpack.c.bf16 %v1002, %v1002
    %v1011 = vpack.c.bf16 %v1003, %v1003
    %v1012 = vpack.c.bf16 %v1004, %v1004
    %v1013 = vpack.c.bf16 %v1005, %v1005
    %v1014 = vpack.c.bf16 %v1006, %v1006
    %v1015 = vpack.c.bf16 %v1007, %v1007
    %v1016 = vpack.c.bf16 %v1008, %v1008
    %v1017 = vld [vmem:[#allocation4] sm:$0xff]
    %v1018 = vld [vmem:[#allocation4 + $0x8] sm:$0xff]
    %v1019 = vld [vmem:[#allocation4 + $0x10] sm:$0xff]
    %v1020 = vld [vmem:[#allocation4 + $0x18] sm:$0xff]
    %v1021 = vld [vmem:[#allocation4 + $0x20] sm:$0xff]
    %v1022 = vld [vmem:[#allocation4 + $0x28] sm:$0xff]
    %v1023 = vld [vmem:[#allocation4 + $0x30] sm:$0xff]
    %v1024 = vld [vmem:[#allocation4 + $0x38] sm:$0xff]
    %v1025 = vld [vmem:[#allocation4 + $0x40] sm:$0xff]
    %v1026 = vld [vmem:[#allocation4 + $0x48] sm:$0xff]
    %v1027 = vld [vmem:[#allocation4 + $0x50] sm:$0xff]
    %v1028 = vld [vmem:[#allocation4 + $0x58] sm:$0xff]
    %v1029 = vld [vmem:[#allocation4 + $0x60] sm:$0xff]
    %v1030 = vld [vmem:[#allocation4 + $0x68] sm:$0xff]
    %v1031 = vld [vmem:[#allocation4 + $0x70] sm:$0xff]
    %v1032 = vld [vmem:[#allocation4 + $0x78] sm:$0xff]
    %v1033 = vld [vmem:[#allocation4 + $0x80] sm:$0xff]
    %v1034 = vld [vmem:[#allocation4 + $0x88] sm:$0xff]
    %v1035 = vld [vmem:[#allocation4 + $0x90] sm:$0xff]
    %v1036 = vld [vmem:[#allocation4 + $0x98] sm:$0xff]
    %v1037 = vld [vmem:[#allocation4 + $0xa0] sm:$0xff]
    %v1038 = vld [vmem:[#allocation4 + $0xa8] sm:$0xff]
    %v1039 = vld [vmem:[#allocation4 + $0xb0] sm:$0xff]
    %v1040 = vld [vmem:[#allocation4 + $0xb8] sm:$0xff]
    %v1041 = vld [vmem:[#allocation4 + $0xc0] sm:$0xff]
    %v1042 = vld [vmem:[#allocation4 + $0xc8] sm:$0xff]
    %v1043 = vld [vmem:[#allocation4 + $0xd0] sm:$0xff]
    %v1044 = vld [vmem:[#allocation4 + $0xd8] sm:$0xff]
    %v1045 = vld [vmem:[#allocation4 + $0xe0] sm:$0xff]
    %v1046 = vld [vmem:[#allocation4 + $0xe8] sm:$0xff]
    %v1047 = vld [vmem:[#allocation4 + $0xf0] sm:$0xff]
    %v1048 = vld [vmem:[#allocation4 + $0xf8] sm:$0xff]
    %v1049 = vld [vmem:[#allocation4 + $0x100] sm:$0xff]
    %v1050 = vld [vmem:[#allocation4 + $0x108] sm:$0xff]
    %v1051 = vld [vmem:[#allocation4 + $0x110] sm:$0xff]
    %v1052 = vld [vmem:[#allocation4 + $0x118] sm:$0xff]
    %v1053 = vld [vmem:[#allocation4 + $0x120] sm:$0xff]
    %v1054 = vld [vmem:[#allocation4 + $0x128] sm:$0xff]
    %v1055 = vld [vmem:[#allocation4 + $0x130] sm:$0xff]
    %v1056 = vld [vmem:[#allocation4 + $0x138] sm:$0xff]
    %v1057 = vld [vmem:[#allocation4 + $0x140] sm:$0xff]
    %v1058 = vld [vmem:[#allocation4 + $0x148] sm:$0xff]
    %v1059 = vld [vmem:[#allocation4 + $0x150] sm:$0xff]
    %v1060 = vld [vmem:[#allocation4 + $0x158] sm:$0xff]
    %v1061 = vld [vmem:[#allocation4 + $0x160] sm:$0xff]
    %v1062 = vld [vmem:[#allocation4 + $0x168] sm:$0xff]
    %v1063 = vld [vmem:[#allocation4 + $0x170] sm:$0xff]
    %v1064 = vld [vmem:[#allocation4 + $0x178] sm:$0xff]
    %v1065 = vld [vmem:[#allocation4 + $0x180] sm:$0xff]
    %v1066 = vld [vmem:[#allocation4 + $0x188] sm:$0xff]
    %v1067 = vld [vmem:[#allocation4 + $0x190] sm:$0xff]
    %v1068 = vld [vmem:[#allocation4 + $0x198] sm:$0xff]
    %v1069 = vld [vmem:[#allocation4 + $0x1a0] sm:$0xff]
    %v1070 = vld [vmem:[#allocation4 + $0x1a8] sm:$0xff]
    %v1071 = vld [vmem:[#allocation4 + $0x1b0] sm:$0xff]
    %v1072 = vld [vmem:[#allocation4 + $0x1b8] sm:$0xff]
    %v1073 = vld [vmem:[#allocation4 + $0x1c0] sm:$0xff]
    %v1074 = vld [vmem:[#allocation4 + $0x1c8] sm:$0xff]
    %v1075 = vld [vmem:[#allocation4 + $0x1d0] sm:$0xff]
    %v1076 = vld [vmem:[#allocation4 + $0x1d8] sm:$0xff]
    %v1077 = vld [vmem:[#allocation4 + $0x1e0] sm:$0xff]
    %v1078 = vld [vmem:[#allocation4 + $0x1e8] sm:$0xff]
    %v1079 = vld [vmem:[#allocation4 + $0x1f0] sm:$0xff]
    %v1080 = vld [vmem:[#allocation4 + $0x1f8] sm:$0xff]
    %v1081 = vld [vmem:[#allocation4 + $0x200] sm:$0xff]
    %v1082 = vld [vmem:[#allocation4 + $0x208] sm:$0xff]
    %v1083 = vld [vmem:[#allocation4 + $0x210] sm:$0xff]
    %v1084 = vld [vmem:[#allocation4 + $0x218] sm:$0xff]
    %v1085 = vld [vmem:[#allocation4 + $0x220] sm:$0xff]
    %v1086 = vld [vmem:[#allocation4 + $0x228] sm:$0xff]
    %v1087 = vld [vmem:[#allocation4 + $0x230] sm:$0xff]
    %v1088 = vld [vmem:[#allocation4 + $0x238] sm:$0xff]
    %v1089 = vld [vmem:[#allocation4 + $0x240] sm:$0xff]
    %v1090 = vld [vmem:[#allocation4 + $0x248] sm:$0xff]
    %v1091 = vld [vmem:[#allocation4 + $0x250] sm:$0xff]
    %v1092 = vld [vmem:[#allocation4 + $0x258] sm:$0xff]
    %v1093 = vld [vmem:[#allocation4 + $0x260] sm:$0xff]
    %v1094 = vld [vmem:[#allocation4 + $0x268] sm:$0xff]
    %v1095 = vld [vmem:[#allocation4 + $0x270] sm:$0xff]
    %v1096 = vld [vmem:[#allocation4 + $0x278] sm:$0xff]
    %v1097 = vld [vmem:[#allocation4 + $0x280] sm:$0xff]
    %v1098 = vld [vmem:[#allocation4 + $0x288] sm:$0xff]
    %v1099 = vld [vmem:[#allocation4 + $0x290] sm:$0xff]
    %v1100 = vld [vmem:[#allocation4 + $0x298] sm:$0xff]
    %v1101 = vld [vmem:[#allocation4 + $0x2a0] sm:$0xff]
    %v1102 = vld [vmem:[#allocation4 + $0x2a8] sm:$0xff]
    %v1103 = vld [vmem:[#allocation4 + $0x2b0] sm:$0xff]
    %v1104 = vld [vmem:[#allocation4 + $0x2b8] sm:$0xff]
    %v1105 = vld [vmem:[#allocation4 + $0x2c0] sm:$0xff]
    %v1106 = vld [vmem:[#allocation4 + $0x2c8] sm:$0xff]
    %v1107 = vld [vmem:[#allocation4 + $0x2d0] sm:$0xff]
    %v1108 = vld [vmem:[#allocation4 + $0x2d8] sm:$0xff]
    %v1109 = vld [vmem:[#allocation4 + $0x2e0] sm:$0xff]
    %v1110 = vld [vmem:[#allocation4 + $0x2e8] sm:$0xff]
    %v1111 = vld [vmem:[#allocation4 + $0x2f0] sm:$0xff]
    %v1112 = vld [vmem:[#allocation4 + $0x2f8] sm:$0xff]
    %v1113 = vld [vmem:[#allocation6] sm:$0xff]
    %v1114 = vld [vmem:[#allocation6 + $0x8] sm:$0xff]
    %v1115 = vld [vmem:[#allocation6 + $0x10] sm:$0xff]
    %v1116 = vld [vmem:[#allocation6 + $0x18] sm:$0xff]
    %v1117 = vld [vmem:[#allocation6 + $0x20] sm:$0xff]
    %v1118 = vld [vmem:[#allocation6 + $0x28] sm:$0xff]
    %v1125 = vlaneseq
    %v1126 = vshrl.u32 %v1125, 7
    %v1127 = vsub.s32 0, %v1126
    %v1128 = vrot.slane %v1113, %v1127
    %v1129 = vlaneseq
    %v1130 = vshrl.u32 %v1129, 7
    %v1131 = vsub.s32 1, %v1130
    %v1132 = vrot.slane %v1113, %v1131
    %v1133 = vlaneseq
    %v1134 = vshrl.u32 %v1133, 7
    %v1135 = vsub.s32 2, %v1134
    %v1136 = vrot.slane %v1113, %v1135
    %v1137 = vlaneseq
    %v1138 = vshrl.u32 %v1137, 7
    %v1139 = vsub.s32 3, %v1138
    %v1140 = vrot.slane %v1113, %v1139
    %v1141 = vlaneseq
    %v1142 = vshrl.u32 %v1141, 7
    %v1143 = vsub.s32 4, %v1142
    %v1144 = vrot.slane %v1113, %v1143
    %v1145 = vlaneseq
    %v1146 = vshrl.u32 %v1145, 7
    %v1147 = vsub.s32 5, %v1146
    %v1148 = vrot.slane %v1113, %v1147
    %v1149 = vlaneseq
    %v1150 = vshrl.u32 %v1149, 7
    %v1151 = vsub.s32 6, %v1150
    %v1152 = vrot.slane %v1113, %v1151
    %v1153 = vlaneseq
    %v1154 = vshrl.u32 %v1153, 7
    %v1155 = vsub.s32 7, %v1154
    %v1156 = vrot.slane %v1113, %v1155
    %v1157 = vlaneseq
    %v1158 = vshrl.u32 %v1157, 7
    %v1159 = vsub.s32 0, %v1158
    %v1160 = vrot.slane %v1114, %v1159
    %v1161 = vlaneseq
    %v1162 = vshrl.u32 %v1161, 7
    %v1163 = vsub.s32 1, %v1162
    %v1164 = vrot.slane %v1114, %v1163
    %v1165 = vlaneseq
    %v1166 = vshrl.u32 %v1165, 7
    %v1167 = vsub.s32 2, %v1166
    %v1168 = vrot.slane %v1114, %v1167
    %v1169 = vlaneseq
    %v1170 = vshrl.u32 %v1169, 7
    %v1171 = vsub.s32 3, %v1170
    %v1172 = vrot.slane %v1114, %v1171
    %v1173 = vlaneseq
    %v1174 = vshrl.u32 %v1173, 7
    %v1175 = vsub.s32 4, %v1174
    %v1176 = vrot.slane %v1114, %v1175
    %v1177 = vlaneseq
    %v1178 = vshrl.u32 %v1177, 7
    %v1179 = vsub.s32 5, %v1178
    %v1180 = vrot.slane %v1114, %v1179
    %v1181 = vlaneseq
    %v1182 = vshrl.u32 %v1181, 7
    %v1183 = vsub.s32 6, %v1182
    %v1184 = vrot.slane %v1114, %v1183
    %v1185 = vlaneseq
    %v1186 = vshrl.u32 %v1185, 7
    %v1187 = vsub.s32 7, %v1186
    %v1188 = vrot.slane %v1114, %v1187
    %v1189 = vlaneseq
    %v1190 = vshrl.u32 %v1189, 7
    %v1191 = vsub.s32 0, %v1190
    %v1192 = vrot.slane %v1115, %v1191
    %v1193 = vlaneseq
    %v1194 = vshrl.u32 %v1193, 7
    %v1195 = vsub.s32 1, %v1194
    %v1196 = vrot.slane %v1115, %v1195
    %v1197 = vlaneseq
    %v1198 = vshrl.u32 %v1197, 7
    %v1199 = vsub.s32 2, %v1198
    %v1200 = vrot.slane %v1115, %v1199
    %v1201 = vlaneseq
    %v1202 = vshrl.u32 %v1201, 7
    %v1203 = vsub.s32 3, %v1202
    %v1204 = vrot.slane %v1115, %v1203
    %v1205 = vlaneseq
    %v1206 = vshrl.u32 %v1205, 7
    %v1207 = vsub.s32 4, %v1206
    %v1208 = vrot.slane %v1115, %v1207
    %v1209 = vlaneseq
    %v1210 = vshrl.u32 %v1209, 7
    %v1211 = vsub.s32 5, %v1210
    %v1212 = vrot.slane %v1115, %v1211
    %v1213 = vlaneseq
    %v1214 = vshrl.u32 %v1213, 7
    %v1215 = vsub.s32 6, %v1214
    %v1216 = vrot.slane %v1115, %v1215
    %v1217 = vlaneseq
    %v1218 = vshrl.u32 %v1217, 7
    %v1219 = vsub.s32 7, %v1218
    %v1220 = vrot.slane %v1115, %v1219
    %v1221 = vlaneseq
    %v1222 = vshrl.u32 %v1221, 7
    %v1223 = vsub.s32 0, %v1222
    %v1224 = vrot.slane %v1116, %v1223
    %v1225 = vlaneseq
    %v1226 = vshrl.u32 %v1225, 7
    %v1227 = vsub.s32 1, %v1226
    %v1228 = vrot.slane %v1116, %v1227
    %v1229 = vlaneseq
    %v1230 = vshrl.u32 %v1229, 7
    %v1231 = vsub.s32 2, %v1230
    %v1232 = vrot.slane %v1116, %v1231
    %v1233 = vlaneseq
    %v1234 = vshrl.u32 %v1233, 7
    %v1235 = vsub.s32 3, %v1234
    %v1236 = vrot.slane %v1116, %v1235
    %v1237 = vlaneseq
    %v1238 = vshrl.u32 %v1237, 7
    %v1239 = vsub.s32 4, %v1238
    %v1240 = vrot.slane %v1116, %v1239
    %v1241 = vlaneseq
    %v1242 = vshrl.u32 %v1241, 7
    %v1243 = vsub.s32 5, %v1242
    %v1244 = vrot.slane %v1116, %v1243
    %v1245 = vlaneseq
    %v1246 = vshrl.u32 %v1245, 7
    %v1247 = vsub.s32 6, %v1246
    %v1248 = vrot.slane %v1116, %v1247
    %v1249 = vlaneseq
    %v1250 = vshrl.u32 %v1249, 7
    %v1251 = vsub.s32 7, %v1250
    %v1252 = vrot.slane %v1116, %v1251
    %v1253 = vlaneseq
    %v1254 = vshrl.u32 %v1253, 7
    %v1255 = vsub.s32 0, %v1254
    %v1256 = vrot.slane %v1117, %v1255
    %v1257 = vlaneseq
    %v1258 = vshrl.u32 %v1257, 7
    %v1259 = vsub.s32 1, %v1258
    %v1260 = vrot.slane %v1117, %v1259
    %v1261 = vlaneseq
    %v1262 = vshrl.u32 %v1261, 7
    %v1263 = vsub.s32 2, %v1262
    %v1264 = vrot.slane %v1117, %v1263
    %v1265 = vlaneseq
    %v1266 = vshrl.u32 %v1265, 7
    %v1267 = vsub.s32 3, %v1266
    %v1268 = vrot.slane %v1117, %v1267
    %v1269 = vlaneseq
    %v1270 = vshrl.u32 %v1269, 7
    %v1271 = vsub.s32 4, %v1270
    %v1272 = vrot.slane %v1117, %v1271
    %v1273 = vlaneseq
    %v1274 = vshrl.u32 %v1273, 7
    %v1275 = vsub.s32 5, %v1274
    %v1276 = vrot.slane %v1117, %v1275
    %v1277 = vlaneseq
    %v1278 = vshrl.u32 %v1277, 7
    %v1279 = vsub.s32 6, %v1278
    %v1280 = vrot.slane %v1117, %v1279
    %v1281 = vlaneseq
    %v1282 = vshrl.u32 %v1281, 7
    %v1283 = vsub.s32 7, %v1282
    %v1284 = vrot.slane %v1117, %v1283
    %v1285 = vlaneseq
    %v1286 = vshrl.u32 %v1285, 7
    %v1287 = vsub.s32 0, %v1286
    %v1288 = vrot.slane %v1118, %v1287
    %v1289 = vlaneseq
    %v1290 = vshrl.u32 %v1289, 7
    %v1291 = vsub.s32 1, %v1290
    %v1292 = vrot.slane %v1118, %v1291
    %v1293 = vlaneseq
    %v1294 = vshrl.u32 %v1293, 7
    %v1295 = vsub.s32 2, %v1294
    %v1296 = vrot.slane %v1118, %v1295
    %v1297 = vlaneseq
    %v1298 = vshrl.u32 %v1297, 7
    %v1299 = vsub.s32 3, %v1298
    %v1300 = vrot.slane %v1118, %v1299
    %v1301 = vlaneseq
    %v1302 = vshrl.u32 %v1301, 7
    %v1303 = vsub.s32 4, %v1302
    %v1304 = vrot.slane %v1118, %v1303
    %v1305 = vlaneseq
    %v1306 = vshrl.u32 %v1305, 7
    %v1307 = vsub.s32 5, %v1306
    %v1308 = vrot.slane %v1118, %v1307
    %v1309 = vlaneseq
    %v1310 = vshrl.u32 %v1309, 7
    %v1311 = vsub.s32 6, %v1310
    %v1312 = vrot.slane %v1118, %v1311
    %v1313 = vlaneseq
    %v1314 = vshrl.u32 %v1313, 7
    %v1315 = vsub.s32 7, %v1314
    %v1316 = vrot.slane %v1118, %v1315
    %v1373 = vunpack.c.l.b16 %v1009
    %v1374 = vunpack.c.l.b16 %v1010
    %v1375 = vunpack.c.l.b16 %v1011
    %v1376 = vunpack.c.l.b16 %v1012
    %v1377 = vunpack.c.l.b16 %v1013
    %v1378 = vunpack.c.l.b16 %v1014
    %v1379 = vunpack.c.l.b16 %v1015
    %v1380 = vunpack.c.l.b16 %v1016
    %vm1381 = vcmask 1041409
    %v1382 = vsel %vm1381, %v1374, %v1373
    %vm1383 = vcmask 1042434
    %v1384 = vsel %vm1383, %v1375, %v1382
    %vm1385 = vcmask 1043459
    %v1386 = vsel %vm1385, %v1376, %v1384
    %vm1387 = vcmask 1044484
    %v1388 = vsel %vm1387, %v1377, %v1386
    %vm1389 = vcmask 1045509
    %v1390 = vsel %vm1389, %v1378, %v1388
    %vm1391 = vcmask 1046534
    %v1392 = vsel %vm1391, %v1379, %v1390
    %vm1393 = vcmask 1047559
    %v1394 = vsel %vm1393, %v1380, %v1392
    %v1395 = vpack.c.b16 %v1394, %v1394
    %v1492 = vunpack.c.l.b16 %v1017
    %v1493 = vunpack.c.h.b16 %v1017
    %v1494 = vunpack.c.l.b16 %v1018
    %v1495 = vunpack.c.h.b16 %v1018
    %v1496 = vunpack.c.l.b16 %v1019
    %v1497 = vunpack.c.h.b16 %v1019
    %v1498 = vunpack.c.l.b16 %v1020
    %v1499 = vunpack.c.h.b16 %v1020
    %v1500 = vunpack.c.l.b16 %v1021
    %v1501 = vunpack.c.h.b16 %v1021
    %v1502 = vunpack.c.l.b16 %v1022
    %v1503 = vunpack.c.h.b16 %v1022
    %v1504 = vunpack.c.l.b16 %v1023
    %v1505 = vunpack.c.h.b16 %v1023
    %v1506 = vunpack.c.l.b16 %v1024
    %v1507 = vunpack.c.h.b16 %v1024
    %v1508 = vunpack.c.l.b16 %v1025
    %v1509 = vunpack.c.h.b16 %v1025
    %v1510 = vunpack.c.l.b16 %v1026
    %v1511 = vunpack.c.h.b16 %v1026
    %v1512 = vunpack.c.l.b16 %v1027
    %v1513 = vunpack.c.h.b16 %v1027
    %v1514 = vunpack.c.l.b16 %v1028
    %v1515 = vunpack.c.h.b16 %v1028
    %v1516 = vunpack.c.l.b16 %v1029
    %v1517 = vunpack.c.h.b16 %v1029
    %v1518 = vunpack.c.l.b16 %v1030
    %v1519 = vunpack.c.h.b16 %v1030
    %v1520 = vunpack.c.l.b16 %v1031
    %v1521 = vunpack.c.h.b16 %v1031
    %v1522 = vunpack.c.l.b16 %v1032
    %v1523 = vunpack.c.h.b16 %v1032
    %v1524 = vunpack.c.l.b16 %v1033
    %v1525 = vunpack.c.h.b16 %v1033
    %v1526 = vunpack.c.l.b16 %v1034
    %v1527 = vunpack.c.h.b16 %v1034
    %v1528 = vunpack.c.l.b16 %v1035
    %v1529 = vunpack.c.h.b16 %v1035
    %v1530 = vunpack.c.l.b16 %v1036
    %v1531 = vunpack.c.h.b16 %v1036
    %v1532 = vunpack.c.l.b16 %v1037
    %v1533 = vunpack.c.h.b16 %v1037
    %v1534 = vunpack.c.l.b16 %v1038
    %v1535 = vunpack.c.h.b16 %v1038
    %v1536 = vunpack.c.l.b16 %v1039
    %v1537 = vunpack.c.h.b16 %v1039
    %v1538 = vunpack.c.l.b16 %v1040
    %v1539 = vunpack.c.h.b16 %v1040
    %v1540 = vunpack.c.l.b16 %v1041
    %v1541 = vunpack.c.h.b16 %v1041
    %v1542 = vunpack.c.l.b16 %v1042
    %v1543 = vunpack.c.h.b16 %v1042
    %v1544 = vunpack.c.l.b16 %v1043
    %v1545 = vunpack.c.h.b16 %v1043
    %v1546 = vunpack.c.l.b16 %v1044
    %v1547 = vunpack.c.h.b16 %v1044
    %v1548 = vunpack.c.l.b16 %v1045
    %v1549 = vunpack.c.h.b16 %v1045
    %v1550 = vunpack.c.l.b16 %v1046
    %v1551 = vunpack.c.h.b16 %v1046
    %v1552 = vunpack.c.l.b16 %v1047
    %v1553 = vunpack.c.h.b16 %v1047
    %v1554 = vunpack.c.l.b16 %v1048
    %v1555 = vunpack.c.h.b16 %v1048
    %v1556 = vunpack.c.l.b16 %v1049
    %v1557 = vunpack.c.h.b16 %v1049
    %v1558 = vunpack.c.l.b16 %v1050
    %v1559 = vunpack.c.h.b16 %v1050
    %v1560 = vunpack.c.l.b16 %v1051
    %v1561 = vunpack.c.h.b16 %v1051
    %v1562 = vunpack.c.l.b16 %v1052
    %v1563 = vunpack.c.h.b16 %v1052
    %v1564 = vunpack.c.l.b16 %v1053
    %v1565 = vunpack.c.h.b16 %v1053
    %v1566 = vunpack.c.l.b16 %v1054
    %v1567 = vunpack.c.h.b16 %v1054
    %v1568 = vunpack.c.l.b16 %v1055
    %v1569 = vunpack.c.h.b16 %v1055
    %v1570 = vunpack.c.l.b16 %v1056
    %v1571 = vunpack.c.h.b16 %v1056
    %v1572 = vunpack.c.l.b16 %v1057
    %v1573 = vunpack.c.h.b16 %v1057
    %v1574 = vunpack.c.l.b16 %v1058
    %v1575 = vunpack.c.h.b16 %v1058
    %v1576 = vunpack.c.l.b16 %v1059
    %v1577 = vunpack.c.h.b16 %v1059
    %v1578 = vunpack.c.l.b16 %v1060
    %v1579 = vunpack.c.h.b16 %v1060
    %v1580 = vunpack.c.l.b16 %v1061
    %v1581 = vunpack.c.h.b16 %v1061
    %v1582 = vunpack.c.l.b16 %v1062
    %v1583 = vunpack.c.h.b16 %v1062
    %v1584 = vunpack.c.l.b16 %v1063
    %v1585 = vunpack.c.h.b16 %v1063
    %v1586 = vunpack.c.l.b16 %v1064
    %v1587 = vunpack.c.h.b16 %v1064
    %v1588 = vunpack.c.l.b16 %v1065
    %v1589 = vunpack.c.h.b16 %v1065
    %v1590 = vunpack.c.l.b16 %v1066
    %v1591 = vunpack.c.h.b16 %v1066
    %v1592 = vunpack.c.l.b16 %v1067
    %v1593 = vunpack.c.h.b16 %v1067
    %v1594 = vunpack.c.l.b16 %v1068
    %v1595 = vunpack.c.h.b16 %v1068
    %v1596 = vunpack.c.l.b16 %v1069
    %v1597 = vunpack.c.h.b16 %v1069
    %v1598 = vunpack.c.l.b16 %v1070
    %v1599 = vunpack.c.h.b16 %v1070
    %v1600 = vunpack.c.l.b16 %v1071
    %v1601 = vunpack.c.h.b16 %v1071
    %v1602 = vunpack.c.l.b16 %v1072
    %v1603 = vunpack.c.h.b16 %v1072
    %v1604 = vunpack.c.l.b16 %v1073
    %v1605 = vunpack.c.h.b16 %v1073
    %v1606 = vunpack.c.l.b16 %v1074
    %v1607 = vunpack.c.h.b16 %v1074
    %v1608 = vunpack.c.l.b16 %v1075
    %v1609 = vunpack.c.h.b16 %v1075
    %v1610 = vunpack.c.l.b16 %v1076
    %v1611 = vunpack.c.h.b16 %v1076
    %v1612 = vunpack.c.l.b16 %v1077
    %v1613 = vunpack.c.h.b16 %v1077
    %v1614 = vunpack.c.l.b16 %v1078
    %v1615 = vunpack.c.h.b16 %v1078
    %v1616 = vunpack.c.l.b16 %v1079
    %v1617 = vunpack.c.h.b16 %v1079
    %v1618 = vunpack.c.l.b16 %v1080
    %v1619 = vunpack.c.h.b16 %v1080
    %v1620 = vunpack.c.l.b16 %v1081
    %v1621 = vunpack.c.h.b16 %v1081
    %v1622 = vunpack.c.l.b16 %v1082
    %v1623 = vunpack.c.h.b16 %v1082
    %v1624 = vunpack.c.l.b16 %v1083
    %v1625 = vunpack.c.h.b16 %v1083
    %v1626 = vunpack.c.l.b16 %v1084
    %v1627 = vunpack.c.h.b16 %v1084
    %v1628 = vunpack.c.l.b16 %v1085
    %v1629 = vunpack.c.h.b16 %v1085
    %v1630 = vunpack.c.l.b16 %v1086
    %v1631 = vunpack.c.h.b16 %v1086
    %v1632 = vunpack.c.l.b16 %v1087
    %v1633 = vunpack.c.h.b16 %v1087
    %v1634 = vunpack.c.l.b16 %v1088
    %v1635 = vunpack.c.h.b16 %v1088
    %v1636 = vunpack.c.l.b16 %v1089
    %v1637 = vunpack.c.h.b16 %v1089
    %v1638 = vunpack.c.l.b16 %v1090
    %v1639 = vunpack.c.h.b16 %v1090
    %v1640 = vunpack.c.l.b16 %v1091
    %v1641 = vunpack.c.h.b16 %v1091
    %v1642 = vunpack.c.l.b16 %v1092
    %v1643 = vunpack.c.h.b16 %v1092
    %v1644 = vunpack.c.l.b16 %v1093
    %v1645 = vunpack.c.h.b16 %v1093
    %v1646 = vunpack.c.l.b16 %v1094
    %v1647 = vunpack.c.h.b16 %v1094
    %v1648 = vunpack.c.l.b16 %v1095
    %v1649 = vunpack.c.h.b16 %v1095
    %v1650 = vunpack.c.l.b16 %v1096
    %v1651 = vunpack.c.h.b16 %v1096
    %v1652 = vunpack.c.l.b16 %v1097
    %v1653 = vunpack.c.h.b16 %v1097
    %v1654 = vunpack.c.l.b16 %v1098
    %v1655 = vunpack.c.h.b16 %v1098
    %v1656 = vunpack.c.l.b16 %v1099
    %v1657 = vunpack.c.h.b16 %v1099
    %v1658 = vunpack.c.l.b16 %v1100
    %v1659 = vunpack.c.h.b16 %v1100
    %v1660 = vunpack.c.l.b16 %v1101
    %v1661 = vunpack.c.h.b16 %v1101
    %v1662 = vunpack.c.l.b16 %v1102
    %v1663 = vunpack.c.h.b16 %v1102
    %v1664 = vunpack.c.l.b16 %v1103
    %v1665 = vunpack.c.h.b16 %v1103
    %v1666 = vunpack.c.l.b16 %v1104
    %v1667 = vunpack.c.h.b16 %v1104
    %v1668 = vunpack.c.l.b16 %v1105
    %v1669 = vunpack.c.h.b16 %v1105
    %v1670 = vunpack.c.l.b16 %v1106
    %v1671 = vunpack.c.h.b16 %v1106
    %v1672 = vunpack.c.l.b16 %v1107
    %v1673 = vunpack.c.h.b16 %v1107
    %v1674 = vunpack.c.l.b16 %v1108
    %v1675 = vunpack.c.h.b16 %v1108
    %v1676 = vunpack.c.l.b16 %v1109
    %v1677 = vunpack.c.h.b16 %v1109
    %v1678 = vunpack.c.l.b16 %v1110
    %v1679 = vunpack.c.h.b16 %v1110
    %v1680 = vunpack.c.l.b16 %v1111
    %v1681 = vunpack.c.h.b16 %v1111
    %v1682 = vunpack.c.l.b16 %v1112
    %v1683 = vunpack.c.h.b16 %v1112
    %v1684 = vpack.c.b16 %v1540, %v1492
    %v1685 = vpack.c.b16 %v1541, %v1493
    %v1686 = vpack.c.b16 %v1542, %v1494
    %v1687 = vpack.c.b16 %v1543, %v1495
    %v1688 = vpack.c.b16 %v1544, %v1496
    %v1689 = vpack.c.b16 %v1545, %v1497
    %v1690 = vpack.c.b16 %v1546, %v1498
    %v1691 = vpack.c.b16 %v1547, %v1499
    %v1692 = vpack.c.b16 %v1548, %v1500
    %v1693 = vpack.c.b16 %v1549, %v1501
    %v1694 = vpack.c.b16 %v1550, %v1502
    %v1695 = vpack.c.b16 %v1551, %v1503
    %v1696 = vpack.c.b16 %v1552, %v1504
    %v1697 = vpack.c.b16 %v1553, %v1505
    %v1698 = vpack.c.b16 %v1554, %v1506
    %v1699 = vpack.c.b16 %v1555, %v1507
    %v1700 = vpack.c.b16 %v1556, %v1508
    %v1701 = vpack.c.b16 %v1557, %v1509
    %v1702 = vpack.c.b16 %v1558, %v1510
    %v1703 = vpack.c.b16 %v1559, %v1511
    %v1704 = vpack.c.b16 %v1560, %v1512
    %v1705 = vpack.c.b16 %v1561, %v1513
    %v1706 = vpack.c.b16 %v1562, %v1514
    %v1707 = vpack.c.b16 %v1563, %v1515
    %v1708 = vpack.c.b16 %v1564, %v1516
    %v1709 = vpack.c.b16 %v1565, %v1517
    %v1710 = vpack.c.b16 %v1566, %v1518
    %v1711 = vpack.c.b16 %v1567, %v1519
    %v1712 = vpack.c.b16 %v1568, %v1520
    %v1713 = vpack.c.b16 %v1569, %v1521
    %v1714 = vpack.c.b16 %v1570, %v1522
    %v1715 = vpack.c.b16 %v1571, %v1523
    %v1716 = vpack.c.b16 %v1572, %v1524
    %v1717 = vpack.c.b16 %v1573, %v1525
    %v1718 = vpack.c.b16 %v1574, %v1526
    %v1719 = vpack.c.b16 %v1575, %v1527
    %v1720 = vpack.c.b16 %v1576, %v1528
    %v1721 = vpack.c.b16 %v1577, %v1529
    %v1722 = vpack.c.b16 %v1578, %v1530
    %v1723 = vpack.c.b16 %v1579, %v1531
    %v1724 = vpack.c.b16 %v1580, %v1532
    %v1725 = vpack.c.b16 %v1581, %v1533
    %v1726 = vpack.c.b16 %v1582, %v1534
    %v1727 = vpack.c.b16 %v1583, %v1535
    %v1728 = vpack.c.b16 %v1584, %v1536
    %v1729 = vpack.c.b16 %v1585, %v1537
    %v1730 = vpack.c.b16 %v1586, %v1538
    %v1731 = vpack.c.b16 %v1587, %v1539
    %v1732 = vpack.c.b16 %v1636, %v1588
    %v1733 = vpack.c.b16 %v1637, %v1589
    %v1734 = vpack.c.b16 %v1638, %v1590
    %v1735 = vpack.c.b16 %v1639, %v1591
    %v1736 = vpack.c.b16 %v1640, %v1592
    %v1737 = vpack.c.b16 %v1641, %v1593
    %v1738 = vpack.c.b16 %v1642, %v1594
    %v1739 = vpack.c.b16 %v1643, %v1595
    %v1740 = vpack.c.b16 %v1644, %v1596
    %v1741 = vpack.c.b16 %v1645, %v1597
    %v1742 = vpack.c.b16 %v1646, %v1598
    %v1743 = vpack.c.b16 %v1647, %v1599
    %v1744 = vpack.c.b16 %v1648, %v1600
    %v1745 = vpack.c.b16 %v1649, %v1601
    %v1746 = vpack.c.b16 %v1650, %v1602
    %v1747 = vpack.c.b16 %v1651, %v1603
    %v1748 = vpack.c.b16 %v1652, %v1604
    %v1749 = vpack.c.b16 %v1653, %v1605
    %v1750 = vpack.c.b16 %v1654, %v1606
    %v1751 = vpack.c.b16 %v1655, %v1607
    %v1752 = vpack.c.b16 %v1656, %v1608
    %v1753 = vpack.c.b16 %v1657, %v1609
    %v1754 = vpack.c.b16 %v1658, %v1610
    %v1755 = vpack.c.b16 %v1659, %v1611
    %v1756 = vpack.c.b16 %v1660, %v1612
    %v1757 = vpack.c.b16 %v1661, %v1613
    %v1758 = vpack.c.b16 %v1662, %v1614
    %v1759 = vpack.c.b16 %v1663, %v1615
    %v1760 = vpack.c.b16 %v1664, %v1616
    %v1761 = vpack.c.b16 %v1665, %v1617
    %v1762 = vpack.c.b16 %v1666, %v1618
    %v1763 = vpack.c.b16 %v1667, %v1619
    %v1764 = vpack.c.b16 %v1668, %v1620
    %v1765 = vpack.c.b16 %v1669, %v1621
    %v1766 = vpack.c.b16 %v1670, %v1622
    %v1767 = vpack.c.b16 %v1671, %v1623
    %v1768 = vpack.c.b16 %v1672, %v1624
    %v1769 = vpack.c.b16 %v1673, %v1625
    %v1770 = vpack.c.b16 %v1674, %v1626
    %v1771 = vpack.c.b16 %v1675, %v1627
    %v1772 = vpack.c.b16 %v1676, %v1628
    %v1773 = vpack.c.b16 %v1677, %v1629
    %v1774 = vpack.c.b16 %v1678, %v1630
    %v1775 = vpack.c.b16 %v1679, %v1631
    %v1776 = vpack.c.b16 %v1680, %v1632
    %v1777 = vpack.c.b16 %v1681, %v1633
    %v1778 = vpack.c.b16 %v1682, %v1634
    %v1779 = vpack.c.b16 %v1683, %v1635
    %vm1876 = vcmask 261120
    %v1878 = vsel %vm1876, %v1395, 0
    %1880 = vmatprep.subr.bf16.mxu0 %v1685
    %1881 = vmatpush1.bf16.msra.mxu0 %v1684
    %1882 = vmatprep.subr.bf16.mxu0 %v1733
    %1883 = vmatpush1.bf16.msra.mxu0 %v1732
    %1884 = vmatprep.subr.bf16.mxu0 0
    %1885 = vmatpush1.bf16.msra.mxu0 0
    %1886 = vmatprep.subr.bf16.mxu0 0
    %1887 = vmatpush1.bf16.msra.mxu0 0
    %1888 = vmatprep.subr.bf16.mxu0 0
    %1889 = vmatpush1.bf16.msra.mxu0 0
    %1890 = vmatprep.subr.bf16.mxu0 0
    %1891 = vmatpush1.bf16.msra.mxu0 0
    %1892 = vmatprep.subr.bf16.mxu0 0
    %1893 = vmatpush1.bf16.msra.mxu0 0
    %1894 = vmatprep.subr.bf16.mxu0 0
    %1895 = vmatpush1.bf16.msra.mxu0 0
    %1896 = vmatprep.subr.bf16.mxu0 0
    %1897 = vmatpush1.bf16.msra.mxu0 0
    %1898 = vmatprep.subr.bf16.mxu0 0
    %1899 = vmatpush1.bf16.msra.mxu0 0
    %1900 = vmatprep.subr.bf16.mxu0 0
    %1901 = vmatpush1.bf16.msra.mxu0 0
    %1902 = vmatprep.subr.bf16.mxu0 0
    %1903 = vmatpush1.bf16.msra.mxu0 0
    %1904 = vmatprep.subr.bf16.mxu0 0
    %1905 = vmatpush1.bf16.msra.mxu0 0
    %1906 = vmatprep.subr.bf16.mxu0 0
    %1907 = vmatpush1.bf16.msra.mxu0 0
    %1908 = vmatprep.subr.bf16.mxu0 0
    %1909 = vmatpush1.bf16.msra.mxu0 0
    %1910 = vmatprep.subr.bf16.mxu0 0
    %1911 = vmatpush1.bf16.msra.mxu0 0
    %1912 = vmatprep.mubr.bf16.mxu0 0
    %1913 = vmatmul.mubr.bf16.gmra.mrb[0].mxu0 %v1878
    %v1914 = vpop.f32.mrb[0].mxu0
    %v1915 = vadd.f32 %v1128, %v1914
    %v1916 = vpop.f32.mrb[0].mxu0
    %v1917 = vadd.f32 %v1132, %v1916
    %v1918 = vpop.f32.mrb[0].mxu0
    %v1919 = vpop.f32.mrb[0].mxu0
    %1920 = vdwg.mxu0
    %1921 = vmatprep.subr.bf16.mxu0 %v1687
    %1922 = vmatpush1.bf16.msra.mxu0 %v1686
    %1923 = vmatprep.subr.bf16.mxu0 %v1735
    %1924 = vmatpush1.bf16.msra.mxu0 %v1734
    %1925 = vmatprep.subr.bf16.mxu0 0
    %1926 = vmatpush1.bf16.msra.mxu0 0
    %1927 = vmatprep.subr.bf16.mxu0 0
    %1928 = vmatpush1.bf16.msra.mxu0 0
    %1929 = vmatprep.subr.bf16.mxu0 0
    %1930 = vmatpush1.bf16.msra.mxu0 0
    %1931 = vmatprep.subr.bf16.mxu0 0
    %1932 = vmatpush1.bf16.msra.mxu0 0
    %1933 = vmatprep.subr.bf16.mxu0 0
    %1934 = vmatpush1.bf16.msra.mxu0 0
    %1935 = vmatprep.subr.bf16.mxu0 0
    %1936 = vmatpush1.bf16.msra.mxu0 0
    %1937 = vmatprep.subr.bf16.mxu0 0
    %1938 = vmatpush1.bf16.msra.mxu0 0
    %1939 = vmatprep.subr.bf16.mxu0 0
    %1940 = vmatpush1.bf16.msra.mxu0 0
    %1941 = vmatprep.subr.bf16.mxu0 0
    %1942 = vmatpush1.bf16.msra.mxu0 0
    %1943 = vmatprep.subr.bf16.mxu0 0
    %1944 = vmatpush1.bf16.msra.mxu0 0
    %1945 = vmatprep.subr.bf16.mxu0 0
    %1946 = vmatpush1.bf16.msra.mxu0 0
    %1947 = vmatprep.subr.bf16.mxu0 0
    %1948 = vmatpush1.bf16.msra.mxu0 0
    %1949 = vmatprep.subr.bf16.mxu0 0
    %1950 = vmatpush1.bf16.msra.mxu0 0
    %1951 = vmatprep.subr.bf16.mxu0 0
    %1952 = vmatpush1.bf16.msra.mxu0 0
    %1953 = vmatprep.mubr.bf16.mxu0 0
    %1954 = vmatmul.mubr.bf16.gmra.mrb[0].mxu0 %v1878
    %v1955 = vpop.f32.mrb[0].mxu0
    %v1956 = vadd.f32 %v1136, %v1955
    %v1957 = vpop.f32.mrb[0].mxu0
    %v1958 = vadd.f32 %v1140, %v1957
    %v1959 = vpop.f32.mrb[0].mxu0
    %v1960 = vpop.f32.mrb[0].mxu0
    %1961 = vdwg.mxu0
    %1962 = vmatprep.subr.bf16.mxu0 %v1689
    %1963 = vmatpush1.bf16.msra.mxu0 %v1688
    %1964 = vmatprep.subr.bf16.mxu0 %v1737
    %1965 = vmatpush1.bf16.msra.mxu0 %v1736
    %1966 = vmatprep.subr.bf16.mxu0 0
    %1967 = vmatpush1.bf16.msra.mxu0 0
    %1968 = vmatprep.subr.bf16.mxu0 0
    %1969 = vmatpush1.bf16.msra.mxu0 0
    %1970 = vmatprep.subr.bf16.mxu0 0
    %1971 = vmatpush1.bf16.msra.mxu0 0
    %1972 = vmatprep.subr.bf16.mxu0 0
    %1973 = vmatpush1.bf16.msra.mxu0 0
    %1974 = vmatprep.subr.bf16.mxu0 0
    %1975 = vmatpush1.bf16.msra.mxu0 0
    %1976 = vmatprep.subr.bf16.mxu0 0
    %1977 = vmatpush1.bf16.msra.mxu0 0
    %1978 = vmatprep.subr.bf16.mxu0 0
    %1979 = vmatpush1.bf16.msra.mxu0 0
    %1980 = vmatprep.subr.bf16.mxu0 0
    %1981 = vmatpush1.bf16.msra.mxu0 0
    %1982 = vmatprep.subr.bf16.mxu0 0
    %1983 = vmatpush1.bf16.msra.mxu0 0
    %1984 = vmatprep.subr.bf16.mxu0 0
    %1985 = vmatpush1.bf16.msra.mxu0 0
    %1986 = vmatprep.subr.bf16.mxu0 0
    %1987 = vmatpush1.bf16.msra.mxu0 0
    %1988 = vmatprep.subr.bf16.mxu0 0
    %1989 = vmatpush1.bf16.msra.mxu0 0
    %1990 = vmatprep.subr.bf16.mxu0 0
    %1991 = vmatpush1.bf16.msra.mxu0 0
    %1992 = vmatprep.subr.bf16.mxu0 0
    %1993 = vmatpush1.bf16.msra.mxu0 0
    %1994 = vmatprep.mubr.bf16.mxu0 0
    %1995 = vmatmul.mubr.bf16.gmra.mrb[0].mxu0 %v1878
    %v1996 = vpop.f32.mrb[0].mxu0
    %v1997 = vadd.f32 %v1144, %v1996
    %v1998 = vpop.f32.mrb[0].mxu0
    %v1999 = vadd.f32 %v1148, %v1998
    %v2000 = vpop.f32.mrb[0].mxu0
    %v2001 = vpop.f32.mrb[0].mxu0
    %2002 = vdwg.mxu0
    %2003 = vmatprep.subr.bf16.mxu0 %v1691
    %2004 = vmatpush1.bf16.msra.mxu0 %v1690
    %2005 = vmatprep.subr.bf16.mxu0 %v1739
    %2006 = vmatpush1.bf16.msra.mxu0 %v1738
    %2007 = vmatprep.subr.bf16.mxu0 0
    %2008 = vmatpush1.bf16.msra.mxu0 0
    %2009 = vmatprep.subr.bf16.mxu0 0
    %2010 = vmatpush1.bf16.msra.mxu0 0
    %2011 = vmatprep.subr.bf16.mxu0 0
    %2012 = vmatpush1.bf16.msra.mxu0 0
    %2013 = vmatprep.subr.bf16.mxu0 0
    %2014 = vmatpush1.bf16.msra.mxu0 0
    %2015 = vmatprep.subr.bf16.mxu0 0
    %2016 = vmatpush1.bf16.msra.mxu0 0
    %2017 = vmatprep.subr.bf16.mxu0 0
    %2018 = vmatpush1.bf16.msra.mxu0 0
    %2019 = vmatprep.subr.bf16.mxu0 0
    %2020 = vmatpush1.bf16.msra.mxu0 0
    %2021 = vmatprep.subr.bf16.mxu0 0
    %2022 = vmatpush1.bf16.msra.mxu0 0
    %2023 = vmatprep.subr.bf16.mxu0 0
    %2024 = vmatpush1.bf16.msra.mxu0 0
    %2025 = vmatprep.subr.bf16.mxu0 0
    %2026 = vmatpush1.bf16.msra.mxu0 0
    %2027 = vmatprep.subr.bf16.mxu0 0
    %2028 = vmatpush1.bf16.msra.mxu0 0
    %2029 = vmatprep.subr.bf16.mxu0 0
    %2030 = vmatpush1.bf16.msra.mxu0 0
    %2031 = vmatprep.subr.bf16.mxu0 0
    %2032 = vmatpush1.bf16.msra.mxu0 0
    %2033 = vmatprep.subr.bf16.mxu0 0
    %2034 = vmatpush1.bf16.msra.mxu0 0
    %2035 = vmatprep.mubr.bf16.mxu0 0
    %2036 = vmatmul.mubr.bf16.gmra.mrb[0].mxu0 %v1878
    %v2037 = vpop.f32.mrb[0].mxu0
    %v2038 = vadd.f32 %v1152, %v2037
    %v2039 = vpop.f32.mrb[0].mxu0
    %v2040 = vadd.f32 %v1156, %v2039
    %v2041 = vpop.f32.mrb[0].mxu0
    %v2042 = vpop.f32.mrb[0].mxu0
    %2043 = vdwg.mxu0
    %2044 = vmatprep.subr.bf16.mxu0 %v1693
    %2045 = vmatpush1.bf16.msra.mxu0 %v1692
    %2046 = vmatprep.subr.bf16.mxu0 %v1741
    %2047 = vmatpush1.bf16.msra.mxu0 %v1740
    %2048 = vmatprep.subr.bf16.mxu0 0
    %2049 = vmatpush1.bf16.msra.mxu0 0
    %2050 = vmatprep.subr.bf16.mxu0 0
    %2051 = vmatpush1.bf16.msra.mxu0 0
    %2052 = vmatprep.subr.bf16.mxu0 0
    %2053 = vmatpush1.bf16.msra.mxu0 0
    %2054 = vmatprep.subr.bf16.mxu0 0
    %2055 = vmatpush1.bf16.msra.mxu0 0
    %2056 = vmatprep.subr.bf16.mxu0 0
    %2057 = vmatpush1.bf16.msra.mxu0 0
    %2058 = vmatprep.subr.bf16.mxu0 0
    %2059 = vmatpush1.bf16.msra.mxu0 0
    %2060 = vmatprep.subr.bf16.mxu0 0
    %2061 = vmatpush1.bf16.msra.mxu0 0
    %2062 = vmatprep.subr.bf16.mxu0 0
    %2063 = vmatpush1.bf16.msra.mxu0 0
    %2064 = vmatprep.subr.bf16.mxu0 0
    %2065 = vmatpush1.bf16.msra.mxu0 0
    %2066 = vmatprep.subr.bf16.mxu0 0
    %2067 = vmatpush1.bf16.msra.mxu0 0
    %2068 = vmatprep.subr.bf16.mxu0 0
    %2069 = vmatpush1.bf16.msra.mxu0 0
    %2070 = vmatprep.subr.bf16.mxu0 0
    %2071 = vmatpush1.bf16.msra.mxu0 0
    %2072 = vmatprep.subr.bf16.mxu0 0
    %2073 = vmatpush1.bf16.msra.mxu0 0
    %2074 = vmatprep.subr.bf16.mxu0 0
    %2075 = vmatpush1.bf16.msra.mxu0 0
    %2076 = vmatprep.mubr.bf16.mxu0 0
    %2077 = vmatmul.mubr.bf16.gmra.mrb[0].mxu0 %v1878
    %v2078 = vpop.f32.mrb[0].mxu0
    %v2079 = vadd.f32 %v1160, %v2078
    %v2080 = vpop.f32.mrb[0].mxu0
    %v2081 = vadd.f32 %v1164, %v2080
    %v2082 = vpop.f32.mrb[0].mxu0
    %v2083 = vpop.f32.mrb[0].mxu0
    %2084 = vdwg.mxu0
    %2085 = vmatprep.subr.bf16.mxu0 %v1695
    %2086 = vmatpush1.bf16.msra.mxu0 %v1694
    %2087 = vmatprep.subr.bf16.mxu0 %v1743
    %2088 = vmatpush1.bf16.msra.mxu0 %v1742
    %2089 = vmatprep.subr.bf16.mxu0 0
    %2090 = vmatpush1.bf16.msra.mxu0 0
    %2091 = vmatprep.subr.bf16.mxu0 0
    %2092 = vmatpush1.bf16.msra.mxu0 0
    %2093 = vmatprep.subr.bf16.mxu0 0
    %2094 = vmatpush1.bf16.msra.mxu0 0
    %2095 = vmatprep.subr.bf16.mxu0 0
    %2096 = vmatpush1.bf16.msra.mxu0 0
    %2097 = vmatprep.subr.bf16.mxu0 0
    %2098 = vmatpush1.bf16.msra.mxu0 0
    %2099 = vmatprep.subr.bf16.mxu0 0
    %2100 = vmatpush1.bf16.msra.mxu0 0
    %2101 = vmatprep.subr.bf16.mxu0 0
    %2102 = vmatpush1.bf16.msra.mxu0 0
    %2103 = vmatprep.subr.bf16.mxu0 0
    %2104 = vmatpush1.bf16.msra.mxu0 0
    %2105 = vmatprep.subr.bf16.mxu0 0
    %2106 = vmatpush1.bf16.msra.mxu0 0
    %2107 = vmatprep.subr.bf16.mxu0 0
    %2108 = vmatpush1.bf16.msra.mxu0 0
    %2109 = vmatprep.subr.bf16.mxu0 0
    %2110 = vmatpush1.bf16.msra.mxu0 0
    %2111 = vmatprep.subr.bf16.mxu0 0
    %2112 = vmatpush1.bf16.msra.mxu0 0
    %2113 = vmatprep.subr.bf16.mxu0 0
    %2114 = vmatpush1.bf16.msra.mxu0 0
    %2115 = vmatprep.subr.bf16.mxu0 0
    %2116 = vmatpush1.bf16.msra.mxu0 0
    %2117 = vmatprep.mubr.bf16.mxu0 0
    %2118 = vmatmul.mubr.bf16.gmra.mrb[0].mxu0 %v1878
    %v2119 = vpop.f32.mrb[0].mxu0
    %v2120 = vadd.f32 %v1168, %v2119
    %v2121 = vpop.f32.mrb[0].mxu0
    %v2122 = vadd.f32 %v1172, %v2121
    %v2123 = vpop.f32.mrb[0].mxu0
    %v2124 = vpop.f32.mrb[0].mxu0
    %2125 = vdwg.mxu0
    %2126 = vmatprep.subr.bf16.mxu0 %v1697
    %2127 = vmatpush1.bf16.msra.mxu0 %v1696
    %2128 = vmatprep.subr.bf16.mxu0 %v1745
    %2129 = vmatpush1.bf16.msra.mxu0 %v1744
    %2130 = vmatprep.subr.bf16.mxu0 0
    %2131 = vmatpush1.bf16.msra.mxu0 0
    %2132 = vmatprep.subr.bf16.mxu0 0
    %2133 = vmatpush1.bf16.msra.mxu0 0
    %2134 = vmatprep.subr.bf16.mxu0 0
    %2135 = vmatpush1.bf16.msra.mxu0 0
    %2136 = vmatprep.subr.bf16.mxu0 0
    %2137 = vmatpush1.bf16.msra.mxu0 0
    %2138 = vmatprep.subr.bf16.mxu0 0
    %2139 = vmatpush1.bf16.msra.mxu0 0
    %2140 = vmatprep.subr.bf16.mxu0 0
    %2141 = vmatpush1.bf16.msra.mxu0 0
    %2142 = vmatprep.subr.bf16.mxu0 0
    %2143 = vmatpush1.bf16.msra.mxu0 0
    %2144 = vmatprep.subr.bf16.mxu0 0
    %2145 = vmatpush1.bf16.msra.mxu0 0
    %2146 = vmatprep.subr.bf16.mxu0 0
    %2147 = vmatpush1.bf16.msra.mxu0 0
    %2148 = vmatprep.subr.bf16.mxu0 0
    %2149 = vmatpush1.bf16.msra.mxu0 0
    %2150 = vmatprep.subr.bf16.mxu0 0
    %2151 = vmatpush1.bf16.msra.mxu0 0
    %2152 = vmatprep.subr.bf16.mxu0 0
    %2153 = vmatpush1.bf16.msra.mxu0 0
    %2154 = vmatprep.subr.bf16.mxu0 0
    %2155 = vmatpush1.bf16.msra.mxu0 0
    %2156 = vmatprep.subr.bf16.mxu0 0
    %2157 = vmatpush1.bf16.msra.mxu0 0
    %2158 = vmatprep.mubr.bf16.mxu0 0
    %2159 = vmatmul.mubr.bf16.gmra.mrb[0].mxu0 %v1878
    %v2160 = vpop.f32.mrb[0].mxu0
    %v2161 = vadd.f32 %v1176, %v2160
    %v2162 = vpop.f32.mrb[0].mxu0
    %v2163 = vadd.f32 %v1180, %v2162
    %v2164 = vpop.f32.mrb[0].mxu0
    %v2165 = vpop.f32.mrb[0].mxu0
    %2166 = vdwg.mxu0
    %2167 = vmatprep.subr.bf16.mxu0 %v1699
    %2168 = vmatpush1.bf16.msra.mxu0 %v1698
    %2169 = vmatprep.subr.bf16.mxu0 %v1747
    %2170 = vmatpush1.bf16.msra.mxu0 %v1746
    %2171 = vmatprep.subr.bf16.mxu0 0
    %2172 = vmatpush1.bf16.msra.mxu0 0
    %2173 = vmatprep.subr.bf16.mxu0 0
    %2174 = vmatpush1.bf16.msra.mxu0 0
    %2175 = vmatprep.subr.bf16.mxu0 0
    %2176 = vmatpush1.bf16.msra.mxu0 0
    %2177 = vmatprep.subr.bf16.mxu0 0
    %2178 = vmatpush1.bf16.msra.mxu0 0
    %2179 = vmatprep.subr.bf16.mxu0 0
    %2180 = vmatpush1.bf16.msra.mxu0 0
    %2181 = vmatprep.subr.bf16.mxu0 0
    %2182 = vmatpush1.bf16.msra.mxu0 0
    %2183 = vmatprep.subr.bf16.mxu0 0
    %2184 = vmatpush1.bf16.msra.mxu0 0
    %2185 = vmatprep.subr.bf16.mxu0 0
    %2186 = vmatpush1.bf16.msra.mxu0 0
    %2187 = vmatprep.subr.bf16.mxu0 0
    %2188 = vmatpush1.bf16.msra.mxu0 0
    %2189 = vmatprep.subr.bf16.mxu0 0
    %2190 = vmatpush1.bf16.msra.mxu0 0
    %2191 = vmatprep.subr.bf16.mxu0 0
    %2192 = vmatpush1.bf16.msra.mxu0 0
    %2193 = vmatprep.subr.bf16.mxu0 0
    %2194 = vmatpush1.bf16.msra.mxu0 0
    %2195 = vmatprep.subr.bf16.mxu0 0
    %2196 = vmatpush1.bf16.msra.mxu0 0
    %2197 = vmatprep.subr.bf16.mxu0 0
    %2198 = vmatpush1.bf16.msra.mxu0 0
    %2199 = vmatprep.mubr.bf16.mxu0 0
    %2200 = vmatmul.mubr.bf16.gmra.mrb[0].mxu0 %v1878
    %v2201 = vpop.f32.mrb[0].mxu0
    %v2202 = vadd.f32 %v1184, %v2201
    %v2203 = vpop.f32.mrb[0].mxu0
    %v2204 = vadd.f32 %v1188, %v2203
    %v2205 = vpop.f32.mrb[0].mxu0
    %v2206 = vpop.f32.mrb[0].mxu0
    %2207 = vdwg.mxu0
    %2208 = vmatprep.subr.bf16.mxu0 %v1701
    %2209 = vmatpush1.bf16.msra.mxu0 %v1700
    %2210 = vmatprep.subr.bf16.mxu0 %v1749
    %2211 = vmatpush1.bf16.msra.mxu0 %v1748
    %2212 = vmatprep.subr.bf16.mxu0 0
    %2213 = vmatpush1.bf16.msra.mxu0 0
    %2214 = vmatprep.subr.bf16.mxu0 0
    %2215 = vmatpush1.bf16.msra.mxu0 0
    %2216 = vmatprep.subr.bf16.mxu0 0
    %2217 = vmatpush1.bf16.msra.mxu0 0
    %2218 = vmatprep.subr.bf16.mxu0 0
    %2219 = vmatpush1.bf16.msra.mxu0 0
    %2220 = vmatprep.subr.bf16.mxu0 0
    %2221 = vmatpush1.bf16.msra.mxu0 0
    %2222 = vmatprep.subr.bf16.mxu0 0
    %2223 = vmatpush1.bf16.msra.mxu0 0
    %2224 = vmatprep.subr.bf16.mxu0 0
    %2225 = vmatpush1.bf16.msra.mxu0 0
    %2226 = vmatprep.subr.bf16.mxu0 0
    %2227 = vmatpush1.bf16.msra.mxu0 0
    %2228 = vmatprep.subr.bf16.mxu0 0
    %2229 = vmatpush1.bf16.msra.mxu0 0
    %2230 = vmatprep.subr.bf16.mxu0 0
    %2231 = vmatpush1.bf16.msra.mxu0 0
    %2232 = vmatprep.subr.bf16.mxu0 0
    %2233 = vmatpush1.bf16.msra.mxu0 0
    %2234 = vmatprep.subr.bf16.mxu0 0
    %2235 = vmatpush1.bf16.msra.mxu0 0
    %2236 = vmatprep.subr.bf16.mxu0 0
    %2237 = vmatpush1.bf16.msra.mxu0 0
    %2238 = vmatprep.subr.bf16.mxu0 0
    %2239 = vmatpush1.bf16.msra.mxu0 0
    %2240 = vmatprep.mubr.bf16.mxu0 0
    %2241 = vmatmul.mubr.bf16.gmra.mrb[0].mxu0 %v1878
    %v2242 = vpop.f32.mrb[0].mxu0
    %v2243 = vadd.f32 %v1192, %v2242
    %v2244 = vpop.f32.mrb[0].mxu0
    %v2245 = vadd.f32 %v1196, %v2244
    %v2246 = vpop.f32.mrb[0].mxu0
    %v2247 = vpop.f32.mrb[0].mxu0
    %2248 = vdwg.mxu0
    %2249 = vmatprep.subr.bf16.mxu0 %v1703
    %2250 = vmatpush1.bf16.msra.mxu0 %v1702
    %2251 = vmatprep.subr.bf16.mxu0 %v1751
    %2252 = vmatpush1.bf16.msra.mxu0 %v1750
    %2253 = vmatprep.subr.bf16.mxu0 0
    %2254 = vmatpush1.bf16.msra.mxu0 0
    %2255 = vmatprep.subr.bf16.mxu0 0
    %2256 = vmatpush1.bf16.msra.mxu0 0
    %2257 = vmatprep.subr.bf16.mxu0 0
    %2258 = vmatpush1.bf16.msra.mxu0 0
    %2259 = vmatprep.subr.bf16.mxu0 0
    %2260 = vmatpush1.bf16.msra.mxu0 0
    %2261 = vmatprep.subr.bf16.mxu0 0
    %2262 = vmatpush1.bf16.msra.mxu0 0
    %2263 = vmatprep.subr.bf16.mxu0 0
    %2264 = vmatpush1.bf16.msra.mxu0 0
    %2265 = vmatprep.subr.bf16.mxu0 0
    %2266 = vmatpush1.bf16.msra.mxu0 0
    %2267 = vmatprep.subr.bf16.mxu0 0
    %2268 = vmatpush1.bf16.msra.mxu0 0
    %2269 = vmatprep.subr.bf16.mxu0 0
    %2270 = vmatpush1.bf16.msra.mxu0 0
    %2271 = vmatprep.subr.bf16.mxu0 0
    %2272 = vmatpush1.bf16.msra.mxu0 0
    %2273 = vmatprep.subr.bf16.mxu0 0
    %2274 = vmatpush1.bf16.msra.mxu0 0
    %2275 = vmatprep.subr.bf16.mxu0 0
    %2276 = vmatpush1.bf16.msra.mxu0 0
    %2277 = vmatprep.subr.bf16.mxu0 0
    %2278 = vmatpush1.bf16.msra.mxu0 0
    %2279 = vmatprep.subr.bf16.mxu0 0
    %2280 = vmatpush1.bf16.msra.mxu0 0
    %2281 = vmatprep.mubr.bf16.mxu0 0
    %2282 = vmatmul.mubr.bf16.gmra.mrb[0].mxu0 %v1878
    %v2283 = vpop.f32.mrb[0].mxu0
    %v2284 = vadd.f32 %v1200, %v2283
    %v2285 = vpop.f32.mrb[0].mxu0
    %v2286 = vadd.f32 %v1204, %v2285
    %v2287 = vpop.f32.mrb[0].mxu0
    %v2288 = vpop.f32.mrb[0].mxu0
    %2289 = vdwg.mxu0
    %2290 = vmatprep.subr.bf16.mxu0 %v1705
    %2291 = vmatpush1.bf16.msra.mxu0 %v1704
    %2292 = vmatprep.subr.bf16.mxu0 %v1753
    %2293 = vmatpush1.bf16.msra.mxu0 %v1752
    %2294 = vmatprep.subr.bf16.mxu0 0
    %2295 = vmatpush1.bf16.msra.mxu0 0
    %2296 = vmatprep.subr.bf16.mxu0 0
    %2297 = vmatpush1.bf16.msra.mxu0 0
    %2298 = vmatprep.subr.bf16.mxu0 0
    %2299 = vmatpush1.bf16.msra.mxu0 0
    %2300 = vmatprep.subr.bf16.mxu0 0
    %2301 = vmatpush1.bf16.msra.mxu0 0
    %2302 = vmatprep.subr.bf16.mxu0 0
    %2303 = vmatpush1.bf16.msra.mxu0 0
    %2304 = vmatprep.subr.bf16.mxu0 0
    %2305 = vmatpush1.bf16.msra.mxu0 0
    %2306 = vmatprep.subr.bf16.mxu0 0
    %2307 = vmatpush1.bf16.msra.mxu0 0
    %2308 = vmatprep.subr.bf16.mxu0 0
    %2309 = vmatpush1.bf16.msra.mxu0 0
    %2310 = vmatprep.subr.bf16.mxu0 0
    %2311 = vmatpush1.bf16.msra.mxu0 0
    %2312 = vmatprep.subr.bf16.mxu0 0
    %2313 = vmatpush1.bf16.msra.mxu0 0
    %2314 = vmatprep.subr.bf16.mxu0 0
    %2315 = vmatpush1.bf16.msra.mxu0 0
    %2316 = vmatprep.subr.bf16.mxu0 0
    %2317 = vmatpush1.bf16.msra.mxu0 0
    %2318 = vmatprep.subr.bf16.mxu0 0
    %2319 = vmatpush1.bf16.msra.mxu0 0
    %2320 = vmatprep.subr.bf16.mxu0 0
    %2321 = vmatpush1.bf16.msra.mxu0 0
    %2322 = vmatprep.mubr.bf16.mxu0 0
    %2323 = vmatmul.mubr.bf16.gmra.mrb[0].mxu0 %v1878
    %v2324 = vpop.f32.mrb[0].mxu0
    %v2325 = vadd.f32 %v1208, %v2324
    %v2326 = vpop.f32.mrb[0].mxu0
    %v2327 = vadd.f32 %v1212, %v2326
    %v2328 = vpop.f32.mrb[0].mxu0
    %v2329 = vpop.f32.mrb[0].mxu0
    %2330 = vdwg.mxu0
    %2331 = vmatprep.subr.bf16.mxu0 %v1707
    %2332 = vmatpush1.bf16.msra.mxu0 %v1706
    %2333 = vmatprep.subr.bf16.mxu0 %v1755
    %2334 = vmatpush1.bf16.msra.mxu0 %v1754
    %2335 = vmatprep.subr.bf16.mxu0 0
    %2336 = vmatpush1.bf16.msra.mxu0 0
    %2337 = vmatprep.subr.bf16.mxu0 0
    %2338 = vmatpush1.bf16.msra.mxu0 0
    %2339 = vmatprep.subr.bf16.mxu0 0
    %2340 = vmatpush1.bf16.msra.mxu0 0
    %2341 = vmatprep.subr.bf16.mxu0 0
    %2342 = vmatpush1.bf16.msra.mxu0 0
    %2343 = vmatprep.subr.bf16.mxu0 0
    %2344 = vmatpush1.bf16.msra.mxu0 0
    %2345 = vmatprep.subr.bf16.mxu0 0
    %2346 = vmatpush1.bf16.msra.mxu0 0
    %2347 = vmatprep.subr.bf16.mxu0 0
    %2348 = vmatpush1.bf16.msra.mxu0 0
    %2349 = vmatprep.subr.bf16.mxu0 0
    %2350 = vmatpush1.bf16.msra.mxu0 0
    %2351 = vmatprep.subr.bf16.mxu0 0
    %2352 = vmatpush1.bf16.msra.mxu0 0
    %2353 = vmatprep.subr.bf16.mxu0 0
    %2354 = vmatpush1.bf16.msra.mxu0 0
    %2355 = vmatprep.subr.bf16.mxu0 0
    %2356 = vmatpush1.bf16.msra.mxu0 0
    %2357 = vmatprep.subr.bf16.mxu0 0
    %2358 = vmatpush1.bf16.msra.mxu0 0
    %2359 = vmatprep.subr.bf16.mxu0 0
    %2360 = vmatpush1.bf16.msra.mxu0 0
    %2361 = vmatprep.subr.bf16.mxu0 0
    %2362 = vmatpush1.bf16.msra.mxu0 0
    %2363 = vmatprep.mubr.bf16.mxu0 0
    %2364 = vmatmul.mubr.bf16.gmra.mrb[0].mxu0 %v1878
    %v2365 = vpop.f32.mrb[0].mxu0
    %v2366 = vadd.f32 %v1216, %v2365
    %v2367 = vpop.f32.mrb[0].mxu0
    %v2368 = vadd.f32 %v1220, %v2367
    %v2369 = vpop.f32.mrb[0].mxu0
    %v2370 = vpop.f32.mrb[0].mxu0
    %2371 = vdwg.mxu0
    %2372 = vmatprep.subr.bf16.mxu0 %v1709
    %2373 = vmatpush1.bf16.msra.mxu0 %v1708
    %2374 = vmatprep.subr.bf16.mxu0 %v1757
    %2375 = vmatpush1.bf16.msra.mxu0 %v1756
    %2376 = vmatprep.subr.bf16.mxu0 0
    %2377 = vmatpush1.bf16.msra.mxu0 0
    %2378 = vmatprep.subr.bf16.mxu0 0
    %2379 = vmatpush1.bf16.msra.mxu0 0
    %2380 = vmatprep.subr.bf16.mxu0 0
    %2381 = vmatpush1.bf16.msra.mxu0 0
    %2382 = vmatprep.subr.bf16.mxu0 0
    %2383 = vmatpush1.bf16.msra.mxu0 0
    %2384 = vmatprep.subr.bf16.mxu0 0
    %2385 = vmatpush1.bf16.msra.mxu0 0
    %2386 = vmatprep.subr.bf16.mxu0 0
    %2387 = vmatpush1.bf16.msra.mxu0 0
    %2388 = vmatprep.subr.bf16.mxu0 0
    %2389 = vmatpush1.bf16.msra.mxu0 0
    %2390 = vmatprep.subr.bf16.mxu0 0
    %2391 = vmatpush1.bf16.msra.mxu0 0
    %2392 = vmatprep.subr.bf16.mxu0 0
    %2393 = vmatpush1.bf16.msra.mxu0 0
    %2394 = vmatprep.subr.bf16.mxu0 0
    %2395 = vmatpush1.bf16.msra.mxu0 0
    %2396 = vmatprep.subr.bf16.mxu0 0
    %2397 = vmatpush1.bf16.msra.mxu0 0
    %2398 = vmatprep.subr.bf16.mxu0 0
    %2399 = vmatpush1.bf16.msra.mxu0 0
    %2400 = vmatprep.subr.bf16.mxu0 0
    %2401 = vmatpush1.bf16.msra.mxu0 0
    %2402 = vmatprep.subr.bf16.mxu0 0
    %2403 = vmatpush1.bf16.msra.mxu0 0
    %2404 = vmatprep.mubr.bf16.mxu0 0
    %2405 = vmatmul.mubr.bf16.gmra.mrb[0].mxu0 %v1878
    %v2406 = vpop.f32.mrb[0].mxu0
    %v2407 = vadd.f32 %v1224, %v2406
    %v2408 = vpop.f32.mrb[0].mxu0
    %v2409 = vadd.f32 %v1228, %v2408
    %v2410 = vpop.f32.mrb[0].mxu0
    %v2411 = vpop.f32.mrb[0].mxu0
    %2412 = vdwg.mxu0
    %2413 = vmatprep.subr.bf16.mxu0 %v1711
    %2414 = vmatpush1.bf16.msra.mxu0 %v1710
    %2415 = vmatprep.subr.bf16.mxu0 %v1759
    %2416 = vmatpush1.bf16.msra.mxu0 %v1758
    %2417 = vmatprep.subr.bf16.mxu0 0
    %2418 = vmatpush1.bf16.msra.mxu0 0
    %2419 = vmatprep.subr.bf16.mxu0 0
    %2420 = vmatpush1.bf16.msra.mxu0 0
    %2421 = vmatprep.subr.bf16.mxu0 0
    %2422 = vmatpush1.bf16.msra.mxu0 0
    %2423 = vmatprep.subr.bf16.mxu0 0
    %2424 = vmatpush1.bf16.msra.mxu0 0
    %2425 = vmatprep.subr.bf16.mxu0 0
    %2426 = vmatpush1.bf16.msra.mxu0 0
    %2427 = vmatprep.subr.bf16.mxu0 0
    %2428 = vmatpush1.bf16.msra.mxu0 0
    %2429 = vmatprep.subr.bf16.mxu0 0
    %2430 = vmatpush1.bf16.msra.mxu0 0
    %2431 = vmatprep.subr.bf16.mxu0 0
    %2432 = vmatpush1.bf16.msra.mxu0 0
    %2433 = vmatprep.subr.bf16.mxu0 0
    %2434 = vmatpush1.bf16.msra.mxu0 0
    %2435 = vmatprep.subr.bf16.mxu0 0
    %2436 = vmatpush1.bf16.msra.mxu0 0
    %2437 = vmatprep.subr.bf16.mxu0 0
    %2438 = vmatpush1.bf16.msra.mxu0 0
    %2439 = vmatprep.subr.bf16.mxu0 0
    %2440 = vmatpush1.bf16.msra.mxu0 0
    %2441 = vmatprep.subr.bf16.mxu0 0
    %2442 = vmatpush1.bf16.msra.mxu0 0
    %2443 = vmatprep.subr.bf16.mxu0 0
    %2444 = vmatpush1.bf16.msra.mxu0 0
    %2445 = vmatprep.mubr.bf16.mxu0 0
    %2446 = vmatmul.mubr.bf16.gmra.mrb[0].mxu0 %v1878
    %v2447 = vpop.f32.mrb[0].mxu0
    %v2448 = vadd.f32 %v1232, %v2447
    %v2449 = vpop.f32.mrb[0].mxu0
    %v2450 = vadd.f32 %v1236, %v2449
    %v2451 = vpop.f32.mrb[0].mxu0
    %v2452 = vpop.f32.mrb[0].mxu0
    %2453 = vdwg.mxu0
    %2454 = vmatprep.subr.bf16.mxu0 %v1713
    %2455 = vmatpush1.bf16.msra.mxu0 %v1712
    %2456 = vmatprep.subr.bf16.mxu0 %v1761
    %2457 = vmatpush1.bf16.msra.mxu0 %v1760
    %2458 = vmatprep.subr.bf16.mxu0 0
    %2459 = vmatpush1.bf16.msra.mxu0 0
    %2460 = vmatprep.subr.bf16.mxu0 0
    %2461 = vmatpush1.bf16.msra.mxu0 0
    %2462 = vmatprep.subr.bf16.mxu0 0
    %2463 = vmatpush1.bf16.msra.mxu0 0
    %2464 = vmatprep.subr.bf16.mxu0 0
    %2465 = vmatpush1.bf16.msra.mxu0 0
    %2466 = vmatprep.subr.bf16.mxu0 0
    %2467 = vmatpush1.bf16.msra.mxu0 0
    %2468 = vmatprep.subr.bf16.mxu0 0
    %2469 = vmatpush1.bf16.msra.mxu0 0
    %2470 = vmatprep.subr.bf16.mxu0 0
    %2471 = vmatpush1.bf16.msra.mxu0 0
    %2472 = vmatprep.subr.bf16.mxu0 0
    %2473 = vmatpush1.bf16.msra.mxu0 0
    %2474 = vmatprep.subr.bf16.mxu0 0
    %2475 = vmatpush1.bf16.msra.mxu0 0
    %2476 = vmatprep.subr.bf16.mxu0 0
    %2477 = vmatpush1.bf16.msra.mxu0 0
    %2478 = vmatprep.subr.bf16.mxu0 0
    %2479 = vmatpush1.bf16.msra.mxu0 0
    %2480 = vmatprep.subr.bf16.mxu0 0
    %2481 = vmatpush1.bf16.msra.mxu0 0
    %2482 = vmatprep.subr.bf16.mxu0 0
    %2483 = vmatpush1.bf16.msra.mxu0 0
    %2484 = vmatprep.subr.bf16.mxu0 0
    %2485 = vmatpush1.bf16.msra.mxu0 0
    %2486 = vmatprep.mubr.bf16.mxu0 0
    %2487 = vmatmul.mubr.bf16.gmra.mrb[0].mxu0 %v1878
    %v2488 = vpop.f32.mrb[0].mxu0
    %v2489 = vadd.f32 %v1240, %v2488
    %v2490 = vpop.f32.mrb[0].mxu0
    %v2491 = vadd.f32 %v1244, %v2490
    %v2492 = vpop.f32.mrb[0].mxu0
    %v2493 = vpop.f32.mrb[0].mxu0
    %2494 = vdwg.mxu0
    %2495 = vmatprep.subr.bf16.mxu0 %v1715
    %2496 = vmatpush1.bf16.msra.mxu0 %v1714
    %2497 = vmatprep.subr.bf16.mxu0 %v1763
    %2498 = vmatpush1.bf16.msra.mxu0 %v1762
    %2499 = vmatprep.subr.bf16.mxu0 0
    %2500 = vmatpush1.bf16.msra.mxu0 0
    %2501 = vmatprep.subr.bf16.mxu0 0
    %2502 = vmatpush1.bf16.msra.mxu0 0
    %2503 = vmatprep.subr.bf16.mxu0 0
    %2504 = vmatpush1.bf16.msra.mxu0 0
    %2505 = vmatprep.subr.bf16.mxu0 0
    %2506 = vmatpush1.bf16.msra.mxu0 0
    %2507 = vmatprep.subr.bf16.mxu0 0
    %2508 = vmatpush1.bf16.msra.mxu0 0
    %2509 = vmatprep.subr.bf16.mxu0 0
    %2510 = vmatpush1.bf16.msra.mxu0 0
    %2511 = vmatprep.subr.bf16.mxu0 0
    %2512 = vmatpush1.bf16.msra.mxu0 0
    %2513 = vmatprep.subr.bf16.mxu0 0
    %2514 = vmatpush1.bf16.msra.mxu0 0
    %2515 = vmatprep.subr.bf16.mxu0 0
    %2516 = vmatpush1.bf16.msra.mxu0 0
    %2517 = vmatprep.subr.bf16.mxu0 0
    %2518 = vmatpush1.bf16.msra.mxu0 0
    %2519 = vmatprep.subr.bf16.mxu0 0
    %2520 = vmatpush1.bf16.msra.mxu0 0
    %2521 = vmatprep.subr.bf16.mxu0 0
    %2522 = vmatpush1.bf16.msra.mxu0 0
    %2523 = vmatprep.subr.bf16.mxu0 0
    %2524 = vmatpush1.bf16.msra.mxu0 0
    %2525 = vmatprep.subr.bf16.mxu0 0
    %2526 = vmatpush1.bf16.msra.mxu0 0
    %2527 = vmatprep.mubr.bf16.mxu0 0
    %2528 = vmatmul.mubr.bf16.gmra.mrb[0].mxu0 %v1878
    %v2529 = vpop.f32.mrb[0].mxu0
    %v2530 = vadd.f32 %v1248, %v2529
    %v2531 = vpop.f32.mrb[0].mxu0
    %v2532 = vadd.f32 %v1252, %v2531
    %v2533 = vpop.f32.mrb[0].mxu0
    %v2534 = vpop.f32.mrb[0].mxu0
    %2535 = vdwg.mxu0
    %2536 = vmatprep.subr.bf16.mxu0 %v1717
    %2537 = vmatpush1.bf16.msra.mxu0 %v1716
    %2538 = vmatprep.subr.bf16.mxu0 %v1765
    %2539 = vmatpush1.bf16.msra.mxu0 %v1764
    %2540 = vmatprep.subr.bf16.mxu0 0
    %2541 = vmatpush1.bf16.msra.mxu0 0
    %2542 = vmatprep.subr.bf16.mxu0 0
    %2543 = vmatpush1.bf16.msra.mxu0 0
    %2544 = vmatprep.subr.bf16.mxu0 0
    %2545 = vmatpush1.bf16.msra.mxu0 0
    %2546 = vmatprep.subr.bf16.mxu0 0
    %2547 = vmatpush1.bf16.msra.mxu0 0
    %2548 = vmatprep.subr.bf16.mxu0 0
    %2549 = vmatpush1.bf16.msra.mxu0 0
    %2550 = vmatprep.subr.bf16.mxu0 0
    %2551 = vmatpush1.bf16.msra.mxu0 0
    %2552 = vmatprep.subr.bf16.mxu0 0
    %2553 = vmatpush1.bf16.msra.mxu0 0
    %2554 = vmatprep.subr.bf16.mxu0 0
    %2555 = vmatpush1.bf16.msra.mxu0 0
    %2556 = vmatprep.subr.bf16.mxu0 0
    %2557 = vmatpush1.bf16.msra.mxu0 0
    %2558 = vmatprep.subr.bf16.mxu0 0
    %2559 = vmatpush1.bf16.msra.mxu0 0
    %2560 = vmatprep.subr.bf16.mxu0 0
    %2561 = vmatpush1.bf16.msra.mxu0 0
    %2562 = vmatprep.subr.bf16.mxu0 0
    %2563 = vmatpush1.bf16.msra.mxu0 0
    %2564 = vmatprep.subr.bf16.mxu0 0
    %2565 = vmatpush1.bf16.msra.mxu0 0
    %2566 = vmatprep.subr.bf16.mxu0 0
    %2567 = vmatpush1.bf16.msra.mxu0 0
    %2568 = vmatprep.mubr.bf16.mxu0 0
    %2569 = vmatmul.mubr.bf16.gmra.mrb[0].mxu0 %v1878
    %v2570 = vpop.f32.mrb[0].mxu0
    %v2571 = vadd.f32 %v1256, %v2570
    %v2572 = vpop.f32.mrb[0].mxu0
    %v2573 = vadd.f32 %v1260, %v2572
    %v2574 = vpop.f32.mrb[0].mxu0
    %v2575 = vpop.f32.mrb[0].mxu0
    %2576 = vdwg.mxu0
    %2577 = vmatprep.subr.bf16.mxu0 %v1719
    %2578 = vmatpush1.bf16.msra.mxu0 %v1718
    %2579 = vmatprep.subr.bf16.mxu0 %v1767
    %2580 = vmatpush1.bf16.msra.mxu0 %v1766
    %2581 = vmatprep.subr.bf16.mxu0 0
    %2582 = vmatpush1.bf16.msra.mxu0 0
    %2583 = vmatprep.subr.bf16.mxu0 0
    %2584 = vmatpush1.bf16.msra.mxu0 0
    %2585 = vmatprep.subr.bf16.mxu0 0
    %2586 = vmatpush1.bf16.msra.mxu0 0
    %2587 = vmatprep.subr.bf16.mxu0 0
    %2588 = vmatpush1.bf16.msra.mxu0 0
    %2589 = vmatprep.subr.bf16.mxu0 0
    %2590 = vmatpush1.bf16.msra.mxu0 0
    %2591 = vmatprep.subr.bf16.mxu0 0
    %2592 = vmatpush1.bf16.msra.mxu0 0
    %2593 = vmatprep.subr.bf16.mxu0 0
    %2594 = vmatpush1.bf16.msra.mxu0 0
    %2595 = vmatprep.subr.bf16.mxu0 0
    %2596 = vmatpush1.bf16.msra.mxu0 0
    %2597 = vmatprep.subr.bf16.mxu0 0
    %2598 = vmatpush1.bf16.msra.mxu0 0
    %2599 = vmatprep.subr.bf16.mxu0 0
    %2600 = vmatpush1.bf16.msra.mxu0 0
    %2601 = vmatprep.subr.bf16.mxu0 0
    %2602 = vmatpush1.bf16.msra.mxu0 0
    %2603 = vmatprep.subr.bf16.mxu0 0
    %2604 = vmatpush1.bf16.msra.mxu0 0
    %2605 = vmatprep.subr.bf16.mxu0 0
    %2606 = vmatpush1.bf16.msra.mxu0 0
    %2607 = vmatprep.subr.bf16.mxu0 0
    %2608 = vmatpush1.bf16.msra.mxu0 0
    %2609 = vmatprep.mubr.bf16.mxu0 0
    %2610 = vmatmul.mubr.bf16.gmra.mrb[0].mxu0 %v1878
    %v2611 = vpop.f32.mrb[0].mxu0
    %v2612 = vadd.f32 %v1264, %v2611
    %v2613 = vpop.f32.mrb[0].mxu0
    %v2614 = vadd.f32 %v1268, %v2613
    %v2615 = vpop.f32.mrb[0].mxu0
    %v2616 = vpop.f32.mrb[0].mxu0
    %2617 = vdwg.mxu0
    %2618 = vmatprep.subr.bf16.mxu0 %v1721
    %2619 = vmatpush1.bf16.msra.mxu0 %v1720
    %2620 = vmatprep.subr.bf16.mxu0 %v1769
    %2621 = vmatpush1.bf16.msra.mxu0 %v1768
    %2622 = vmatprep.subr.bf16.mxu0 0
    %2623 = vmatpush1.bf16.msra.mxu0 0
    %2624 = vmatprep.subr.bf16.mxu0 0
    %2625 = vmatpush1.bf16.msra.mxu0 0
    %2626 = vmatprep.subr.bf16.mxu0 0
    %2627 = vmatpush1.bf16.msra.mxu0 0
    %2628 = vmatprep.subr.bf16.mxu0 0
    %2629 = vmatpush1.bf16.msra.mxu0 0
    %2630 = vmatprep.subr.bf16.mxu0 0
    %2631 = vmatpush1.bf16.msra.mxu0 0
    %2632 = vmatprep.subr.bf16.mxu0 0
    %2633 = vmatpush1.bf16.msra.mxu0 0
    %2634 = vmatprep.subr.bf16.mxu0 0
    %2635 = vmatpush1.bf16.msra.mxu0 0
    %2636 = vmatprep.subr.bf16.mxu0 0
    %2637 = vmatpush1.bf16.msra.mxu0 0
    %2638 = vmatprep.subr.bf16.mxu0 0
    %2639 = vmatpush1.bf16.msra.mxu0 0
    %2640 = vmatprep.subr.bf16.mxu0 0
    %2641 = vmatpush1.bf16.msra.mxu0 0
    %2642 = vmatprep.subr.bf16.mxu0 0
    %2643 = vmatpush1.bf16.msra.mxu0 0
    %2644 = vmatprep.subr.bf16.mxu0 0
    %2645 = vmatpush1.bf16.msra.mxu0 0
    %2646 = vmatprep.subr.bf16.mxu0 0
    %2647 = vmatpush1.bf16.msra.mxu0 0
    %2648 = vmatprep.subr.bf16.mxu0 0
    %2649 = vmatpush1.bf16.msra.mxu0 0
    %2650 = vmatprep.mubr.bf16.mxu0 0
    %2651 = vmatmul.mubr.bf16.gmra.mrb[0].mxu0 %v1878
    %v2652 = vpop.f32.mrb[0].mxu0
    %v2653 = vadd.f32 %v1272, %v2652
    %v2654 = vpop.f32.mrb[0].mxu0
    %v2655 = vadd.f32 %v1276, %v2654
    %v2656 = vpop.f32.mrb[0].mxu0
    %v2657 = vpop.f32.mrb[0].mxu0
    %2658 = vdwg.mxu0
    %2659 = vmatprep.subr.bf16.mxu0 %v1723
    %2660 = vmatpush1.bf16.msra.mxu0 %v1722
    %2661 = vmatprep.subr.bf16.mxu0 %v1771
    %2662 = vmatpush1.bf16.msra.mxu0 %v1770
    %2663 = vmatprep.subr.bf16.mxu0 0
    %2664 = vmatpush1.bf16.msra.mxu0 0
    %2665 = vmatprep.subr.bf16.mxu0 0
    %2666 = vmatpush1.bf16.msra.mxu0 0
    %2667 = vmatprep.subr.bf16.mxu0 0
    %2668 = vmatpush1.bf16.msra.mxu0 0
    %2669 = vmatprep.subr.bf16.mxu0 0
    %2670 = vmatpush1.bf16.msra.mxu0 0
    %2671 = vmatprep.subr.bf16.mxu0 0
    %2672 = vmatpush1.bf16.msra.mxu0 0
    %2673 = vmatprep.subr.bf16.mxu0 0
    %2674 = vmatpush1.bf16.msra.mxu0 0
    %2675 = vmatprep.subr.bf16.mxu0 0
    %2676 = vmatpush1.bf16.msra.mxu0 0
    %2677 = vmatprep.subr.bf16.mxu0 0
    %2678 = vmatpush1.bf16.msra.mxu0 0
    %2679 = vmatprep.subr.bf16.mxu0 0
    %2680 = vmatpush1.bf16.msra.mxu0 0
    %2681 = vmatprep.subr.bf16.mxu0 0
    %2682 = vmatpush1.bf16.msra.mxu0 0
    %2683 = vmatprep.subr.bf16.mxu0 0
    %2684 = vmatpush1.bf16.msra.mxu0 0
    %2685 = vmatprep.subr.bf16.mxu0 0
    %2686 = vmatpush1.bf16.msra.mxu0 0
    %2687 = vmatprep.subr.bf16.mxu0 0
    %2688 = vmatpush1.bf16.msra.mxu0 0
    %2689 = vmatprep.subr.bf16.mxu0 0
    %2690 = vmatpush1.bf16.msra.mxu0 0
    %2691 = vmatprep.mubr.bf16.mxu0 0
    %2692 = vmatmul.mubr.bf16.gmra.mrb[0].mxu0 %v1878
    %v2693 = vpop.f32.mrb[0].mxu0
    %v2694 = vadd.f32 %v1280, %v2693
    %v2695 = vpop.f32.mrb[0].mxu0
    %v2696 = vadd.f32 %v1284, %v2695
    %v2697 = vpop.f32.mrb[0].mxu0
    %v2698 = vpop.f32.mrb[0].mxu0
    %2699 = vdwg.mxu0
    %2700 = vmatprep.subr.bf16.mxu0 %v1725
    %2701 = vmatpush1.bf16.msra.mxu0 %v1724
    %2702 = vmatprep.subr.bf16.mxu0 %v1773
    %2703 = vmatpush1.bf16.msra.mxu0 %v1772
    %2704 = vmatprep.subr.bf16.mxu0 0
    %2705 = vmatpush1.bf16.msra.mxu0 0
    %2706 = vmatprep.subr.bf16.mxu0 0
    %2707 = vmatpush1.bf16.msra.mxu0 0
    %2708 = vmatprep.subr.bf16.mxu0 0
    %2709 = vmatpush1.bf16.msra.mxu0 0
    %2710 = vmatprep.subr.bf16.mxu0 0
    %2711 = vmatpush1.bf16.msra.mxu0 0
    %2712 = vmatprep.subr.bf16.mxu0 0
    %2713 = vmatpush1.bf16.msra.mxu0 0
    %2714 = vmatprep.subr.bf16.mxu0 0
    %2715 = vmatpush1.bf16.msra.mxu0 0
    %2716 = vmatprep.subr.bf16.mxu0 0
    %2717 = vmatpush1.bf16.msra.mxu0 0
    %2718 = vmatprep.subr.bf16.mxu0 0
    %2719 = vmatpush1.bf16.msra.mxu0 0
    %2720 = vmatprep.subr.bf16.mxu0 0
    %2721 = vmatpush1.bf16.msra.mxu0 0
    %2722 = vmatprep.subr.bf16.mxu0 0
    %2723 = vmatpush1.bf16.msra.mxu0 0
    %2724 = vmatprep.subr.bf16.mxu0 0
    %2725 = vmatpush1.bf16.msra.mxu0 0
    %2726 = vmatprep.subr.bf16.mxu0 0
    %2727 = vmatpush1.bf16.msra.mxu0 0
    %2728 = vmatprep.subr.bf16.mxu0 0
    %2729 = vmatpush1.bf16.msra.mxu0 0
    %2730 = vmatprep.subr.bf16.mxu0 0
    %2731 = vmatpush1.bf16.msra.mxu0 0
    %2732 = vmatprep.mubr.bf16.mxu0 0
    %2733 = vmatmul.mubr.bf16.gmra.mrb[0].mxu0 %v1878
    %v2734 = vpop.f32.mrb[0].mxu0
    %v2735 = vadd.f32 %v1288, %v2734
    %v2736 = vpop.f32.mrb[0].mxu0
    %v2737 = vadd.f32 %v1292, %v2736
    %v2738 = vpop.f32.mrb[0].mxu0
    %v2739 = vpop.f32.mrb[0].mxu0
    %2740 = vdwg.mxu0
    %2741 = vmatprep.subr.bf16.mxu0 %v1727
    %2742 = vmatpush1.bf16.msra.mxu0 %v1726
    %2743 = vmatprep.subr.bf16.mxu0 %v1775
    %2744 = vmatpush1.bf16.msra.mxu0 %v1774
    %2745 = vmatprep.subr.bf16.mxu0 0
    %2746 = vmatpush1.bf16.msra.mxu0 0
    %2747 = vmatprep.subr.bf16.mxu0 0
    %2748 = vmatpush1.bf16.msra.mxu0 0
    %2749 = vmatprep.subr.bf16.mxu0 0
    %2750 = vmatpush1.bf16.msra.mxu0 0
    %2751 = vmatprep.subr.bf16.mxu0 0
    %2752 = vmatpush1.bf16.msra.mxu0 0
    %2753 = vmatprep.subr.bf16.mxu0 0
    %2754 = vmatpush1.bf16.msra.mxu0 0
    %2755 = vmatprep.subr.bf16.mxu0 0
    %2756 = vmatpush1.bf16.msra.mxu0 0
    %2757 = vmatprep.subr.bf16.mxu0 0
    %2758 = vmatpush1.bf16.msra.mxu0 0
    %2759 = vmatprep.subr.bf16.mxu0 0
    %2760 = vmatpush1.bf16.msra.mxu0 0
    %2761 = vmatprep.subr.bf16.mxu0 0
    %2762 = vmatpush1.bf16.msra.mxu0 0
    %2763 = vmatprep.subr.bf16.mxu0 0
    %2764 = vmatpush1.bf16.msra.mxu0 0
    %2765 = vmatprep.subr.bf16.mxu0 0
    %2766 = vmatpush1.bf16.msra.mxu0 0
    %2767 = vmatprep.subr.bf16.mxu0 0
    %2768 = vmatpush1.bf16.msra.mxu0 0
    %2769 = vmatprep.subr.bf16.mxu0 0
    %2770 = vmatpush1.bf16.msra.mxu0 0
    %2771 = vmatprep.subr.bf16.mxu0 0
    %2772 = vmatpush1.bf16.msra.mxu0 0
    %2773 = vmatprep.mubr.bf16.mxu0 0
    %2774 = vmatmul.mubr.bf16.gmra.mrb[0].mxu0 %v1878
    %v2775 = vpop.f32.mrb[0].mxu0
    %v2776 = vadd.f32 %v1296, %v2775
    %v2777 = vpop.f32.mrb[0].mxu0
    %v2778 = vadd.f32 %v1300, %v2777
    %v2779 = vpop.f32.mrb[0].mxu0
    %v2780 = vpop.f32.mrb[0].mxu0
    %2781 = vdwg.mxu0
    %2782 = vmatprep.subr.bf16.mxu0 %v1729
    %2783 = vmatpush1.bf16.msra.mxu0 %v1728
    %2784 = vmatprep.subr.bf16.mxu0 %v1777
    %2785 = vmatpush1.bf16.msra.mxu0 %v1776
    %2786 = vmatprep.subr.bf16.mxu0 0
    %2787 = vmatpush1.bf16.msra.mxu0 0
    %2788 = vmatprep.subr.bf16.mxu0 0
    %2789 = vmatpush1.bf16.msra.mxu0 0
    %2790 = vmatprep.subr.bf16.mxu0 0
    %2791 = vmatpush1.bf16.msra.mxu0 0
    %2792 = vmatprep.subr.bf16.mxu0 0
    %2793 = vmatpush1.bf16.msra.mxu0 0
    %2794 = vmatprep.subr.bf16.mxu0 0
    %2795 = vmatpush1.bf16.msra.mxu0 0
    %2796 = vmatprep.subr.bf16.mxu0 0
    %2797 = vmatpush1.bf16.msra.mxu0 0
    %2798 = vmatprep.subr.bf16.mxu0 0
    %2799 = vmatpush1.bf16.msra.mxu0 0
    %2800 = vmatprep.subr.bf16.mxu0 0
    %2801 = vmatpush1.bf16.msra.mxu0 0
    %2802 = vmatprep.subr.bf16.mxu0 0
    %2803 = vmatpush1.bf16.msra.mxu0 0
    %2804 = vmatprep.subr.bf16.mxu0 0
    %2805 = vmatpush1.bf16.msra.mxu0 0
    %2806 = vmatprep.subr.bf16.mxu0 0
    %2807 = vmatpush1.bf16.msra.mxu0 0
    %2808 = vmatprep.subr.bf16.mxu0 0
    %2809 = vmatpush1.bf16.msra.mxu0 0
    %2810 = vmatprep.subr.bf16.mxu0 0
    %2811 = vmatpush1.bf16.msra.mxu0 0
    %2812 = vmatprep.subr.bf16.mxu0 0
    %2813 = vmatpush1.bf16.msra.mxu0 0
    %2814 = vmatprep.mubr.bf16.mxu0 0
    %2815 = vmatmul.mubr.bf16.gmra.mrb[0].mxu0 %v1878
    %v2816 = vpop.f32.mrb[0].mxu0
    %v2817 = vadd.f32 %v1304, %v2816
    %v2818 = vpop.f32.mrb[0].mxu0
    %v2819 = vadd.f32 %v1308, %v2818
    %v2820 = vpop.f32.mrb[0].mxu0
    %v2821 = vpop.f32.mrb[0].mxu0
    %2822 = vdwg.mxu0
    %2823 = vmatprep.subr.bf16.mxu0 %v1731
    %2824 = vmatpush1.bf16.msra.mxu0 %v1730
    %2825 = vmatprep.subr.bf16.mxu0 %v1779
    %2826 = vmatpush1.bf16.msra.mxu0 %v1778
    %2827 = vmatprep.subr.bf16.mxu0 0
    %2828 = vmatpush1.bf16.msra.mxu0 0
    %2829 = vmatprep.subr.bf16.mxu0 0
    %2830 = vmatpush1.bf16.msra.mxu0 0
    %2831 = vmatprep.subr.bf16.mxu0 0
    %2832 = vmatpush1.bf16.msra.mxu0 0
    %2833 = vmatprep.subr.bf16.mxu0 0
    %2834 = vmatpush1.bf16.msra.mxu0 0
    %2835 = vmatprep.subr.bf16.mxu0 0
    %2836 = vmatpush1.bf16.msra.mxu0 0
    %2837 = vmatprep.subr.bf16.mxu0 0
    %2838 = vmatpush1.bf16.msra.mxu0 0
    %2839 = vmatprep.subr.bf16.mxu0 0
    %2840 = vmatpush1.bf16.msra.mxu0 0
    %2841 = vmatprep.subr.bf16.mxu0 0
    %2842 = vmatpush1.bf16.msra.mxu0 0
    %2843 = vmatprep.subr.bf16.mxu0 0
    %2844 = vmatpush1.bf16.msra.mxu0 0
    %2845 = vmatprep.subr.bf16.mxu0 0
    %2846 = vmatpush1.bf16.msra.mxu0 0
    %2847 = vmatprep.subr.bf16.mxu0 0
    %2848 = vmatpush1.bf16.msra.mxu0 0
    %2849 = vmatprep.subr.bf16.mxu0 0
    %2850 = vmatpush1.bf16.msra.mxu0 0
    %2851 = vmatprep.subr.bf16.mxu0 0
    %2852 = vmatpush1.bf16.msra.mxu0 0
    %2853 = vmatprep.subr.bf16.mxu0 0
    %2854 = vmatpush1.bf16.msra.mxu0 0
    %2855 = vmatprep.mubr.bf16.mxu0 0
    %2856 = vmatmul.mubr.bf16.gmra.mrb[0].mxu0 %v1878
    %v2857 = vpop.f32.mrb[0].mxu0
    %v2858 = vadd.f32 %v1312, %v2857
    %v2859 = vpop.f32.mrb[0].mxu0
    %v2860 = vadd.f32 %v1316, %v2859
    %v2861 = vpop.f32.mrb[0].mxu0
    %v2862 = vpop.f32.mrb[0].mxu0
    %2863 = vdwg.mxu0
    %vm2864 = vcmp.gt.f32.partialorder %v1915, 0.0
    %vm2865 = vcmp.gt.f32.partialorder %v1917, 0.0
    %vm2866 = vcmp.gt.f32.partialorder %v1956, 0.0
    %vm2867 = vcmp.gt.f32.partialorder %v1958, 0.0
    %vm2868 = vcmp.gt.f32.partialorder %v1997, 0.0
    %vm2869 = vcmp.gt.f32.partialorder %v1999, 0.0
    %vm2870 = vcmp.gt.f32.partialorder %v2038, 0.0
    %vm2871 = vcmp.gt.f32.partialorder %v2040, 0.0
    %vm2872 = vcmp.gt.f32.partialorder %v2079, 0.0
    %vm2873 = vcmp.gt.f32.partialorder %v2081, 0.0
    %vm2874 = vcmp.gt.f32.partialorder %v2120, 0.0
    %vm2875 = vcmp.gt.f32.partialorder %v2122, 0.0
    %vm2876 = vcmp.gt.f32.partialorder %v2161, 0.0
    %vm2877 = vcmp.gt.f32.partialorder %v2163, 0.0
    %vm2878 = vcmp.gt.f32.partialorder %v2202, 0.0
    %vm2879 = vcmp.gt.f32.partialorder %v2204, 0.0
    %vm2880 = vcmp.gt.f32.partialorder %v2243, 0.0
    %vm2881 = vcmp.gt.f32.partialorder %v2245, 0.0
    %vm2882 = vcmp.gt.f32.partialorder %v2284, 0.0
    %vm2883 = vcmp.gt.f32.partialorder %v2286, 0.0
    %vm2884 = vcmp.gt.f32.partialorder %v2325, 0.0
    %vm2885 = vcmp.gt.f32.partialorder %v2327, 0.0
    %vm2886 = vcmp.gt.f32.partialorder %v2366, 0.0
    %vm2887 = vcmp.gt.f32.partialorder %v2368, 0.0
    %vm2888 = vcmp.gt.f32.partialorder %v2407, 0.0
    %vm2889 = vcmp.gt.f32.partialorder %v2409, 0.0
    %vm2890 = vcmp.gt.f32.partialorder %v2448, 0.0
    %vm2891 = vcmp.gt.f32.partialorder %v2450, 0.0
    %vm2892 = vcmp.gt.f32.partialorder %v2489, 0.0
    %vm2893 = vcmp.gt.f32.partialorder %v2491, 0.0
    %vm2894 = vcmp.gt.f32.partialorder %v2530, 0.0
    %vm2895 = vcmp.gt.f32.partialorder %v2532, 0.0
    %vm2896 = vcmp.gt.f32.partialorder %v2571, 0.0
    %vm2897 = vcmp.gt.f32.partialorder %v2573, 0.0
    %vm2898 = vcmp.gt.f32.partialorder %v2612, 0.0
    %vm2899 = vcmp.gt.f32.partialorder %v2614, 0.0
    %vm2900 = vcmp.gt.f32.partialorder %v2653, 0.0
    %vm2901 = vcmp.gt.f32.partialorder %v2655, 0.0
    %vm2902 = vcmp.gt.f32.partialorder %v2694, 0.0
    %vm2903 = vcmp.gt.f32.partialorder %v2696, 0.0
    %vm2904 = vcmp.gt.f32.partialorder %v2735, 0.0
    %vm2905 = vcmp.gt.f32.partialorder %v2737, 0.0
    %vm2906 = vcmp.gt.f32.partialorder %v2776, 0.0
    %vm2907 = vcmp.gt.f32.partialorder %v2778, 0.0
    %vm2908 = vcmp.gt.f32.partialorder %v2817, 0.0
    %vm2909 = vcmp.gt.f32.partialorder %v2819, 0.0
    %vm2910 = vcmp.gt.f32.partialorder %v2858, 0.0
    %vm2911 = vcmp.gt.f32.partialorder %v2860, 0.0
    %v2912 = vmul.f32 %v1915, 1.442695
    %v2913 = vpow.pop %v2912
    %v2914 = vmul.f32 %v1917, 1.442695
    %v2915 = vpow.pop %v2914
    %v2916 = vmul.f32 %v1956, 1.442695
    %v2917 = vpow.pop %v2916
    %v2918 = vmul.f32 %v1958, 1.442695
    %v2919 = vpow.pop %v2918
    %v2920 = vmul.f32 %v1997, 1.442695
    %v2921 = vpow.pop %v2920
    %v2922 = vmul.f32 %v1999, 1.442695
    %v2923 = vpow.pop %v2922
    %v2924 = vmul.f32 %v2038, 1.442695
    %v2925 = vpow.pop %v2924
    %v2926 = vmul.f32 %v2040, 1.442695
    %v2927 = vpow.pop %v2926
    %v2928 = vmul.f32 %v2079, 1.442695
    %v2929 = vpow.pop %v2928
    %v2930 = vmul.f32 %v2081, 1.442695
    %v2931 = vpow.pop %v2930
    %v2932 = vmul.f32 %v2120, 1.442695
    %v2933 = vpow.pop %v2932
    %v2934 = vmul.f32 %v2122, 1.442695
    %v2935 = vpow.pop %v2934
    %v2936 = vmul.f32 %v2161, 1.442695
    %v2937 = vpow.pop %v2936
    %v2938 = vmul.f32 %v2163, 1.442695
    %v2939 = vpow.pop %v2938
    %v2940 = vmul.f32 %v2202, 1.442695
    %v2941 = vpow.pop %v2940
    %v2942 = vmul.f32 %v2204, 1.442695
    %v2943 = vpow.pop %v2942
    %v2944 = vmul.f32 %v2243, 1.442695
    %v2945 = vpow.pop %v2944
    %v2946 = vmul.f32 %v2245, 1.442695
    %v2947 = vpow.pop %v2946
    %v2948 = vmul.f32 %v2284, 1.442695
    %v2949 = vpow.pop %v2948
    %v2950 = vmul.f32 %v2286, 1.442695
    %v2951 = vpow.pop %v2950
    %v2952 = vmul.f32 %v2325, 1.442695
    %v2953 = vpow.pop %v2952
    %v2954 = vmul.f32 %v2327, 1.442695
    %v2955 = vpow.pop %v2954
    %v2956 = vmul.f32 %v2366, 1.442695
    %v2957 = vpow.pop %v2956
    %v2958 = vmul.f32 %v2368, 1.442695
    %v2959 = vpow.pop %v2958
    %v2960 = vmul.f32 %v2407, 1.442695
    %v2961 = vpow.pop %v2960
    %v2962 = vmul.f32 %v2409, 1.442695
    %v2963 = vpow.pop %v2962
    %v2964 = vmul.f32 %v2448, 1.442695
    %v2965 = vpow.pop %v2964
    %v2966 = vmul.f32 %v2450, 1.442695
    %v2967 = vpow.pop %v2966
    %v2968 = vmul.f32 %v2489, 1.442695
    %v2969 = vpow.pop %v2968
    %v2970 = vmul.f32 %v2491, 1.442695
    %v2971 = vpow.pop %v2970
    %v2972 = vmul.f32 %v2530, 1.442695
    %v2973 = vpow.pop %v2972
    %v2974 = vmul.f32 %v2532, 1.442695
    %v2975 = vpow.pop %v2974
    %v2976 = vmul.f32 %v2571, 1.442695
    %v2977 = vpow.pop %v2976
    %v2978 = vmul.f32 %v2573, 1.442695
    %v2979 = vpow.pop %v2978
    %v2980 = vmul.f32 %v2612, 1.442695
    %v2981 = vpow.pop %v2980
    %v2982 = vmul.f32 %v2614, 1.442695
    %v2983 = vpow.pop %v2982
    %v2984 = vmul.f32 %v2653, 1.442695
    %v2985 = vpow.pop %v2984
    %v2986 = vmul.f32 %v2655, 1.442695
    %v2987 = vpow.pop %v2986
    %v2988 = vmul.f32 %v2694, 1.442695
    %v2989 = vpow.pop %v2988
    %v2990 = vmul.f32 %v2696, 1.442695
    %v2991 = vpow.pop %v2990
    %v2992 = vmul.f32 %v2735, 1.442695
    %v2993 = vpow.pop %v2992
    %v2994 = vmul.f32 %v2737, 1.442695
    %v2995 = vpow.pop %v2994
    %v2996 = vmul.f32 %v2776, 1.442695
    %v2997 = vpow.pop %v2996
    %v2998 = vmul.f32 %v2778, 1.442695
    %v2999 = vpow.pop %v2998
    %v3000 = vmul.f32 %v2817, 1.442695
    %v3001 = vpow.pop %v3000
    %v3002 = vmul.f32 %v2819, 1.442695
    %v3003 = vpow.pop %v3002
    %v3004 = vmul.f32 %v2858, 1.442695
    %v3005 = vpow.pop %v3004
    %v3006 = vmul.f32 %v2860, 1.442695
    %v3007 = vpow.pop %v3006
    %v3008 = vsub.f32 %v2913, 1.0
    %v3009 = vsub.f32 %v2915, 1.0
    %v3010 = vsub.f32 %v2917, 1.0
    %v3011 = vsub.f32 %v2919, 1.0
    %v3012 = vsub.f32 %v2921, 1.0
    %v3013 = vsub.f32 %v2923, 1.0
    %v3014 = vsub.f32 %v2925, 1.0
    %v3015 = vsub.f32 %v2927, 1.0
    %v3016 = vsub.f32 %v2929, 1.0
    %v3017 = vsub.f32 %v2931, 1.0
    %v3018 = vsub.f32 %v2933, 1.0
    %v3019 = vsub.f32 %v2935, 1.0
    %v3020 = vsub.f32 %v2937, 1.0
    %v3021 = vsub.f32 %v2939, 1.0
    %v3022 = vsub.f32 %v2941, 1.0
    %v3023 = vsub.f32 %v2943, 1.0
    %v3024 = vsub.f32 %v2945, 1.0
    %v3025 = vsub.f32 %v2947, 1.0
    %v3026 = vsub.f32 %v2949, 1.0
    %v3027 = vsub.f32 %v2951, 1.0
    %v3028 = vsub.f32 %v2953, 1.0
    %v3029 = vsub.f32 %v2955, 1.0
    %v3030 = vsub.f32 %v2957, 1.0
    %v3031 = vsub.f32 %v2959, 1.0
    %v3032 = vsub.f32 %v2961, 1.0
    %v3033 = vsub.f32 %v2963, 1.0
    %v3034 = vsub.f32 %v2965, 1.0
    %v3035 = vsub.f32 %v2967, 1.0
    %v3036 = vsub.f32 %v2969, 1.0
    %v3037 = vsub.f32 %v2971, 1.0
    %v3038 = vsub.f32 %v2973, 1.0
    %v3039 = vsub.f32 %v2975, 1.0
    %v3040 = vsub.f32 %v2977, 1.0
    %v3041 = vsub.f32 %v2979, 1.0
    %v3042 = vsub.f32 %v2981, 1.0
    %v3043 = vsub.f32 %v2983, 1.0
    %v3044 = vsub.f32 %v2985, 1.0
    %v3045 = vsub.f32 %v2987, 1.0
    %v3046 = vsub.f32 %v2989, 1.0
    %v3047 = vsub.f32 %v2991, 1.0
    %v3048 = vsub.f32 %v2993, 1.0
    %v3049 = vsub.f32 %v2995, 1.0
    %v3050 = vsub.f32 %v2997, 1.0
    %v3051 = vsub.f32 %v2999, 1.0
    %v3052 = vsub.f32 %v3001, 1.0
    %v3053 = vsub.f32 %v3003, 1.0
    %v3054 = vsub.f32 %v3005, 1.0
    %v3055 = vsub.f32 %v3007, 1.0
    %v3056 = vmul.f32 %v3008, 1.6732632
    %v3057 = vmul.f32 %v3009, 1.6732632
    %v3058 = vmul.f32 %v3010, 1.6732632
    %v3059 = vmul.f32 %v3011, 1.6732632
    %v3060 = vmul.f32 %v3012, 1.6732632
    %v3061 = vmul.f32 %v3013, 1.6732632
    %v3062 = vmul.f32 %v3014, 1.6732632
    %v3063 = vmul.f32 %v3015, 1.6732632
    %v3064 = vmul.f32 %v3016, 1.6732632
    %v3065 = vmul.f32 %v3017, 1.6732632
    %v3066 = vmul.f32 %v3018, 1.6732632
    %v3067 = vmul.f32 %v3019, 1.6732632
    %v3068 = vmul.f32 %v3020, 1.6732632
    %v3069 = vmul.f32 %v3021, 1.6732632
    %v3070 = vmul.f32 %v3022, 1.6732632
    %v3071 = vmul.f32 %v3023, 1.6732632
    %v3072 = vmul.f32 %v3024, 1.6732632
    %v3073 = vmul.f32 %v3025, 1.6732632
    %v3074 = vmul.f32 %v3026, 1.6732632
    %v3075 = vmul.f32 %v3027, 1.6732632
    %v3076 = vmul.f32 %v3028, 1.6732632
    %v3077 = vmul.f32 %v3029, 1.6732632
    %v3078 = vmul.f32 %v3030, 1.6732632
    %v3079 = vmul.f32 %v3031, 1.6732632
    %v3080 = vmul.f32 %v3032, 1.6732632
    %v3081 = vmul.f32 %v3033, 1.6732632
    %v3082 = vmul.f32 %v3034, 1.6732632
    %v3083 = vmul.f32 %v3035, 1.6732632
    %v3084 = vmul.f32 %v3036, 1.6732632
    %v3085 = vmul.f32 %v3037, 1.6732632
    %v3086 = vmul.f32 %v3038, 1.6732632
    %v3087 = vmul.f32 %v3039, 1.6732632
    %v3088 = vmul.f32 %v3040, 1.6732632
    %v3089 = vmul.f32 %v3041, 1.6732632
    %v3090 = vmul.f32 %v3042, 1.6732632
    %v3091 = vmul.f32 %v3043, 1.6732632
    %v3092 = vmul.f32 %v3044, 1.6732632
    %v3093 = vmul.f32 %v3045, 1.6732632
    %v3094 = vmul.f32 %v3046, 1.6732632
    %v3095 = vmul.f32 %v3047, 1.6732632
    %v3096 = vmul.f32 %v3048, 1.6732632
    %v3097 = vmul.f32 %v3049, 1.6732632
    %v3098 = vmul.f32 %v3050, 1.6732632
    %v3099 = vmul.f32 %v3051, 1.6732632
    %v3100 = vmul.f32 %v3052, 1.6732632
    %v3101 = vmul.f32 %v3053, 1.6732632
    %v3102 = vmul.f32 %v3054, 1.6732632
    %v3103 = vmul.f32 %v3055, 1.6732632
    %v3104 = vsel %vm2864, %v1915, %v3056
    %v3105 = vsel %vm2865, %v1917, %v3057
    %v3106 = vsel %vm2866, %v1956, %v3058
    %v3107 = vsel %vm2867, %v1958, %v3059
    %v3108 = vsel %vm2868, %v1997, %v3060
    %v3109 = vsel %vm2869, %v1999, %v3061
    %v3110 = vsel %vm2870, %v2038, %v3062
    %v3111 = vsel %vm2871, %v2040, %v3063
    %v3112 = vsel %vm2872, %v2079, %v3064
    %v3113 = vsel %vm2873, %v2081, %v3065
    %v3114 = vsel %vm2874, %v2120, %v3066
    %v3115 = vsel %vm2875, %v2122, %v3067
    %v3116 = vsel %vm2876, %v2161, %v3068
    %v3117 = vsel %vm2877, %v2163, %v3069
    %v3118 = vsel %vm2878, %v2202, %v3070
    %v3119 = vsel %vm2879, %v2204, %v3071
    %v3120 = vsel %vm2880, %v2243, %v3072
    %v3121 = vsel %vm2881, %v2245, %v3073
    %v3122 = vsel %vm2882, %v2284, %v3074
    %v3123 = vsel %vm2883, %v2286, %v3075
    %v3124 = vsel %vm2884, %v2325, %v3076
    %v3125 = vsel %vm2885, %v2327, %v3077
    %v3126 = vsel %vm2886, %v2366, %v3078
    %v3127 = vsel %vm2887, %v2368, %v3079
    %v3128 = vsel %vm2888, %v2407, %v3080
    %v3129 = vsel %vm2889, %v2409, %v3081
    %v3130 = vsel %vm2890, %v2448, %v3082
    %v3131 = vsel %vm2891, %v2450, %v3083
    %v3132 = vsel %vm2892, %v2489, %v3084
    %v3133 = vsel %vm2893, %v2491, %v3085
    %v3134 = vsel %vm2894, %v2530, %v3086
    %v3135 = vsel %vm2895, %v2532, %v3087
    %v3136 = vsel %vm2896, %v2571, %v3088
    %v3137 = vsel %vm2897, %v2573, %v3089
    %v3138 = vsel %vm2898, %v2612, %v3090
    %v3139 = vsel %vm2899, %v2614, %v3091
    %v3140 = vsel %vm2900, %v2653, %v3092
    %v3141 = vsel %vm2901, %v2655, %v3093
    %v3142 = vsel %vm2902, %v2694, %v3094
    %v3143 = vsel %vm2903, %v2696, %v3095
    %v3144 = vsel %vm2904, %v2735, %v3096
    %v3145 = vsel %vm2905, %v2737, %v3097
    %v3146 = vsel %vm2906, %v2776, %v3098
    %v3147 = vsel %vm2907, %v2778, %v3099
    %v3148 = vsel %vm2908, %v2817, %v3100
    %v3149 = vsel %vm2909, %v2819, %v3101
    %v3150 = vsel %vm2910, %v2858, %v3102
    %v3151 = vsel %vm2911, %v2860, %v3103
    %v3152 = vmul.f32 %v3104, 1.050701
    %v3153 = vmul.f32 %v3105, 1.050701
    %v3154 = vmul.f32 %v3106, 1.050701
    %v3155 = vmul.f32 %v3107, 1.050701
    %v3156 = vmul.f32 %v3108, 1.050701
    %v3157 = vmul.f32 %v3109, 1.050701
    %v3158 = vmul.f32 %v3110, 1.050701
    %v3159 = vmul.f32 %v3111, 1.050701
    %v3160 = vmul.f32 %v3112, 1.050701
    %v3161 = vmul.f32 %v3113, 1.050701
    %v3162 = vmul.f32 %v3114, 1.050701
    %v3163 = vmul.f32 %v3115, 1.050701
    %v3164 = vmul.f32 %v3116, 1.050701
    %v3165 = vmul.f32 %v3117, 1.050701
    %v3166 = vmul.f32 %v3118, 1.050701
    %v3167 = vmul.f32 %v3119, 1.050701
    %v3168 = vmul.f32 %v3120, 1.050701
    %v3169 = vmul.f32 %v3121, 1.050701
    %v3170 = vmul.f32 %v3122, 1.050701
    %v3171 = vmul.f32 %v3123, 1.050701
    %v3172 = vmul.f32 %v3124, 1.050701
    %v3173 = vmul.f32 %v3125, 1.050701
    %v3174 = vmul.f32 %v3126, 1.050701
    %v3175 = vmul.f32 %v3127, 1.050701
    %v3176 = vmul.f32 %v3128, 1.050701
    %v3177 = vmul.f32 %v3129, 1.050701
    %v3178 = vmul.f32 %v3130, 1.050701
    %v3179 = vmul.f32 %v3131, 1.050701
    %v3180 = vmul.f32 %v3132, 1.050701
    %v3181 = vmul.f32 %v3133, 1.050701
    %v3182 = vmul.f32 %v3134, 1.050701
    %v3183 = vmul.f32 %v3135, 1.050701
    %v3184 = vmul.f32 %v3136, 1.050701
    %v3185 = vmul.f32 %v3137, 1.050701
    %v3186 = vmul.f32 %v3138, 1.050701
    %v3187 = vmul.f32 %v3139, 1.050701
    %v3188 = vmul.f32 %v3140, 1.050701
    %v3189 = vmul.f32 %v3141, 1.050701
    %v3190 = vmul.f32 %v3142, 1.050701
    %v3191 = vmul.f32 %v3143, 1.050701
    %v3192 = vmul.f32 %v3144, 1.050701
    %v3193 = vmul.f32 %v3145, 1.050701
    %v3194 = vmul.f32 %v3146, 1.050701
    %v3195 = vmul.f32 %v3147, 1.050701
    %v3196 = vmul.f32 %v3148, 1.050701
    %v3197 = vmul.f32 %v3149, 1.050701
    %v3198 = vmul.f32 %v3150, 1.050701
    %v3199 = vmul.f32 %v3151, 1.050701
    %v3200 = vpack.c.bf16 %v3152, %v3152
    %v3201 = vpack.c.bf16 %v3153, %v3153
    %v3202 = vpack.c.bf16 %v3154, %v3154
    %v3203 = vpack.c.bf16 %v3155, %v3155
    %v3204 = vpack.c.bf16 %v3156, %v3156
    %v3205 = vpack.c.bf16 %v3157, %v3157
    %v3206 = vpack.c.bf16 %v3158, %v3158
    %v3207 = vpack.c.bf16 %v3159, %v3159
    %v3208 = vpack.c.bf16 %v3160, %v3160
    %v3209 = vpack.c.bf16 %v3161, %v3161
    %v3210 = vpack.c.bf16 %v3162, %v3162
    %v3211 = vpack.c.bf16 %v3163, %v3163
    %v3212 = vpack.c.bf16 %v3164, %v3164
    %v3213 = vpack.c.bf16 %v3165, %v3165
    %v3214 = vpack.c.bf16 %v3166, %v3166
    %v3215 = vpack.c.bf16 %v3167, %v3167
    %v3216 = vpack.c.bf16 %v3168, %v3168
    %v3217 = vpack.c.bf16 %v3169, %v3169
    %v3218 = vpack.c.bf16 %v3170, %v3170
    %v3219 = vpack.c.bf16 %v3171, %v3171
    %v3220 = vpack.c.bf16 %v3172, %v3172
    %v3221 = vpack.c.bf16 %v3173, %v3173
    %v3222 = vpack.c.bf16 %v3174, %v3174
    %v3223 = vpack.c.bf16 %v3175, %v3175
    %v3224 = vpack.c.bf16 %v3176, %v3176
    %v3225 = vpack.c.bf16 %v3177, %v3177
    %v3226 = vpack.c.bf16 %v3178, %v3178
    %v3227 = vpack.c.bf16 %v3179, %v3179
    %v3228 = vpack.c.bf16 %v3180, %v3180
    %v3229 = vpack.c.bf16 %v3181, %v3181
    %v3230 = vpack.c.bf16 %v3182, %v3182
    %v3231 = vpack.c.bf16 %v3183, %v3183
    %v3232 = vpack.c.bf16 %v3184, %v3184
    %v3233 = vpack.c.bf16 %v3185, %v3185
    %v3234 = vpack.c.bf16 %v3186, %v3186
    %v3235 = vpack.c.bf16 %v3187, %v3187
    %v3236 = vpack.c.bf16 %v3188, %v3188
    %v3237 = vpack.c.bf16 %v3189, %v3189
    %v3238 = vpack.c.bf16 %v3190, %v3190
    %v3239 = vpack.c.bf16 %v3191, %v3191
    %v3240 = vpack.c.bf16 %v3192, %v3192
    %v3241 = vpack.c.bf16 %v3193, %v3193
    %v3242 = vpack.c.bf16 %v3194, %v3194
    %v3243 = vpack.c.bf16 %v3195, %v3195
    %v3244 = vpack.c.bf16 %v3196, %v3196
    %v3245 = vpack.c.bf16 %v3197, %v3197
    %v3246 = vpack.c.bf16 %v3198, %v3198
    %v3247 = vpack.c.bf16 %v3199, %v3199
    %v3248 = vld [vmem:[#allocation7] sm:$0xff]
    %v3249 = vld [vmem:[#allocation7 + $0x8] sm:$0xff]
    %v3250 = vld [vmem:[#allocation7 + $0x10] sm:$0xff]
    %v3251 = vld [vmem:[#allocation7 + $0x18] sm:$0xff]
    %v3252 = vld [vmem:[#allocation7 + $0x20] sm:$0xff]
    %v3253 = vld [vmem:[#allocation7 + $0x28] sm:$0xff]
    %v3254 = vld [vmem:[#allocation7 + $0x30] sm:$0xff]
    %v3255 = vld [vmem:[#allocation7 + $0x38] sm:$0xff]
    %v3256 = vld [vmem:[#allocation7 + $0x40] sm:$0xff]
    %v3257 = vld [vmem:[#allocation7 + $0x48] sm:$0xff]
    %v3258 = vld [vmem:[#allocation7 + $0x50] sm:$0xff]
    %v3259 = vld [vmem:[#allocation7 + $0x58] sm:$0xff]
    %v3260 = vld [vmem:[#allocation7 + $0x60] sm:$0xff]
    %v3261 = vld [vmem:[#allocation7 + $0x68] sm:$0xff]
    %v3262 = vld [vmem:[#allocation7 + $0x70] sm:$0xff]
    %v3263 = vld [vmem:[#allocation7 + $0x78] sm:$0xff]
    %v3264 = vld [vmem:[#allocation7 + $0x80] sm:$0xff]
    %v3265 = vld [vmem:[#allocation7 + $0x88] sm:$0xff]
    %v3266 = vld [vmem:[#allocation7 + $0x90] sm:$0xff]
    %v3267 = vld [vmem:[#allocation7 + $0x98] sm:$0xff]
    %v3268 = vld [vmem:[#allocation7 + $0xa0] sm:$0xff]
    %v3269 = vld [vmem:[#allocation7 + $0xa8] sm:$0xff]
    %v3270 = vld [vmem:[#allocation7 + $0xb0] sm:$0xff]
    %v3271 = vld [vmem:[#allocation7 + $0xb8] sm:$0xff]
    %v3272 = vld [vmem:[#allocation7 + $0xc0] sm:$0xff]
    %v3273 = vld [vmem:[#allocation7 + $0xc8] sm:$0xff]
    %v3274 = vld [vmem:[#allocation7 + $0xd0] sm:$0xff]
    %v3275 = vld [vmem:[#allocation7 + $0xd8] sm:$0xff]
    %v3276 = vld [vmem:[#allocation7 + $0xe0] sm:$0xff]
    %v3277 = vld [vmem:[#allocation7 + $0xe8] sm:$0xff]
    %v3278 = vld [vmem:[#allocation7 + $0xf0] sm:$0xff]
    %v3279 = vld [vmem:[#allocation7 + $0xf8] sm:$0xff]
    %v3280 = vld [vmem:[#allocation7 + $0x100] sm:$0xff]
    %v3281 = vld [vmem:[#allocation7 + $0x108] sm:$0xff]
    %v3282 = vld [vmem:[#allocation7 + $0x110] sm:$0xff]
    %v3283 = vld [vmem:[#allocation7 + $0x118] sm:$0xff]
    %v3284 = vld [vmem:[#allocation7 + $0x120] sm:$0xff]
    %v3285 = vld [vmem:[#allocation7 + $0x128] sm:$0xff]
    %v3286 = vld [vmem:[#allocation7 + $0x130] sm:$0xff]
    %v3287 = vld [vmem:[#allocation7 + $0x138] sm:$0xff]
    %v3288 = vld [vmem:[#allocation7 + $0x140] sm:$0xff]
    %v3289 = vld [vmem:[#allocation7 + $0x148] sm:$0xff]
    %v3290 = vld [vmem:[#allocation7 + $0x150] sm:$0xff]
    %v3291 = vld [vmem:[#allocation7 + $0x158] sm:$0xff]
    %v3292 = vld [vmem:[#allocation7 + $0x160] sm:$0xff]
    %v3293 = vld [vmem:[#allocation7 + $0x168] sm:$0xff]
    %v3294 = vld [vmem:[#allocation7 + $0x170] sm:$0xff]
    %v3295 = vld [vmem:[#allocation7 + $0x178] sm:$0xff]
    %v3296 = vld [vmem:[#allocation7 + $0x180] sm:$0xff]
    %v3297 = vld [vmem:[#allocation7 + $0x188] sm:$0xff]
    %v3298 = vld [vmem:[#allocation7 + $0x190] sm:$0xff]
    %v3299 = vld [vmem:[#allocation7 + $0x198] sm:$0xff]
    %v3300 = vld [vmem:[#allocation7 + $0x1a0] sm:$0xff]
    %v3301 = vld [vmem:[#allocation7 + $0x1a8] sm:$0xff]
    %v3302 = vld [vmem:[#allocation7 + $0x1b0] sm:$0xff]
    %v3303 = vld [vmem:[#allocation7 + $0x1b8] sm:$0xff]
    %v3304 = vld [vmem:[#allocation7 + $0x1c0] sm:$0xff]
    %v3305 = vld [vmem:[#allocation7 + $0x1c8] sm:$0xff]
    %v3306 = vld [vmem:[#allocation7 + $0x1d0] sm:$0xff]
    %v3307 = vld [vmem:[#allocation7 + $0x1d8] sm:$0xff]
    %v3308 = vld [vmem:[#allocation7 + $0x1e0] sm:$0xff]
    %v3309 = vld [vmem:[#allocation7 + $0x1e8] sm:$0xff]
    %v3310 = vld [vmem:[#allocation7 + $0x1f0] sm:$0xff]
    %v3311 = vld [vmem:[#allocation7 + $0x1f8] sm:$0xff]
    %v3312 = vld [vmem:[#allocation7 + $0x200] sm:$0xff]
    %v3313 = vld [vmem:[#allocation7 + $0x208] sm:$0xff]
    %v3314 = vld [vmem:[#allocation7 + $0x210] sm:$0xff]
    %v3315 = vld [vmem:[#allocation7 + $0x218] sm:$0xff]
    %v3316 = vld [vmem:[#allocation7 + $0x220] sm:$0xff]
    %v3317 = vld [vmem:[#allocation7 + $0x228] sm:$0xff]
    %v3318 = vld [vmem:[#allocation7 + $0x230] sm:$0xff]
    %v3319 = vld [vmem:[#allocation7 + $0x238] sm:$0xff]
    %v3320 = vld [vmem:[#allocation7 + $0x240] sm:$0xff]
    %v3321 = vld [vmem:[#allocation7 + $0x248] sm:$0xff]
    %v3322 = vld [vmem:[#allocation7 + $0x250] sm:$0xff]
    %v3323 = vld [vmem:[#allocation7 + $0x258] sm:$0xff]
    %v3324 = vld [vmem:[#allocation7 + $0x260] sm:$0xff]
    %v3325 = vld [vmem:[#allocation7 + $0x268] sm:$0xff]
    %v3326 = vld [vmem:[#allocation7 + $0x270] sm:$0xff]
    %v3327 = vld [vmem:[#allocation7 + $0x278] sm:$0xff]
    %v3328 = vld [vmem:[#allocation7 + $0x280] sm:$0xff]
    %v3329 = vld [vmem:[#allocation7 + $0x288] sm:$0xff]
    %v3330 = vld [vmem:[#allocation7 + $0x290] sm:$0xff]
    %v3331 = vld [vmem:[#allocation7 + $0x298] sm:$0xff]
    %v3332 = vld [vmem:[#allocation7 + $0x2a0] sm:$0xff]
    %v3333 = vld [vmem:[#allocation7 + $0x2a8] sm:$0xff]
    %v3334 = vld [vmem:[#allocation7 + $0x2b0] sm:$0xff]
    %v3335 = vld [vmem:[#allocation7 + $0x2b8] sm:$0xff]
    %v3336 = vld [vmem:[#allocation7 + $0x2c0] sm:$0xff]
    %v3337 = vld [vmem:[#allocation7 + $0x2c8] sm:$0xff]
    %v3338 = vld [vmem:[#allocation7 + $0x2d0] sm:$0xff]
    %v3339 = vld [vmem:[#allocation7 + $0x2d8] sm:$0xff]
    %v3340 = vld [vmem:[#allocation7 + $0x2e0] sm:$0xff]
    %v3341 = vld [vmem:[#allocation7 + $0x2e8] sm:$0xff]
    %v3342 = vld [vmem:[#allocation7 + $0x2f0] sm:$0xff]
    %v3343 = vld [vmem:[#allocation7 + $0x2f8] sm:$0xff]
    %v3344 = vld [vmem:[#allocation7 + $0x300] sm:$0xff]
    %v3345 = vld [vmem:[#allocation7 + $0x308] sm:$0xff]
    %v3346 = vld [vmem:[#allocation7 + $0x310] sm:$0xff]
    %v3347 = vld [vmem:[#allocation7 + $0x318] sm:$0xff]
    %v3348 = vld [vmem:[#allocation7 + $0x320] sm:$0xff]
    %v3349 = vld [vmem:[#allocation7 + $0x328] sm:$0xff]
    %v3350 = vld [vmem:[#allocation7 + $0x330] sm:$0xff]
    %v3351 = vld [vmem:[#allocation7 + $0x338] sm:$0xff]
    %v3352 = vld [vmem:[#allocation7 + $0x340] sm:$0xff]
    %v3353 = vld [vmem:[#allocation7 + $0x348] sm:$0xff]
    %v3354 = vld [vmem:[#allocation7 + $0x350] sm:$0xff]
    %v3355 = vld [vmem:[#allocation7 + $0x358] sm:$0xff]
    %v3356 = vld [vmem:[#allocation7 + $0x360] sm:$0xff]
    %v3357 = vld [vmem:[#allocation7 + $0x368] sm:$0xff]
    %v3358 = vld [vmem:[#allocation7 + $0x370] sm:$0xff]
    %v3359 = vld [vmem:[#allocation7 + $0x378] sm:$0xff]
    %v3360 = vld [vmem:[#allocation7 + $0x380] sm:$0xff]
    %v3361 = vld [vmem:[#allocation7 + $0x388] sm:$0xff]
    %v3362 = vld [vmem:[#allocation7 + $0x390] sm:$0xff]
    %v3363 = vld [vmem:[#allocation7 + $0x398] sm:$0xff]
    %v3364 = vld [vmem:[#allocation7 + $0x3a0] sm:$0xff]
    %v3365 = vld [vmem:[#allocation7 + $0x3a8] sm:$0xff]
    %v3366 = vld [vmem:[#allocation7 + $0x3b0] sm:$0xff]
    %v3367 = vld [vmem:[#allocation7 + $0x3b8] sm:$0xff]
    %v3368 = vld [vmem:[#allocation7 + $0x3c0] sm:$0xff]
    %v3369 = vld [vmem:[#allocation7 + $0x3c8] sm:$0xff]
    %v3370 = vld [vmem:[#allocation7 + $0x3d0] sm:$0xff]
    %v3371 = vld [vmem:[#allocation7 + $0x3d8] sm:$0xff]
    %v3372 = vld [vmem:[#allocation7 + $0x3e0] sm:$0xff]
    %v3373 = vld [vmem:[#allocation7 + $0x3e8] sm:$0xff]
    %v3374 = vld [vmem:[#allocation7 + $0x3f0] sm:$0xff]
    %v3375 = vld [vmem:[#allocation7 + $0x3f8] sm:$0xff]
    %v3376 = vld [vmem:[#allocation7 + $0x400] sm:$0xff]
    %v3377 = vld [vmem:[#allocation7 + $0x408] sm:$0xff]
    %v3378 = vld [vmem:[#allocation7 + $0x410] sm:$0xff]
    %v3379 = vld [vmem:[#allocation7 + $0x418] sm:$0xff]
    %v3380 = vld [vmem:[#allocation7 + $0x420] sm:$0xff]
    %v3381 = vld [vmem:[#allocation7 + $0x428] sm:$0xff]
    %v3382 = vld [vmem:[#allocation7 + $0x430] sm:$0xff]
    %v3383 = vld [vmem:[#allocation7 + $0x438] sm:$0xff]
    %v3384 = vld [vmem:[#allocation7 + $0x440] sm:$0xff]
    %v3385 = vld [vmem:[#allocation7 + $0x448] sm:$0xff]
    %v3386 = vld [vmem:[#allocation7 + $0x450] sm:$0xff]
    %v3387 = vld [vmem:[#allocation7 + $0x458] sm:$0xff]
    %v3388 = vld [vmem:[#allocation7 + $0x460] sm:$0xff]
    %v3389 = vld [vmem:[#allocation7 + $0x468] sm:$0xff]
    %v3390 = vld [vmem:[#allocation7 + $0x470] sm:$0xff]
    %v3391 = vld [vmem:[#allocation7 + $0x478] sm:$0xff]
    %v3392 = vld [vmem:[#allocation7 + $0x480] sm:$0xff]
    %v3393 = vld [vmem:[#allocation7 + $0x488] sm:$0xff]
    %v3394 = vld [vmem:[#allocation7 + $0x490] sm:$0xff]
    %v3395 = vld [vmem:[#allocation7 + $0x498] sm:$0xff]
    %v3396 = vld [vmem:[#allocation7 + $0x4a0] sm:$0xff]
    %v3397 = vld [vmem:[#allocation7 + $0x4a8] sm:$0xff]
    %v3398 = vld [vmem:[#allocation7 + $0x4b0] sm:$0xff]
    %v3399 = vld [vmem:[#allocation7 + $0x4b8] sm:$0xff]
    %v3400 = vld [vmem:[#allocation7 + $0x4c0] sm:$0xff]
    %v3401 = vld [vmem:[#allocation7 + $0x4c8] sm:$0xff]
    %v3402 = vld [vmem:[#allocation7 + $0x4d0] sm:$0xff]
    %v3403 = vld [vmem:[#allocation7 + $0x4d8] sm:$0xff]
    %v3404 = vld [vmem:[#allocation7 + $0x4e0] sm:$0xff]
    %v3405 = vld [vmem:[#allocation7 + $0x4e8] sm:$0xff]
    %v3406 = vld [vmem:[#allocation7 + $0x4f0] sm:$0xff]
    %v3407 = vld [vmem:[#allocation7 + $0x4f8] sm:$0xff]
    %v3408 = vld [vmem:[#allocation7 + $0x500] sm:$0xff]
    %v3409 = vld [vmem:[#allocation7 + $0x508] sm:$0xff]
    %v3410 = vld [vmem:[#allocation7 + $0x510] sm:$0xff]
    %v3411 = vld [vmem:[#allocation7 + $0x518] sm:$0xff]
    %v3412 = vld [vmem:[#allocation7 + $0x520] sm:$0xff]
    %v3413 = vld [vmem:[#allocation7 + $0x528] sm:$0xff]
    %v3414 = vld [vmem:[#allocation7 + $0x530] sm:$0xff]
    %v3415 = vld [vmem:[#allocation7 + $0x538] sm:$0xff]
    %v3416 = vld [vmem:[#allocation7 + $0x540] sm:$0xff]
    %v3417 = vld [vmem:[#allocation7 + $0x548] sm:$0xff]
    %v3418 = vld [vmem:[#allocation7 + $0x550] sm:$0xff]
    %v3419 = vld [vmem:[#allocation7 + $0x558] sm:$0xff]
    %v3420 = vld [vmem:[#allocation7 + $0x560] sm:$0xff]
    %v3421 = vld [vmem:[#allocation7 + $0x568] sm:$0xff]
    %v3422 = vld [vmem:[#allocation7 + $0x570] sm:$0xff]
    %v3423 = vld [vmem:[#allocation7 + $0x578] sm:$0xff]
    %v3424 = vld [vmem:[#allocation7 + $0x580] sm:$0xff]
    %v3425 = vld [vmem:[#allocation7 + $0x588] sm:$0xff]
    %v3426 = vld [vmem:[#allocation7 + $0x590] sm:$0xff]
    %v3427 = vld [vmem:[#allocation7 + $0x598] sm:$0xff]
    %v3428 = vld [vmem:[#allocation7 + $0x5a0] sm:$0xff]
    %v3429 = vld [vmem:[#allocation7 + $0x5a8] sm:$0xff]
    %v3430 = vld [vmem:[#allocation7 + $0x5b0] sm:$0xff]
    %v3431 = vld [vmem:[#allocation7 + $0x5b8] sm:$0xff]
    %v3432 = vld [vmem:[#allocation7 + $0x5c0] sm:$0xff]
    %v3433 = vld [vmem:[#allocation7 + $0x5c8] sm:$0xff]
    %v3434 = vld [vmem:[#allocation7 + $0x5d0] sm:$0xff]
    %v3435 = vld [vmem:[#allocation7 + $0x5d8] sm:$0xff]
    %v3436 = vld [vmem:[#allocation7 + $0x5e0] sm:$0xff]
    %v3437 = vld [vmem:[#allocation7 + $0x5e8] sm:$0xff]
    %v3438 = vld [vmem:[#allocation7 + $0x5f0] sm:$0xff]
    %v3439 = vld [vmem:[#allocation7 + $0x5f8] sm:$0xff]
    %v3440 = vld [vmem:[#allocation7 + $0x600] sm:$0xff]
    %v3441 = vld [vmem:[#allocation7 + $0x608] sm:$0xff]
    %v3442 = vld [vmem:[#allocation7 + $0x610] sm:$0xff]
    %v3443 = vld [vmem:[#allocation7 + $0x618] sm:$0xff]
    %v3444 = vld [vmem:[#allocation7 + $0x620] sm:$0xff]
    %v3445 = vld [vmem:[#allocation7 + $0x628] sm:$0xff]
    %v3446 = vld [vmem:[#allocation7 + $0x630] sm:$0xff]
    %v3447 = vld [vmem:[#allocation7 + $0x638] sm:$0xff]
    %v3448 = vld [vmem:[#allocation7 + $0x640] sm:$0xff]
    %v3449 = vld [vmem:[#allocation7 + $0x648] sm:$0xff]
    %v3450 = vld [vmem:[#allocation7 + $0x650] sm:$0xff]
    %v3451 = vld [vmem:[#allocation7 + $0x658] sm:$0xff]
    %v3452 = vld [vmem:[#allocation7 + $0x660] sm:$0xff]
    %v3453 = vld [vmem:[#allocation7 + $0x668] sm:$0xff]
    %v3454 = vld [vmem:[#allocation7 + $0x670] sm:$0xff]
    %v3455 = vld [vmem:[#allocation7 + $0x678] sm:$0xff]
    %v3456 = vld [vmem:[#allocation7 + $0x680] sm:$0xff]
    %v3457 = vld [vmem:[#allocation7 + $0x688] sm:$0xff]
    %v3458 = vld [vmem:[#allocation7 + $0x690] sm:$0xff]
    %v3459 = vld [vmem:[#allocation7 + $0x698] sm:$0xff]
    %v3460 = vld [vmem:[#allocation7 + $0x6a0] sm:$0xff]
    %v3461 = vld [vmem:[#allocation7 + $0x6a8] sm:$0xff]
    %v3462 = vld [vmem:[#allocation7 + $0x6b0] sm:$0xff]
    %v3463 = vld [vmem:[#allocation7 + $0x6b8] sm:$0xff]
    %v3464 = vld [vmem:[#allocation7 + $0x6c0] sm:$0xff]
    %v3465 = vld [vmem:[#allocation7 + $0x6c8] sm:$0xff]
    %v3466 = vld [vmem:[#allocation7 + $0x6d0] sm:$0xff]
    %v3467 = vld [vmem:[#allocation7 + $0x6d8] sm:$0xff]
    %v3468 = vld [vmem:[#allocation7 + $0x6e0] sm:$0xff]
    %v3469 = vld [vmem:[#allocation7 + $0x6e8] sm:$0xff]
    %v3470 = vld [vmem:[#allocation7 + $0x6f0] sm:$0xff]
    %v3471 = vld [vmem:[#allocation7 + $0x6f8] sm:$0xff]
    %v3472 = vld [vmem:[#allocation7 + $0x700] sm:$0xff]
    %v3473 = vld [vmem:[#allocation7 + $0x708] sm:$0xff]
    %v3474 = vld [vmem:[#allocation7 + $0x710] sm:$0xff]
    %v3475 = vld [vmem:[#allocation7 + $0x718] sm:$0xff]
    %v3476 = vld [vmem:[#allocation7 + $0x720] sm:$0xff]
    %v3477 = vld [vmem:[#allocation7 + $0x728] sm:$0xff]
    %v3478 = vld [vmem:[#allocation7 + $0x730] sm:$0xff]
    %v3479 = vld [vmem:[#allocation7 + $0x738] sm:$0xff]
    %v3480 = vld [vmem:[#allocation7 + $0x740] sm:$0xff]
    %v3481 = vld [vmem:[#allocation7 + $0x748] sm:$0xff]
    %v3482 = vld [vmem:[#allocation7 + $0x750] sm:$0xff]
    %v3483 = vld [vmem:[#allocation7 + $0x758] sm:$0xff]
    %v3484 = vld [vmem:[#allocation7 + $0x760] sm:$0xff]
    %v3485 = vld [vmem:[#allocation7 + $0x768] sm:$0xff]
    %v3486 = vld [vmem:[#allocation7 + $0x770] sm:$0xff]
    %v3487 = vld [vmem:[#allocation7 + $0x778] sm:$0xff]
    %v3488 = vld [vmem:[#allocation7 + $0x780] sm:$0xff]
    %v3489 = vld [vmem:[#allocation7 + $0x788] sm:$0xff]
    %v3490 = vld [vmem:[#allocation7 + $0x790] sm:$0xff]
    %v3491 = vld [vmem:[#allocation7 + $0x798] sm:$0xff]
    %v3492 = vld [vmem:[#allocation7 + $0x7a0] sm:$0xff]
    %v3493 = vld [vmem:[#allocation7 + $0x7a8] sm:$0xff]
    %v3494 = vld [vmem:[#allocation7 + $0x7b0] sm:$0xff]
    %v3495 = vld [vmem:[#allocation7 + $0x7b8] sm:$0xff]
    %v3496 = vld [vmem:[#allocation7 + $0x7c0] sm:$0xff]
    %v3497 = vld [vmem:[#allocation7 + $0x7c8] sm:$0xff]
    %v3498 = vld [vmem:[#allocation7 + $0x7d0] sm:$0xff]
    %v3499 = vld [vmem:[#allocation7 + $0x7d8] sm:$0xff]
    %v3500 = vld [vmem:[#allocation7 + $0x7e0] sm:$0xff]
    %v3501 = vld [vmem:[#allocation7 + $0x7e8] sm:$0xff]
    %v3502 = vld [vmem:[#allocation7 + $0x7f0] sm:$0xff]
    %v3503 = vld [vmem:[#allocation7 + $0x7f8] sm:$0xff]
    %v3504 = vld [vmem:[#allocation7 + $0x800] sm:$0xff]
    %v3505 = vld [vmem:[#allocation7 + $0x808] sm:$0xff]
    %v3506 = vld [vmem:[#allocation7 + $0x810] sm:$0xff]
    %v3507 = vld [vmem:[#allocation7 + $0x818] sm:$0xff]
    %v3508 = vld [vmem:[#allocation7 + $0x820] sm:$0xff]
    %v3509 = vld [vmem:[#allocation7 + $0x828] sm:$0xff]
    %v3510 = vld [vmem:[#allocation7 + $0x830] sm:$0xff]
    %v3511 = vld [vmem:[#allocation7 + $0x838] sm:$0xff]
    %v3512 = vld [vmem:[#allocation7 + $0x840] sm:$0xff]
    %v3513 = vld [vmem:[#allocation7 + $0x848] sm:$0xff]
    %v3514 = vld [vmem:[#allocation7 + $0x850] sm:$0xff]
    %v3515 = vld [vmem:[#allocation7 + $0x858] sm:$0xff]
    %v3516 = vld [vmem:[#allocation7 + $0x860] sm:$0xff]
    %v3517 = vld [vmem:[#allocation7 + $0x868] sm:$0xff]
    %v3518 = vld [vmem:[#allocation7 + $0x870] sm:$0xff]
    %v3519 = vld [vmem:[#allocation7 + $0x878] sm:$0xff]
    %v3520 = vld [vmem:[#allocation7 + $0x880] sm:$0xff]
    %v3521 = vld [vmem:[#allocation7 + $0x888] sm:$0xff]
    %v3522 = vld [vmem:[#allocation7 + $0x890] sm:$0xff]
    %v3523 = vld [vmem:[#allocation7 + $0x898] sm:$0xff]
    %v3524 = vld [vmem:[#allocation7 + $0x8a0] sm:$0xff]
    %v3525 = vld [vmem:[#allocation7 + $0x8a8] sm:$0xff]
    %v3526 = vld [vmem:[#allocation7 + $0x8b0] sm:$0xff]
    %v3527 = vld [vmem:[#allocation7 + $0x8b8] sm:$0xff]
    %v3528 = vld [vmem:[#allocation7 + $0x8c0] sm:$0xff]
    %v3529 = vld [vmem:[#allocation7 + $0x8c8] sm:$0xff]
    %v3530 = vld [vmem:[#allocation7 + $0x8d0] sm:$0xff]
    %v3531 = vld [vmem:[#allocation7 + $0x8d8] sm:$0xff]
    %v3532 = vld [vmem:[#allocation7 + $0x8e0] sm:$0xff]
    %v3533 = vld [vmem:[#allocation7 + $0x8e8] sm:$0xff]
    %v3534 = vld [vmem:[#allocation7 + $0x8f0] sm:$0xff]
    %v3535 = vld [vmem:[#allocation7 + $0x8f8] sm:$0xff]
    %v3536 = vld [vmem:[#allocation7 + $0x900] sm:$0xff]
    %v3537 = vld [vmem:[#allocation7 + $0x908] sm:$0xff]
    %v3538 = vld [vmem:[#allocation7 + $0x910] sm:$0xff]
    %v3539 = vld [vmem:[#allocation7 + $0x918] sm:$0xff]
    %v3540 = vld [vmem:[#allocation7 + $0x920] sm:$0xff]
    %v3541 = vld [vmem:[#allocation7 + $0x928] sm:$0xff]
    %v3542 = vld [vmem:[#allocation7 + $0x930] sm:$0xff]
    %v3543 = vld [vmem:[#allocation7 + $0x938] sm:$0xff]
    %v3544 = vld [vmem:[#allocation7 + $0x940] sm:$0xff]
    %v3545 = vld [vmem:[#allocation7 + $0x948] sm:$0xff]
    %v3546 = vld [vmem:[#allocation7 + $0x950] sm:$0xff]
    %v3547 = vld [vmem:[#allocation7 + $0x958] sm:$0xff]
    %v3548 = vld [vmem:[#allocation7 + $0x960] sm:$0xff]
    %v3549 = vld [vmem:[#allocation7 + $0x968] sm:$0xff]
    %v3550 = vld [vmem:[#allocation7 + $0x970] sm:$0xff]
    %v3551 = vld [vmem:[#allocation7 + $0x978] sm:$0xff]
    %v3552 = vld [vmem:[#allocation7 + $0x980] sm:$0xff]
    %v3553 = vld [vmem:[#allocation7 + $0x988] sm:$0xff]
    %v3554 = vld [vmem:[#allocation7 + $0x990] sm:$0xff]
    %v3555 = vld [vmem:[#allocation7 + $0x998] sm:$0xff]
    %v3556 = vld [vmem:[#allocation7 + $0x9a0] sm:$0xff]
    %v3557 = vld [vmem:[#allocation7 + $0x9a8] sm:$0xff]
    %v3558 = vld [vmem:[#allocation7 + $0x9b0] sm:$0xff]
    %v3559 = vld [vmem:[#allocation7 + $0x9b8] sm:$0xff]
    %v3560 = vld [vmem:[#allocation7 + $0x9c0] sm:$0xff]
    %v3561 = vld [vmem:[#allocation7 + $0x9c8] sm:$0xff]
    %v3562 = vld [vmem:[#allocation7 + $0x9d0] sm:$0xff]
    %v3563 = vld [vmem:[#allocation7 + $0x9d8] sm:$0xff]
    %v3564 = vld [vmem:[#allocation7 + $0x9e0] sm:$0xff]
    %v3565 = vld [vmem:[#allocation7 + $0x9e8] sm:$0xff]
    %v3566 = vld [vmem:[#allocation7 + $0x9f0] sm:$0xff]
    %v3567 = vld [vmem:[#allocation7 + $0x9f8] sm:$0xff]
    %v3568 = vld [vmem:[#allocation7 + $0xa00] sm:$0xff]
    %v3569 = vld [vmem:[#allocation7 + $0xa08] sm:$0xff]
    %v3570 = vld [vmem:[#allocation7 + $0xa10] sm:$0xff]
    %v3571 = vld [vmem:[#allocation7 + $0xa18] sm:$0xff]
    %v3572 = vld [vmem:[#allocation7 + $0xa20] sm:$0xff]
    %v3573 = vld [vmem:[#allocation7 + $0xa28] sm:$0xff]
    %v3574 = vld [vmem:[#allocation7 + $0xa30] sm:$0xff]
    %v3575 = vld [vmem:[#allocation7 + $0xa38] sm:$0xff]
    %v3576 = vld [vmem:[#allocation7 + $0xa40] sm:$0xff]
    %v3577 = vld [vmem:[#allocation7 + $0xa48] sm:$0xff]
    %v3578 = vld [vmem:[#allocation7 + $0xa50] sm:$0xff]
    %v3579 = vld [vmem:[#allocation7 + $0xa58] sm:$0xff]
    %v3580 = vld [vmem:[#allocation7 + $0xa60] sm:$0xff]
    %v3581 = vld [vmem:[#allocation7 + $0xa68] sm:$0xff]
    %v3582 = vld [vmem:[#allocation7 + $0xa70] sm:$0xff]
    %v3583 = vld [vmem:[#allocation7 + $0xa78] sm:$0xff]
    %v3584 = vld [vmem:[#allocation7 + $0xa80] sm:$0xff]
    %v3585 = vld [vmem:[#allocation7 + $0xa88] sm:$0xff]
    %v3586 = vld [vmem:[#allocation7 + $0xa90] sm:$0xff]
    %v3587 = vld [vmem:[#allocation7 + $0xa98] sm:$0xff]
    %v3588 = vld [vmem:[#allocation7 + $0xaa0] sm:$0xff]
    %v3589 = vld [vmem:[#allocation7 + $0xaa8] sm:$0xff]
    %v3590 = vld [vmem:[#allocation7 + $0xab0] sm:$0xff]
    %v3591 = vld [vmem:[#allocation7 + $0xab8] sm:$0xff]
    %v3592 = vld [vmem:[#allocation7 + $0xac0] sm:$0xff]
    %v3593 = vld [vmem:[#allocation7 + $0xac8] sm:$0xff]
    %v3594 = vld [vmem:[#allocation7 + $0xad0] sm:$0xff]
    %v3595 = vld [vmem:[#allocation7 + $0xad8] sm:$0xff]
    %v3596 = vld [vmem:[#allocation7 + $0xae0] sm:$0xff]
    %v3597 = vld [vmem:[#allocation7 + $0xae8] sm:$0xff]
    %v3598 = vld [vmem:[#allocation7 + $0xaf0] sm:$0xff]
    %v3599 = vld [vmem:[#allocation7 + $0xaf8] sm:$0xff]
    %v3600 = vld [vmem:[#allocation7 + $0xb00] sm:$0xff]
    %v3601 = vld [vmem:[#allocation7 + $0xb08] sm:$0xff]
    %v3602 = vld [vmem:[#allocation7 + $0xb10] sm:$0xff]
    %v3603 = vld [vmem:[#allocation7 + $0xb18] sm:$0xff]
    %v3604 = vld [vmem:[#allocation7 + $0xb20] sm:$0xff]
    %v3605 = vld [vmem:[#allocation7 + $0xb28] sm:$0xff]
    %v3606 = vld [vmem:[#allocation7 + $0xb30] sm:$0xff]
    %v3607 = vld [vmem:[#allocation7 + $0xb38] sm:$0xff]
    %v3608 = vld [vmem:[#allocation7 + $0xb40] sm:$0xff]
    %v3609 = vld [vmem:[#allocation7 + $0xb48] sm:$0xff]
    %v3610 = vld [vmem:[#allocation7 + $0xb50] sm:$0xff]
    %v3611 = vld [vmem:[#allocation7 + $0xb58] sm:$0xff]
    %v3612 = vld [vmem:[#allocation7 + $0xb60] sm:$0xff]
    %v3613 = vld [vmem:[#allocation7 + $0xb68] sm:$0xff]
    %v3614 = vld [vmem:[#allocation7 + $0xb70] sm:$0xff]
    %v3615 = vld [vmem:[#allocation7 + $0xb78] sm:$0xff]
    %v3616 = vld [vmem:[#allocation7 + $0xb80] sm:$0xff]
    %v3617 = vld [vmem:[#allocation7 + $0xb88] sm:$0xff]
    %v3618 = vld [vmem:[#allocation7 + $0xb90] sm:$0xff]
    %v3619 = vld [vmem:[#allocation7 + $0xb98] sm:$0xff]
    %v3620 = vld [vmem:[#allocation7 + $0xba0] sm:$0xff]
    %v3621 = vld [vmem:[#allocation7 + $0xba8] sm:$0xff]
    %v3622 = vld [vmem:[#allocation7 + $0xbb0] sm:$0xff]
    %v3623 = vld [vmem:[#allocation7 + $0xbb8] sm:$0xff]
    %v3624 = vld [vmem:[#allocation7 + $0xbc0] sm:$0xff]
    %v3625 = vld [vmem:[#allocation7 + $0xbc8] sm:$0xff]
    %v3626 = vld [vmem:[#allocation7 + $0xbd0] sm:$0xff]
    %v3627 = vld [vmem:[#allocation7 + $0xbd8] sm:$0xff]
    %v3628 = vld [vmem:[#allocation7 + $0xbe0] sm:$0xff]
    %v3629 = vld [vmem:[#allocation7 + $0xbe8] sm:$0xff]
    %v3630 = vld [vmem:[#allocation7 + $0xbf0] sm:$0xff]
    %v3631 = vld [vmem:[#allocation7 + $0xbf8] sm:$0xff]
    %v3632 = vld [vmem:[#allocation7 + $0xc00] sm:$0xff]
    %v3633 = vld [vmem:[#allocation7 + $0xc08] sm:$0xff]
    %v3634 = vld [vmem:[#allocation7 + $0xc10] sm:$0xff]
    %v3635 = vld [vmem:[#allocation7 + $0xc18] sm:$0xff]
    %v3636 = vld [vmem:[#allocation7 + $0xc20] sm:$0xff]
    %v3637 = vld [vmem:[#allocation7 + $0xc28] sm:$0xff]
    %v3638 = vld [vmem:[#allocation7 + $0xc30] sm:$0xff]
    %v3639 = vld [vmem:[#allocation7 + $0xc38] sm:$0xff]
    %v3640 = vld [vmem:[#allocation7 + $0xc40] sm:$0xff]
    %v3641 = vld [vmem:[#allocation7 + $0xc48] sm:$0xff]
    %v3642 = vld [vmem:[#allocation7 + $0xc50] sm:$0xff]
    %v3643 = vld [vmem:[#allocation7 + $0xc58] sm:$0xff]
    %v3644 = vld [vmem:[#allocation7 + $0xc60] sm:$0xff]
    %v3645 = vld [vmem:[#allocation7 + $0xc68] sm:$0xff]
    %v3646 = vld [vmem:[#allocation7 + $0xc70] sm:$0xff]
    %v3647 = vld [vmem:[#allocation7 + $0xc78] sm:$0xff]
    %v3648 = vld [vmem:[#allocation7 + $0xc80] sm:$0xff]
    %v3649 = vld [vmem:[#allocation7 + $0xc88] sm:$0xff]
    %v3650 = vld [vmem:[#allocation7 + $0xc90] sm:$0xff]
    %v3651 = vld [vmem:[#allocation7 + $0xc98] sm:$0xff]
    %v3652 = vld [vmem:[#allocation7 + $0xca0] sm:$0xff]
    %v3653 = vld [vmem:[#allocation7 + $0xca8] sm:$0xff]
    %v3654 = vld [vmem:[#allocation7 + $0xcb0] sm:$0xff]
    %v3655 = vld [vmem:[#allocation7 + $0xcb8] sm:$0xff]
    %v3656 = vld [vmem:[#allocation7 + $0xcc0] sm:$0xff]
    %v3657 = vld [vmem:[#allocation7 + $0xcc8] sm:$0xff]
    %v3658 = vld [vmem:[#allocation7 + $0xcd0] sm:$0xff]
    %v3659 = vld [vmem:[#allocation7 + $0xcd8] sm:$0xff]
    %v3660 = vld [vmem:[#allocation7 + $0xce0] sm:$0xff]
    %v3661 = vld [vmem:[#allocation7 + $0xce8] sm:$0xff]
    %v3662 = vld [vmem:[#allocation7 + $0xcf0] sm:$0xff]
    %v3663 = vld [vmem:[#allocation7 + $0xcf8] sm:$0xff]
    %v3664 = vld [vmem:[#allocation7 + $0xd00] sm:$0xff]
    %v3665 = vld [vmem:[#allocation7 + $0xd08] sm:$0xff]
    %v3666 = vld [vmem:[#allocation7 + $0xd10] sm:$0xff]
    %v3667 = vld [vmem:[#allocation7 + $0xd18] sm:$0xff]
    %v3668 = vld [vmem:[#allocation7 + $0xd20] sm:$0xff]
    %v3669 = vld [vmem:[#allocation7 + $0xd28] sm:$0xff]
    %v3670 = vld [vmem:[#allocation7 + $0xd30] sm:$0xff]
    %v3671 = vld [vmem:[#allocation7 + $0xd38] sm:$0xff]
    %v3672 = vld [vmem:[#allocation7 + $0xd40] sm:$0xff]
    %v3673 = vld [vmem:[#allocation7 + $0xd48] sm:$0xff]
    %v3674 = vld [vmem:[#allocation7 + $0xd50] sm:$0xff]
    %v3675 = vld [vmem:[#allocation7 + $0xd58] sm:$0xff]
    %v3676 = vld [vmem:[#allocation7 + $0xd60] sm:$0xff]
    %v3677 = vld [vmem:[#allocation7 + $0xd68] sm:$0xff]
    %v3678 = vld [vmem:[#allocation7 + $0xd70] sm:$0xff]
    %v3679 = vld [vmem:[#allocation7 + $0xd78] sm:$0xff]
    %v3680 = vld [vmem:[#allocation7 + $0xd80] sm:$0xff]
    %v3681 = vld [vmem:[#allocation7 + $0xd88] sm:$0xff]
    %v3682 = vld [vmem:[#allocation7 + $0xd90] sm:$0xff]
    %v3683 = vld [vmem:[#allocation7 + $0xd98] sm:$0xff]
    %v3684 = vld [vmem:[#allocation7 + $0xda0] sm:$0xff]
    %v3685 = vld [vmem:[#allocation7 + $0xda8] sm:$0xff]
    %v3686 = vld [vmem:[#allocation7 + $0xdb0] sm:$0xff]
    %v3687 = vld [vmem:[#allocation7 + $0xdb8] sm:$0xff]
    %v3688 = vld [vmem:[#allocation7 + $0xdc0] sm:$0xff]
    %v3689 = vld [vmem:[#allocation7 + $0xdc8] sm:$0xff]
    %v3690 = vld [vmem:[#allocation7 + $0xdd0] sm:$0xff]
    %v3691 = vld [vmem:[#allocation7 + $0xdd8] sm:$0xff]
    %v3692 = vld [vmem:[#allocation7 + $0xde0] sm:$0xff]
    %v3693 = vld [vmem:[#allocation7 + $0xde8] sm:$0xff]
    %v3694 = vld [vmem:[#allocation7 + $0xdf0] sm:$0xff]
    %v3695 = vld [vmem:[#allocation7 + $0xdf8] sm:$0xff]
    %v3696 = vld [vmem:[#allocation7 + $0xe00] sm:$0xff]
    %v3697 = vld [vmem:[#allocation7 + $0xe08] sm:$0xff]
    %v3698 = vld [vmem:[#allocation7 + $0xe10] sm:$0xff]
    %v3699 = vld [vmem:[#allocation7 + $0xe18] sm:$0xff]
    %v3700 = vld [vmem:[#allocation7 + $0xe20] sm:$0xff]
    %v3701 = vld [vmem:[#allocation7 + $0xe28] sm:$0xff]
    %v3702 = vld [vmem:[#allocation7 + $0xe30] sm:$0xff]
    %v3703 = vld [vmem:[#allocation7 + $0xe38] sm:$0xff]
    %v3704 = vld [vmem:[#allocation7 + $0xe40] sm:$0xff]
    %v3705 = vld [vmem:[#allocation7 + $0xe48] sm:$0xff]
    %v3706 = vld [vmem:[#allocation7 + $0xe50] sm:$0xff]
    %v3707 = vld [vmem:[#allocation7 + $0xe58] sm:$0xff]
    %v3708 = vld [vmem:[#allocation7 + $0xe60] sm:$0xff]
    %v3709 = vld [vmem:[#allocation7 + $0xe68] sm:$0xff]
    %v3710 = vld [vmem:[#allocation7 + $0xe70] sm:$0xff]
    %v3711 = vld [vmem:[#allocation7 + $0xe78] sm:$0xff]
    %v3712 = vld [vmem:[#allocation7 + $0xe80] sm:$0xff]
    %v3713 = vld [vmem:[#allocation7 + $0xe88] sm:$0xff]
    %v3714 = vld [vmem:[#allocation7 + $0xe90] sm:$0xff]
    %v3715 = vld [vmem:[#allocation7 + $0xe98] sm:$0xff]
    %v3716 = vld [vmem:[#allocation7 + $0xea0] sm:$0xff]
    %v3717 = vld [vmem:[#allocation7 + $0xea8] sm:$0xff]
    %v3718 = vld [vmem:[#allocation7 + $0xeb0] sm:$0xff]
    %v3719 = vld [vmem:[#allocation7 + $0xeb8] sm:$0xff]
    %v3720 = vld [vmem:[#allocation7 + $0xec0] sm:$0xff]
    %v3721 = vld [vmem:[#allocation7 + $0xec8] sm:$0xff]
    %v3722 = vld [vmem:[#allocation7 + $0xed0] sm:$0xff]
    %v3723 = vld [vmem:[#allocation7 + $0xed8] sm:$0xff]
    %v3724 = vld [vmem:[#allocation7 + $0xee0] sm:$0xff]
    %v3725 = vld [vmem:[#allocation7 + $0xee8] sm:$0xff]
    %v3726 = vld [vmem:[#allocation7 + $0xef0] sm:$0xff]
    %v3727 = vld [vmem:[#allocation7 + $0xef8] sm:$0xff]
    %v3728 = vld [vmem:[#allocation7 + $0xf00] sm:$0xff]
    %v3729 = vld [vmem:[#allocation7 + $0xf08] sm:$0xff]
    %v3730 = vld [vmem:[#allocation7 + $0xf10] sm:$0xff]
    %v3731 = vld [vmem:[#allocation7 + $0xf18] sm:$0xff]
    %v3732 = vld [vmem:[#allocation7 + $0xf20] sm:$0xff]
    %v3733 = vld [vmem:[#allocation7 + $0xf28] sm:$0xff]
    %v3734 = vld [vmem:[#allocation7 + $0xf30] sm:$0xff]
    %v3735 = vld [vmem:[#allocation7 + $0xf38] sm:$0xff]
    %v3736 = vld [vmem:[#allocation7 + $0xf40] sm:$0xff]
    %v3737 = vld [vmem:[#allocation7 + $0xf48] sm:$0xff]
    %v3738 = vld [vmem:[#allocation7 + $0xf50] sm:$0xff]
    %v3739 = vld [vmem:[#allocation7 + $0xf58] sm:$0xff]
    %v3740 = vld [vmem:[#allocation7 + $0xf60] sm:$0xff]
    %v3741 = vld [vmem:[#allocation7 + $0xf68] sm:$0xff]
    %v3742 = vld [vmem:[#allocation7 + $0xf70] sm:$0xff]
    %v3743 = vld [vmem:[#allocation7 + $0xf78] sm:$0xff]
    %v3744 = vld [vmem:[#allocation7 + $0xf80] sm:$0xff]
    %v3745 = vld [vmem:[#allocation7 + $0xf88] sm:$0xff]
    %v3746 = vld [vmem:[#allocation7 + $0xf90] sm:$0xff]
    %v3747 = vld [vmem:[#allocation7 + $0xf98] sm:$0xff]
    %v3748 = vld [vmem:[#allocation7 + $0xfa0] sm:$0xff]
    %v3749 = vld [vmem:[#allocation7 + $0xfa8] sm:$0xff]
    %v3750 = vld [vmem:[#allocation7 + $0xfb0] sm:$0xff]
    %v3751 = vld [vmem:[#allocation7 + $0xfb8] sm:$0xff]
    %v3752 = vld [vmem:[#allocation7 + $0xfc0] sm:$0xff]
    %v3753 = vld [vmem:[#allocation7 + $0xfc8] sm:$0xff]
    %v3754 = vld [vmem:[#allocation7 + $0xfd0] sm:$0xff]
    %v3755 = vld [vmem:[#allocation7 + $0xfd8] sm:$0xff]
    %v3756 = vld [vmem:[#allocation7 + $0xfe0] sm:$0xff]
    %v3757 = vld [vmem:[#allocation7 + $0xfe8] sm:$0xff]
    %v3758 = vld [vmem:[#allocation7 + $0xff0] sm:$0xff]
    %v3759 = vld [vmem:[#allocation7 + $0xff8] sm:$0xff]
    %v3760 = vld [vmem:[#allocation7 + $0x1000] sm:$0xff]
    %v3761 = vld [vmem:[#allocation7 + $0x1008] sm:$0xff]
    %v3762 = vld [vmem:[#allocation7 + $0x1010] sm:$0xff]
    %v3763 = vld [vmem:[#allocation7 + $0x1018] sm:$0xff]
    %v3764 = vld [vmem:[#allocation7 + $0x1020] sm:$0xff]
    %v3765 = vld [vmem:[#allocation7 + $0x1028] sm:$0xff]
    %v3766 = vld [vmem:[#allocation7 + $0x1030] sm:$0xff]
    %v3767 = vld [vmem:[#allocation7 + $0x1038] sm:$0xff]
    %v3768 = vld [vmem:[#allocation7 + $0x1040] sm:$0xff]
    %v3769 = vld [vmem:[#allocation7 + $0x1048] sm:$0xff]
    %v3770 = vld [vmem:[#allocation7 + $0x1050] sm:$0xff]
    %v3771 = vld [vmem:[#allocation7 + $0x1058] sm:$0xff]
    %v3772 = vld [vmem:[#allocation7 + $0x1060] sm:$0xff]
    %v3773 = vld [vmem:[#allocation7 + $0x1068] sm:$0xff]
    %v3774 = vld [vmem:[#allocation7 + $0x1070] sm:$0xff]
    %v3775 = vld [vmem:[#allocation7 + $0x1078] sm:$0xff]
    %v3776 = vld [vmem:[#allocation7 + $0x1080] sm:$0xff]
    %v3777 = vld [vmem:[#allocation7 + $0x1088] sm:$0xff]
    %v3778 = vld [vmem:[#allocation7 + $0x1090] sm:$0xff]
    %v3779 = vld [vmem:[#allocation7 + $0x1098] sm:$0xff]
    %v3780 = vld [vmem:[#allocation7 + $0x10a0] sm:$0xff]
    %v3781 = vld [vmem:[#allocation7 + $0x10a8] sm:$0xff]
    %v3782 = vld [vmem:[#allocation7 + $0x10b0] sm:$0xff]
    %v3783 = vld [vmem:[#allocation7 + $0x10b8] sm:$0xff]
    %v3784 = vld [vmem:[#allocation7 + $0x10c0] sm:$0xff]
    %v3785 = vld [vmem:[#allocation7 + $0x10c8] sm:$0xff]
    %v3786 = vld [vmem:[#allocation7 + $0x10d0] sm:$0xff]
    %v3787 = vld [vmem:[#allocation7 + $0x10d8] sm:$0xff]
    %v3788 = vld [vmem:[#allocation7 + $0x10e0] sm:$0xff]
    %v3789 = vld [vmem:[#allocation7 + $0x10e8] sm:$0xff]
    %v3790 = vld [vmem:[#allocation7 + $0x10f0] sm:$0xff]
    %v3791 = vld [vmem:[#allocation7 + $0x10f8] sm:$0xff]
    %v3792 = vld [vmem:[#allocation7 + $0x1100] sm:$0xff]
    %v3793 = vld [vmem:[#allocation7 + $0x1108] sm:$0xff]
    %v3794 = vld [vmem:[#allocation7 + $0x1110] sm:$0xff]
    %v3795 = vld [vmem:[#allocation7 + $0x1118] sm:$0xff]
    %v3796 = vld [vmem:[#allocation7 + $0x1120] sm:$0xff]
    %v3797 = vld [vmem:[#allocation7 + $0x1128] sm:$0xff]
    %v3798 = vld [vmem:[#allocation7 + $0x1130] sm:$0xff]
    %v3799 = vld [vmem:[#allocation7 + $0x1138] sm:$0xff]
    %v3800 = vld [vmem:[#allocation7 + $0x1140] sm:$0xff]
    %v3801 = vld [vmem:[#allocation7 + $0x1148] sm:$0xff]
    %v3802 = vld [vmem:[#allocation7 + $0x1150] sm:$0xff]
    %v3803 = vld [vmem:[#allocation7 + $0x1158] sm:$0xff]
    %v3804 = vld [vmem:[#allocation7 + $0x1160] sm:$0xff]
    %v3805 = vld [vmem:[#allocation7 + $0x1168] sm:$0xff]
    %v3806 = vld [vmem:[#allocation7 + $0x1170] sm:$0xff]
    %v3807 = vld [vmem:[#allocation7 + $0x1178] sm:$0xff]
    %v3808 = vld [vmem:[#allocation7 + $0x1180] sm:$0xff]
    %v3809 = vld [vmem:[#allocation7 + $0x1188] sm:$0xff]
    %v3810 = vld [vmem:[#allocation7 + $0x1190] sm:$0xff]
    %v3811 = vld [vmem:[#allocation7 + $0x1198] sm:$0xff]
    %v3812 = vld [vmem:[#allocation7 + $0x11a0] sm:$0xff]
    %v3813 = vld [vmem:[#allocation7 + $0x11a8] sm:$0xff]
    %v3814 = vld [vmem:[#allocation7 + $0x11b0] sm:$0xff]
    %v3815 = vld [vmem:[#allocation7 + $0x11b8] sm:$0xff]
    %v3816 = vld [vmem:[#allocation7 + $0x11c0] sm:$0xff]
    %v3817 = vld [vmem:[#allocation7 + $0x11c8] sm:$0xff]
    %v3818 = vld [vmem:[#allocation7 + $0x11d0] sm:$0xff]
    %v3819 = vld [vmem:[#allocation7 + $0x11d8] sm:$0xff]
    %v3820 = vld [vmem:[#allocation7 + $0x11e0] sm:$0xff]
    %v3821 = vld [vmem:[#allocation7 + $0x11e8] sm:$0xff]
    %v3822 = vld [vmem:[#allocation7 + $0x11f0] sm:$0xff]
    %v3823 = vld [vmem:[#allocation7 + $0x11f8] sm:$0xff]
    %v3824 = vld [vmem:[#allocation7 + $0x1200] sm:$0xff]
    %v3825 = vld [vmem:[#allocation7 + $0x1208] sm:$0xff]
    %v3826 = vld [vmem:[#allocation7 + $0x1210] sm:$0xff]
    %v3827 = vld [vmem:[#allocation7 + $0x1218] sm:$0xff]
    %v3828 = vld [vmem:[#allocation7 + $0x1220] sm:$0xff]
    %v3829 = vld [vmem:[#allocation7 + $0x1228] sm:$0xff]
    %v3830 = vld [vmem:[#allocation7 + $0x1230] sm:$0xff]
    %v3831 = vld [vmem:[#allocation7 + $0x1238] sm:$0xff]
    %v3832 = vld [vmem:[#allocation7 + $0x1240] sm:$0xff]
    %v3833 = vld [vmem:[#allocation7 + $0x1248] sm:$0xff]
    %v3834 = vld [vmem:[#allocation7 + $0x1250] sm:$0xff]
    %v3835 = vld [vmem:[#allocation7 + $0x1258] sm:$0xff]
    %v3836 = vld [vmem:[#allocation7 + $0x1260] sm:$0xff]
    %v3837 = vld [vmem:[#allocation7 + $0x1268] sm:$0xff]
    %v3838 = vld [vmem:[#allocation7 + $0x1270] sm:$0xff]
    %v3839 = vld [vmem:[#allocation7 + $0x1278] sm:$0xff]
    %v3840 = vld [vmem:[#allocation7 + $0x1280] sm:$0xff]
    %v3841 = vld [vmem:[#allocation7 + $0x1288] sm:$0xff]
    %v3842 = vld [vmem:[#allocation7 + $0x1290] sm:$0xff]
    %v3843 = vld [vmem:[#allocation7 + $0x1298] sm:$0xff]
    %v3844 = vld [vmem:[#allocation7 + $0x12a0] sm:$0xff]
    %v3845 = vld [vmem:[#allocation7 + $0x12a8] sm:$0xff]
    %v3846 = vld [vmem:[#allocation7 + $0x12b0] sm:$0xff]
    %v3847 = vld [vmem:[#allocation7 + $0x12b8] sm:$0xff]
    %v3848 = vld [vmem:[#allocation7 + $0x12c0] sm:$0xff]
    %v3849 = vld [vmem:[#allocation7 + $0x12c8] sm:$0xff]
    %v3850 = vld [vmem:[#allocation7 + $0x12d0] sm:$0xff]
    %v3851 = vld [vmem:[#allocation7 + $0x12d8] sm:$0xff]
    %v3852 = vld [vmem:[#allocation7 + $0x12e0] sm:$0xff]
    %v3853 = vld [vmem:[#allocation7 + $0x12e8] sm:$0xff]
    %v3854 = vld [vmem:[#allocation7 + $0x12f0] sm:$0xff]
    %v3855 = vld [vmem:[#allocation7 + $0x12f8] sm:$0xff]
    %v3856 = vld [vmem:[#allocation7 + $0x1300] sm:$0xff]
    %v3857 = vld [vmem:[#allocation7 + $0x1308] sm:$0xff]
    %v3858 = vld [vmem:[#allocation7 + $0x1310] sm:$0xff]
    %v3859 = vld [vmem:[#allocation7 + $0x1318] sm:$0xff]
    %v3860 = vld [vmem:[#allocation7 + $0x1320] sm:$0xff]
    %v3861 = vld [vmem:[#allocation7 + $0x1328] sm:$0xff]
    %v3862 = vld [vmem:[#allocation7 + $0x1330] sm:$0xff]
    %v3863 = vld [vmem:[#allocation7 + $0x1338] sm:$0xff]
    %v3864 = vld [vmem:[#allocation7 + $0x1340] sm:$0xff]
    %v3865 = vld [vmem:[#allocation7 + $0x1348] sm:$0xff]
    %v3866 = vld [vmem:[#allocation7 + $0x1350] sm:$0xff]
    %v3867 = vld [vmem:[#allocation7 + $0x1358] sm:$0xff]
    %v3868 = vld [vmem:[#allocation7 + $0x1360] sm:$0xff]
    %v3869 = vld [vmem:[#allocation7 + $0x1368] sm:$0xff]
    %v3870 = vld [vmem:[#allocation7 + $0x1370] sm:$0xff]
    %v3871 = vld [vmem:[#allocation7 + $0x1378] sm:$0xff]
    %v3872 = vld [vmem:[#allocation7 + $0x1380] sm:$0xff]
    %v3873 = vld [vmem:[#allocation7 + $0x1388] sm:$0xff]
    %v3874 = vld [vmem:[#allocation7 + $0x1390] sm:$0xff]
    %v3875 = vld [vmem:[#allocation7 + $0x1398] sm:$0xff]
    %v3876 = vld [vmem:[#allocation7 + $0x13a0] sm:$0xff]
    %v3877 = vld [vmem:[#allocation7 + $0x13a8] sm:$0xff]
    %v3878 = vld [vmem:[#allocation7 + $0x13b0] sm:$0xff]
    %v3879 = vld [vmem:[#allocation7 + $0x13b8] sm:$0xff]
    %v3880 = vld [vmem:[#allocation7 + $0x13c0] sm:$0xff]
    %v3881 = vld [vmem:[#allocation7 + $0x13c8] sm:$0xff]
    %v3882 = vld [vmem:[#allocation7 + $0x13d0] sm:$0xff]
    %v3883 = vld [vmem:[#allocation7 + $0x13d8] sm:$0xff]
    %v3884 = vld [vmem:[#allocation7 + $0x13e0] sm:$0xff]
    %v3885 = vld [vmem:[#allocation7 + $0x13e8] sm:$0xff]
    %v3886 = vld [vmem:[#allocation7 + $0x13f0] sm:$0xff]
    %v3887 = vld [vmem:[#allocation7 + $0x13f8] sm:$0xff]
    %v3888 = vld [vmem:[#allocation7 + $0x1400] sm:$0xff]
    %v3889 = vld [vmem:[#allocation7 + $0x1408] sm:$0xff]
    %v3890 = vld [vmem:[#allocation7 + $0x1410] sm:$0xff]
    %v3891 = vld [vmem:[#allocation7 + $0x1418] sm:$0xff]
    %v3892 = vld [vmem:[#allocation7 + $0x1420] sm:$0xff]
    %v3893 = vld [vmem:[#allocation7 + $0x1428] sm:$0xff]
    %v3894 = vld [vmem:[#allocation7 + $0x1430] sm:$0xff]
    %v3895 = vld [vmem:[#allocation7 + $0x1438] sm:$0xff]
    %v3896 = vld [vmem:[#allocation7 + $0x1440] sm:$0xff]
    %v3897 = vld [vmem:[#allocation7 + $0x1448] sm:$0xff]
    %v3898 = vld [vmem:[#allocation7 + $0x1450] sm:$0xff]
    %v3899 = vld [vmem:[#allocation7 + $0x1458] sm:$0xff]
    %v3900 = vld [vmem:[#allocation7 + $0x1460] sm:$0xff]
    %v3901 = vld [vmem:[#allocation7 + $0x1468] sm:$0xff]
    %v3902 = vld [vmem:[#allocation7 + $0x1470] sm:$0xff]
    %v3903 = vld [vmem:[#allocation7 + $0x1478] sm:$0xff]
    %v3904 = vld [vmem:[#allocation7 + $0x1480] sm:$0xff]
    %v3905 = vld [vmem:[#allocation7 + $0x1488] sm:$0xff]
    %v3906 = vld [vmem:[#allocation7 + $0x1490] sm:$0xff]
    %v3907 = vld [vmem:[#allocation7 + $0x1498] sm:$0xff]
    %v3908 = vld [vmem:[#allocation7 + $0x14a0] sm:$0xff]
    %v3909 = vld [vmem:[#allocation7 + $0x14a8] sm:$0xff]
    %v3910 = vld [vmem:[#allocation7 + $0x14b0] sm:$0xff]
    %v3911 = vld [vmem:[#allocation7 + $0x14b8] sm:$0xff]
    %v3912 = vld [vmem:[#allocation7 + $0x14c0] sm:$0xff]
    %v3913 = vld [vmem:[#allocation7 + $0x14c8] sm:$0xff]
    %v3914 = vld [vmem:[#allocation7 + $0x14d0] sm:$0xff]
    %v3915 = vld [vmem:[#allocation7 + $0x14d8] sm:$0xff]
    %v3916 = vld [vmem:[#allocation7 + $0x14e0] sm:$0xff]
    %v3917 = vld [vmem:[#allocation7 + $0x14e8] sm:$0xff]
    %v3918 = vld [vmem:[#allocation7 + $0x14f0] sm:$0xff]
    %v3919 = vld [vmem:[#allocation7 + $0x14f8] sm:$0xff]
    %v3920 = vld [vmem:[#allocation7 + $0x1500] sm:$0xff]
    %v3921 = vld [vmem:[#allocation7 + $0x1508] sm:$0xff]
    %v3922 = vld [vmem:[#allocation7 + $0x1510] sm:$0xff]
    %v3923 = vld [vmem:[#allocation7 + $0x1518] sm:$0xff]
    %v3924 = vld [vmem:[#allocation7 + $0x1520] sm:$0xff]
    %v3925 = vld [vmem:[#allocation7 + $0x1528] sm:$0xff]
    %v3926 = vld [vmem:[#allocation7 + $0x1530] sm:$0xff]
    %v3927 = vld [vmem:[#allocation7 + $0x1538] sm:$0xff]
    %v3928 = vld [vmem:[#allocation7 + $0x1540] sm:$0xff]
    %v3929 = vld [vmem:[#allocation7 + $0x1548] sm:$0xff]
    %v3930 = vld [vmem:[#allocation7 + $0x1550] sm:$0xff]
    %v3931 = vld [vmem:[#allocation7 + $0x1558] sm:$0xff]
    %v3932 = vld [vmem:[#allocation7 + $0x1560] sm:$0xff]
    %v3933 = vld [vmem:[#allocation7 + $0x1568] sm:$0xff]
    %v3934 = vld [vmem:[#allocation7 + $0x1570] sm:$0xff]
    %v3935 = vld [vmem:[#allocation7 + $0x1578] sm:$0xff]
    %v3936 = vld [vmem:[#allocation7 + $0x1580] sm:$0xff]
    %v3937 = vld [vmem:[#allocation7 + $0x1588] sm:$0xff]
    %v3938 = vld [vmem:[#allocation7 + $0x1590] sm:$0xff]
    %v3939 = vld [vmem:[#allocation7 + $0x1598] sm:$0xff]
    %v3940 = vld [vmem:[#allocation7 + $0x15a0] sm:$0xff]
    %v3941 = vld [vmem:[#allocation7 + $0x15a8] sm:$0xff]
    %v3942 = vld [vmem:[#allocation7 + $0x15b0] sm:$0xff]
    %v3943 = vld [vmem:[#allocation7 + $0x15b8] sm:$0xff]
    %v3944 = vld [vmem:[#allocation7 + $0x15c0] sm:$0xff]
    %v3945 = vld [vmem:[#allocation7 + $0x15c8] sm:$0xff]
    %v3946 = vld [vmem:[#allocation7 + $0x15d0] sm:$0xff]
    %v3947 = vld [vmem:[#allocation7 + $0x15d8] sm:$0xff]
    %v3948 = vld [vmem:[#allocation7 + $0x15e0] sm:$0xff]
    %v3949 = vld [vmem:[#allocation7 + $0x15e8] sm:$0xff]
    %v3950 = vld [vmem:[#allocation7 + $0x15f0] sm:$0xff]
    %v3951 = vld [vmem:[#allocation7 + $0x15f8] sm:$0xff]
    %v3952 = vld [vmem:[#allocation7 + $0x1600] sm:$0xff]
    %v3953 = vld [vmem:[#allocation7 + $0x1608] sm:$0xff]
    %v3954 = vld [vmem:[#allocation7 + $0x1610] sm:$0xff]
    %v3955 = vld [vmem:[#allocation7 + $0x1618] sm:$0xff]
    %v3956 = vld [vmem:[#allocation7 + $0x1620] sm:$0xff]
    %v3957 = vld [vmem:[#allocation7 + $0x1628] sm:$0xff]
    %v3958 = vld [vmem:[#allocation7 + $0x1630] sm:$0xff]
    %v3959 = vld [vmem:[#allocation7 + $0x1638] sm:$0xff]
    %v3960 = vld [vmem:[#allocation7 + $0x1640] sm:$0xff]
    %v3961 = vld [vmem:[#allocation7 + $0x1648] sm:$0xff]
    %v3962 = vld [vmem:[#allocation7 + $0x1650] sm:$0xff]
    %v3963 = vld [vmem:[#allocation7 + $0x1658] sm:$0xff]
    %v3964 = vld [vmem:[#allocation7 + $0x1660] sm:$0xff]
    %v3965 = vld [vmem:[#allocation7 + $0x1668] sm:$0xff]
    %v3966 = vld [vmem:[#allocation7 + $0x1670] sm:$0xff]
    %v3967 = vld [vmem:[#allocation7 + $0x1678] sm:$0xff]
    %v3968 = vld [vmem:[#allocation7 + $0x1680] sm:$0xff]
    %v3969 = vld [vmem:[#allocation7 + $0x1688] sm:$0xff]
    %v3970 = vld [vmem:[#allocation7 + $0x1690] sm:$0xff]
    %v3971 = vld [vmem:[#allocation7 + $0x1698] sm:$0xff]
    %v3972 = vld [vmem:[#allocation7 + $0x16a0] sm:$0xff]
    %v3973 = vld [vmem:[#allocation7 + $0x16a8] sm:$0xff]
    %v3974 = vld [vmem:[#allocation7 + $0x16b0] sm:$0xff]
    %v3975 = vld [vmem:[#allocation7 + $0x16b8] sm:$0xff]
    %v3976 = vld [vmem:[#allocation7 + $0x16c0] sm:$0xff]
    %v3977 = vld [vmem:[#allocation7 + $0x16c8] sm:$0xff]
    %v3978 = vld [vmem:[#allocation7 + $0x16d0] sm:$0xff]
    %v3979 = vld [vmem:[#allocation7 + $0x16d8] sm:$0xff]
    %v3980 = vld [vmem:[#allocation7 + $0x16e0] sm:$0xff]
    %v3981 = vld [vmem:[#allocation7 + $0x16e8] sm:$0xff]
    %v3982 = vld [vmem:[#allocation7 + $0x16f0] sm:$0xff]
    %v3983 = vld [vmem:[#allocation7 + $0x16f8] sm:$0xff]
    %v3984 = vld [vmem:[#allocation7 + $0x1700] sm:$0xff]
    %v3985 = vld [vmem:[#allocation7 + $0x1708] sm:$0xff]
    %v3986 = vld [vmem:[#allocation7 + $0x1710] sm:$0xff]
    %v3987 = vld [vmem:[#allocation7 + $0x1718] sm:$0xff]
    %v3988 = vld [vmem:[#allocation7 + $0x1720] sm:$0xff]
    %v3989 = vld [vmem:[#allocation7 + $0x1728] sm:$0xff]
    %v3990 = vld [vmem:[#allocation7 + $0x1730] sm:$0xff]
    %v3991 = vld [vmem:[#allocation7 + $0x1738] sm:$0xff]
    %v3992 = vld [vmem:[#allocation7 + $0x1740] sm:$0xff]
    %v3993 = vld [vmem:[#allocation7 + $0x1748] sm:$0xff]
    %v3994 = vld [vmem:[#allocation7 + $0x1750] sm:$0xff]
    %v3995 = vld [vmem:[#allocation7 + $0x1758] sm:$0xff]
    %v3996 = vld [vmem:[#allocation7 + $0x1760] sm:$0xff]
    %v3997 = vld [vmem:[#allocation7 + $0x1768] sm:$0xff]
    %v3998 = vld [vmem:[#allocation7 + $0x1770] sm:$0xff]
    %v3999 = vld [vmem:[#allocation7 + $0x1778] sm:$0xff]
    %v4000 = vld [vmem:[#allocation7 + $0x1780] sm:$0xff]
    %v4001 = vld [vmem:[#allocation7 + $0x1788] sm:$0xff]
    %v4002 = vld [vmem:[#allocation7 + $0x1790] sm:$0xff]
    %v4003 = vld [vmem:[#allocation7 + $0x1798] sm:$0xff]
    %v4004 = vld [vmem:[#allocation7 + $0x17a0] sm:$0xff]
    %v4005 = vld [vmem:[#allocation7 + $0x17a8] sm:$0xff]
    %v4006 = vld [vmem:[#allocation7 + $0x17b0] sm:$0xff]
    %v4007 = vld [vmem:[#allocation7 + $0x17b8] sm:$0xff]
    %v4008 = vld [vmem:[#allocation7 + $0x17c0] sm:$0xff]
    %v4009 = vld [vmem:[#allocation7 + $0x17c8] sm:$0xff]
    %v4010 = vld [vmem:[#allocation7 + $0x17d0] sm:$0xff]
    %v4011 = vld [vmem:[#allocation7 + $0x17d8] sm:$0xff]
    %v4012 = vld [vmem:[#allocation7 + $0x17e0] sm:$0xff]
    %v4013 = vld [vmem:[#allocation7 + $0x17e8] sm:$0xff]
    %v4014 = vld [vmem:[#allocation7 + $0x17f0] sm:$0xff]
    %v4015 = vld [vmem:[#allocation7 + $0x17f8] sm:$0xff]
    %v4016 = vld [vmem:[#allocation9] sm:$0x3]
    %v4018 = vlaneseq
    %v4019 = vshrl.u32 %v4018, 7
    %v4020 = vsub.s32 0, %v4019
    %v4021 = vrot.slane %v4016, %v4020
    %v4022 = vlaneseq
    %v4023 = vshrl.u32 %v4022, 7
    %v4024 = vsub.s32 1, %v4023
    %v4025 = vrot.slane %v4016, %v4024
    %v4796 = vunpack.c.l.b16 %v3248
    %v4797 = vunpack.c.h.b16 %v3248
    %v4798 = vunpack.c.l.b16 %v3249
    %v4799 = vunpack.c.h.b16 %v3249
    %v4800 = vunpack.c.l.b16 %v3250
    %v4801 = vunpack.c.h.b16 %v3250
    %v4802 = vunpack.c.l.b16 %v3251
    %v4803 = vunpack.c.h.b16 %v3251
    %v4804 = vunpack.c.l.b16 %v3252
    %v4805 = vunpack.c.h.b16 %v3252
    %v4806 = vunpack.c.l.b16 %v3253
    %v4807 = vunpack.c.h.b16 %v3253
    %v4808 = vunpack.c.l.b16 %v3254
    %v4809 = vunpack.c.h.b16 %v3254
    %v4810 = vunpack.c.l.b16 %v3255
    %v4811 = vunpack.c.h.b16 %v3255
    %v4812 = vunpack.c.l.b16 %v3256
    %v4813 = vunpack.c.h.b16 %v3256
    %v4814 = vunpack.c.l.b16 %v3257
    %v4815 = vunpack.c.h.b16 %v3257
    %v4816 = vunpack.c.l.b16 %v3258
    %v4817 = vunpack.c.h.b16 %v3258
    %v4818 = vunpack.c.l.b16 %v3259
    %v4819 = vunpack.c.h.b16 %v3259
    %v4820 = vunpack.c.l.b16 %v3260
    %v4821 = vunpack.c.h.b16 %v3260
    %v4822 = vunpack.c.l.b16 %v3261
    %v4823 = vunpack.c.h.b16 %v3261
    %v4824 = vunpack.c.l.b16 %v3262
    %v4825 = vunpack.c.h.b16 %v3262
    %v4826 = vunpack.c.l.b16 %v3263
    %v4827 = vunpack.c.h.b16 %v3263
    %v4828 = vunpack.c.l.b16 %v3264
    %v4829 = vunpack.c.h.b16 %v3264
    %v4830 = vunpack.c.l.b16 %v3265
    %v4831 = vunpack.c.h.b16 %v3265
    %v4832 = vunpack.c.l.b16 %v3266
    %v4833 = vunpack.c.h.b16 %v3266
    %v4834 = vunpack.c.l.b16 %v3267
    %v4835 = vunpack.c.h.b16 %v3267
    %v4836 = vunpack.c.l.b16 %v3268
    %v4837 = vunpack.c.h.b16 %v3268
    %v4838 = vunpack.c.l.b16 %v3269
    %v4839 = vunpack.c.h.b16 %v3269
    %v4840 = vunpack.c.l.b16 %v3270
    %v4841 = vunpack.c.h.b16 %v3270
    %v4842 = vunpack.c.l.b16 %v3271
    %v4843 = vunpack.c.h.b16 %v3271
    %v4844 = vunpack.c.l.b16 %v3272
    %v4845 = vunpack.c.h.b16 %v3272
    %v4846 = vunpack.c.l.b16 %v3273
    %v4847 = vunpack.c.h.b16 %v3273
    %v4848 = vunpack.c.l.b16 %v3274
    %v4849 = vunpack.c.h.b16 %v3274
    %v4850 = vunpack.c.l.b16 %v3275
    %v4851 = vunpack.c.h.b16 %v3275
    %v4852 = vunpack.c.l.b16 %v3276
    %v4853 = vunpack.c.h.b16 %v3276
    %v4854 = vunpack.c.l.b16 %v3277
    %v4855 = vunpack.c.h.b16 %v3277
    %v4856 = vunpack.c.l.b16 %v3278
    %v4857 = vunpack.c.h.b16 %v3278
    %v4858 = vunpack.c.l.b16 %v3279
    %v4859 = vunpack.c.h.b16 %v3279
    %v4860 = vunpack.c.l.b16 %v3280
    %v4861 = vunpack.c.h.b16 %v3280
    %v4862 = vunpack.c.l.b16 %v3281
    %v4863 = vunpack.c.h.b16 %v3281
    %v4864 = vunpack.c.l.b16 %v3282
    %v4865 = vunpack.c.h.b16 %v3282
    %v4866 = vunpack.c.l.b16 %v3283
    %v4867 = vunpack.c.h.b16 %v3283
    %v4868 = vunpack.c.l.b16 %v3284
    %v4869 = vunpack.c.h.b16 %v3284
    %v4870 = vunpack.c.l.b16 %v3285
    %v4871 = vunpack.c.h.b16 %v3285
    %v4872 = vunpack.c.l.b16 %v3286
    %v4873 = vunpack.c.h.b16 %v3286
    %v4874 = vunpack.c.l.b16 %v3287
    %v4875 = vunpack.c.h.b16 %v3287
    %v4876 = vunpack.c.l.b16 %v3288
    %v4877 = vunpack.c.h.b16 %v3288
    %v4878 = vunpack.c.l.b16 %v3289
    %v4879 = vunpack.c.h.b16 %v3289
    %v4880 = vunpack.c.l.b16 %v3290
    %v4881 = vunpack.c.h.b16 %v3290
    %v4882 = vunpack.c.l.b16 %v3291
    %v4883 = vunpack.c.h.b16 %v3291
    %v4884 = vunpack.c.l.b16 %v3292
    %v4885 = vunpack.c.h.b16 %v3292
    %v4886 = vunpack.c.l.b16 %v3293
    %v4887 = vunpack.c.h.b16 %v3293
    %v4888 = vunpack.c.l.b16 %v3294
    %v4889 = vunpack.c.h.b16 %v3294
    %v4890 = vunpack.c.l.b16 %v3295
    %v4891 = vunpack.c.h.b16 %v3295
    %v4892 = vunpack.c.l.b16 %v3296
    %v4893 = vunpack.c.h.b16 %v3296
    %v4894 = vunpack.c.l.b16 %v3297
    %v4895 = vunpack.c.h.b16 %v3297
    %v4896 = vunpack.c.l.b16 %v3298
    %v4897 = vunpack.c.h.b16 %v3298
    %v4898 = vunpack.c.l.b16 %v3299
    %v4899 = vunpack.c.h.b16 %v3299
    %v4900 = vunpack.c.l.b16 %v3300
    %v4901 = vunpack.c.h.b16 %v3300
    %v4902 = vunpack.c.l.b16 %v3301
    %v4903 = vunpack.c.h.b16 %v3301
    %v4904 = vunpack.c.l.b16 %v3302
    %v4905 = vunpack.c.h.b16 %v3302
    %v4906 = vunpack.c.l.b16 %v3303
    %v4907 = vunpack.c.h.b16 %v3303
    %v4908 = vunpack.c.l.b16 %v3304
    %v4909 = vunpack.c.h.b16 %v3304
    %v4910 = vunpack.c.l.b16 %v3305
    %v4911 = vunpack.c.h.b16 %v3305
    %v4912 = vunpack.c.l.b16 %v3306
    %v4913 = vunpack.c.h.b16 %v3306
    %v4914 = vunpack.c.l.b16 %v3307
    %v4915 = vunpack.c.h.b16 %v3307
    %v4916 = vunpack.c.l.b16 %v3308
    %v4917 = vunpack.c.h.b16 %v3308
    %v4918 = vunpack.c.l.b16 %v3309
    %v4919 = vunpack.c.h.b16 %v3309
    %v4920 = vunpack.c.l.b16 %v3310
    %v4921 = vunpack.c.h.b16 %v3310
    %v4922 = vunpack.c.l.b16 %v3311
    %v4923 = vunpack.c.h.b16 %v3311
    %v4924 = vunpack.c.l.b16 %v3312
    %v4925 = vunpack.c.h.b16 %v3312
    %v4926 = vunpack.c.l.b16 %v3313
    %v4927 = vunpack.c.h.b16 %v3313
    %v4928 = vunpack.c.l.b16 %v3314
    %v4929 = vunpack.c.h.b16 %v3314
    %v4930 = vunpack.c.l.b16 %v3315
    %v4931 = vunpack.c.h.b16 %v3315
    %v4932 = vunpack.c.l.b16 %v3316
    %v4933 = vunpack.c.h.b16 %v3316
    %v4934 = vunpack.c.l.b16 %v3317
    %v4935 = vunpack.c.h.b16 %v3317
    %v4936 = vunpack.c.l.b16 %v3318
    %v4937 = vunpack.c.h.b16 %v3318
    %v4938 = vunpack.c.l.b16 %v3319
    %v4939 = vunpack.c.h.b16 %v3319
    %v4940 = vunpack.c.l.b16 %v3320
    %v4941 = vunpack.c.h.b16 %v3320
    %v4942 = vunpack.c.l.b16 %v3321
    %v4943 = vunpack.c.h.b16 %v3321
    %v4944 = vunpack.c.l.b16 %v3322
    %v4945 = vunpack.c.h.b16 %v3322
    %v4946 = vunpack.c.l.b16 %v3323
    %v4947 = vunpack.c.h.b16 %v3323
    %v4948 = vunpack.c.l.b16 %v3324
    %v4949 = vunpack.c.h.b16 %v3324
    %v4950 = vunpack.c.l.b16 %v3325
    %v4951 = vunpack.c.h.b16 %v3325
    %v4952 = vunpack.c.l.b16 %v3326
    %v4953 = vunpack.c.h.b16 %v3326
    %v4954 = vunpack.c.l.b16 %v3327
    %v4955 = vunpack.c.h.b16 %v3327
    %v4956 = vunpack.c.l.b16 %v3328
    %v4957 = vunpack.c.h.b16 %v3328
    %v4958 = vunpack.c.l.b16 %v3329
    %v4959 = vunpack.c.h.b16 %v3329
    %v4960 = vunpack.c.l.b16 %v3330
    %v4961 = vunpack.c.h.b16 %v3330
    %v4962 = vunpack.c.l.b16 %v3331
    %v4963 = vunpack.c.h.b16 %v3331
    %v4964 = vunpack.c.l.b16 %v3332
    %v4965 = vunpack.c.h.b16 %v3332
    %v4966 = vunpack.c.l.b16 %v3333
    %v4967 = vunpack.c.h.b16 %v3333
    %v4968 = vunpack.c.l.b16 %v3334
    %v4969 = vunpack.c.h.b16 %v3334
    %v4970 = vunpack.c.l.b16 %v3335
    %v4971 = vunpack.c.h.b16 %v3335
    %v4972 = vunpack.c.l.b16 %v3336
    %v4973 = vunpack.c.h.b16 %v3336
    %v4974 = vunpack.c.l.b16 %v3337
    %v4975 = vunpack.c.h.b16 %v3337
    %v4976 = vunpack.c.l.b16 %v3338
    %v4977 = vunpack.c.h.b16 %v3338
    %v4978 = vunpack.c.l.b16 %v3339
    %v4979 = vunpack.c.h.b16 %v3339
    %v4980 = vunpack.c.l.b16 %v3340
    %v4981 = vunpack.c.h.b16 %v3340
    %v4982 = vunpack.c.l.b16 %v3341
    %v4983 = vunpack.c.h.b16 %v3341
    %v4984 = vunpack.c.l.b16 %v3342
    %v4985 = vunpack.c.h.b16 %v3342
    %v4986 = vunpack.c.l.b16 %v3343
    %v4987 = vunpack.c.h.b16 %v3343
    %v4988 = vunpack.c.l.b16 %v3344
    %v4989 = vunpack.c.h.b16 %v3344
    %v4990 = vunpack.c.l.b16 %v3345
    %v4991 = vunpack.c.h.b16 %v3345
    %v4992 = vunpack.c.l.b16 %v3346
    %v4993 = vunpack.c.h.b16 %v3346
    %v4994 = vunpack.c.l.b16 %v3347
    %v4995 = vunpack.c.h.b16 %v3347
    %v4996 = vunpack.c.l.b16 %v3348
    %v4997 = vunpack.c.h.b16 %v3348
    %v4998 = vunpack.c.l.b16 %v3349
    %v4999 = vunpack.c.h.b16 %v3349
    %v5000 = vunpack.c.l.b16 %v3350
    %v5001 = vunpack.c.h.b16 %v3350
    %v5002 = vunpack.c.l.b16 %v3351
    %v5003 = vunpack.c.h.b16 %v3351
    %v5004 = vunpack.c.l.b16 %v3352
    %v5005 = vunpack.c.h.b16 %v3352
    %v5006 = vunpack.c.l.b16 %v3353
    %v5007 = vunpack.c.h.b16 %v3353
    %v5008 = vunpack.c.l.b16 %v3354
    %v5009 = vunpack.c.h.b16 %v3354
    %v5010 = vunpack.c.l.b16 %v3355
    %v5011 = vunpack.c.h.b16 %v3355
    %v5012 = vunpack.c.l.b16 %v3356
    %v5013 = vunpack.c.h.b16 %v3356
    %v5014 = vunpack.c.l.b16 %v3357
    %v5015 = vunpack.c.h.b16 %v3357
    %v5016 = vunpack.c.l.b16 %v3358
    %v5017 = vunpack.c.h.b16 %v3358
    %v5018 = vunpack.c.l.b16 %v3359
    %v5019 = vunpack.c.h.b16 %v3359
    %v5020 = vunpack.c.l.b16 %v3360
    %v5021 = vunpack.c.h.b16 %v3360
    %v5022 = vunpack.c.l.b16 %v3361
    %v5023 = vunpack.c.h.b16 %v3361
    %v5024 = vunpack.c.l.b16 %v3362
    %v5025 = vunpack.c.h.b16 %v3362
    %v5026 = vunpack.c.l.b16 %v3363
    %v5027 = vunpack.c.h.b16 %v3363
    %v5028 = vunpack.c.l.b16 %v3364
    %v5029 = vunpack.c.h.b16 %v3364
    %v5030 = vunpack.c.l.b16 %v3365
    %v5031 = vunpack.c.h.b16 %v3365
    %v5032 = vunpack.c.l.b16 %v3366
    %v5033 = vunpack.c.h.b16 %v3366
    %v5034 = vunpack.c.l.b16 %v3367
    %v5035 = vunpack.c.h.b16 %v3367
    %v5036 = vunpack.c.l.b16 %v3368
    %v5037 = vunpack.c.h.b16 %v3368
    %v5038 = vunpack.c.l.b16 %v3369
    %v5039 = vunpack.c.h.b16 %v3369
    %v5040 = vunpack.c.l.b16 %v3370
    %v5041 = vunpack.c.h.b16 %v3370
    %v5042 = vunpack.c.l.b16 %v3371
    %v5043 = vunpack.c.h.b16 %v3371
    %v5044 = vunpack.c.l.b16 %v3372
    %v5045 = vunpack.c.h.b16 %v3372
    %v5046 = vunpack.c.l.b16 %v3373
    %v5047 = vunpack.c.h.b16 %v3373
    %v5048 = vunpack.c.l.b16 %v3374
    %v5049 = vunpack.c.h.b16 %v3374
    %v5050 = vunpack.c.l.b16 %v3375
    %v5051 = vunpack.c.h.b16 %v3375
    %v5052 = vunpack.c.l.b16 %v3376
    %v5053 = vunpack.c.h.b16 %v3376
    %v5054 = vunpack.c.l.b16 %v3377
    %v5055 = vunpack.c.h.b16 %v3377
    %v5056 = vunpack.c.l.b16 %v3378
    %v5057 = vunpack.c.h.b16 %v3378
    %v5058 = vunpack.c.l.b16 %v3379
    %v5059 = vunpack.c.h.b16 %v3379
    %v5060 = vunpack.c.l.b16 %v3380
    %v5061 = vunpack.c.h.b16 %v3380
    %v5062 = vunpack.c.l.b16 %v3381
    %v5063 = vunpack.c.h.b16 %v3381
    %v5064 = vunpack.c.l.b16 %v3382
    %v5065 = vunpack.c.h.b16 %v3382
    %v5066 = vunpack.c.l.b16 %v3383
    %v5067 = vunpack.c.h.b16 %v3383
    %v5068 = vunpack.c.l.b16 %v3384
    %v5069 = vunpack.c.h.b16 %v3384
    %v5070 = vunpack.c.l.b16 %v3385
    %v5071 = vunpack.c.h.b16 %v3385
    %v5072 = vunpack.c.l.b16 %v3386
    %v5073 = vunpack.c.h.b16 %v3386
    %v5074 = vunpack.c.l.b16 %v3387
    %v5075 = vunpack.c.h.b16 %v3387
    %v5076 = vunpack.c.l.b16 %v3388
    %v5077 = vunpack.c.h.b16 %v3388
    %v5078 = vunpack.c.l.b16 %v3389
    %v5079 = vunpack.c.h.b16 %v3389
    %v5080 = vunpack.c.l.b16 %v3390
    %v5081 = vunpack.c.h.b16 %v3390
    %v5082 = vunpack.c.l.b16 %v3391
    %v5083 = vunpack.c.h.b16 %v3391
    %v5084 = vunpack.c.l.b16 %v3392
    %v5085 = vunpack.c.h.b16 %v3392
    %v5086 = vunpack.c.l.b16 %v3393
    %v5087 = vunpack.c.h.b16 %v3393
    %v5088 = vunpack.c.l.b16 %v3394
    %v5089 = vunpack.c.h.b16 %v3394
    %v5090 = vunpack.c.l.b16 %v3395
    %v5091 = vunpack.c.h.b16 %v3395
    %v5092 = vunpack.c.l.b16 %v3396
    %v5093 = vunpack.c.h.b16 %v3396
    %v5094 = vunpack.c.l.b16 %v3397
    %v5095 = vunpack.c.h.b16 %v3397
    %v5096 = vunpack.c.l.b16 %v3398
    %v5097 = vunpack.c.h.b16 %v3398
    %v5098 = vunpack.c.l.b16 %v3399
    %v5099 = vunpack.c.h.b16 %v3399
    %v5100 = vunpack.c.l.b16 %v3400
    %v5101 = vunpack.c.h.b16 %v3400
    %v5102 = vunpack.c.l.b16 %v3401
    %v5103 = vunpack.c.h.b16 %v3401
    %v5104 = vunpack.c.l.b16 %v3402
    %v5105 = vunpack.c.h.b16 %v3402
    %v5106 = vunpack.c.l.b16 %v3403
    %v5107 = vunpack.c.h.b16 %v3403
    %v5108 = vunpack.c.l.b16 %v3404
    %v5109 = vunpack.c.h.b16 %v3404
    %v5110 = vunpack.c.l.b16 %v3405
    %v5111 = vunpack.c.h.b16 %v3405
    %v5112 = vunpack.c.l.b16 %v3406
    %v5113 = vunpack.c.h.b16 %v3406
    %v5114 = vunpack.c.l.b16 %v3407
    %v5115 = vunpack.c.h.b16 %v3407
    %v5116 = vunpack.c.l.b16 %v3408
    %v5117 = vunpack.c.h.b16 %v3408
    %v5118 = vunpack.c.l.b16 %v3409
    %v5119 = vunpack.c.h.b16 %v3409
    %v5120 = vunpack.c.l.b16 %v3410
    %v5121 = vunpack.c.h.b16 %v3410
    %v5122 = vunpack.c.l.b16 %v3411
    %v5123 = vunpack.c.h.b16 %v3411
    %v5124 = vunpack.c.l.b16 %v3412
    %v5125 = vunpack.c.h.b16 %v3412
    %v5126 = vunpack.c.l.b16 %v3413
    %v5127 = vunpack.c.h.b16 %v3413
    %v5128 = vunpack.c.l.b16 %v3414
    %v5129 = vunpack.c.h.b16 %v3414
    %v5130 = vunpack.c.l.b16 %v3415
    %v5131 = vunpack.c.h.b16 %v3415
    %v5132 = vunpack.c.l.b16 %v3416
    %v5133 = vunpack.c.h.b16 %v3416
    %v5134 = vunpack.c.l.b16 %v3417
    %v5135 = vunpack.c.h.b16 %v3417
    %v5136 = vunpack.c.l.b16 %v3418
    %v5137 = vunpack.c.h.b16 %v3418
    %v5138 = vunpack.c.l.b16 %v3419
    %v5139 = vunpack.c.h.b16 %v3419
    %v5140 = vunpack.c.l.b16 %v3420
    %v5141 = vunpack.c.h.b16 %v3420
    %v5142 = vunpack.c.l.b16 %v3421
    %v5143 = vunpack.c.h.b16 %v3421
    %v5144 = vunpack.c.l.b16 %v3422
    %v5145 = vunpack.c.h.b16 %v3422
    %v5146 = vunpack.c.l.b16 %v3423
    %v5147 = vunpack.c.h.b16 %v3423
    %v5148 = vunpack.c.l.b16 %v3424
    %v5149 = vunpack.c.h.b16 %v3424
    %v5150 = vunpack.c.l.b16 %v3425
    %v5151 = vunpack.c.h.b16 %v3425
    %v5152 = vunpack.c.l.b16 %v3426
    %v5153 = vunpack.c.h.b16 %v3426
    %v5154 = vunpack.c.l.b16 %v3427
    %v5155 = vunpack.c.h.b16 %v3427
    %v5156 = vunpack.c.l.b16 %v3428
    %v5157 = vunpack.c.h.b16 %v3428
    %v5158 = vunpack.c.l.b16 %v3429
    %v5159 = vunpack.c.h.b16 %v3429
    %v5160 = vunpack.c.l.b16 %v3430
    %v5161 = vunpack.c.h.b16 %v3430
    %v5162 = vunpack.c.l.b16 %v3431
    %v5163 = vunpack.c.h.b16 %v3431
    %v5164 = vunpack.c.l.b16 %v3432
    %v5165 = vunpack.c.h.b16 %v3432
    %v5166 = vunpack.c.l.b16 %v3433
    %v5167 = vunpack.c.h.b16 %v3433
    %v5168 = vunpack.c.l.b16 %v3434
    %v5169 = vunpack.c.h.b16 %v3434
    %v5170 = vunpack.c.l.b16 %v3435
    %v5171 = vunpack.c.h.b16 %v3435
    %v5172 = vunpack.c.l.b16 %v3436
    %v5173 = vunpack.c.h.b16 %v3436
    %v5174 = vunpack.c.l.b16 %v3437
    %v5175 = vunpack.c.h.b16 %v3437
    %v5176 = vunpack.c.l.b16 %v3438
    %v5177 = vunpack.c.h.b16 %v3438
    %v5178 = vunpack.c.l.b16 %v3439
    %v5179 = vunpack.c.h.b16 %v3439
    %v5180 = vunpack.c.l.b16 %v3440
    %v5181 = vunpack.c.h.b16 %v3440
    %v5182 = vunpack.c.l.b16 %v3441
    %v5183 = vunpack.c.h.b16 %v3441
    %v5184 = vunpack.c.l.b16 %v3442
    %v5185 = vunpack.c.h.b16 %v3442
    %v5186 = vunpack.c.l.b16 %v3443
    %v5187 = vunpack.c.h.b16 %v3443
    %v5188 = vunpack.c.l.b16 %v3444
    %v5189 = vunpack.c.h.b16 %v3444
    %v5190 = vunpack.c.l.b16 %v3445
    %v5191 = vunpack.c.h.b16 %v3445
    %v5192 = vunpack.c.l.b16 %v3446
    %v5193 = vunpack.c.h.b16 %v3446
    %v5194 = vunpack.c.l.b16 %v3447
    %v5195 = vunpack.c.h.b16 %v3447
    %v5196 = vunpack.c.l.b16 %v3448
    %v5197 = vunpack.c.h.b16 %v3448
    %v5198 = vunpack.c.l.b16 %v3449
    %v5199 = vunpack.c.h.b16 %v3449
    %v5200 = vunpack.c.l.b16 %v3450
    %v5201 = vunpack.c.h.b16 %v3450
    %v5202 = vunpack.c.l.b16 %v3451
    %v5203 = vunpack.c.h.b16 %v3451
    %v5204 = vunpack.c.l.b16 %v3452
    %v5205 = vunpack.c.h.b16 %v3452
    %v5206 = vunpack.c.l.b16 %v3453
    %v5207 = vunpack.c.h.b16 %v3453
    %v5208 = vunpack.c.l.b16 %v3454
    %v5209 = vunpack.c.h.b16 %v3454
    %v5210 = vunpack.c.l.b16 %v3455
    %v5211 = vunpack.c.h.b16 %v3455
    %v5212 = vunpack.c.l.b16 %v3456
    %v5213 = vunpack.c.h.b16 %v3456
    %v5214 = vunpack.c.l.b16 %v3457
    %v5215 = vunpack.c.h.b16 %v3457
    %v5216 = vunpack.c.l.b16 %v3458
    %v5217 = vunpack.c.h.b16 %v3458
    %v5218 = vunpack.c.l.b16 %v3459
    %v5219 = vunpack.c.h.b16 %v3459
    %v5220 = vunpack.c.l.b16 %v3460
    %v5221 = vunpack.c.h.b16 %v3460
    %v5222 = vunpack.c.l.b16 %v3461
    %v5223 = vunpack.c.h.b16 %v3461
    %v5224 = vunpack.c.l.b16 %v3462
    %v5225 = vunpack.c.h.b16 %v3462
    %v5226 = vunpack.c.l.b16 %v3463
    %v5227 = vunpack.c.h.b16 %v3463
    %v5228 = vunpack.c.l.b16 %v3464
    %v5229 = vunpack.c.h.b16 %v3464
    %v5230 = vunpack.c.l.b16 %v3465
    %v5231 = vunpack.c.h.b16 %v3465
    %v5232 = vunpack.c.l.b16 %v3466
    %v5233 = vunpack.c.h.b16 %v3466
    %v5234 = vunpack.c.l.b16 %v3467
    %v5235 = vunpack.c.h.b16 %v3467
    %v5236 = vunpack.c.l.b16 %v3468
    %v5237 = vunpack.c.h.b16 %v3468
    %v5238 = vunpack.c.l.b16 %v3469
    %v5239 = vunpack.c.h.b16 %v3469
    %v5240 = vunpack.c.l.b16 %v3470
    %v5241 = vunpack.c.h.b16 %v3470
    %v5242 = vunpack.c.l.b16 %v3471
    %v5243 = vunpack.c.h.b16 %v3471
    %v5244 = vunpack.c.l.b16 %v3472
    %v5245 = vunpack.c.h.b16 %v3472
    %v5246 = vunpack.c.l.b16 %v3473
    %v5247 = vunpack.c.h.b16 %v3473
    %v5248 = vunpack.c.l.b16 %v3474
    %v5249 = vunpack.c.h.b16 %v3474
    %v5250 = vunpack.c.l.b16 %v3475
    %v5251 = vunpack.c.h.b16 %v3475
    %v5252 = vunpack.c.l.b16 %v3476
    %v5253 = vunpack.c.h.b16 %v3476
    %v5254 = vunpack.c.l.b16 %v3477
    %v5255 = vunpack.c.h.b16 %v3477
    %v5256 = vunpack.c.l.b16 %v3478
    %v5257 = vunpack.c.h.b16 %v3478
    %v5258 = vunpack.c.l.b16 %v3479
    %v5259 = vunpack.c.h.b16 %v3479
    %v5260 = vunpack.c.l.b16 %v3480
    %v5261 = vunpack.c.h.b16 %v3480
    %v5262 = vunpack.c.l.b16 %v3481
    %v5263 = vunpack.c.h.b16 %v3481
    %v5264 = vunpack.c.l.b16 %v3482
    %v5265 = vunpack.c.h.b16 %v3482
    %v5266 = vunpack.c.l.b16 %v3483
    %v5267 = vunpack.c.h.b16 %v3483
    %v5268 = vunpack.c.l.b16 %v3484
    %v5269 = vunpack.c.h.b16 %v3484
    %v5270 = vunpack.c.l.b16 %v3485
    %v5271 = vunpack.c.h.b16 %v3485
    %v5272 = vunpack.c.l.b16 %v3486
    %v5273 = vunpack.c.h.b16 %v3486
    %v5274 = vunpack.c.l.b16 %v3487
    %v5275 = vunpack.c.h.b16 %v3487
    %v5276 = vunpack.c.l.b16 %v3488
    %v5277 = vunpack.c.h.b16 %v3488
    %v5278 = vunpack.c.l.b16 %v3489
    %v5279 = vunpack.c.h.b16 %v3489
    %v5280 = vunpack.c.l.b16 %v3490
    %v5281 = vunpack.c.h.b16 %v3490
    %v5282 = vunpack.c.l.b16 %v3491
    %v5283 = vunpack.c.h.b16 %v3491
    %v5284 = vunpack.c.l.b16 %v3492
    %v5285 = vunpack.c.h.b16 %v3492
    %v5286 = vunpack.c.l.b16 %v3493
    %v5287 = vunpack.c.h.b16 %v3493
    %v5288 = vunpack.c.l.b16 %v3494
    %v5289 = vunpack.c.h.b16 %v3494
    %v5290 = vunpack.c.l.b16 %v3495
    %v5291 = vunpack.c.h.b16 %v3495
    %v5292 = vunpack.c.l.b16 %v3496
    %v5293 = vunpack.c.h.b16 %v3496
    %v5294 = vunpack.c.l.b16 %v3497
    %v5295 = vunpack.c.h.b16 %v3497
    %v5296 = vunpack.c.l.b16 %v3498
    %v5297 = vunpack.c.h.b16 %v3498
    %v5298 = vunpack.c.l.b16 %v3499
    %v5299 = vunpack.c.h.b16 %v3499
    %v5300 = vunpack.c.l.b16 %v3500
    %v5301 = vunpack.c.h.b16 %v3500
    %v5302 = vunpack.c.l.b16 %v3501
    %v5303 = vunpack.c.h.b16 %v3501
    %v5304 = vunpack.c.l.b16 %v3502
    %v5305 = vunpack.c.h.b16 %v3502
    %v5306 = vunpack.c.l.b16 %v3503
    %v5307 = vunpack.c.h.b16 %v3503
    %v5308 = vunpack.c.l.b16 %v3504
    %v5309 = vunpack.c.h.b16 %v3504
    %v5310 = vunpack.c.l.b16 %v3505
    %v5311 = vunpack.c.h.b16 %v3505
    %v5312 = vunpack.c.l.b16 %v3506
    %v5313 = vunpack.c.h.b16 %v3506
    %v5314 = vunpack.c.l.b16 %v3507
    %v5315 = vunpack.c.h.b16 %v3507
    %v5316 = vunpack.c.l.b16 %v3508
    %v5317 = vunpack.c.h.b16 %v3508
    %v5318 = vunpack.c.l.b16 %v3509
    %v5319 = vunpack.c.h.b16 %v3509
    %v5320 = vunpack.c.l.b16 %v3510
    %v5321 = vunpack.c.h.b16 %v3510
    %v5322 = vunpack.c.l.b16 %v3511
    %v5323 = vunpack.c.h.b16 %v3511
    %v5324 = vunpack.c.l.b16 %v3512
    %v5325 = vunpack.c.h.b16 %v3512
    %v5326 = vunpack.c.l.b16 %v3513
    %v5327 = vunpack.c.h.b16 %v3513
    %v5328 = vunpack.c.l.b16 %v3514
    %v5329 = vunpack.c.h.b16 %v3514
    %v5330 = vunpack.c.l.b16 %v3515
    %v5331 = vunpack.c.h.b16 %v3515
    %v5332 = vunpack.c.l.b16 %v3516
    %v5333 = vunpack.c.h.b16 %v3516
    %v5334 = vunpack.c.l.b16 %v3517
    %v5335 = vunpack.c.h.b16 %v3517
    %v5336 = vunpack.c.l.b16 %v3518
    %v5337 = vunpack.c.h.b16 %v3518
    %v5338 = vunpack.c.l.b16 %v3519
    %v5339 = vunpack.c.h.b16 %v3519
    %v5340 = vunpack.c.l.b16 %v3520
    %v5341 = vunpack.c.h.b16 %v3520
    %v5342 = vunpack.c.l.b16 %v3521
    %v5343 = vunpack.c.h.b16 %v3521
    %v5344 = vunpack.c.l.b16 %v3522
    %v5345 = vunpack.c.h.b16 %v3522
    %v5346 = vunpack.c.l.b16 %v3523
    %v5347 = vunpack.c.h.b16 %v3523
    %v5348 = vunpack.c.l.b16 %v3524
    %v5349 = vunpack.c.h.b16 %v3524
    %v5350 = vunpack.c.l.b16 %v3525
    %v5351 = vunpack.c.h.b16 %v3525
    %v5352 = vunpack.c.l.b16 %v3526
    %v5353 = vunpack.c.h.b16 %v3526
    %v5354 = vunpack.c.l.b16 %v3527
    %v5355 = vunpack.c.h.b16 %v3527
    %v5356 = vunpack.c.l.b16 %v3528
    %v5357 = vunpack.c.h.b16 %v3528
    %v5358 = vunpack.c.l.b16 %v3529
    %v5359 = vunpack.c.h.b16 %v3529
    %v5360 = vunpack.c.l.b16 %v3530
    %v5361 = vunpack.c.h.b16 %v3530
    %v5362 = vunpack.c.l.b16 %v3531
    %v5363 = vunpack.c.h.b16 %v3531
    %v5364 = vunpack.c.l.b16 %v3532
    %v5365 = vunpack.c.h.b16 %v3532
    %v5366 = vunpack.c.l.b16 %v3533
    %v5367 = vunpack.c.h.b16 %v3533
    %v5368 = vunpack.c.l.b16 %v3534
    %v5369 = vunpack.c.h.b16 %v3534
    %v5370 = vunpack.c.l.b16 %v3535
    %v5371 = vunpack.c.h.b16 %v3535
    %v5372 = vunpack.c.l.b16 %v3536
    %v5373 = vunpack.c.h.b16 %v3536
    %v5374 = vunpack.c.l.b16 %v3537
    %v5375 = vunpack.c.h.b16 %v3537
    %v5376 = vunpack.c.l.b16 %v3538
    %v5377 = vunpack.c.h.b16 %v3538
    %v5378 = vunpack.c.l.b16 %v3539
    %v5379 = vunpack.c.h.b16 %v3539
    %v5380 = vunpack.c.l.b16 %v3540
    %v5381 = vunpack.c.h.b16 %v3540
    %v5382 = vunpack.c.l.b16 %v3541
    %v5383 = vunpack.c.h.b16 %v3541
    %v5384 = vunpack.c.l.b16 %v3542
    %v5385 = vunpack.c.h.b16 %v3542
    %v5386 = vunpack.c.l.b16 %v3543
    %v5387 = vunpack.c.h.b16 %v3543
    %v5388 = vunpack.c.l.b16 %v3544
    %v5389 = vunpack.c.h.b16 %v3544
    %v5390 = vunpack.c.l.b16 %v3545
    %v5391 = vunpack.c.h.b16 %v3545
    %v5392 = vunpack.c.l.b16 %v3546
    %v5393 = vunpack.c.h.b16 %v3546
    %v5394 = vunpack.c.l.b16 %v3547
    %v5395 = vunpack.c.h.b16 %v3547
    %v5396 = vunpack.c.l.b16 %v3548
    %v5397 = vunpack.c.h.b16 %v3548
    %v5398 = vunpack.c.l.b16 %v3549
    %v5399 = vunpack.c.h.b16 %v3549
    %v5400 = vunpack.c.l.b16 %v3550
    %v5401 = vunpack.c.h.b16 %v3550
    %v5402 = vunpack.c.l.b16 %v3551
    %v5403 = vunpack.c.h.b16 %v3551
    %v5404 = vunpack.c.l.b16 %v3552
    %v5405 = vunpack.c.h.b16 %v3552
    %v5406 = vunpack.c.l.b16 %v3553
    %v5407 = vunpack.c.h.b16 %v3553
    %v5408 = vunpack.c.l.b16 %v3554
    %v5409 = vunpack.c.h.b16 %v3554
    %v5410 = vunpack.c.l.b16 %v3555
    %v5411 = vunpack.c.h.b16 %v3555
    %v5412 = vunpack.c.l.b16 %v3556
    %v5413 = vunpack.c.h.b16 %v3556
    %v5414 = vunpack.c.l.b16 %v3557
    %v5415 = vunpack.c.h.b16 %v3557
    %v5416 = vunpack.c.l.b16 %v3558
    %v5417 = vunpack.c.h.b16 %v3558
    %v5418 = vunpack.c.l.b16 %v3559
    %v5419 = vunpack.c.h.b16 %v3559
    %v5420 = vunpack.c.l.b16 %v3560
    %v5421 = vunpack.c.h.b16 %v3560
    %v5422 = vunpack.c.l.b16 %v3561
    %v5423 = vunpack.c.h.b16 %v3561
    %v5424 = vunpack.c.l.b16 %v3562
    %v5425 = vunpack.c.h.b16 %v3562
    %v5426 = vunpack.c.l.b16 %v3563
    %v5427 = vunpack.c.h.b16 %v3563
    %v5428 = vunpack.c.l.b16 %v3564
    %v5429 = vunpack.c.h.b16 %v3564
    %v5430 = vunpack.c.l.b16 %v3565
    %v5431 = vunpack.c.h.b16 %v3565
    %v5432 = vunpack.c.l.b16 %v3566
    %v5433 = vunpack.c.h.b16 %v3566
    %v5434 = vunpack.c.l.b16 %v3567
    %v5435 = vunpack.c.h.b16 %v3567
    %v5436 = vunpack.c.l.b16 %v3568
    %v5437 = vunpack.c.h.b16 %v3568
    %v5438 = vunpack.c.l.b16 %v3569
    %v5439 = vunpack.c.h.b16 %v3569
    %v5440 = vunpack.c.l.b16 %v3570
    %v5441 = vunpack.c.h.b16 %v3570
    %v5442 = vunpack.c.l.b16 %v3571
    %v5443 = vunpack.c.h.b16 %v3571
    %v5444 = vunpack.c.l.b16 %v3572
    %v5445 = vunpack.c.h.b16 %v3572
    %v5446 = vunpack.c.l.b16 %v3573
    %v5447 = vunpack.c.h.b16 %v3573
    %v5448 = vunpack.c.l.b16 %v3574
    %v5449 = vunpack.c.h.b16 %v3574
    %v5450 = vunpack.c.l.b16 %v3575
    %v5451 = vunpack.c.h.b16 %v3575
    %v5452 = vunpack.c.l.b16 %v3576
    %v5453 = vunpack.c.h.b16 %v3576
    %v5454 = vunpack.c.l.b16 %v3577
    %v5455 = vunpack.c.h.b16 %v3577
    %v5456 = vunpack.c.l.b16 %v3578
    %v5457 = vunpack.c.h.b16 %v3578
    %v5458 = vunpack.c.l.b16 %v3579
    %v5459 = vunpack.c.h.b16 %v3579
    %v5460 = vunpack.c.l.b16 %v3580
    %v5461 = vunpack.c.h.b16 %v3580
    %v5462 = vunpack.c.l.b16 %v3581
    %v5463 = vunpack.c.h.b16 %v3581
    %v5464 = vunpack.c.l.b16 %v3582
    %v5465 = vunpack.c.h.b16 %v3582
    %v5466 = vunpack.c.l.b16 %v3583
    %v5467 = vunpack.c.h.b16 %v3583
    %v5468 = vunpack.c.l.b16 %v3584
    %v5469 = vunpack.c.h.b16 %v3584
    %v5470 = vunpack.c.l.b16 %v3585
    %v5471 = vunpack.c.h.b16 %v3585
    %v5472 = vunpack.c.l.b16 %v3586
    %v5473 = vunpack.c.h.b16 %v3586
    %v5474 = vunpack.c.l.b16 %v3587
    %v5475 = vunpack.c.h.b16 %v3587
    %v5476 = vunpack.c.l.b16 %v3588
    %v5477 = vunpack.c.h.b16 %v3588
    %v5478 = vunpack.c.l.b16 %v3589
    %v5479 = vunpack.c.h.b16 %v3589
    %v5480 = vunpack.c.l.b16 %v3590
    %v5481 = vunpack.c.h.b16 %v3590
    %v5482 = vunpack.c.l.b16 %v3591
    %v5483 = vunpack.c.h.b16 %v3591
    %v5484 = vunpack.c.l.b16 %v3592
    %v5485 = vunpack.c.h.b16 %v3592
    %v5486 = vunpack.c.l.b16 %v3593
    %v5487 = vunpack.c.h.b16 %v3593
    %v5488 = vunpack.c.l.b16 %v3594
    %v5489 = vunpack.c.h.b16 %v3594
    %v5490 = vunpack.c.l.b16 %v3595
    %v5491 = vunpack.c.h.b16 %v3595
    %v5492 = vunpack.c.l.b16 %v3596
    %v5493 = vunpack.c.h.b16 %v3596
    %v5494 = vunpack.c.l.b16 %v3597
    %v5495 = vunpack.c.h.b16 %v3597
    %v5496 = vunpack.c.l.b16 %v3598
    %v5497 = vunpack.c.h.b16 %v3598
    %v5498 = vunpack.c.l.b16 %v3599
    %v5499 = vunpack.c.h.b16 %v3599
    %v5500 = vunpack.c.l.b16 %v3600
    %v5501 = vunpack.c.h.b16 %v3600
    %v5502 = vunpack.c.l.b16 %v3601
    %v5503 = vunpack.c.h.b16 %v3601
    %v5504 = vunpack.c.l.b16 %v3602
    %v5505 = vunpack.c.h.b16 %v3602
    %v5506 = vunpack.c.l.b16 %v3603
    %v5507 = vunpack.c.h.b16 %v3603
    %v5508 = vunpack.c.l.b16 %v3604
    %v5509 = vunpack.c.h.b16 %v3604
    %v5510 = vunpack.c.l.b16 %v3605
    %v5511 = vunpack.c.h.b16 %v3605
    %v5512 = vunpack.c.l.b16 %v3606
    %v5513 = vunpack.c.h.b16 %v3606
    %v5514 = vunpack.c.l.b16 %v3607
    %v5515 = vunpack.c.h.b16 %v3607
    %v5516 = vunpack.c.l.b16 %v3608
    %v5517 = vunpack.c.h.b16 %v3608
    %v5518 = vunpack.c.l.b16 %v3609
    %v5519 = vunpack.c.h.b16 %v3609
    %v5520 = vunpack.c.l.b16 %v3610
    %v5521 = vunpack.c.h.b16 %v3610
    %v5522 = vunpack.c.l.b16 %v3611
    %v5523 = vunpack.c.h.b16 %v3611
    %v5524 = vunpack.c.l.b16 %v3612
    %v5525 = vunpack.c.h.b16 %v3612
    %v5526 = vunpack.c.l.b16 %v3613
    %v5527 = vunpack.c.h.b16 %v3613
    %v5528 = vunpack.c.l.b16 %v3614
    %v5529 = vunpack.c.h.b16 %v3614
    %v5530 = vunpack.c.l.b16 %v3615
    %v5531 = vunpack.c.h.b16 %v3615
    %v5532 = vunpack.c.l.b16 %v3616
    %v5533 = vunpack.c.h.b16 %v3616
    %v5534 = vunpack.c.l.b16 %v3617
    %v5535 = vunpack.c.h.b16 %v3617
    %v5536 = vunpack.c.l.b16 %v3618
    %v5537 = vunpack.c.h.b16 %v3618
    %v5538 = vunpack.c.l.b16 %v3619
    %v5539 = vunpack.c.h.b16 %v3619
    %v5540 = vunpack.c.l.b16 %v3620
    %v5541 = vunpack.c.h.b16 %v3620
    %v5542 = vunpack.c.l.b16 %v3621
    %v5543 = vunpack.c.h.b16 %v3621
    %v5544 = vunpack.c.l.b16 %v3622
    %v5545 = vunpack.c.h.b16 %v3622
    %v5546 = vunpack.c.l.b16 %v3623
    %v5547 = vunpack.c.h.b16 %v3623
    %v5548 = vunpack.c.l.b16 %v3624
    %v5549 = vunpack.c.h.b16 %v3624
    %v5550 = vunpack.c.l.b16 %v3625
    %v5551 = vunpack.c.h.b16 %v3625
    %v5552 = vunpack.c.l.b16 %v3626
    %v5553 = vunpack.c.h.b16 %v3626
    %v5554 = vunpack.c.l.b16 %v3627
    %v5555 = vunpack.c.h.b16 %v3627
    %v5556 = vunpack.c.l.b16 %v3628
    %v5557 = vunpack.c.h.b16 %v3628
    %v5558 = vunpack.c.l.b16 %v3629
    %v5559 = vunpack.c.h.b16 %v3629
    %v5560 = vunpack.c.l.b16 %v3630
    %v5561 = vunpack.c.h.b16 %v3630
    %v5562 = vunpack.c.l.b16 %v3631
    %v5563 = vunpack.c.h.b16 %v3631
    %v5564 = vunpack.c.l.b16 %v3632
    %v5565 = vunpack.c.h.b16 %v3632
    %v5566 = vunpack.c.l.b16 %v3633
    %v5567 = vunpack.c.h.b16 %v3633
    %v5568 = vunpack.c.l.b16 %v3634
    %v5569 = vunpack.c.h.b16 %v3634
    %v5570 = vunpack.c.l.b16 %v3635
    %v5571 = vunpack.c.h.b16 %v3635
    %v5572 = vunpack.c.l.b16 %v3636
    %v5573 = vunpack.c.h.b16 %v3636
    %v5574 = vunpack.c.l.b16 %v3637
    %v5575 = vunpack.c.h.b16 %v3637
    %v5576 = vunpack.c.l.b16 %v3638
    %v5577 = vunpack.c.h.b16 %v3638
    %v5578 = vunpack.c.l.b16 %v3639
    %v5579 = vunpack.c.h.b16 %v3639
    %v5580 = vunpack.c.l.b16 %v3640
    %v5581 = vunpack.c.h.b16 %v3640
    %v5582 = vunpack.c.l.b16 %v3641
    %v5583 = vunpack.c.h.b16 %v3641
    %v5584 = vunpack.c.l.b16 %v3642
    %v5585 = vunpack.c.h.b16 %v3642
    %v5586 = vunpack.c.l.b16 %v3643
    %v5587 = vunpack.c.h.b16 %v3643
    %v5588 = vunpack.c.l.b16 %v3644
    %v5589 = vunpack.c.h.b16 %v3644
    %v5590 = vunpack.c.l.b16 %v3645
    %v5591 = vunpack.c.h.b16 %v3645
    %v5592 = vunpack.c.l.b16 %v3646
    %v5593 = vunpack.c.h.b16 %v3646
    %v5594 = vunpack.c.l.b16 %v3647
    %v5595 = vunpack.c.h.b16 %v3647
    %v5596 = vunpack.c.l.b16 %v3648
    %v5597 = vunpack.c.h.b16 %v3648
    %v5598 = vunpack.c.l.b16 %v3649
    %v5599 = vunpack.c.h.b16 %v3649
    %v5600 = vunpack.c.l.b16 %v3650
    %v5601 = vunpack.c.h.b16 %v3650
    %v5602 = vunpack.c.l.b16 %v3651
    %v5603 = vunpack.c.h.b16 %v3651
    %v5604 = vunpack.c.l.b16 %v3652
    %v5605 = vunpack.c.h.b16 %v3652
    %v5606 = vunpack.c.l.b16 %v3653
    %v5607 = vunpack.c.h.b16 %v3653
    %v5608 = vunpack.c.l.b16 %v3654
    %v5609 = vunpack.c.h.b16 %v3654
    %v5610 = vunpack.c.l.b16 %v3655
    %v5611 = vunpack.c.h.b16 %v3655
    %v5612 = vunpack.c.l.b16 %v3656
    %v5613 = vunpack.c.h.b16 %v3656
    %v5614 = vunpack.c.l.b16 %v3657
    %v5615 = vunpack.c.h.b16 %v3657
    %v5616 = vunpack.c.l.b16 %v3658
    %v5617 = vunpack.c.h.b16 %v3658
    %v5618 = vunpack.c.l.b16 %v3659
    %v5619 = vunpack.c.h.b16 %v3659
    %v5620 = vunpack.c.l.b16 %v3660
    %v5621 = vunpack.c.h.b16 %v3660
    %v5622 = vunpack.c.l.b16 %v3661
    %v5623 = vunpack.c.h.b16 %v3661
    %v5624 = vunpack.c.l.b16 %v3662
    %v5625 = vunpack.c.h.b16 %v3662
    %v5626 = vunpack.c.l.b16 %v3663
    %v5627 = vunpack.c.h.b16 %v3663
    %v5628 = vunpack.c.l.b16 %v3664
    %v5629 = vunpack.c.h.b16 %v3664
    %v5630 = vunpack.c.l.b16 %v3665
    %v5631 = vunpack.c.h.b16 %v3665
    %v5632 = vunpack.c.l.b16 %v3666
    %v5633 = vunpack.c.h.b16 %v3666
    %v5634 = vunpack.c.l.b16 %v3667
    %v5635 = vunpack.c.h.b16 %v3667
    %v5636 = vunpack.c.l.b16 %v3668
    %v5637 = vunpack.c.h.b16 %v3668
    %v5638 = vunpack.c.l.b16 %v3669
    %v5639 = vunpack.c.h.b16 %v3669
    %v5640 = vunpack.c.l.b16 %v3670
    %v5641 = vunpack.c.h.b16 %v3670
    %v5642 = vunpack.c.l.b16 %v3671
    %v5643 = vunpack.c.h.b16 %v3671
    %v5644 = vunpack.c.l.b16 %v3672
    %v5645 = vunpack.c.h.b16 %v3672
    %v5646 = vunpack.c.l.b16 %v3673
    %v5647 = vunpack.c.h.b16 %v3673
    %v5648 = vunpack.c.l.b16 %v3674
    %v5649 = vunpack.c.h.b16 %v3674
    %v5650 = vunpack.c.l.b16 %v3675
    %v5651 = vunpack.c.h.b16 %v3675
    %v5652 = vunpack.c.l.b16 %v3676
    %v5653 = vunpack.c.h.b16 %v3676
    %v5654 = vunpack.c.l.b16 %v3677
    %v5655 = vunpack.c.h.b16 %v3677
    %v5656 = vunpack.c.l.b16 %v3678
    %v5657 = vunpack.c.h.b16 %v3678
    %v5658 = vunpack.c.l.b16 %v3679
    %v5659 = vunpack.c.h.b16 %v3679
    %v5660 = vunpack.c.l.b16 %v3680
    %v5661 = vunpack.c.h.b16 %v3680
    %v5662 = vunpack.c.l.b16 %v3681
    %v5663 = vunpack.c.h.b16 %v3681
    %v5664 = vunpack.c.l.b16 %v3682
    %v5665 = vunpack.c.h.b16 %v3682
    %v5666 = vunpack.c.l.b16 %v3683
    %v5667 = vunpack.c.h.b16 %v3683
    %v5668 = vunpack.c.l.b16 %v3684
    %v5669 = vunpack.c.h.b16 %v3684
    %v5670 = vunpack.c.l.b16 %v3685
    %v5671 = vunpack.c.h.b16 %v3685
    %v5672 = vunpack.c.l.b16 %v3686
    %v5673 = vunpack.c.h.b16 %v3686
    %v5674 = vunpack.c.l.b16 %v3687
    %v5675 = vunpack.c.h.b16 %v3687
    %v5676 = vunpack.c.l.b16 %v3688
    %v5677 = vunpack.c.h.b16 %v3688
    %v5678 = vunpack.c.l.b16 %v3689
    %v5679 = vunpack.c.h.b16 %v3689
    %v5680 = vunpack.c.l.b16 %v3690
    %v5681 = vunpack.c.h.b16 %v3690
    %v5682 = vunpack.c.l.b16 %v3691
    %v5683 = vunpack.c.h.b16 %v3691
    %v5684 = vunpack.c.l.b16 %v3692
    %v5685 = vunpack.c.h.b16 %v3692
    %v5686 = vunpack.c.l.b16 %v3693
    %v5687 = vunpack.c.h.b16 %v3693
    %v5688 = vunpack.c.l.b16 %v3694
    %v5689 = vunpack.c.h.b16 %v3694
    %v5690 = vunpack.c.l.b16 %v3695
    %v5691 = vunpack.c.h.b16 %v3695
    %v5692 = vunpack.c.l.b16 %v3696
    %v5693 = vunpack.c.h.b16 %v3696
    %v5694 = vunpack.c.l.b16 %v3697
    %v5695 = vunpack.c.h.b16 %v3697
    %v5696 = vunpack.c.l.b16 %v3698
    %v5697 = vunpack.c.h.b16 %v3698
    %v5698 = vunpack.c.l.b16 %v3699
    %v5699 = vunpack.c.h.b16 %v3699
    %v5700 = vunpack.c.l.b16 %v3700
    %v5701 = vunpack.c.h.b16 %v3700
    %v5702 = vunpack.c.l.b16 %v3701
    %v5703 = vunpack.c.h.b16 %v3701
    %v5704 = vunpack.c.l.b16 %v3702
    %v5705 = vunpack.c.h.b16 %v3702
    %v5706 = vunpack.c.l.b16 %v3703
    %v5707 = vunpack.c.h.b16 %v3703
    %v5708 = vunpack.c.l.b16 %v3704
    %v5709 = vunpack.c.h.b16 %v3704
    %v5710 = vunpack.c.l.b16 %v3705
    %v5711 = vunpack.c.h.b16 %v3705
    %v5712 = vunpack.c.l.b16 %v3706
    %v5713 = vunpack.c.h.b16 %v3706
    %v5714 = vunpack.c.l.b16 %v3707
    %v5715 = vunpack.c.h.b16 %v3707
    %v5716 = vunpack.c.l.b16 %v3708
    %v5717 = vunpack.c.h.b16 %v3708
    %v5718 = vunpack.c.l.b16 %v3709
    %v5719 = vunpack.c.h.b16 %v3709
    %v5720 = vunpack.c.l.b16 %v3710
    %v5721 = vunpack.c.h.b16 %v3710
    %v5722 = vunpack.c.l.b16 %v3711
    %v5723 = vunpack.c.h.b16 %v3711
    %v5724 = vunpack.c.l.b16 %v3712
    %v5725 = vunpack.c.h.b16 %v3712
    %v5726 = vunpack.c.l.b16 %v3713
    %v5727 = vunpack.c.h.b16 %v3713
    %v5728 = vunpack.c.l.b16 %v3714
    %v5729 = vunpack.c.h.b16 %v3714
    %v5730 = vunpack.c.l.b16 %v3715
    %v5731 = vunpack.c.h.b16 %v3715
    %v5732 = vunpack.c.l.b16 %v3716
    %v5733 = vunpack.c.h.b16 %v3716
    %v5734 = vunpack.c.l.b16 %v3717
    %v5735 = vunpack.c.h.b16 %v3717
    %v5736 = vunpack.c.l.b16 %v3718
    %v5737 = vunpack.c.h.b16 %v3718
    %v5738 = vunpack.c.l.b16 %v3719
    %v5739 = vunpack.c.h.b16 %v3719
    %v5740 = vunpack.c.l.b16 %v3720
    %v5741 = vunpack.c.h.b16 %v3720
    %v5742 = vunpack.c.l.b16 %v3721
    %v5743 = vunpack.c.h.b16 %v3721
    %v5744 = vunpack.c.l.b16 %v3722
    %v5745 = vunpack.c.h.b16 %v3722
    %v5746 = vunpack.c.l.b16 %v3723
    %v5747 = vunpack.c.h.b16 %v3723
    %v5748 = vunpack.c.l.b16 %v3724
    %v5749 = vunpack.c.h.b16 %v3724
    %v5750 = vunpack.c.l.b16 %v3725
    %v5751 = vunpack.c.h.b16 %v3725
    %v5752 = vunpack.c.l.b16 %v3726
    %v5753 = vunpack.c.h.b16 %v3726
    %v5754 = vunpack.c.l.b16 %v3727
    %v5755 = vunpack.c.h.b16 %v3727
    %v5756 = vunpack.c.l.b16 %v3728
    %v5757 = vunpack.c.h.b16 %v3728
    %v5758 = vunpack.c.l.b16 %v3729
    %v5759 = vunpack.c.h.b16 %v3729
    %v5760 = vunpack.c.l.b16 %v3730
    %v5761 = vunpack.c.h.b16 %v3730
    %v5762 = vunpack.c.l.b16 %v3731
    %v5763 = vunpack.c.h.b16 %v3731
    %v5764 = vunpack.c.l.b16 %v3732
    %v5765 = vunpack.c.h.b16 %v3732
    %v5766 = vunpack.c.l.b16 %v3733
    %v5767 = vunpack.c.h.b16 %v3733
    %v5768 = vunpack.c.l.b16 %v3734
    %v5769 = vunpack.c.h.b16 %v3734
    %v5770 = vunpack.c.l.b16 %v3735
    %v5771 = vunpack.c.h.b16 %v3735
    %v5772 = vunpack.c.l.b16 %v3736
    %v5773 = vunpack.c.h.b16 %v3736
    %v5774 = vunpack.c.l.b16 %v3737
    %v5775 = vunpack.c.h.b16 %v3737
    %v5776 = vunpack.c.l.b16 %v3738
    %v5777 = vunpack.c.h.b16 %v3738
    %v5778 = vunpack.c.l.b16 %v3739
    %v5779 = vunpack.c.h.b16 %v3739
    %v5780 = vunpack.c.l.b16 %v3740
    %v5781 = vunpack.c.h.b16 %v3740
    %v5782 = vunpack.c.l.b16 %v3741
    %v5783 = vunpack.c.h.b16 %v3741
    %v5784 = vunpack.c.l.b16 %v3742
    %v5785 = vunpack.c.h.b16 %v3742
    %v5786 = vunpack.c.l.b16 %v3743
    %v5787 = vunpack.c.h.b16 %v3743
    %v5788 = vunpack.c.l.b16 %v3744
    %v5789 = vunpack.c.h.b16 %v3744
    %v5790 = vunpack.c.l.b16 %v3745
    %v5791 = vunpack.c.h.b16 %v3745
    %v5792 = vunpack.c.l.b16 %v3746
    %v5793 = vunpack.c.h.b16 %v3746
    %v5794 = vunpack.c.l.b16 %v3747
    %v5795 = vunpack.c.h.b16 %v3747
    %v5796 = vunpack.c.l.b16 %v3748
    %v5797 = vunpack.c.h.b16 %v3748
    %v5798 = vunpack.c.l.b16 %v3749
    %v5799 = vunpack.c.h.b16 %v3749
    %v5800 = vunpack.c.l.b16 %v3750
    %v5801 = vunpack.c.h.b16 %v3750
    %v5802 = vunpack.c.l.b16 %v3751
    %v5803 = vunpack.c.h.b16 %v3751
    %v5804 = vunpack.c.l.b16 %v3752
    %v5805 = vunpack.c.h.b16 %v3752
    %v5806 = vunpack.c.l.b16 %v3753
    %v5807 = vunpack.c.h.b16 %v3753
    %v5808 = vunpack.c.l.b16 %v3754
    %v5809 = vunpack.c.h.b16 %v3754
    %v5810 = vunpack.c.l.b16 %v3755
    %v5811 = vunpack.c.h.b16 %v3755
    %v5812 = vunpack.c.l.b16 %v3756
    %v5813 = vunpack.c.h.b16 %v3756
    %v5814 = vunpack.c.l.b16 %v3757
    %v5815 = vunpack.c.h.b16 %v3757
    %v5816 = vunpack.c.l.b16 %v3758
    %v5817 = vunpack.c.h.b16 %v3758
    %v5818 = vunpack.c.l.b16 %v3759
    %v5819 = vunpack.c.h.b16 %v3759
    %v5820 = vunpack.c.l.b16 %v3760
    %v5821 = vunpack.c.h.b16 %v3760
    %v5822 = vunpack.c.l.b16 %v3761
    %v5823 = vunpack.c.h.b16 %v3761
    %v5824 = vunpack.c.l.b16 %v3762
    %v5825 = vunpack.c.h.b16 %v3762
    %v5826 = vunpack.c.l.b16 %v3763
    %v5827 = vunpack.c.h.b16 %v3763
    %v5828 = vunpack.c.l.b16 %v3764
    %v5829 = vunpack.c.h.b16 %v3764
    %v5830 = vunpack.c.l.b16 %v3765
    %v5831 = vunpack.c.h.b16 %v3765
    %v5832 = vunpack.c.l.b16 %v3766
    %v5833 = vunpack.c.h.b16 %v3766
    %v5834 = vunpack.c.l.b16 %v3767
    %v5835 = vunpack.c.h.b16 %v3767
    %v5836 = vunpack.c.l.b16 %v3768
    %v5837 = vunpack.c.h.b16 %v3768
    %v5838 = vunpack.c.l.b16 %v3769
    %v5839 = vunpack.c.h.b16 %v3769
    %v5840 = vunpack.c.l.b16 %v3770
    %v5841 = vunpack.c.h.b16 %v3770
    %v5842 = vunpack.c.l.b16 %v3771
    %v5843 = vunpack.c.h.b16 %v3771
    %v5844 = vunpack.c.l.b16 %v3772
    %v5845 = vunpack.c.h.b16 %v3772
    %v5846 = vunpack.c.l.b16 %v3773
    %v5847 = vunpack.c.h.b16 %v3773
    %v5848 = vunpack.c.l.b16 %v3774
    %v5849 = vunpack.c.h.b16 %v3774
    %v5850 = vunpack.c.l.b16 %v3775
    %v5851 = vunpack.c.h.b16 %v3775
    %v5852 = vunpack.c.l.b16 %v3776
    %v5853 = vunpack.c.h.b16 %v3776
    %v5854 = vunpack.c.l.b16 %v3777
    %v5855 = vunpack.c.h.b16 %v3777
    %v5856 = vunpack.c.l.b16 %v3778
    %v5857 = vunpack.c.h.b16 %v3778
    %v5858 = vunpack.c.l.b16 %v3779
    %v5859 = vunpack.c.h.b16 %v3779
    %v5860 = vunpack.c.l.b16 %v3780
    %v5861 = vunpack.c.h.b16 %v3780
    %v5862 = vunpack.c.l.b16 %v3781
    %v5863 = vunpack.c.h.b16 %v3781
    %v5864 = vunpack.c.l.b16 %v3782
    %v5865 = vunpack.c.h.b16 %v3782
    %v5866 = vunpack.c.l.b16 %v3783
    %v5867 = vunpack.c.h.b16 %v3783
    %v5868 = vunpack.c.l.b16 %v3784
    %v5869 = vunpack.c.h.b16 %v3784
    %v5870 = vunpack.c.l.b16 %v3785
    %v5871 = vunpack.c.h.b16 %v3785
    %v5872 = vunpack.c.l.b16 %v3786
    %v5873 = vunpack.c.h.b16 %v3786
    %v5874 = vunpack.c.l.b16 %v3787
    %v5875 = vunpack.c.h.b16 %v3787
    %v5876 = vunpack.c.l.b16 %v3788
    %v5877 = vunpack.c.h.b16 %v3788
    %v5878 = vunpack.c.l.b16 %v3789
    %v5879 = vunpack.c.h.b16 %v3789
    %v5880 = vunpack.c.l.b16 %v3790
    %v5881 = vunpack.c.h.b16 %v3790
    %v5882 = vunpack.c.l.b16 %v3791
    %v5883 = vunpack.c.h.b16 %v3791
    %v5884 = vunpack.c.l.b16 %v3792
    %v5885 = vunpack.c.h.b16 %v3792
    %v5886 = vunpack.c.l.b16 %v3793
    %v5887 = vunpack.c.h.b16 %v3793
    %v5888 = vunpack.c.l.b16 %v3794
    %v5889 = vunpack.c.h.b16 %v3794
    %v5890 = vunpack.c.l.b16 %v3795
    %v5891 = vunpack.c.h.b16 %v3795
    %v5892 = vunpack.c.l.b16 %v3796
    %v5893 = vunpack.c.h.b16 %v3796
    %v5894 = vunpack.c.l.b16 %v3797
    %v5895 = vunpack.c.h.b16 %v3797
    %v5896 = vunpack.c.l.b16 %v3798
    %v5897 = vunpack.c.h.b16 %v3798
    %v5898 = vunpack.c.l.b16 %v3799
    %v5899 = vunpack.c.h.b16 %v3799
    %v5900 = vunpack.c.l.b16 %v3800
    %v5901 = vunpack.c.h.b16 %v3800
    %v5902 = vunpack.c.l.b16 %v3801
    %v5903 = vunpack.c.h.b16 %v3801
    %v5904 = vunpack.c.l.b16 %v3802
    %v5905 = vunpack.c.h.b16 %v3802
    %v5906 = vunpack.c.l.b16 %v3803
    %v5907 = vunpack.c.h.b16 %v3803
    %v5908 = vunpack.c.l.b16 %v3804
    %v5909 = vunpack.c.h.b16 %v3804
    %v5910 = vunpack.c.l.b16 %v3805
    %v5911 = vunpack.c.h.b16 %v3805
    %v5912 = vunpack.c.l.b16 %v3806
    %v5913 = vunpack.c.h.b16 %v3806
    %v5914 = vunpack.c.l.b16 %v3807
    %v5915 = vunpack.c.h.b16 %v3807
    %v5916 = vunpack.c.l.b16 %v3808
    %v5917 = vunpack.c.h.b16 %v3808
    %v5918 = vunpack.c.l.b16 %v3809
    %v5919 = vunpack.c.h.b16 %v3809
    %v5920 = vunpack.c.l.b16 %v3810
    %v5921 = vunpack.c.h.b16 %v3810
    %v5922 = vunpack.c.l.b16 %v3811
    %v5923 = vunpack.c.h.b16 %v3811
    %v5924 = vunpack.c.l.b16 %v3812
    %v5925 = vunpack.c.h.b16 %v3812
    %v5926 = vunpack.c.l.b16 %v3813
    %v5927 = vunpack.c.h.b16 %v3813
    %v5928 = vunpack.c.l.b16 %v3814
    %v5929 = vunpack.c.h.b16 %v3814
    %v5930 = vunpack.c.l.b16 %v3815
    %v5931 = vunpack.c.h.b16 %v3815
    %v5932 = vunpack.c.l.b16 %v3816
    %v5933 = vunpack.c.h.b16 %v3816
    %v5934 = vunpack.c.l.b16 %v3817
    %v5935 = vunpack.c.h.b16 %v3817
    %v5936 = vunpack.c.l.b16 %v3818
    %v5937 = vunpack.c.h.b16 %v3818
    %v5938 = vunpack.c.l.b16 %v3819
    %v5939 = vunpack.c.h.b16 %v3819
    %v5940 = vunpack.c.l.b16 %v3820
    %v5941 = vunpack.c.h.b16 %v3820
    %v5942 = vunpack.c.l.b16 %v3821
    %v5943 = vunpack.c.h.b16 %v3821
    %v5944 = vunpack.c.l.b16 %v3822
    %v5945 = vunpack.c.h.b16 %v3822
    %v5946 = vunpack.c.l.b16 %v3823
    %v5947 = vunpack.c.h.b16 %v3823
    %v5948 = vunpack.c.l.b16 %v3824
    %v5949 = vunpack.c.h.b16 %v3824
    %v5950 = vunpack.c.l.b16 %v3825
    %v5951 = vunpack.c.h.b16 %v3825
    %v5952 = vunpack.c.l.b16 %v3826
    %v5953 = vunpack.c.h.b16 %v3826
    %v5954 = vunpack.c.l.b16 %v3827
    %v5955 = vunpack.c.h.b16 %v3827
    %v5956 = vunpack.c.l.b16 %v3828
    %v5957 = vunpack.c.h.b16 %v3828
    %v5958 = vunpack.c.l.b16 %v3829
    %v5959 = vunpack.c.h.b16 %v3829
    %v5960 = vunpack.c.l.b16 %v3830
    %v5961 = vunpack.c.h.b16 %v3830
    %v5962 = vunpack.c.l.b16 %v3831
    %v5963 = vunpack.c.h.b16 %v3831
    %v5964 = vunpack.c.l.b16 %v3832
    %v5965 = vunpack.c.h.b16 %v3832
    %v5966 = vunpack.c.l.b16 %v3833
    %v5967 = vunpack.c.h.b16 %v3833
    %v5968 = vunpack.c.l.b16 %v3834
    %v5969 = vunpack.c.h.b16 %v3834
    %v5970 = vunpack.c.l.b16 %v3835
    %v5971 = vunpack.c.h.b16 %v3835
    %v5972 = vunpack.c.l.b16 %v3836
    %v5973 = vunpack.c.h.b16 %v3836
    %v5974 = vunpack.c.l.b16 %v3837
    %v5975 = vunpack.c.h.b16 %v3837
    %v5976 = vunpack.c.l.b16 %v3838
    %v5977 = vunpack.c.h.b16 %v3838
    %v5978 = vunpack.c.l.b16 %v3839
    %v5979 = vunpack.c.h.b16 %v3839
    %v5980 = vunpack.c.l.b16 %v3840
    %v5981 = vunpack.c.h.b16 %v3840
    %v5982 = vunpack.c.l.b16 %v3841
    %v5983 = vunpack.c.h.b16 %v3841
    %v5984 = vunpack.c.l.b16 %v3842
    %v5985 = vunpack.c.h.b16 %v3842
    %v5986 = vunpack.c.l.b16 %v3843
    %v5987 = vunpack.c.h.b16 %v3843
    %v5988 = vunpack.c.l.b16 %v3844
    %v5989 = vunpack.c.h.b16 %v3844
    %v5990 = vunpack.c.l.b16 %v3845
    %v5991 = vunpack.c.h.b16 %v3845
    %v5992 = vunpack.c.l.b16 %v3846
    %v5993 = vunpack.c.h.b16 %v3846
    %v5994 = vunpack.c.l.b16 %v3847
    %v5995 = vunpack.c.h.b16 %v3847
    %v5996 = vunpack.c.l.b16 %v3848
    %v5997 = vunpack.c.h.b16 %v3848
    %v5998 = vunpack.c.l.b16 %v3849
    %v5999 = vunpack.c.h.b16 %v3849
    %v6000 = vunpack.c.l.b16 %v3850
    %v6001 = vunpack.c.h.b16 %v3850
    %v6002 = vunpack.c.l.b16 %v3851
    %v6003 = vunpack.c.h.b16 %v3851
    %v6004 = vunpack.c.l.b16 %v3852
    %v6005 = vunpack.c.h.b16 %v3852
    %v6006 = vunpack.c.l.b16 %v3853
    %v6007 = vunpack.c.h.b16 %v3853
    %v6008 = vunpack.c.l.b16 %v3854
    %v6009 = vunpack.c.h.b16 %v3854
    %v6010 = vunpack.c.l.b16 %v3855
    %v6011 = vunpack.c.h.b16 %v3855
    %v6012 = vunpack.c.l.b16 %v3856
    %v6013 = vunpack.c.h.b16 %v3856
    %v6014 = vunpack.c.l.b16 %v3857
    %v6015 = vunpack.c.h.b16 %v3857
    %v6016 = vunpack.c.l.b16 %v3858
    %v6017 = vunpack.c.h.b16 %v3858
    %v6018 = vunpack.c.l.b16 %v3859
    %v6019 = vunpack.c.h.b16 %v3859
    %v6020 = vunpack.c.l.b16 %v3860
    %v6021 = vunpack.c.h.b16 %v3860
    %v6022 = vunpack.c.l.b16 %v3861
    %v6023 = vunpack.c.h.b16 %v3861
    %v6024 = vunpack.c.l.b16 %v3862
    %v6025 = vunpack.c.h.b16 %v3862
    %v6026 = vunpack.c.l.b16 %v3863
    %v6027 = vunpack.c.h.b16 %v3863
    %v6028 = vunpack.c.l.b16 %v3864
    %v6029 = vunpack.c.h.b16 %v3864
    %v6030 = vunpack.c.l.b16 %v3865
    %v6031 = vunpack.c.h.b16 %v3865
    %v6032 = vunpack.c.l.b16 %v3866
    %v6033 = vunpack.c.h.b16 %v3866
    %v6034 = vunpack.c.l.b16 %v3867
    %v6035 = vunpack.c.h.b16 %v3867
    %v6036 = vunpack.c.l.b16 %v3868
    %v6037 = vunpack.c.h.b16 %v3868
    %v6038 = vunpack.c.l.b16 %v3869
    %v6039 = vunpack.c.h.b16 %v3869
    %v6040 = vunpack.c.l.b16 %v3870
    %v6041 = vunpack.c.h.b16 %v3870
    %v6042 = vunpack.c.l.b16 %v3871
    %v6043 = vunpack.c.h.b16 %v3871
    %v6044 = vunpack.c.l.b16 %v3872
    %v6045 = vunpack.c.h.b16 %v3872
    %v6046 = vunpack.c.l.b16 %v3873
    %v6047 = vunpack.c.h.b16 %v3873
    %v6048 = vunpack.c.l.b16 %v3874
    %v6049 = vunpack.c.h.b16 %v3874
    %v6050 = vunpack.c.l.b16 %v3875
    %v6051 = vunpack.c.h.b16 %v3875
    %v6052 = vunpack.c.l.b16 %v3876
    %v6053 = vunpack.c.h.b16 %v3876
    %v6054 = vunpack.c.l.b16 %v3877
    %v6055 = vunpack.c.h.b16 %v3877
    %v6056 = vunpack.c.l.b16 %v3878
    %v6057 = vunpack.c.h.b16 %v3878
    %v6058 = vunpack.c.l.b16 %v3879
    %v6059 = vunpack.c.h.b16 %v3879
    %v6060 = vunpack.c.l.b16 %v3880
    %v6061 = vunpack.c.h.b16 %v3880
    %v6062 = vunpack.c.l.b16 %v3881
    %v6063 = vunpack.c.h.b16 %v3881
    %v6064 = vunpack.c.l.b16 %v3882
    %v6065 = vunpack.c.h.b16 %v3882
    %v6066 = vunpack.c.l.b16 %v3883
    %v6067 = vunpack.c.h.b16 %v3883
    %v6068 = vunpack.c.l.b16 %v3884
    %v6069 = vunpack.c.h.b16 %v3884
    %v6070 = vunpack.c.l.b16 %v3885
    %v6071 = vunpack.c.h.b16 %v3885
    %v6072 = vunpack.c.l.b16 %v3886
    %v6073 = vunpack.c.h.b16 %v3886
    %v6074 = vunpack.c.l.b16 %v3887
    %v6075 = vunpack.c.h.b16 %v3887
    %v6076 = vunpack.c.l.b16 %v3888
    %v6077 = vunpack.c.h.b16 %v3888
    %v6078 = vunpack.c.l.b16 %v3889
    %v6079 = vunpack.c.h.b16 %v3889
    %v6080 = vunpack.c.l.b16 %v3890
    %v6081 = vunpack.c.h.b16 %v3890
    %v6082 = vunpack.c.l.b16 %v3891
    %v6083 = vunpack.c.h.b16 %v3891
    %v6084 = vunpack.c.l.b16 %v3892
    %v6085 = vunpack.c.h.b16 %v3892
    %v6086 = vunpack.c.l.b16 %v3893
    %v6087 = vunpack.c.h.b16 %v3893
    %v6088 = vunpack.c.l.b16 %v3894
    %v6089 = vunpack.c.h.b16 %v3894
    %v6090 = vunpack.c.l.b16 %v3895
    %v6091 = vunpack.c.h.b16 %v3895
    %v6092 = vunpack.c.l.b16 %v3896
    %v6093 = vunpack.c.h.b16 %v3896
    %v6094 = vunpack.c.l.b16 %v3897
    %v6095 = vunpack.c.h.b16 %v3897
    %v6096 = vunpack.c.l.b16 %v3898
    %v6097 = vunpack.c.h.b16 %v3898
    %v6098 = vunpack.c.l.b16 %v3899
    %v6099 = vunpack.c.h.b16 %v3899
    %v6100 = vunpack.c.l.b16 %v3900
    %v6101 = vunpack.c.h.b16 %v3900
    %v6102 = vunpack.c.l.b16 %v3901
    %v6103 = vunpack.c.h.b16 %v3901
    %v6104 = vunpack.c.l.b16 %v3902
    %v6105 = vunpack.c.h.b16 %v3902
    %v6106 = vunpack.c.l.b16 %v3903
    %v6107 = vunpack.c.h.b16 %v3903
    %v6108 = vunpack.c.l.b16 %v3904
    %v6109 = vunpack.c.h.b16 %v3904
    %v6110 = vunpack.c.l.b16 %v3905
    %v6111 = vunpack.c.h.b16 %v3905
    %v6112 = vunpack.c.l.b16 %v3906
    %v6113 = vunpack.c.h.b16 %v3906
    %v6114 = vunpack.c.l.b16 %v3907
    %v6115 = vunpack.c.h.b16 %v3907
    %v6116 = vunpack.c.l.b16 %v3908
    %v6117 = vunpack.c.h.b16 %v3908
    %v6118 = vunpack.c.l.b16 %v3909
    %v6119 = vunpack.c.h.b16 %v3909
    %v6120 = vunpack.c.l.b16 %v3910
    %v6121 = vunpack.c.h.b16 %v3910
    %v6122 = vunpack.c.l.b16 %v3911
    %v6123 = vunpack.c.h.b16 %v3911
    %v6124 = vunpack.c.l.b16 %v3912
    %v6125 = vunpack.c.h.b16 %v3912
    %v6126 = vunpack.c.l.b16 %v3913
    %v6127 = vunpack.c.h.b16 %v3913
    %v6128 = vunpack.c.l.b16 %v3914
    %v6129 = vunpack.c.h.b16 %v3914
    %v6130 = vunpack.c.l.b16 %v3915
    %v6131 = vunpack.c.h.b16 %v3915
    %v6132 = vunpack.c.l.b16 %v3916
    %v6133 = vunpack.c.h.b16 %v3916
    %v6134 = vunpack.c.l.b16 %v3917
    %v6135 = vunpack.c.h.b16 %v3917
    %v6136 = vunpack.c.l.b16 %v3918
    %v6137 = vunpack.c.h.b16 %v3918
    %v6138 = vunpack.c.l.b16 %v3919
    %v6139 = vunpack.c.h.b16 %v3919
    %v6140 = vunpack.c.l.b16 %v3920
    %v6141 = vunpack.c.h.b16 %v3920
    %v6142 = vunpack.c.l.b16 %v3921
    %v6143 = vunpack.c.h.b16 %v3921
    %v6144 = vunpack.c.l.b16 %v3922
    %v6145 = vunpack.c.h.b16 %v3922
    %v6146 = vunpack.c.l.b16 %v3923
    %v6147 = vunpack.c.h.b16 %v3923
    %v6148 = vunpack.c.l.b16 %v3924
    %v6149 = vunpack.c.h.b16 %v3924
    %v6150 = vunpack.c.l.b16 %v3925
    %v6151 = vunpack.c.h.b16 %v3925
    %v6152 = vunpack.c.l.b16 %v3926
    %v6153 = vunpack.c.h.b16 %v3926
    %v6154 = vunpack.c.l.b16 %v3927
    %v6155 = vunpack.c.h.b16 %v3927
    %v6156 = vunpack.c.l.b16 %v3928
    %v6157 = vunpack.c.h.b16 %v3928
    %v6158 = vunpack.c.l.b16 %v3929
    %v6159 = vunpack.c.h.b16 %v3929
    %v6160 = vunpack.c.l.b16 %v3930
    %v6161 = vunpack.c.h.b16 %v3930
    %v6162 = vunpack.c.l.b16 %v3931
    %v6163 = vunpack.c.h.b16 %v3931
    %v6164 = vunpack.c.l.b16 %v3932
    %v6165 = vunpack.c.h.b16 %v3932
    %v6166 = vunpack.c.l.b16 %v3933
    %v6167 = vunpack.c.h.b16 %v3933
    %v6168 = vunpack.c.l.b16 %v3934
    %v6169 = vunpack.c.h.b16 %v3934
    %v6170 = vunpack.c.l.b16 %v3935
    %v6171 = vunpack.c.h.b16 %v3935
    %v6172 = vunpack.c.l.b16 %v3936
    %v6173 = vunpack.c.h.b16 %v3936
    %v6174 = vunpack.c.l.b16 %v3937
    %v6175 = vunpack.c.h.b16 %v3937
    %v6176 = vunpack.c.l.b16 %v3938
    %v6177 = vunpack.c.h.b16 %v3938
    %v6178 = vunpack.c.l.b16 %v3939
    %v6179 = vunpack.c.h.b16 %v3939
    %v6180 = vunpack.c.l.b16 %v3940
    %v6181 = vunpack.c.h.b16 %v3940
    %v6182 = vunpack.c.l.b16 %v3941
    %v6183 = vunpack.c.h.b16 %v3941
    %v6184 = vunpack.c.l.b16 %v3942
    %v6185 = vunpack.c.h.b16 %v3942
    %v6186 = vunpack.c.l.b16 %v3943
    %v6187 = vunpack.c.h.b16 %v3943
    %v6188 = vunpack.c.l.b16 %v3944
    %v6189 = vunpack.c.h.b16 %v3944
    %v6190 = vunpack.c.l.b16 %v3945
    %v6191 = vunpack.c.h.b16 %v3945
    %v6192 = vunpack.c.l.b16 %v3946
    %v6193 = vunpack.c.h.b16 %v3946
    %v6194 = vunpack.c.l.b16 %v3947
    %v6195 = vunpack.c.h.b16 %v3947
    %v6196 = vunpack.c.l.b16 %v3948
    %v6197 = vunpack.c.h.b16 %v3948
    %v6198 = vunpack.c.l.b16 %v3949
    %v6199 = vunpack.c.h.b16 %v3949
    %v6200 = vunpack.c.l.b16 %v3950
    %v6201 = vunpack.c.h.b16 %v3950
    %v6202 = vunpack.c.l.b16 %v3951
    %v6203 = vunpack.c.h.b16 %v3951
    %v6204 = vunpack.c.l.b16 %v3952
    %v6205 = vunpack.c.h.b16 %v3952
    %v6206 = vunpack.c.l.b16 %v3953
    %v6207 = vunpack.c.h.b16 %v3953
    %v6208 = vunpack.c.l.b16 %v3954
    %v6209 = vunpack.c.h.b16 %v3954
    %v6210 = vunpack.c.l.b16 %v3955
    %v6211 = vunpack.c.h.b16 %v3955
    %v6212 = vunpack.c.l.b16 %v3956
    %v6213 = vunpack.c.h.b16 %v3956
    %v6214 = vunpack.c.l.b16 %v3957
    %v6215 = vunpack.c.h.b16 %v3957
    %v6216 = vunpack.c.l.b16 %v3958
    %v6217 = vunpack.c.h.b16 %v3958
    %v6218 = vunpack.c.l.b16 %v3959
    %v6219 = vunpack.c.h.b16 %v3959
    %v6220 = vunpack.c.l.b16 %v3960
    %v6221 = vunpack.c.h.b16 %v3960
    %v6222 = vunpack.c.l.b16 %v3961
    %v6223 = vunpack.c.h.b16 %v3961
    %v6224 = vunpack.c.l.b16 %v3962
    %v6225 = vunpack.c.h.b16 %v3962
    %v6226 = vunpack.c.l.b16 %v3963
    %v6227 = vunpack.c.h.b16 %v3963
    %v6228 = vunpack.c.l.b16 %v3964
    %v6229 = vunpack.c.h.b16 %v3964
    %v6230 = vunpack.c.l.b16 %v3965
    %v6231 = vunpack.c.h.b16 %v3965
    %v6232 = vunpack.c.l.b16 %v3966
    %v6233 = vunpack.c.h.b16 %v3966
    %v6234 = vunpack.c.l.b16 %v3967
    %v6235 = vunpack.c.h.b16 %v3967
    %v6236 = vunpack.c.l.b16 %v3968
    %v6237 = vunpack.c.h.b16 %v3968
    %v6238 = vunpack.c.l.b16 %v3969
    %v6239 = vunpack.c.h.b16 %v3969
    %v6240 = vunpack.c.l.b16 %v3970
    %v6241 = vunpack.c.h.b16 %v3970
    %v6242 = vunpack.c.l.b16 %v3971
    %v6243 = vunpack.c.h.b16 %v3971
    %v6244 = vunpack.c.l.b16 %v3972
    %v6245 = vunpack.c.h.b16 %v3972
    %v6246 = vunpack.c.l.b16 %v3973
    %v6247 = vunpack.c.h.b16 %v3973
    %v6248 = vunpack.c.l.b16 %v3974
    %v6249 = vunpack.c.h.b16 %v3974
    %v6250 = vunpack.c.l.b16 %v3975
    %v6251 = vunpack.c.h.b16 %v3975
    %v6252 = vunpack.c.l.b16 %v3976
    %v6253 = vunpack.c.h.b16 %v3976
    %v6254 = vunpack.c.l.b16 %v3977
    %v6255 = vunpack.c.h.b16 %v3977
    %v6256 = vunpack.c.l.b16 %v3978
    %v6257 = vunpack.c.h.b16 %v3978
    %v6258 = vunpack.c.l.b16 %v3979
    %v6259 = vunpack.c.h.b16 %v3979
    %v6260 = vunpack.c.l.b16 %v3980
    %v6261 = vunpack.c.h.b16 %v3980
    %v6262 = vunpack.c.l.b16 %v3981
    %v6263 = vunpack.c.h.b16 %v3981
    %v6264 = vunpack.c.l.b16 %v3982
    %v6265 = vunpack.c.h.b16 %v3982
    %v6266 = vunpack.c.l.b16 %v3983
    %v6267 = vunpack.c.h.b16 %v3983
    %v6268 = vunpack.c.l.b16 %v3984
    %v6269 = vunpack.c.h.b16 %v3984
    %v6270 = vunpack.c.l.b16 %v3985
    %v6271 = vunpack.c.h.b16 %v3985
    %v6272 = vunpack.c.l.b16 %v3986
    %v6273 = vunpack.c.h.b16 %v3986
    %v6274 = vunpack.c.l.b16 %v3987
    %v6275 = vunpack.c.h.b16 %v3987
    %v6276 = vunpack.c.l.b16 %v3988
    %v6277 = vunpack.c.h.b16 %v3988
    %v6278 = vunpack.c.l.b16 %v3989
    %v6279 = vunpack.c.h.b16 %v3989
    %v6280 = vunpack.c.l.b16 %v3990
    %v6281 = vunpack.c.h.b16 %v3990
    %v6282 = vunpack.c.l.b16 %v3991
    %v6283 = vunpack.c.h.b16 %v3991
    %v6284 = vunpack.c.l.b16 %v3992
    %v6285 = vunpack.c.h.b16 %v3992
    %v6286 = vunpack.c.l.b16 %v3993
    %v6287 = vunpack.c.h.b16 %v3993
    %v6288 = vunpack.c.l.b16 %v3994
    %v6289 = vunpack.c.h.b16 %v3994
    %v6290 = vunpack.c.l.b16 %v3995
    %v6291 = vunpack.c.h.b16 %v3995
    %v6292 = vunpack.c.l.b16 %v3996
    %v6293 = vunpack.c.h.b16 %v3996
    %v6294 = vunpack.c.l.b16 %v3997
    %v6295 = vunpack.c.h.b16 %v3997
    %v6296 = vunpack.c.l.b16 %v3998
    %v6297 = vunpack.c.h.b16 %v3998
    %v6298 = vunpack.c.l.b16 %v3999
    %v6299 = vunpack.c.h.b16 %v3999
    %v6300 = vunpack.c.l.b16 %v4000
    %v6301 = vunpack.c.h.b16 %v4000
    %v6302 = vunpack.c.l.b16 %v4001
    %v6303 = vunpack.c.h.b16 %v4001
    %v6304 = vunpack.c.l.b16 %v4002
    %v6305 = vunpack.c.h.b16 %v4002
    %v6306 = vunpack.c.l.b16 %v4003
    %v6307 = vunpack.c.h.b16 %v4003
    %v6308 = vunpack.c.l.b16 %v4004
    %v6309 = vunpack.c.h.b16 %v4004
    %v6310 = vunpack.c.l.b16 %v4005
    %v6311 = vunpack.c.h.b16 %v4005
    %v6312 = vunpack.c.l.b16 %v4006
    %v6313 = vunpack.c.h.b16 %v4006
    %v6314 = vunpack.c.l.b16 %v4007
    %v6315 = vunpack.c.h.b16 %v4007
    %v6316 = vunpack.c.l.b16 %v4008
    %v6317 = vunpack.c.h.b16 %v4008
    %v6318 = vunpack.c.l.b16 %v4009
    %v6319 = vunpack.c.h.b16 %v4009
    %v6320 = vunpack.c.l.b16 %v4010
    %v6321 = vunpack.c.h.b16 %v4010
    %v6322 = vunpack.c.l.b16 %v4011
    %v6323 = vunpack.c.h.b16 %v4011
    %v6324 = vunpack.c.l.b16 %v4012
    %v6325 = vunpack.c.h.b16 %v4012
    %v6326 = vunpack.c.l.b16 %v4013
    %v6327 = vunpack.c.h.b16 %v4013
    %v6328 = vunpack.c.l.b16 %v4014
    %v6329 = vunpack.c.h.b16 %v4014
    %v6330 = vunpack.c.l.b16 %v4015
    %v6331 = vunpack.c.h.b16 %v4015
    %v6332 = vpack.c.b16 %v4798, %v4796
    %v6333 = vpack.c.b16 %v4799, %v4797
    %v6334 = vpack.c.b16 %v4802, %v4800
    %v6335 = vpack.c.b16 %v4803, %v4801
    %v6336 = vpack.c.b16 %v4806, %v4804
    %v6337 = vpack.c.b16 %v4807, %v4805
    %v6338 = vpack.c.b16 %v4810, %v4808
    %v6339 = vpack.c.b16 %v4811, %v4809
    %v6340 = vpack.c.b16 %v4814, %v4812
    %v6341 = vpack.c.b16 %v4815, %v4813
    %v6342 = vpack.c.b16 %v4818, %v4816
    %v6343 = vpack.c.b16 %v4819, %v4817
    %v6344 = vpack.c.b16 %v4822, %v4820
    %v6345 = vpack.c.b16 %v4823, %v4821
    %v6346 = vpack.c.b16 %v4826, %v4824
    %v6347 = vpack.c.b16 %v4827, %v4825
    %v6348 = vpack.c.b16 %v4830, %v4828
    %v6349 = vpack.c.b16 %v4831, %v4829
    %v6350 = vpack.c.b16 %v4834, %v4832
    %v6351 = vpack.c.b16 %v4835, %v4833
    %v6352 = vpack.c.b16 %v4838, %v4836
    %v6353 = vpack.c.b16 %v4839, %v4837
    %v6354 = vpack.c.b16 %v4842, %v4840
    %v6355 = vpack.c.b16 %v4843, %v4841
    %v6356 = vpack.c.b16 %v4846, %v4844
    %v6357 = vpack.c.b16 %v4847, %v4845
    %v6358 = vpack.c.b16 %v4850, %v4848
    %v6359 = vpack.c.b16 %v4851, %v4849
    %v6360 = vpack.c.b16 %v4854, %v4852
    %v6361 = vpack.c.b16 %v4855, %v4853
    %v6362 = vpack.c.b16 %v4858, %v4856
    %v6363 = vpack.c.b16 %v4859, %v4857
    %v6364 = vpack.c.b16 %v4862, %v4860
    %v6365 = vpack.c.b16 %v4863, %v4861
    %v6366 = vpack.c.b16 %v4866, %v4864
    %v6367 = vpack.c.b16 %v4867, %v4865
    %v6368 = vpack.c.b16 %v4870, %v4868
    %v6369 = vpack.c.b16 %v4871, %v4869
    %v6370 = vpack.c.b16 %v4874, %v4872
    %v6371 = vpack.c.b16 %v4875, %v4873
    %v6372 = vpack.c.b16 %v4878, %v4876
    %v6373 = vpack.c.b16 %v4879, %v4877
    %v6374 = vpack.c.b16 %v4882, %v4880
    %v6375 = vpack.c.b16 %v4883, %v4881
    %v6376 = vpack.c.b16 %v4886, %v4884
    %v6377 = vpack.c.b16 %v4887, %v4885
    %v6378 = vpack.c.b16 %v4890, %v4888
    %v6379 = vpack.c.b16 %v4891, %v4889
    %v6380 = vpack.c.b16 %v4894, %v4892
    %v6381 = vpack.c.b16 %v4895, %v4893
    %v6382 = vpack.c.b16 %v4898, %v4896
    %v6383 = vpack.c.b16 %v4899, %v4897
    %v6384 = vpack.c.b16 %v4902, %v4900
    %v6385 = vpack.c.b16 %v4903, %v4901
    %v6386 = vpack.c.b16 %v4906, %v4904
    %v6387 = vpack.c.b16 %v4907, %v4905
    %v6388 = vpack.c.b16 %v4910, %v4908
    %v6389 = vpack.c.b16 %v4911, %v4909
    %v6390 = vpack.c.b16 %v4914, %v4912
    %v6391 = vpack.c.b16 %v4915, %v4913
    %v6392 = vpack.c.b16 %v4918, %v4916
    %v6393 = vpack.c.b16 %v4919, %v4917
    %v6394 = vpack.c.b16 %v4922, %v4920
    %v6395 = vpack.c.b16 %v4923, %v4921
    %v6396 = vpack.c.b16 %v4926, %v4924
    %v6397 = vpack.c.b16 %v4927, %v4925
    %v6398 = vpack.c.b16 %v4930, %v4928
    %v6399 = vpack.c.b16 %v4931, %v4929
    %v6400 = vpack.c.b16 %v4934, %v4932
    %v6401 = vpack.c.b16 %v4935, %v4933
    %v6402 = vpack.c.b16 %v4938, %v4936
    %v6403 = vpack.c.b16 %v4939, %v4937
    %v6404 = vpack.c.b16 %v4942, %v4940
    %v6405 = vpack.c.b16 %v4943, %v4941
    %v6406 = vpack.c.b16 %v4946, %v4944
    %v6407 = vpack.c.b16 %v4947, %v4945
    %v6408 = vpack.c.b16 %v4950, %v4948
    %v6409 = vpack.c.b16 %v4951, %v4949
    %v6410 = vpack.c.b16 %v4954, %v4952
    %v6411 = vpack.c.b16 %v4955, %v4953
    %v6412 = vpack.c.b16 %v4958, %v4956
    %v6413 = vpack.c.b16 %v4959, %v4957
    %v6414 = vpack.c.b16 %v4962, %v4960
    %v6415 = vpack.c.b16 %v4963, %v4961
    %v6416 = vpack.c.b16 %v4966, %v4964
    %v6417 = vpack.c.b16 %v4967, %v4965
    %v6418 = vpack.c.b16 %v4970, %v4968
    %v6419 = vpack.c.b16 %v4971, %v4969
    %v6420 = vpack.c.b16 %v4974, %v4972
    %v6421 = vpack.c.b16 %v4975, %v4973
    %v6422 = vpack.c.b16 %v4978, %v4976
    %v6423 = vpack.c.b16 %v4979, %v4977
    %v6424 = vpack.c.b16 %v4982, %v4980
    %v6425 = vpack.c.b16 %v4983, %v4981
    %v6426 = vpack.c.b16 %v4986, %v4984
    %v6427 = vpack.c.b16 %v4987, %v4985
    %v6428 = vpack.c.b16 %v4990, %v4988
    %v6429 = vpack.c.b16 %v4991, %v4989
    %v6430 = vpack.c.b16 %v4994, %v4992
    %v6431 = vpack.c.b16 %v4995, %v4993
    %v6432 = vpack.c.b16 %v4998, %v4996
    %v6433 = vpack.c.b16 %v4999, %v4997
    %v6434 = vpack.c.b16 %v5002, %v5000
    %v6435 = vpack.c.b16 %v5003, %v5001
    %v6436 = vpack.c.b16 %v5006, %v5004
    %v6437 = vpack.c.b16 %v5007, %v5005
    %v6438 = vpack.c.b16 %v5010, %v5008
    %v6439 = vpack.c.b16 %v5011, %v5009
    %v6440 = vpack.c.b16 %v5014, %v5012
    %v6441 = vpack.c.b16 %v5015, %v5013
    %v6442 = vpack.c.b16 %v5018, %v5016
    %v6443 = vpack.c.b16 %v5019, %v5017
    %v6444 = vpack.c.b16 %v5022, %v5020
    %v6445 = vpack.c.b16 %v5023, %v5021
    %v6446 = vpack.c.b16 %v5026, %v5024
    %v6447 = vpack.c.b16 %v5027, %v5025
    %v6448 = vpack.c.b16 %v5030, %v5028
    %v6449 = vpack.c.b16 %v5031, %v5029
    %v6450 = vpack.c.b16 %v5034, %v5032
    %v6451 = vpack.c.b16 %v5035, %v5033
    %v6452 = vpack.c.b16 %v5038, %v5036
    %v6453 = vpack.c.b16 %v5039, %v5037
    %v6454 = vpack.c.b16 %v5042, %v5040
    %v6455 = vpack.c.b16 %v5043, %v5041
    %v6456 = vpack.c.b16 %v5046, %v5044
    %v6457 = vpack.c.b16 %v5047, %v5045
    %v6458 = vpack.c.b16 %v5050, %v5048
    %v6459 = vpack.c.b16 %v5051, %v5049
    %v6460 = vpack.c.b16 %v5054, %v5052
    %v6461 = vpack.c.b16 %v5055, %v5053
    %v6462 = vpack.c.b16 %v5058, %v5056
    %v6463 = vpack.c.b16 %v5059, %v5057
    %v6464 = vpack.c.b16 %v5062, %v5060
    %v6465 = vpack.c.b16 %v5063, %v5061
    %v6466 = vpack.c.b16 %v5066, %v5064
    %v6467 = vpack.c.b16 %v5067, %v5065
    %v6468 = vpack.c.b16 %v5070, %v5068
    %v6469 = vpack.c.b16 %v5071, %v5069
    %v6470 = vpack.c.b16 %v5074, %v5072
    %v6471 = vpack.c.b16 %v5075, %v5073
    %v6472 = vpack.c.b16 %v5078, %v5076
    %v6473 = vpack.c.b16 %v5079, %v5077
    %v6474 = vpack.c.b16 %v5082, %v5080
    %v6475 = vpack.c.b16 %v5083, %v5081
    %v6476 = vpack.c.b16 %v5086, %v5084
    %v6477 = vpack.c.b16 %v5087, %v5085
    %v6478 = vpack.c.b16 %v5090, %v5088
    %v6479 = vpack.c.b16 %v5091, %v5089
    %v6480 = vpack.c.b16 %v5094, %v5092
    %v6481 = vpack.c.b16 %v5095, %v5093
    %v6482 = vpack.c.b16 %v5098, %v5096
    %v6483 = vpack.c.b16 %v5099, %v5097
    %v6484 = vpack.c.b16 %v5102, %v5100
    %v6485 = vpack.c.b16 %v5103, %v5101
    %v6486 = vpack.c.b16 %v5106, %v5104
    %v6487 = vpack.c.b16 %v5107, %v5105
    %v6488 = vpack.c.b16 %v5110, %v5108
    %v6489 = vpack.c.b16 %v5111, %v5109
    %v6490 = vpack.c.b16 %v5114, %v5112
    %v6491 = vpack.c.b16 %v5115, %v5113
    %v6492 = vpack.c.b16 %v5118, %v5116
    %v6493 = vpack.c.b16 %v5119, %v5117
    %v6494 = vpack.c.b16 %v5122, %v5120
    %v6495 = vpack.c.b16 %v5123, %v5121
    %v6496 = vpack.c.b16 %v5126, %v5124
    %v6497 = vpack.c.b16 %v5127, %v5125
    %v6498 = vpack.c.b16 %v5130, %v5128
    %v6499 = vpack.c.b16 %v5131, %v5129
    %v6500 = vpack.c.b16 %v5134, %v5132
    %v6501 = vpack.c.b16 %v5135, %v5133
    %v6502 = vpack.c.b16 %v5138, %v5136
    %v6503 = vpack.c.b16 %v5139, %v5137
    %v6504 = vpack.c.b16 %v5142, %v5140
    %v6505 = vpack.c.b16 %v5143, %v5141
    %v6506 = vpack.c.b16 %v5146, %v5144
    %v6507 = vpack.c.b16 %v5147, %v5145
    %v6508 = vpack.c.b16 %v5150, %v5148
    %v6509 = vpack.c.b16 %v5151, %v5149
    %v6510 = vpack.c.b16 %v5154, %v5152
    %v6511 = vpack.c.b16 %v5155, %v5153
    %v6512 = vpack.c.b16 %v5158, %v5156
    %v6513 = vpack.c.b16 %v5159, %v5157
    %v6514 = vpack.c.b16 %v5162, %v5160
    %v6515 = vpack.c.b16 %v5163, %v5161
    %v6516 = vpack.c.b16 %v5166, %v5164
    %v6517 = vpack.c.b16 %v5167, %v5165
    %v6518 = vpack.c.b16 %v5170, %v5168
    %v6519 = vpack.c.b16 %v5171, %v5169
    %v6520 = vpack.c.b16 %v5174, %v5172
    %v6521 = vpack.c.b16 %v5175, %v5173
    %v6522 = vpack.c.b16 %v5178, %v5176
    %v6523 = vpack.c.b16 %v5179, %v5177
    %v6524 = vpack.c.b16 %v5182, %v5180
    %v6525 = vpack.c.b16 %v5183, %v5181
    %v6526 = vpack.c.b16 %v5186, %v5184
    %v6527 = vpack.c.b16 %v5187, %v5185
    %v6528 = vpack.c.b16 %v5190, %v5188
    %v6529 = vpack.c.b16 %v5191, %v5189
    %v6530 = vpack.c.b16 %v5194, %v5192
    %v6531 = vpack.c.b16 %v5195, %v5193
    %v6532 = vpack.c.b16 %v5198, %v5196
    %v6533 = vpack.c.b16 %v5199, %v5197
    %v6534 = vpack.c.b16 %v5202, %v5200
    %v6535 = vpack.c.b16 %v5203, %v5201
    %v6536 = vpack.c.b16 %v5206, %v5204
    %v6537 = vpack.c.b16 %v5207, %v5205
    %v6538 = vpack.c.b16 %v5210, %v5208
    %v6539 = vpack.c.b16 %v5211, %v5209
    %v6540 = vpack.c.b16 %v5214, %v5212
    %v6541 = vpack.c.b16 %v5215, %v5213
    %v6542 = vpack.c.b16 %v5218, %v5216
    %v6543 = vpack.c.b16 %v5219, %v5217
    %v6544 = vpack.c.b16 %v5222, %v5220
    %v6545 = vpack.c.b16 %v5223, %v5221
    %v6546 = vpack.c.b16 %v5226, %v5224
    %v6547 = vpack.c.b16 %v5227, %v5225
    %v6548 = vpack.c.b16 %v5230, %v5228
    %v6549 = vpack.c.b16 %v5231, %v5229
    %v6550 = vpack.c.b16 %v5234, %v5232
    %v6551 = vpack.c.b16 %v5235, %v5233
    %v6552 = vpack.c.b16 %v5238, %v5236
    %v6553 = vpack.c.b16 %v5239, %v5237
    %v6554 = vpack.c.b16 %v5242, %v5240
    %v6555 = vpack.c.b16 %v5243, %v5241
    %v6556 = vpack.c.b16 %v5246, %v5244
    %v6557 = vpack.c.b16 %v5247, %v5245
    %v6558 = vpack.c.b16 %v5250, %v5248
    %v6559 = vpack.c.b16 %v5251, %v5249
    %v6560 = vpack.c.b16 %v5254, %v5252
    %v6561 = vpack.c.b16 %v5255, %v5253
    %v6562 = vpack.c.b16 %v5258, %v5256
    %v6563 = vpack.c.b16 %v5259, %v5257
    %v6564 = vpack.c.b16 %v5262, %v5260
    %v6565 = vpack.c.b16 %v5263, %v5261
    %v6566 = vpack.c.b16 %v5266, %v5264
    %v6567 = vpack.c.b16 %v5267, %v5265
    %v6568 = vpack.c.b16 %v5270, %v5268
    %v6569 = vpack.c.b16 %v5271, %v5269
    %v6570 = vpack.c.b16 %v5274, %v5272
    %v6571 = vpack.c.b16 %v5275, %v5273
    %v6572 = vpack.c.b16 %v5278, %v5276
    %v6573 = vpack.c.b16 %v5279, %v5277
    %v6574 = vpack.c.b16 %v5282, %v5280
    %v6575 = vpack.c.b16 %v5283, %v5281
    %v6576 = vpack.c.b16 %v5286, %v5284
    %v6577 = vpack.c.b16 %v5287, %v5285
    %v6578 = vpack.c.b16 %v5290, %v5288
    %v6579 = vpack.c.b16 %v5291, %v5289
    %v6580 = vpack.c.b16 %v5294, %v5292
    %v6581 = vpack.c.b16 %v5295, %v5293
    %v6582 = vpack.c.b16 %v5298, %v5296
    %v6583 = vpack.c.b16 %v5299, %v5297
    %v6584 = vpack.c.b16 %v5302, %v5300
    %v6585 = vpack.c.b16 %v5303, %v5301
    %v6586 = vpack.c.b16 %v5306, %v5304
    %v6587 = vpack.c.b16 %v5307, %v5305
    %v6588 = vpack.c.b16 %v5310, %v5308
    %v6589 = vpack.c.b16 %v5311, %v5309
    %v6590 = vpack.c.b16 %v5314, %v5312
    %v6591 = vpack.c.b16 %v5315, %v5313
    %v6592 = vpack.c.b16 %v5318, %v5316
    %v6593 = vpack.c.b16 %v5319, %v5317
    %v6594 = vpack.c.b16 %v5322, %v5320
    %v6595 = vpack.c.b16 %v5323, %v5321
    %v6596 = vpack.c.b16 %v5326, %v5324
    %v6597 = vpack.c.b16 %v5327, %v5325
    %v6598 = vpack.c.b16 %v5330, %v5328
    %v6599 = vpack.c.b16 %v5331, %v5329
    %v6600 = vpack.c.b16 %v5334, %v5332
    %v6601 = vpack.c.b16 %v5335, %v5333
    %v6602 = vpack.c.b16 %v5338, %v5336
    %v6603 = vpack.c.b16 %v5339, %v5337
    %v6604 = vpack.c.b16 %v5342, %v5340
    %v6605 = vpack.c.b16 %v5343, %v5341
    %v6606 = vpack.c.b16 %v5346, %v5344
    %v6607 = vpack.c.b16 %v5347, %v5345
    %v6608 = vpack.c.b16 %v5350, %v5348
    %v6609 = vpack.c.b16 %v5351, %v5349
    %v6610 = vpack.c.b16 %v5354, %v5352
    %v6611 = vpack.c.b16 %v5355, %v5353
    %v6612 = vpack.c.b16 %v5358, %v5356
    %v6613 = vpack.c.b16 %v5359, %v5357
    %v6614 = vpack.c.b16 %v5362, %v5360
    %v6615 = vpack.c.b16 %v5363, %v5361
    %v6616 = vpack.c.b16 %v5366, %v5364
    %v6617 = vpack.c.b16 %v5367, %v5365
    %v6618 = vpack.c.b16 %v5370, %v5368
    %v6619 = vpack.c.b16 %v5371, %v5369
    %v6620 = vpack.c.b16 %v5374, %v5372
    %v6621 = vpack.c.b16 %v5375, %v5373
    %v6622 = vpack.c.b16 %v5378, %v5376
    %v6623 = vpack.c.b16 %v5379, %v5377
    %v6624 = vpack.c.b16 %v5382, %v5380
    %v6625 = vpack.c.b16 %v5383, %v5381
    %v6626 = vpack.c.b16 %v5386, %v5384
    %v6627 = vpack.c.b16 %v5387, %v5385
    %v6628 = vpack.c.b16 %v5390, %v5388
    %v6629 = vpack.c.b16 %v5391, %v5389
    %v6630 = vpack.c.b16 %v5394, %v5392
    %v6631 = vpack.c.b16 %v5395, %v5393
    %v6632 = vpack.c.b16 %v5398, %v5396
    %v6633 = vpack.c.b16 %v5399, %v5397
    %v6634 = vpack.c.b16 %v5402, %v5400
    %v6635 = vpack.c.b16 %v5403, %v5401
    %v6636 = vpack.c.b16 %v5406, %v5404
    %v6637 = vpack.c.b16 %v5407, %v5405
    %v6638 = vpack.c.b16 %v5410, %v5408
    %v6639 = vpack.c.b16 %v5411, %v5409
    %v6640 = vpack.c.b16 %v5414, %v5412
    %v6641 = vpack.c.b16 %v5415, %v5413
    %v6642 = vpack.c.b16 %v5418, %v5416
    %v6643 = vpack.c.b16 %v5419, %v5417
    %v6644 = vpack.c.b16 %v5422, %v5420
    %v6645 = vpack.c.b16 %v5423, %v5421
    %v6646 = vpack.c.b16 %v5426, %v5424
    %v6647 = vpack.c.b16 %v5427, %v5425
    %v6648 = vpack.c.b16 %v5430, %v5428
    %v6649 = vpack.c.b16 %v5431, %v5429
    %v6650 = vpack.c.b16 %v5434, %v5432
    %v6651 = vpack.c.b16 %v5435, %v5433
    %v6652 = vpack.c.b16 %v5438, %v5436
    %v6653 = vpack.c.b16 %v5439, %v5437
    %v6654 = vpack.c.b16 %v5442, %v5440
    %v6655 = vpack.c.b16 %v5443, %v5441
    %v6656 = vpack.c.b16 %v5446, %v5444
    %v6657 = vpack.c.b16 %v5447, %v5445
    %v6658 = vpack.c.b16 %v5450, %v5448
    %v6659 = vpack.c.b16 %v5451, %v5449
    %v6660 = vpack.c.b16 %v5454, %v5452
    %v6661 = vpack.c.b16 %v5455, %v5453
    %v6662 = vpack.c.b16 %v5458, %v5456
    %v6663 = vpack.c.b16 %v5459, %v5457
    %v6664 = vpack.c.b16 %v5462, %v5460
    %v6665 = vpack.c.b16 %v5463, %v5461
    %v6666 = vpack.c.b16 %v5466, %v5464
    %v6667 = vpack.c.b16 %v5467, %v5465
    %v6668 = vpack.c.b16 %v5470, %v5468
    %v6669 = vpack.c.b16 %v5471, %v5469
    %v6670 = vpack.c.b16 %v5474, %v5472
    %v6671 = vpack.c.b16 %v5475, %v5473
    %v6672 = vpack.c.b16 %v5478, %v5476
    %v6673 = vpack.c.b16 %v5479, %v5477
    %v6674 = vpack.c.b16 %v5482, %v5480
    %v6675 = vpack.c.b16 %v5483, %v5481
    %v6676 = vpack.c.b16 %v5486, %v5484
    %v6677 = vpack.c.b16 %v5487, %v5485
    %v6678 = vpack.c.b16 %v5490, %v5488
    %v6679 = vpack.c.b16 %v5491, %v5489
    %v6680 = vpack.c.b16 %v5494, %v5492
    %v6681 = vpack.c.b16 %v5495, %v5493
    %v6682 = vpack.c.b16 %v5498, %v5496
    %v6683 = vpack.c.b16 %v5499, %v5497
    %v6684 = vpack.c.b16 %v5502, %v5500
    %v6685 = vpack.c.b16 %v5503, %v5501
    %v6686 = vpack.c.b16 %v5506, %v5504
    %v6687 = vpack.c.b16 %v5507, %v5505
    %v6688 = vpack.c.b16 %v5510, %v5508
    %v6689 = vpack.c.b16 %v5511, %v5509
    %v6690 = vpack.c.b16 %v5514, %v5512
    %v6691 = vpack.c.b16 %v5515, %v5513
    %v6692 = vpack.c.b16 %v5518, %v5516
    %v6693 = vpack.c.b16 %v5519, %v5517
    %v6694 = vpack.c.b16 %v5522, %v5520
    %v6695 = vpack.c.b16 %v5523, %v5521
    %v6696 = vpack.c.b16 %v5526, %v5524
    %v6697 = vpack.c.b16 %v5527, %v5525
    %v6698 = vpack.c.b16 %v5530, %v5528
    %v6699 = vpack.c.b16 %v5531, %v5529
    %v6700 = vpack.c.b16 %v5534, %v5532
    %v6701 = vpack.c.b16 %v5535, %v5533
    %v6702 = vpack.c.b16 %v5538, %v5536
    %v6703 = vpack.c.b16 %v5539, %v5537
    %v6704 = vpack.c.b16 %v5542, %v5540
    %v6705 = vpack.c.b16 %v5543, %v5541
    %v6706 = vpack.c.b16 %v5546, %v5544
    %v6707 = vpack.c.b16 %v5547, %v5545
    %v6708 = vpack.c.b16 %v5550, %v5548
    %v6709 = vpack.c.b16 %v5551, %v5549
    %v6710 = vpack.c.b16 %v5554, %v5552
    %v6711 = vpack.c.b16 %v5555, %v5553
    %v6712 = vpack.c.b16 %v5558, %v5556
    %v6713 = vpack.c.b16 %v5559, %v5557
    %v6714 = vpack.c.b16 %v5562, %v5560
    %v6715 = vpack.c.b16 %v5563, %v5561
    %v6716 = vpack.c.b16 %v5566, %v5564
    %v6717 = vpack.c.b16 %v5567, %v5565
    %v6718 = vpack.c.b16 %v5570, %v5568
    %v6719 = vpack.c.b16 %v5571, %v5569
    %v6720 = vpack.c.b16 %v5574, %v5572
    %v6721 = vpack.c.b16 %v5575, %v5573
    %v6722 = vpack.c.b16 %v5578, %v5576
    %v6723 = vpack.c.b16 %v5579, %v5577
    %v6724 = vpack.c.b16 %v5582, %v5580
    %v6725 = vpack.c.b16 %v5583, %v5581
    %v6726 = vpack.c.b16 %v5586, %v5584
    %v6727 = vpack.c.b16 %v5587, %v5585
    %v6728 = vpack.c.b16 %v5590, %v5588
    %v6729 = vpack.c.b16 %v5591, %v5589
    %v6730 = vpack.c.b16 %v5594, %v5592
    %v6731 = vpack.c.b16 %v5595, %v5593
    %v6732 = vpack.c.b16 %v5598, %v5596
    %v6733 = vpack.c.b16 %v5599, %v5597
    %v6734 = vpack.c.b16 %v5602, %v5600
    %v6735 = vpack.c.b16 %v5603, %v5601
    %v6736 = vpack.c.b16 %v5606, %v5604
    %v6737 = vpack.c.b16 %v5607, %v5605
    %v6738 = vpack.c.b16 %v5610, %v5608
    %v6739 = vpack.c.b16 %v5611, %v5609
    %v6740 = vpack.c.b16 %v5614, %v5612
    %v6741 = vpack.c.b16 %v5615, %v5613
    %v6742 = vpack.c.b16 %v5618, %v5616
    %v6743 = vpack.c.b16 %v5619, %v5617
    %v6744 = vpack.c.b16 %v5622, %v5620
    %v6745 = vpack.c.b16 %v5623, %v5621
    %v6746 = vpack.c.b16 %v5626, %v5624
    %v6747 = vpack.c.b16 %v5627, %v5625
    %v6748 = vpack.c.b16 %v5630, %v5628
    %v6749 = vpack.c.b16 %v5631, %v5629
    %v6750 = vpack.c.b16 %v5634, %v5632
    %v6751 = vpack.c.b16 %v5635, %v5633
    %v6752 = vpack.c.b16 %v5638, %v5636
    %v6753 = vpack.c.b16 %v5639, %v5637
    %v6754 = vpack.c.b16 %v5642, %v5640
    %v6755 = vpack.c.b16 %v5643, %v5641
    %v6756 = vpack.c.b16 %v5646, %v5644
    %v6757 = vpack.c.b16 %v5647, %v5645
    %v6758 = vpack.c.b16 %v5650, %v5648
    %v6759 = vpack.c.b16 %v5651, %v5649
    %v6760 = vpack.c.b16 %v5654, %v5652
    %v6761 = vpack.c.b16 %v5655, %v5653
    %v6762 = vpack.c.b16 %v5658, %v5656
    %v6763 = vpack.c.b16 %v5659, %v5657
    %v6764 = vpack.c.b16 %v5662, %v5660
    %v6765 = vpack.c.b16 %v5663, %v5661
    %v6766 = vpack.c.b16 %v5666, %v5664
    %v6767 = vpack.c.b16 %v5667, %v5665
    %v6768 = vpack.c.b16 %v5670, %v5668
    %v6769 = vpack.c.b16 %v5671, %v5669
    %v6770 = vpack.c.b16 %v5674, %v5672
    %v6771 = vpack.c.b16 %v5675, %v5673
    %v6772 = vpack.c.b16 %v5678, %v5676
    %v6773 = vpack.c.b16 %v5679, %v5677
    %v6774 = vpack.c.b16 %v5682, %v5680
    %v6775 = vpack.c.b16 %v5683, %v5681
    %v6776 = vpack.c.b16 %v5686, %v5684
    %v6777 = vpack.c.b16 %v5687, %v5685
    %v6778 = vpack.c.b16 %v5690, %v5688
    %v6779 = vpack.c.b16 %v5691, %v5689
    %v6780 = vpack.c.b16 %v5694, %v5692
    %v6781 = vpack.c.b16 %v5695, %v5693
    %v6782 = vpack.c.b16 %v5698, %v5696
    %v6783 = vpack.c.b16 %v5699, %v5697
    %v6784 = vpack.c.b16 %v5702, %v5700
    %v6785 = vpack.c.b16 %v5703, %v5701
    %v6786 = vpack.c.b16 %v5706, %v5704
    %v6787 = vpack.c.b16 %v5707, %v5705
    %v6788 = vpack.c.b16 %v5710, %v5708
    %v6789 = vpack.c.b16 %v5711, %v5709
    %v6790 = vpack.c.b16 %v5714, %v5712
    %v6791 = vpack.c.b16 %v5715, %v5713
    %v6792 = vpack.c.b16 %v5718, %v5716
    %v6793 = vpack.c.b16 %v5719, %v5717
    %v6794 = vpack.c.b16 %v5722, %v5720
    %v6795 = vpack.c.b16 %v5723, %v5721
    %v6796 = vpack.c.b16 %v5726, %v5724
    %v6797 = vpack.c.b16 %v5727, %v5725
    %v6798 = vpack.c.b16 %v5730, %v5728
    %v6799 = vpack.c.b16 %v5731, %v5729
    %v6800 = vpack.c.b16 %v5734, %v5732
    %v6801 = vpack.c.b16 %v5735, %v5733
    %v6802 = vpack.c.b16 %v5738, %v5736
    %v6803 = vpack.c.b16 %v5739, %v5737
    %v6804 = vpack.c.b16 %v5742, %v5740
    %v6805 = vpack.c.b16 %v5743, %v5741
    %v6806 = vpack.c.b16 %v5746, %v5744
    %v6807 = vpack.c.b16 %v5747, %v5745
    %v6808 = vpack.c.b16 %v5750, %v5748
    %v6809 = vpack.c.b16 %v5751, %v5749
    %v6810 = vpack.c.b16 %v5754, %v5752
    %v6811 = vpack.c.b16 %v5755, %v5753
    %v6812 = vpack.c.b16 %v5758, %v5756
    %v6813 = vpack.c.b16 %v5759, %v5757
    %v6814 = vpack.c.b16 %v5762, %v5760
    %v6815 = vpack.c.b16 %v5763, %v5761
    %v6816 = vpack.c.b16 %v5766, %v5764
    %v6817 = vpack.c.b16 %v5767, %v5765
    %v6818 = vpack.c.b16 %v5770, %v5768
    %v6819 = vpack.c.b16 %v5771, %v5769
    %v6820 = vpack.c.b16 %v5774, %v5772
    %v6821 = vpack.c.b16 %v5775, %v5773
    %v6822 = vpack.c.b16 %v5778, %v5776
    %v6823 = vpack.c.b16 %v5779, %v5777
    %v6824 = vpack.c.b16 %v5782, %v5780
    %v6825 = vpack.c.b16 %v5783, %v5781
    %v6826 = vpack.c.b16 %v5786, %v5784
    %v6827 = vpack.c.b16 %v5787, %v5785
    %v6828 = vpack.c.b16 %v5790, %v5788
    %v6829 = vpack.c.b16 %v5791, %v5789
    %v6830 = vpack.c.b16 %v5794, %v5792
    %v6831 = vpack.c.b16 %v5795, %v5793
    %v6832 = vpack.c.b16 %v5798, %v5796
    %v6833 = vpack.c.b16 %v5799, %v5797
    %v6834 = vpack.c.b16 %v5802, %v5800
    %v6835 = vpack.c.b16 %v5803, %v5801
    %v6836 = vpack.c.b16 %v5806, %v5804
    %v6837 = vpack.c.b16 %v5807, %v5805
    %v6838 = vpack.c.b16 %v5810, %v5808
    %v6839 = vpack.c.b16 %v5811, %v5809
    %v6840 = vpack.c.b16 %v5814, %v5812
    %v6841 = vpack.c.b16 %v5815, %v5813
    %v6842 = vpack.c.b16 %v5818, %v5816
    %v6843 = vpack.c.b16 %v5819, %v5817
    %v6844 = vpack.c.b16 %v5822, %v5820
    %v6845 = vpack.c.b16 %v5823, %v5821
    %v6846 = vpack.c.b16 %v5826, %v5824
    %v6847 = vpack.c.b16 %v5827, %v5825
    %v6848 = vpack.c.b16 %v5830, %v5828
    %v6849 = vpack.c.b16 %v5831, %v5829
    %v6850 = vpack.c.b16 %v5834, %v5832
    %v6851 = vpack.c.b16 %v5835, %v5833
    %v6852 = vpack.c.b16 %v5838, %v5836
    %v6853 = vpack.c.b16 %v5839, %v5837
    %v6854 = vpack.c.b16 %v5842, %v5840
    %v6855 = vpack.c.b16 %v5843, %v5841
    %v6856 = vpack.c.b16 %v5846, %v5844
    %v6857 = vpack.c.b16 %v5847, %v5845
    %v6858 = vpack.c.b16 %v5850, %v5848
    %v6859 = vpack.c.b16 %v5851, %v5849
    %v6860 = vpack.c.b16 %v5854, %v5852
    %v6861 = vpack.c.b16 %v5855, %v5853
    %v6862 = vpack.c.b16 %v5858, %v5856
    %v6863 = vpack.c.b16 %v5859, %v5857
    %v6864 = vpack.c.b16 %v5862, %v5860
    %v6865 = vpack.c.b16 %v5863, %v5861
    %v6866 = vpack.c.b16 %v5866, %v5864
    %v6867 = vpack.c.b16 %v5867, %v5865
    %v6868 = vpack.c.b16 %v5870, %v5868
    %v6869 = vpack.c.b16 %v5871, %v5869
    %v6870 = vpack.c.b16 %v5874, %v5872
    %v6871 = vpack.c.b16 %v5875, %v5873
    %v6872 = vpack.c.b16 %v5878, %v5876
    %v6873 = vpack.c.b16 %v5879, %v5877
    %v6874 = vpack.c.b16 %v5882, %v5880
    %v6875 = vpack.c.b16 %v5883, %v5881
    %v6876 = vpack.c.b16 %v5886, %v5884
    %v6877 = vpack.c.b16 %v5887, %v5885
    %v6878 = vpack.c.b16 %v5890, %v5888
    %v6879 = vpack.c.b16 %v5891, %v5889
    %v6880 = vpack.c.b16 %v5894, %v5892
    %v6881 = vpack.c.b16 %v5895, %v5893
    %v6882 = vpack.c.b16 %v5898, %v5896
    %v6883 = vpack.c.b16 %v5899, %v5897
    %v6884 = vpack.c.b16 %v5902, %v5900
    %v6885 = vpack.c.b16 %v5903, %v5901
    %v6886 = vpack.c.b16 %v5906, %v5904
    %v6887 = vpack.c.b16 %v5907, %v5905
    %v6888 = vpack.c.b16 %v5910, %v5908
    %v6889 = vpack.c.b16 %v5911, %v5909
    %v6890 = vpack.c.b16 %v5914, %v5912
    %v6891 = vpack.c.b16 %v5915, %v5913
    %v6892 = vpack.c.b16 %v5918, %v5916
    %v6893 = vpack.c.b16 %v5919, %v5917
    %v6894 = vpack.c.b16 %v5922, %v5920
    %v6895 = vpack.c.b16 %v5923, %v5921
    %v6896 = vpack.c.b16 %v5926, %v5924
    %v6897 = vpack.c.b16 %v5927, %v5925
    %v6898 = vpack.c.b16 %v5930, %v5928
    %v6899 = vpack.c.b16 %v5931, %v5929
    %v6900 = vpack.c.b16 %v5934, %v5932
    %v6901 = vpack.c.b16 %v5935, %v5933
    %v6902 = vpack.c.b16 %v5938, %v5936
    %v6903 = vpack.c.b16 %v5939, %v5937
    %v6904 = vpack.c.b16 %v5942, %v5940
    %v6905 = vpack.c.b16 %v5943, %v5941
    %v6906 = vpack.c.b16 %v5946, %v5944
    %v6907 = vpack.c.b16 %v5947, %v5945
    %v6908 = vpack.c.b16 %v5950, %v5948
    %v6909 = vpack.c.b16 %v5951, %v5949
    %v6910 = vpack.c.b16 %v5954, %v5952
    %v6911 = vpack.c.b16 %v5955, %v5953
    %v6912 = vpack.c.b16 %v5958, %v5956
    %v6913 = vpack.c.b16 %v5959, %v5957
    %v6914 = vpack.c.b16 %v5962, %v5960
    %v6915 = vpack.c.b16 %v5963, %v5961
    %v6916 = vpack.c.b16 %v5966, %v5964
    %v6917 = vpack.c.b16 %v5967, %v5965
    %v6918 = vpack.c.b16 %v5970, %v5968
    %v6919 = vpack.c.b16 %v5971, %v5969
    %v6920 = vpack.c.b16 %v5974, %v5972
    %v6921 = vpack.c.b16 %v5975, %v5973
    %v6922 = vpack.c.b16 %v5978, %v5976
    %v6923 = vpack.c.b16 %v5979, %v5977
    %v6924 = vpack.c.b16 %v5982, %v5980
    %v6925 = vpack.c.b16 %v5983, %v5981
    %v6926 = vpack.c.b16 %v5986, %v5984
    %v6927 = vpack.c.b16 %v5987, %v5985
    %v6928 = vpack.c.b16 %v5990, %v5988
    %v6929 = vpack.c.b16 %v5991, %v5989
    %v6930 = vpack.c.b16 %v5994, %v5992
    %v6931 = vpack.c.b16 %v5995, %v5993
    %v6932 = vpack.c.b16 %v5998, %v5996
    %v6933 = vpack.c.b16 %v5999, %v5997
    %v6934 = vpack.c.b16 %v6002, %v6000
    %v6935 = vpack.c.b16 %v6003, %v6001
    %v6936 = vpack.c.b16 %v6006, %v6004
    %v6937 = vpack.c.b16 %v6007, %v6005
    %v6938 = vpack.c.b16 %v6010, %v6008
    %v6939 = vpack.c.b16 %v6011, %v6009
    %v6940 = vpack.c.b16 %v6014, %v6012
    %v6941 = vpack.c.b16 %v6015, %v6013
    %v6942 = vpack.c.b16 %v6018, %v6016
    %v6943 = vpack.c.b16 %v6019, %v6017
    %v6944 = vpack.c.b16 %v6022, %v6020
    %v6945 = vpack.c.b16 %v6023, %v6021
    %v6946 = vpack.c.b16 %v6026, %v6024
    %v6947 = vpack.c.b16 %v6027, %v6025
    %v6948 = vpack.c.b16 %v6030, %v6028
    %v6949 = vpack.c.b16 %v6031, %v6029
    %v6950 = vpack.c.b16 %v6034, %v6032
    %v6951 = vpack.c.b16 %v6035, %v6033
    %v6952 = vpack.c.b16 %v6038, %v6036
    %v6953 = vpack.c.b16 %v6039, %v6037
    %v6954 = vpack.c.b16 %v6042, %v6040
    %v6955 = vpack.c.b16 %v6043, %v6041
    %v6956 = vpack.c.b16 %v6046, %v6044
    %v6957 = vpack.c.b16 %v6047, %v6045
    %v6958 = vpack.c.b16 %v6050, %v6048
    %v6959 = vpack.c.b16 %v6051, %v6049
    %v6960 = vpack.c.b16 %v6054, %v6052
    %v6961 = vpack.c.b16 %v6055, %v6053
    %v6962 = vpack.c.b16 %v6058, %v6056
    %v6963 = vpack.c.b16 %v6059, %v6057
    %v6964 = vpack.c.b16 %v6062, %v6060
    %v6965 = vpack.c.b16 %v6063, %v6061
    %v6966 = vpack.c.b16 %v6066, %v6064
    %v6967 = vpack.c.b16 %v6067, %v6065
    %v6968 = vpack.c.b16 %v6070, %v6068
    %v6969 = vpack.c.b16 %v6071, %v6069
    %v6970 = vpack.c.b16 %v6074, %v6072
    %v6971 = vpack.c.b16 %v6075, %v6073
    %v6972 = vpack.c.b16 %v6078, %v6076
    %v6973 = vpack.c.b16 %v6079, %v6077
    %v6974 = vpack.c.b16 %v6082, %v6080
    %v6975 = vpack.c.b16 %v6083, %v6081
    %v6976 = vpack.c.b16 %v6086, %v6084
    %v6977 = vpack.c.b16 %v6087, %v6085
    %v6978 = vpack.c.b16 %v6090, %v6088
    %v6979 = vpack.c.b16 %v6091, %v6089
    %v6980 = vpack.c.b16 %v6094, %v6092
    %v6981 = vpack.c.b16 %v6095, %v6093
    %v6982 = vpack.c.b16 %v6098, %v6096
    %v6983 = vpack.c.b16 %v6099, %v6097
    %v6984 = vpack.c.b16 %v6102, %v6100
    %v6985 = vpack.c.b16 %v6103, %v6101
    %v6986 = vpack.c.b16 %v6106, %v6104
    %v6987 = vpack.c.b16 %v6107, %v6105
    %v6988 = vpack.c.b16 %v6110, %v6108
    %v6989 = vpack.c.b16 %v6111, %v6109
    %v6990 = vpack.c.b16 %v6114, %v6112
    %v6991 = vpack.c.b16 %v6115, %v6113
    %v6992 = vpack.c.b16 %v6118, %v6116
    %v6993 = vpack.c.b16 %v6119, %v6117
    %v6994 = vpack.c.b16 %v6122, %v6120
    %v6995 = vpack.c.b16 %v6123, %v6121
    %v6996 = vpack.c.b16 %v6126, %v6124
    %v6997 = vpack.c.b16 %v6127, %v6125
    %v6998 = vpack.c.b16 %v6130, %v6128
    %v6999 = vpack.c.b16 %v6131, %v6129
    %v7000 = vpack.c.b16 %v6134, %v6132
    %v7001 = vpack.c.b16 %v6135, %v6133
    %v7002 = vpack.c.b16 %v6138, %v6136
    %v7003 = vpack.c.b16 %v6139, %v6137
    %v7004 = vpack.c.b16 %v6142, %v6140
    %v7005 = vpack.c.b16 %v6143, %v6141
    %v7006 = vpack.c.b16 %v6146, %v6144
    %v7007 = vpack.c.b16 %v6147, %v6145
    %v7008 = vpack.c.b16 %v6150, %v6148
    %v7009 = vpack.c.b16 %v6151, %v6149
    %v7010 = vpack.c.b16 %v6154, %v6152
    %v7011 = vpack.c.b16 %v6155, %v6153
    %v7012 = vpack.c.b16 %v6158, %v6156
    %v7013 = vpack.c.b16 %v6159, %v6157
    %v7014 = vpack.c.b16 %v6162, %v6160
    %v7015 = vpack.c.b16 %v6163, %v6161
    %v7016 = vpack.c.b16 %v6166, %v6164
    %v7017 = vpack.c.b16 %v6167, %v6165
    %v7018 = vpack.c.b16 %v6170, %v6168
    %v7019 = vpack.c.b16 %v6171, %v6169
    %v7020 = vpack.c.b16 %v6174, %v6172
    %v7021 = vpack.c.b16 %v6175, %v6173
    %v7022 = vpack.c.b16 %v6178, %v6176
    %v7023 = vpack.c.b16 %v6179, %v6177
    %v7024 = vpack.c.b16 %v6182, %v6180
    %v7025 = vpack.c.b16 %v6183, %v6181
    %v7026 = vpack.c.b16 %v6186, %v6184
    %v7027 = vpack.c.b16 %v6187, %v6185
    %v7028 = vpack.c.b16 %v6190, %v6188
    %v7029 = vpack.c.b16 %v6191, %v6189
    %v7030 = vpack.c.b16 %v6194, %v6192
    %v7031 = vpack.c.b16 %v6195, %v6193
    %v7032 = vpack.c.b16 %v6198, %v6196
    %v7033 = vpack.c.b16 %v6199, %v6197
    %v7034 = vpack.c.b16 %v6202, %v6200
    %v7035 = vpack.c.b16 %v6203, %v6201
    %v7036 = vpack.c.b16 %v6206, %v6204
    %v7037 = vpack.c.b16 %v6207, %v6205
    %v7038 = vpack.c.b16 %v6210, %v6208
    %v7039 = vpack.c.b16 %v6211, %v6209
    %v7040 = vpack.c.b16 %v6214, %v6212
    %v7041 = vpack.c.b16 %v6215, %v6213
    %v7042 = vpack.c.b16 %v6218, %v6216
    %v7043 = vpack.c.b16 %v6219, %v6217
    %v7044 = vpack.c.b16 %v6222, %v6220
    %v7045 = vpack.c.b16 %v6223, %v6221
    %v7046 = vpack.c.b16 %v6226, %v6224
    %v7047 = vpack.c.b16 %v6227, %v6225
    %v7048 = vpack.c.b16 %v6230, %v6228
    %v7049 = vpack.c.b16 %v6231, %v6229
    %v7050 = vpack.c.b16 %v6234, %v6232
    %v7051 = vpack.c.b16 %v6235, %v6233
    %v7052 = vpack.c.b16 %v6238, %v6236
    %v7053 = vpack.c.b16 %v6239, %v6237
    %v7054 = vpack.c.b16 %v6242, %v6240
    %v7055 = vpack.c.b16 %v6243, %v6241
    %v7056 = vpack.c.b16 %v6246, %v6244
    %v7057 = vpack.c.b16 %v6247, %v6245
    %v7058 = vpack.c.b16 %v6250, %v6248
    %v7059 = vpack.c.b16 %v6251, %v6249
    %v7060 = vpack.c.b16 %v6254, %v6252
    %v7061 = vpack.c.b16 %v6255, %v6253
    %v7062 = vpack.c.b16 %v6258, %v6256
    %v7063 = vpack.c.b16 %v6259, %v6257
    %v7064 = vpack.c.b16 %v6262, %v6260
    %v7065 = vpack.c.b16 %v6263, %v6261
    %v7066 = vpack.c.b16 %v6266, %v6264
    %v7067 = vpack.c.b16 %v6267, %v6265
    %v7068 = vpack.c.b16 %v6270, %v6268
    %v7069 = vpack.c.b16 %v6271, %v6269
    %v7070 = vpack.c.b16 %v6274, %v6272
    %v7071 = vpack.c.b16 %v6275, %v6273
    %v7072 = vpack.c.b16 %v6278, %v6276
    %v7073 = vpack.c.b16 %v6279, %v6277
    %v7074 = vpack.c.b16 %v6282, %v6280
    %v7075 = vpack.c.b16 %v6283, %v6281
    %v7076 = vpack.c.b16 %v6286, %v6284
    %v7077 = vpack.c.b16 %v6287, %v6285
    %v7078 = vpack.c.b16 %v6290, %v6288
    %v7079 = vpack.c.b16 %v6291, %v6289
    %v7080 = vpack.c.b16 %v6294, %v6292
    %v7081 = vpack.c.b16 %v6295, %v6293
    %v7082 = vpack.c.b16 %v6298, %v6296
    %v7083 = vpack.c.b16 %v6299, %v6297
    %v7084 = vpack.c.b16 %v6302, %v6300
    %v7085 = vpack.c.b16 %v6303, %v6301
    %v7086 = vpack.c.b16 %v6306, %v6304
    %v7087 = vpack.c.b16 %v6307, %v6305
    %v7088 = vpack.c.b16 %v6310, %v6308
    %v7089 = vpack.c.b16 %v6311, %v6309
    %v7090 = vpack.c.b16 %v6314, %v6312
    %v7091 = vpack.c.b16 %v6315, %v6313
    %v7092 = vpack.c.b16 %v6318, %v6316
    %v7093 = vpack.c.b16 %v6319, %v6317
    %v7094 = vpack.c.b16 %v6322, %v6320
    %v7095 = vpack.c.b16 %v6323, %v6321
    %v7096 = vpack.c.b16 %v6326, %v6324
    %v7097 = vpack.c.b16 %v6327, %v6325
    %v7098 = vpack.c.b16 %v6330, %v6328
    %v7099 = vpack.c.b16 %v6331, %v6329
    %7868 = vmatprep.subr.bf16.mxu0 %v6333
    %7869 = vmatpush1.bf16.msra.mxu0 %v6332
    %7870 = vmatprep.subr.bf16.mxu0 %v6335
    %7871 = vmatpush1.bf16.msra.mxu0 %v6334
    %7872 = vmatprep.subr.bf16.mxu0 %v6337
    %7873 = vmatpush1.bf16.msra.mxu0 %v6336
    %7874 = vmatprep.subr.bf16.mxu0 %v6339
    %7875 = vmatpush1.bf16.msra.mxu0 %v6338
    %7876 = vmatprep.subr.bf16.mxu0 %v6341
    %7877 = vmatpush1.bf16.msra.mxu0 %v6340
    %7878 = vmatprep.subr.bf16.mxu0 %v6343
    %7879 = vmatpush1.bf16.msra.mxu0 %v6342
    %7880 = vmatprep.subr.bf16.mxu0 %v6345
    %7881 = vmatpush1.bf16.msra.mxu0 %v6344
    %7882 = vmatprep.subr.bf16.mxu0 %v6347
    %7883 = vmatpush1.bf16.msra.mxu0 %v6346
    %7884 = vmatprep.subr.bf16.mxu0 %v6349
    %7885 = vmatpush1.bf16.msra.mxu0 %v6348
    %7886 = vmatprep.subr.bf16.mxu0 %v6351
    %7887 = vmatpush1.bf16.msra.mxu0 %v6350
    %7888 = vmatprep.subr.bf16.mxu0 %v6353
    %7889 = vmatpush1.bf16.msra.mxu0 %v6352
    %7890 = vmatprep.subr.bf16.mxu0 %v6355
    %7891 = vmatpush1.bf16.msra.mxu0 %v6354
    %7892 = vmatprep.subr.bf16.mxu0 %v6357
    %7893 = vmatpush1.bf16.msra.mxu0 %v6356
    %7894 = vmatprep.subr.bf16.mxu0 %v6359
    %7895 = vmatpush1.bf16.msra.mxu0 %v6358
    %7896 = vmatprep.subr.bf16.mxu0 %v6361
    %7897 = vmatpush1.bf16.msra.mxu0 %v6360
    %7898 = vmatprep.subr.bf16.mxu0 %v6363
    %7899 = vmatpush1.bf16.msra.mxu0 %v6362
    %7900 = vmatprep.mubr.bf16.mxu0 %v3201
    %7901 = vmatmul.mubr.bf16.gmra.mrb[0].mxu0 %v3200
    %v7902 = vpop.f32.mrb[0].mxu0
    %v7903 = vadd.f32 %v4021, %v7902
    %v7904 = vpop.f32.mrb[0].mxu0
    %v7905 = vadd.f32 %v4025, %v7904
    %v7906 = vpop.f32.mrb[0].mxu0
    %v7907 = vpop.f32.mrb[0].mxu0
    %7908 = vdwg.mxu0
    %7909 = vmatprep.subr.bf16.mxu0 %v6365
    %7910 = vmatpush1.bf16.msra.mxu0 %v6364
    %7911 = vmatprep.subr.bf16.mxu0 %v6367
    %7912 = vmatpush1.bf16.msra.mxu0 %v6366
    %7913 = vmatprep.subr.bf16.mxu0 %v6369
    %7914 = vmatpush1.bf16.msra.mxu0 %v6368
    %7915 = vmatprep.subr.bf16.mxu0 %v6371
    %7916 = vmatpush1.bf16.msra.mxu0 %v6370
    %7917 = vmatprep.subr.bf16.mxu0 %v6373
    %7918 = vmatpush1.bf16.msra.mxu0 %v6372
    %7919 = vmatprep.subr.bf16.mxu0 %v6375
    %7920 = vmatpush1.bf16.msra.mxu0 %v6374
    %7921 = vmatprep.subr.bf16.mxu0 %v6377
    %7922 = vmatpush1.bf16.msra.mxu0 %v6376
    %7923 = vmatprep.subr.bf16.mxu0 %v6379
    %7924 = vmatpush1.bf16.msra.mxu0 %v6378
    %7925 = vmatprep.subr.bf16.mxu0 %v6381
    %7926 = vmatpush1.bf16.msra.mxu0 %v6380
    %7927 = vmatprep.subr.bf16.mxu0 %v6383
    %7928 = vmatpush1.bf16.msra.mxu0 %v6382
    %7929 = vmatprep.subr.bf16.mxu0 %v6385
    %7930 = vmatpush1.bf16.msra.mxu0 %v6384
    %7931 = vmatprep.subr.bf16.mxu0 %v6387
    %7932 = vmatpush1.bf16.msra.mxu0 %v6386
    %7933 = vmatprep.subr.bf16.mxu0 %v6389
    %7934 = vmatpush1.bf16.msra.mxu0 %v6388
    %7935 = vmatprep.subr.bf16.mxu0 %v6391
    %7936 = vmatpush1.bf16.msra.mxu0 %v6390
    %7937 = vmatprep.subr.bf16.mxu0 %v6393
    %7938 = vmatpush1.bf16.msra.mxu0 %v6392
    %7939 = vmatprep.subr.bf16.mxu0 %v6395
    %7940 = vmatpush1.bf16.msra.mxu0 %v6394
    %7941 = vmatprep.mubr.bf16.mxu0 %v3203
    %7942 = vmatmul.mubr.bf16.gmra.mrb[0].mxu0 %v3202
    %v7943 = vpop.f32.mrb[0].mxu0
    %v7944 = vadd.f32 %v7903, %v7943
    %v7945 = vpop.f32.mrb[0].mxu0
    %v7946 = vadd.f32 %v7905, %v7945
    %v7947 = vpop.f32.mrb[0].mxu0
    %v7948 = vpop.f32.mrb[0].mxu0
    %7949 = vdwg.mxu0
    %7950 = vmatprep.subr.bf16.mxu0 %v6397
    %7951 = vmatpush1.bf16.msra.mxu0 %v6396
    %7952 = vmatprep.subr.bf16.mxu0 %v6399
    %7953 = vmatpush1.bf16.msra.mxu0 %v6398
    %7954 = vmatprep.subr.bf16.mxu0 %v6401
    %7955 = vmatpush1.bf16.msra.mxu0 %v6400
    %7956 = vmatprep.subr.bf16.mxu0 %v6403
    %7957 = vmatpush1.bf16.msra.mxu0 %v6402
    %7958 = vmatprep.subr.bf16.mxu0 %v6405
    %7959 = vmatpush1.bf16.msra.mxu0 %v6404
    %7960 = vmatprep.subr.bf16.mxu0 %v6407
    %7961 = vmatpush1.bf16.msra.mxu0 %v6406
    %7962 = vmatprep.subr.bf16.mxu0 %v6409
    %7963 = vmatpush1.bf16.msra.mxu0 %v6408
    %7964 = vmatprep.subr.bf16.mxu0 %v6411
    %7965 = vmatpush1.bf16.msra.mxu0 %v6410
    %7966 = vmatprep.subr.bf16.mxu0 %v6413
    %7967 = vmatpush1.bf16.msra.mxu0 %v6412
    %7968 = vmatprep.subr.bf16.mxu0 %v6415
    %7969 = vmatpush1.bf16.msra.mxu0 %v6414
    %7970 = vmatprep.subr.bf16.mxu0 %v6417
    %7971 = vmatpush1.bf16.msra.mxu0 %v6416
    %7972 = vmatprep.subr.bf16.mxu0 %v6419
    %7973 = vmatpush1.bf16.msra.mxu0 %v6418
    %7974 = vmatprep.subr.bf16.mxu0 %v6421
    %7975 = vmatpush1.bf16.msra.mxu0 %v6420
    %7976 = vmatprep.subr.bf16.mxu0 %v6423
    %7977 = vmatpush1.bf16.msra.mxu0 %v6422
    %7978 = vmatprep.subr.bf16.mxu0 %v6425
    %7979 = vmatpush1.bf16.msra.mxu0 %v6424
    %7980 = vmatprep.subr.bf16.mxu0 %v6427
    %7981 = vmatpush1.bf16.msra.mxu0 %v6426
    %7982 = vmatprep.mubr.bf16.mxu0 %v3205
    %7983 = vmatmul.mubr.bf16.gmra.mrb[0].mxu0 %v3204
    %v7984 = vpop.f32.mrb[0].mxu0
    %v7985 = vadd.f32 %v7944, %v7984
    %v7986 = vpop.f32.mrb[0].mxu0
    %v7987 = vadd.f32 %v7946, %v7986
    %v7988 = vpop.f32.mrb[0].mxu0
    %v7989 = vpop.f32.mrb[0].mxu0
    %7990 = vdwg.mxu0
    %7991 = vmatprep.subr.bf16.mxu0 %v6429
    %7992 = vmatpush1.bf16.msra.mxu0 %v6428
    %7993 = vmatprep.subr.bf16.mxu0 %v6431
    %7994 = vmatpush1.bf16.msra.mxu0 %v6430
    %7995 = vmatprep.subr.bf16.mxu0 %v6433
    %7996 = vmatpush1.bf16.msra.mxu0 %v6432
    %7997 = vmatprep.subr.bf16.mxu0 %v6435
    %7998 = vmatpush1.bf16.msra.mxu0 %v6434
    %7999 = vmatprep.subr.bf16.mxu0 %v6437
    %8000 = vmatpush1.bf16.msra.mxu0 %v6436
    %8001 = vmatprep.subr.bf16.mxu0 %v6439
    %8002 = vmatpush1.bf16.msra.mxu0 %v6438
    %8003 = vmatprep.subr.bf16.mxu0 %v6441
    %8004 = vmatpush1.bf16.msra.mxu0 %v6440
    %8005 = vmatprep.subr.bf16.mxu0 %v6443
    %8006 = vmatpush1.bf16.msra.mxu0 %v6442
    %8007 = vmatprep.subr.bf16.mxu0 %v6445
    %8008 = vmatpush1.bf16.msra.mxu0 %v6444
    %8009 = vmatprep.subr.bf16.mxu0 %v6447
    %8010 = vmatpush1.bf16.msra.mxu0 %v6446
    %8011 = vmatprep.subr.bf16.mxu0 %v6449
    %8012 = vmatpush1.bf16.msra.mxu0 %v6448
    %8013 = vmatprep.subr.bf16.mxu0 %v6451
    %8014 = vmatpush1.bf16.msra.mxu0 %v6450
    %8015 = vmatprep.subr.bf16.mxu0 %v6453
    %8016 = vmatpush1.bf16.msra.mxu0 %v6452
    %8017 = vmatprep.subr.bf16.mxu0 %v6455
    %8018 = vmatpush1.bf16.msra.mxu0 %v6454
    %8019 = vmatprep.subr.bf16.mxu0 %v6457
    %8020 = vmatpush1.bf16.msra.mxu0 %v6456
    %8021 = vmatprep.subr.bf16.mxu0 %v6459
    %8022 = vmatpush1.bf16.msra.mxu0 %v6458
    %8023 = vmatprep.mubr.bf16.mxu0 %v3207
    %8024 = vmatmul.mubr.bf16.gmra.mrb[0].mxu0 %v3206
    %v8025 = vpop.f32.mrb[0].mxu0
    %v8026 = vadd.f32 %v7985, %v8025
    %v8027 = vpop.f32.mrb[0].mxu0
    %v8028 = vadd.f32 %v7987, %v8027
    %v8029 = vpop.f32.mrb[0].mxu0
    %v8030 = vpop.f32.mrb[0].mxu0
    %8031 = vdwg.mxu0
    %8032 = vmatprep.subr.bf16.mxu0 %v6461
    %8033 = vmatpush1.bf16.msra.mxu0 %v6460
    %8034 = vmatprep.subr.bf16.mxu0 %v6463
    %8035 = vmatpush1.bf16.msra.mxu0 %v6462
    %8036 = vmatprep.subr.bf16.mxu0 %v6465
    %8037 = vmatpush1.bf16.msra.mxu0 %v6464
    %8038 = vmatprep.subr.bf16.mxu0 %v6467
    %8039 = vmatpush1.bf16.msra.mxu0 %v6466
    %8040 = vmatprep.subr.bf16.mxu0 %v6469
    %8041 = vmatpush1.bf16.msra.mxu0 %v6468
    %8042 = vmatprep.subr.bf16.mxu0 %v6471
    %8043 = vmatpush1.bf16.msra.mxu0 %v6470
    %8044 = vmatprep.subr.bf16.mxu0 %v6473
    %8045 = vmatpush1.bf16.msra.mxu0 %v6472
    %8046 = vmatprep.subr.bf16.mxu0 %v6475
    %8047 = vmatpush1.bf16.msra.mxu0 %v6474
    %8048 = vmatprep.subr.bf16.mxu0 %v6477
    %8049 = vmatpush1.bf16.msra.mxu0 %v6476
    %8050 = vmatprep.subr.bf16.mxu0 %v6479
    %8051 = vmatpush1.bf16.msra.mxu0 %v6478
    %8052 = vmatprep.subr.bf16.mxu0 %v6481
    %8053 = vmatpush1.bf16.msra.mxu0 %v6480
    %8054 = vmatprep.subr.bf16.mxu0 %v6483
    %8055 = vmatpush1.bf16.msra.mxu0 %v6482
    %8056 = vmatprep.subr.bf16.mxu0 %v6485
    %8057 = vmatpush1.bf16.msra.mxu0 %v6484
    %8058 = vmatprep.subr.bf16.mxu0 %v6487
    %8059 = vmatpush1.bf16.msra.mxu0 %v6486
    %8060 = vmatprep.subr.bf16.mxu0 %v6489
    %8061 = vmatpush1.bf16.msra.mxu0 %v6488
    %8062 = vmatprep.subr.bf16.mxu0 %v6491
    %8063 = vmatpush1.bf16.msra.mxu0 %v6490
    %8064 = vmatprep.mubr.bf16.mxu0 %v3209
    %8065 = vmatmul.mubr.bf16.gmra.mrb[0].mxu0 %v3208
    %v8066 = vpop.f32.mrb[0].mxu0
    %v8067 = vadd.f32 %v8026, %v8066
    %v8068 = vpop.f32.mrb[0].mxu0
    %v8069 = vadd.f32 %v8028, %v8068
    %v8070 = vpop.f32.mrb[0].mxu0
    %v8071 = vpop.f32.mrb[0].mxu0
    %8072 = vdwg.mxu0
    %8073 = vmatprep.subr.bf16.mxu0 %v6493
    %8074 = vmatpush1.bf16.msra.mxu0 %v6492
    %8075 = vmatprep.subr.bf16.mxu0 %v6495
    %8076 = vmatpush1.bf16.msra.mxu0 %v6494
    %8077 = vmatprep.subr.bf16.mxu0 %v6497
    %8078 = vmatpush1.bf16.msra.mxu0 %v6496
    %8079 = vmatprep.subr.bf16.mxu0 %v6499
    %8080 = vmatpush1.bf16.msra.mxu0 %v6498
    %8081 = vmatprep.subr.bf16.mxu0 %v6501
    %8082 = vmatpush1.bf16.msra.mxu0 %v6500
    %8083 = vmatprep.subr.bf16.mxu0 %v6503
    %8084 = vmatpush1.bf16.msra.mxu0 %v6502
    %8085 = vmatprep.subr.bf16.mxu0 %v6505
    %8086 = vmatpush1.bf16.msra.mxu0 %v6504
    %8087 = vmatprep.subr.bf16.mxu0 %v6507
    %8088 = vmatpush1.bf16.msra.mxu0 %v6506
    %8089 = vmatprep.subr.bf16.mxu0 %v6509
    %8090 = vmatpush1.bf16.msra.mxu0 %v6508
    %8091 = vmatprep.subr.bf16.mxu0 %v6511
    %8092 = vmatpush1.bf16.msra.mxu0 %v6510
    %8093 = vmatprep.subr.bf16.mxu0 %v6513
    %8094 = vmatpush1.bf16.msra.mxu0 %v6512
    %8095 = vmatprep.subr.bf16.mxu0 %v6515
    %8096 = vmatpush1.bf16.msra.mxu0 %v6514
    %8097 = vmatprep.subr.bf16.mxu0 %v6517
    %8098 = vmatpush1.bf16.msra.mxu0 %v6516
    %8099 = vmatprep.subr.bf16.mxu0 %v6519
    %8100 = vmatpush1.bf16.msra.mxu0 %v6518
    %8101 = vmatprep.subr.bf16.mxu0 %v6521
    %8102 = vmatpush1.bf16.msra.mxu0 %v6520
    %8103 = vmatprep.subr.bf16.mxu0 %v6523
    %8104 = vmatpush1.bf16.msra.mxu0 %v6522
    %8105 = vmatprep.mubr.bf16.mxu0 %v3211
    %8106 = vmatmul.mubr.bf16.gmra.mrb[0].mxu0 %v3210
    %v8107 = vpop.f32.mrb[0].mxu0
    %v8108 = vadd.f32 %v8067, %v8107
    %v8109 = vpop.f32.mrb[0].mxu0
    %v8110 = vadd.f32 %v8069, %v8109
    %v8111 = vpop.f32.mrb[0].mxu0
    %v8112 = vpop.f32.mrb[0].mxu0
    %8113 = vdwg.mxu0
    %8114 = vmatprep.subr.bf16.mxu0 %v6525
    %8115 = vmatpush1.bf16.msra.mxu0 %v6524
    %8116 = vmatprep.subr.bf16.mxu0 %v6527
    %8117 = vmatpush1.bf16.msra.mxu0 %v6526
    %8118 = vmatprep.subr.bf16.mxu0 %v6529
    %8119 = vmatpush1.bf16.msra.mxu0 %v6528
    %8120 = vmatprep.subr.bf16.mxu0 %v6531
    %8121 = vmatpush1.bf16.msra.mxu0 %v6530
    %8122 = vmatprep.subr.bf16.mxu0 %v6533
    %8123 = vmatpush1.bf16.msra.mxu0 %v6532
    %8124 = vmatprep.subr.bf16.mxu0 %v6535
    %8125 = vmatpush1.bf16.msra.mxu0 %v6534
    %8126 = vmatprep.subr.bf16.mxu0 %v6537
    %8127 = vmatpush1.bf16.msra.mxu0 %v6536
    %8128 = vmatprep.subr.bf16.mxu0 %v6539
    %8129 = vmatpush1.bf16.msra.mxu0 %v6538
    %8130 = vmatprep.subr.bf16.mxu0 %v6541
    %8131 = vmatpush1.bf16.msra.mxu0 %v6540
    %8132 = vmatprep.subr.bf16.mxu0 %v6543
    %8133 = vmatpush1.bf16.msra.mxu0 %v6542
    %8134 = vmatprep.subr.bf16.mxu0 %v6545
    %8135 = vmatpush1.bf16.msra.mxu0 %v6544
    %8136 = vmatprep.subr.bf16.mxu0 %v6547
    %8137 = vmatpush1.bf16.msra.mxu0 %v6546
    %8138 = vmatprep.subr.bf16.mxu0 %v6549
    %8139 = vmatpush1.bf16.msra.mxu0 %v6548
    %8140 = vmatprep.subr.bf16.mxu0 %v6551
    %8141 = vmatpush1.bf16.msra.mxu0 %v6550
    %8142 = vmatprep.subr.bf16.mxu0 %v6553
    %8143 = vmatpush1.bf16.msra.mxu0 %v6552
    %8144 = vmatprep.subr.bf16.mxu0 %v6555
    %8145 = vmatpush1.bf16.msra.mxu0 %v6554
    %8146 = vmatprep.mubr.bf16.mxu0 %v3213
    %8147 = vmatmul.mubr.bf16.gmra.mrb[0].mxu0 %v3212
    %v8148 = vpop.f32.mrb[0].mxu0
    %v8149 = vadd.f32 %v8108, %v8148
    %v8150 = vpop.f32.mrb[0].mxu0
    %v8151 = vadd.f32 %v8110, %v8150
    %v8152 = vpop.f32.mrb[0].mxu0
    %v8153 = vpop.f32.mrb[0].mxu0
    %8154 = vdwg.mxu0
    %8155 = vmatprep.subr.bf16.mxu0 %v6557
    %8156 = vmatpush1.bf16.msra.mxu0 %v6556
    %8157 = vmatprep.subr.bf16.mxu0 %v6559
    %8158 = vmatpush1.bf16.msra.mxu0 %v6558
    %8159 = vmatprep.subr.bf16.mxu0 %v6561
    %8160 = vmatpush1.bf16.msra.mxu0 %v6560
    %8161 = vmatprep.subr.bf16.mxu0 %v6563
    %8162 = vmatpush1.bf16.msra.mxu0 %v6562
    %8163 = vmatprep.subr.bf16.mxu0 %v6565
    %8164 = vmatpush1.bf16.msra.mxu0 %v6564
    %8165 = vmatprep.subr.bf16.mxu0 %v6567
    %8166 = vmatpush1.bf16.msra.mxu0 %v6566
    %8167 = vmatprep.subr.bf16.mxu0 %v6569
    %8168 = vmatpush1.bf16.msra.mxu0 %v6568
    %8169 = vmatprep.subr.bf16.mxu0 %v6571
    %8170 = vmatpush1.bf16.msra.mxu0 %v6570
    %8171 = vmatprep.subr.bf16.mxu0 %v6573
    %8172 = vmatpush1.bf16.msra.mxu0 %v6572
    %8173 = vmatprep.subr.bf16.mxu0 %v6575
    %8174 = vmatpush1.bf16.msra.mxu0 %v6574
    %8175 = vmatprep.subr.bf16.mxu0 %v6577
    %8176 = vmatpush1.bf16.msra.mxu0 %v6576
    %8177 = vmatprep.subr.bf16.mxu0 %v6579
    %8178 = vmatpush1.bf16.msra.mxu0 %v6578
    %8179 = vmatprep.subr.bf16.mxu0 %v6581
    %8180 = vmatpush1.bf16.msra.mxu0 %v6580
    %8181 = vmatprep.subr.bf16.mxu0 %v6583
    %8182 = vmatpush1.bf16.msra.mxu0 %v6582
    %8183 = vmatprep.subr.bf16.mxu0 %v6585
    %8184 = vmatpush1.bf16.msra.mxu0 %v6584
    %8185 = vmatprep.subr.bf16.mxu0 %v6587
    %8186 = vmatpush1.bf16.msra.mxu0 %v6586
    %8187 = vmatprep.mubr.bf16.mxu0 %v3215
    %8188 = vmatmul.mubr.bf16.gmra.mrb[0].mxu0 %v3214
    %v8189 = vpop.f32.mrb[0].mxu0
    %v8190 = vadd.f32 %v8149, %v8189
    %v8191 = vpop.f32.mrb[0].mxu0
    %v8192 = vadd.f32 %v8151, %v8191
    %v8193 = vpop.f32.mrb[0].mxu0
    %v8194 = vpop.f32.mrb[0].mxu0
    %8195 = vdwg.mxu0
    %8196 = vmatprep.subr.bf16.mxu0 %v6589
    %8197 = vmatpush1.bf16.msra.mxu0 %v6588
    %8198 = vmatprep.subr.bf16.mxu0 %v6591
    %8199 = vmatpush1.bf16.msra.mxu0 %v6590
    %8200 = vmatprep.subr.bf16.mxu0 %v6593
    %8201 = vmatpush1.bf16.msra.mxu0 %v6592
    %8202 = vmatprep.subr.bf16.mxu0 %v6595
    %8203 = vmatpush1.bf16.msra.mxu0 %v6594
    %8204 = vmatprep.subr.bf16.mxu0 %v6597
    %8205 = vmatpush1.bf16.msra.mxu0 %v6596
    %8206 = vmatprep.subr.bf16.mxu0 %v6599
    %8207 = vmatpush1.bf16.msra.mxu0 %v6598
    %8208 = vmatprep.subr.bf16.mxu0 %v6601
    %8209 = vmatpush1.bf16.msra.mxu0 %v6600
    %8210 = vmatprep.subr.bf16.mxu0 %v6603
    %8211 = vmatpush1.bf16.msra.mxu0 %v6602
    %8212 = vmatprep.subr.bf16.mxu0 %v6605
    %8213 = vmatpush1.bf16.msra.mxu0 %v6604
    %8214 = vmatprep.subr.bf16.mxu0 %v6607
    %8215 = vmatpush1.bf16.msra.mxu0 %v6606
    %8216 = vmatprep.subr.bf16.mxu0 %v6609
    %8217 = vmatpush1.bf16.msra.mxu0 %v6608
    %8218 = vmatprep.subr.bf16.mxu0 %v6611
    %8219 = vmatpush1.bf16.msra.mxu0 %v6610
    %8220 = vmatprep.subr.bf16.mxu0 %v6613
    %8221 = vmatpush1.bf16.msra.mxu0 %v6612
    %8222 = vmatprep.subr.bf16.mxu0 %v6615
    %8223 = vmatpush1.bf16.msra.mxu0 %v6614
    %8224 = vmatprep.subr.bf16.mxu0 %v6617
    %8225 = vmatpush1.bf16.msra.mxu0 %v6616
    %8226 = vmatprep.subr.bf16.mxu0 %v6619
    %8227 = vmatpush1.bf16.msra.mxu0 %v6618
    %8228 = vmatprep.mubr.bf16.mxu0 %v3217
    %8229 = vmatmul.mubr.bf16.gmra.mrb[0].mxu0 %v3216
    %v8230 = vpop.f32.mrb[0].mxu0
    %v8231 = vadd.f32 %v8190, %v8230
    %v8232 = vpop.f32.mrb[0].mxu0
    %v8233 = vadd.f32 %v8192, %v8232
    %v8234 = vpop.f32.mrb[0].mxu0
    %v8235 = vpop.f32.mrb[0].mxu0
    %8236 = vdwg.mxu0
    %8237 = vmatprep.subr.bf16.mxu0 %v6621
    %8238 = vmatpush1.bf16.msra.mxu0 %v6620
    %8239 = vmatprep.subr.bf16.mxu0 %v6623
    %8240 = vmatpush1.bf16.msra.mxu0 %v6622
    %8241 = vmatprep.subr.bf16.mxu0 %v6625
    %8242 = vmatpush1.bf16.msra.mxu0 %v6624
    %8243 = vmatprep.subr.bf16.mxu0 %v6627
    %8244 = vmatpush1.bf16.msra.mxu0 %v6626
    %8245 = vmatprep.subr.bf16.mxu0 %v6629
    %8246 = vmatpush1.bf16.msra.mxu0 %v6628
    %8247 = vmatprep.subr.bf16.mxu0 %v6631
    %8248 = vmatpush1.bf16.msra.mxu0 %v6630
    %8249 = vmatprep.subr.bf16.mxu0 %v6633
    %8250 = vmatpush1.bf16.msra.mxu0 %v6632
    %8251 = vmatprep.subr.bf16.mxu0 %v6635
    %8252 = vmatpush1.bf16.msra.mxu0 %v6634
    %8253 = vmatprep.subr.bf16.mxu0 %v6637
    %8254 = vmatpush1.bf16.msra.mxu0 %v6636
    %8255 = vmatprep.subr.bf16.mxu0 %v6639
    %8256 = vmatpush1.bf16.msra.mxu0 %v6638
    %8257 = vmatprep.subr.bf16.mxu0 %v6641
    %8258 = vmatpush1.bf16.msra.mxu0 %v6640
    %8259 = vmatprep.subr.bf16.mxu0 %v6643
    %8260 = vmatpush1.bf16.msra.mxu0 %v6642
    %8261 = vmatprep.subr.bf16.mxu0 %v6645
    %8262 = vmatpush1.bf16.msra.mxu0 %v6644
    %8263 = vmatprep.subr.bf16.mxu0 %v6647
    %8264 = vmatpush1.bf16.msra.mxu0 %v6646
    %8265 = vmatprep.subr.bf16.mxu0 %v6649
    %8266 = vmatpush1.bf16.msra.mxu0 %v6648
    %8267 = vmatprep.subr.bf16.mxu0 %v6651
    %8268 = vmatpush1.bf16.msra.mxu0 %v6650
    %8269 = vmatprep.mubr.bf16.mxu0 %v3219
    %8270 = vmatmul.mubr.bf16.gmra.mrb[0].mxu0 %v3218
    %v8271 = vpop.f32.mrb[0].mxu0
    %v8272 = vadd.f32 %v8231, %v8271
    %v8273 = vpop.f32.mrb[0].mxu0
    %v8274 = vadd.f32 %v8233, %v8273
    %v8275 = vpop.f32.mrb[0].mxu0
    %v8276 = vpop.f32.mrb[0].mxu0
    %8277 = vdwg.mxu0
    %8278 = vmatprep.subr.bf16.mxu0 %v6653
    %8279 = vmatpush1.bf16.msra.mxu0 %v6652
    %8280 = vmatprep.subr.bf16.mxu0 %v6655
    %8281 = vmatpush1.bf16.msra.mxu0 %v6654
    %8282 = vmatprep.subr.bf16.mxu0 %v6657
    %8283 = vmatpush1.bf16.msra.mxu0 %v6656
    %8284 = vmatprep.subr.bf16.mxu0 %v6659
    %8285 = vmatpush1.bf16.msra.mxu0 %v6658
    %8286 = vmatprep.subr.bf16.mxu0 %v6661
    %8287 = vmatpush1.bf16.msra.mxu0 %v6660
    %8288 = vmatprep.subr.bf16.mxu0 %v6663
    %8289 = vmatpush1.bf16.msra.mxu0 %v6662
    %8290 = vmatprep.subr.bf16.mxu0 %v6665
    %8291 = vmatpush1.bf16.msra.mxu0 %v6664
    %8292 = vmatprep.subr.bf16.mxu0 %v6667
    %8293 = vmatpush1.bf16.msra.mxu0 %v6666
    %8294 = vmatprep.subr.bf16.mxu0 %v6669
    %8295 = vmatpush1.bf16.msra.mxu0 %v6668
    %8296 = vmatprep.subr.bf16.mxu0 %v6671
    %8297 = vmatpush1.bf16.msra.mxu0 %v6670
    %8298 = vmatprep.subr.bf16.mxu0 %v6673
    %8299 = vmatpush1.bf16.msra.mxu0 %v6672
    %8300 = vmatprep.subr.bf16.mxu0 %v6675
    %8301 = vmatpush1.bf16.msra.mxu0 %v6674
    %8302 = vmatprep.subr.bf16.mxu0 %v6677
    %8303 = vmatpush1.bf16.msra.mxu0 %v6676
    %8304 = vmatprep.subr.bf16.mxu0 %v6679
    %8305 = vmatpush1.bf16.msra.mxu0 %v6678
    %8306 = vmatprep.subr.bf16.mxu0 %v6681
    %8307 = vmatpush1.bf16.msra.mxu0 %v6680
    %8308 = vmatprep.subr.bf16.mxu0 %v6683
    %8309 = vmatpush1.bf16.msra.mxu0 %v6682
    %8310 = vmatprep.mubr.bf16.mxu0 %v3221
    %8311 = vmatmul.mubr.bf16.gmra.mrb[0].mxu0 %v3220
    %v8312 = vpop.f32.mrb[0].mxu0
    %v8313 = vadd.f32 %v8272, %v8312
    %v8314 = vpop.f32.mrb[0].mxu0
    %v8315 = vadd.f32 %v8274, %v8314
    %v8316 = vpop.f32.mrb[0].mxu0
    %v8317 = vpop.f32.mrb[0].mxu0
    %8318 = vdwg.mxu0
    %8319 = vmatprep.subr.bf16.mxu0 %v6685
    %8320 = vmatpush1.bf16.msra.mxu0 %v6684
    %8321 = vmatprep.subr.bf16.mxu0 %v6687
    %8322 = vmatpush1.bf16.msra.mxu0 %v6686
    %8323 = vmatprep.subr.bf16.mxu0 %v6689
    %8324 = vmatpush1.bf16.msra.mxu0 %v6688
    %8325 = vmatprep.subr.bf16.mxu0 %v6691
    %8326 = vmatpush1.bf16.msra.mxu0 %v6690
    %8327 = vmatprep.subr.bf16.mxu0 %v6693
    %8328 = vmatpush1.bf16.msra.mxu0 %v6692
    %8329 = vmatprep.subr.bf16.mxu0 %v6695
    %8330 = vmatpush1.bf16.msra.mxu0 %v6694
    %8331 = vmatprep.subr.bf16.mxu0 %v6697
    %8332 = vmatpush1.bf16.msra.mxu0 %v6696
    %8333 = vmatprep.subr.bf16.mxu0 %v6699
    %8334 = vmatpush1.bf16.msra.mxu0 %v6698
    %8335 = vmatprep.subr.bf16.mxu0 %v6701
    %8336 = vmatpush1.bf16.msra.mxu0 %v6700
    %8337 = vmatprep.subr.bf16.mxu0 %v6703
    %8338 = vmatpush1.bf16.msra.mxu0 %v6702
    %8339 = vmatprep.subr.bf16.mxu0 %v6705
    %8340 = vmatpush1.bf16.msra.mxu0 %v6704
    %8341 = vmatprep.subr.bf16.mxu0 %v6707
    %8342 = vmatpush1.bf16.msra.mxu0 %v6706
    %8343 = vmatprep.subr.bf16.mxu0 %v6709
    %8344 = vmatpush1.bf16.msra.mxu0 %v6708
    %8345 = vmatprep.subr.bf16.mxu0 %v6711
    %8346 = vmatpush1.bf16.msra.mxu0 %v6710
    %8347 = vmatprep.subr.bf16.mxu0 %v6713
    %8348 = vmatpush1.bf16.msra.mxu0 %v6712
    %8349 = vmatprep.subr.bf16.mxu0 %v6715
    %8350 = vmatpush1.bf16.msra.mxu0 %v6714
    %8351 = vmatprep.mubr.bf16.mxu0 %v3223
    %8352 = vmatmul.mubr.bf16.gmra.mrb[0].mxu0 %v3222
    %v8353 = vpop.f32.mrb[0].mxu0
    %v8354 = vadd.f32 %v8313, %v8353
    %v8355 = vpop.f32.mrb[0].mxu0
    %v8356 = vadd.f32 %v8315, %v8355
    %v8357 = vpop.f32.mrb[0].mxu0
    %v8358 = vpop.f32.mrb[0].mxu0
    %8359 = vdwg.mxu0
    %8360 = vmatprep.subr.bf16.mxu0 %v6717
    %8361 = vmatpush1.bf16.msra.mxu0 %v6716
    %8362 = vmatprep.subr.bf16.mxu0 %v6719
    %8363 = vmatpush1.bf16.msra.mxu0 %v6718
    %8364 = vmatprep.subr.bf16.mxu0 %v6721
    %8365 = vmatpush1.bf16.msra.mxu0 %v6720
    %8366 = vmatprep.subr.bf16.mxu0 %v6723
    %8367 = vmatpush1.bf16.msra.mxu0 %v6722
    %8368 = vmatprep.subr.bf16.mxu0 %v6725
    %8369 = vmatpush1.bf16.msra.mxu0 %v6724
    %8370 = vmatprep.subr.bf16.mxu0 %v6727
    %8371 = vmatpush1.bf16.msra.mxu0 %v6726
    %8372 = vmatprep.subr.bf16.mxu0 %v6729
    %8373 = vmatpush1.bf16.msra.mxu0 %v6728
    %8374 = vmatprep.subr.bf16.mxu0 %v6731
    %8375 = vmatpush1.bf16.msra.mxu0 %v6730
    %8376 = vmatprep.subr.bf16.mxu0 %v6733
    %8377 = vmatpush1.bf16.msra.mxu0 %v6732
    %8378 = vmatprep.subr.bf16.mxu0 %v6735
    %8379 = vmatpush1.bf16.msra.mxu0 %v6734
    %8380 = vmatprep.subr.bf16.mxu0 %v6737
    %8381 = vmatpush1.bf16.msra.mxu0 %v6736
    %8382 = vmatprep.subr.bf16.mxu0 %v6739
    %8383 = vmatpush1.bf16.msra.mxu0 %v6738
    %8384 = vmatprep.subr.bf16.mxu0 %v6741
    %8385 = vmatpush1.bf16.msra.mxu0 %v6740
    %8386 = vmatprep.subr.bf16.mxu0 %v6743
    %8387 = vmatpush1.bf16.msra.mxu0 %v6742
    %8388 = vmatprep.subr.bf16.mxu0 %v6745
    %8389 = vmatpush1.bf16.msra.mxu0 %v6744
    %8390 = vmatprep.subr.bf16.mxu0 %v6747
    %8391 = vmatpush1.bf16.msra.mxu0 %v6746
    %8392 = vmatprep.mubr.bf16.mxu0 %v3225
    %8393 = vmatmul.mubr.bf16.gmra.mrb[0].mxu0 %v3224
    %v8394 = vpop.f32.mrb[0].mxu0
    %v8395 = vadd.f32 %v8354, %v8394
    %v8396 = vpop.f32.mrb[0].mxu0
    %v8397 = vadd.f32 %v8356, %v8396
    %v8398 = vpop.f32.mrb[0].mxu0
    %v8399 = vpop.f32.mrb[0].mxu0
    %8400 = vdwg.mxu0
    %8401 = vmatprep.subr.bf16.mxu0 %v6749
    %8402 = vmatpush1.bf16.msra.mxu0 %v6748
    %8403 = vmatprep.subr.bf16.mxu0 %v6751
    %8404 = vmatpush1.bf16.msra.mxu0 %v6750
    %8405 = vmatprep.subr.bf16.mxu0 %v6753
    %8406 = vmatpush1.bf16.msra.mxu0 %v6752
    %8407 = vmatprep.subr.bf16.mxu0 %v6755
    %8408 = vmatpush1.bf16.msra.mxu0 %v6754
    %8409 = vmatprep.subr.bf16.mxu0 %v6757
    %8410 = vmatpush1.bf16.msra.mxu0 %v6756
    %8411 = vmatprep.subr.bf16.mxu0 %v6759
    %8412 = vmatpush1.bf16.msra.mxu0 %v6758
    %8413 = vmatprep.subr.bf16.mxu0 %v6761
    %8414 = vmatpush1.bf16.msra.mxu0 %v6760
    %8415 = vmatprep.subr.bf16.mxu0 %v6763
    %8416 = vmatpush1.bf16.msra.mxu0 %v6762
    %8417 = vmatprep.subr.bf16.mxu0 %v6765
    %8418 = vmatpush1.bf16.msra.mxu0 %v6764
    %8419 = vmatprep.subr.bf16.mxu0 %v6767
    %8420 = vmatpush1.bf16.msra.mxu0 %v6766
    %8421 = vmatprep.subr.bf16.mxu0 %v6769
    %8422 = vmatpush1.bf16.msra.mxu0 %v6768
    %8423 = vmatprep.subr.bf16.mxu0 %v6771
    %8424 = vmatpush1.bf16.msra.mxu0 %v6770
    %8425 = vmatprep.subr.bf16.mxu0 %v6773
    %8426 = vmatpush1.bf16.msra.mxu0 %v6772
    %8427 = vmatprep.subr.bf16.mxu0 %v6775
    %8428 = vmatpush1.bf16.msra.mxu0 %v6774
    %8429 = vmatprep.subr.bf16.mxu0 %v6777
    %8430 = vmatpush1.bf16.msra.mxu0 %v6776
    %8431 = vmatprep.subr.bf16.mxu0 %v6779
    %8432 = vmatpush1.bf16.msra.mxu0 %v6778
    %8433 = vmatprep.mubr.bf16.mxu0 %v3227
    %8434 = vmatmul.mubr.bf16.gmra.mrb[0].mxu0 %v3226
    %v8435 = vpop.f32.mrb[0].mxu0
    %v8436 = vadd.f32 %v8395, %v8435
    %v8437 = vpop.f32.mrb[0].mxu0
    %v8438 = vadd.f32 %v8397, %v8437
    %v8439 = vpop.f32.mrb[0].mxu0
    %v8440 = vpop.f32.mrb[0].mxu0
    %8441 = vdwg.mxu0
    %8442 = vmatprep.subr.bf16.mxu0 %v6781
    %8443 = vmatpush1.bf16.msra.mxu0 %v6780
    %8444 = vmatprep.subr.bf16.mxu0 %v6783
    %8445 = vmatpush1.bf16.msra.mxu0 %v6782
    %8446 = vmatprep.subr.bf16.mxu0 %v6785
    %8447 = vmatpush1.bf16.msra.mxu0 %v6784
    %8448 = vmatprep.subr.bf16.mxu0 %v6787
    %8449 = vmatpush1.bf16.msra.mxu0 %v6786
    %8450 = vmatprep.subr.bf16.mxu0 %v6789
    %8451 = vmatpush1.bf16.msra.mxu0 %v6788
    %8452 = vmatprep.subr.bf16.mxu0 %v6791
    %8453 = vmatpush1.bf16.msra.mxu0 %v6790
    %8454 = vmatprep.subr.bf16.mxu0 %v6793
    %8455 = vmatpush1.bf16.msra.mxu0 %v6792
    %8456 = vmatprep.subr.bf16.mxu0 %v6795
    %8457 = vmatpush1.bf16.msra.mxu0 %v6794
    %8458 = vmatprep.subr.bf16.mxu0 %v6797
    %8459 = vmatpush1.bf16.msra.mxu0 %v6796
    %8460 = vmatprep.subr.bf16.mxu0 %v6799
    %8461 = vmatpush1.bf16.msra.mxu0 %v6798
    %8462 = vmatprep.subr.bf16.mxu0 %v6801
    %8463 = vmatpush1.bf16.msra.mxu0 %v6800
    %8464 = vmatprep.subr.bf16.mxu0 %v6803
    %8465 = vmatpush1.bf16.msra.mxu0 %v6802
    %8466 = vmatprep.subr.bf16.mxu0 %v6805
    %8467 = vmatpush1.bf16.msra.mxu0 %v6804
    %8468 = vmatprep.subr.bf16.mxu0 %v6807
    %8469 = vmatpush1.bf16.msra.mxu0 %v6806
    %8470 = vmatprep.subr.bf16.mxu0 %v6809
    %8471 = vmatpush1.bf16.msra.mxu0 %v6808
    %8472 = vmatprep.subr.bf16.mxu0 %v6811
    %8473 = vmatpush1.bf16.msra.mxu0 %v6810
    %8474 = vmatprep.mubr.bf16.mxu0 %v3229
    %8475 = vmatmul.mubr.bf16.gmra.mrb[0].mxu0 %v3228
    %v8476 = vpop.f32.mrb[0].mxu0
    %v8477 = vadd.f32 %v8436, %v8476
    %v8478 = vpop.f32.mrb[0].mxu0
    %v8479 = vadd.f32 %v8438, %v8478
    %v8480 = vpop.f32.mrb[0].mxu0
    %v8481 = vpop.f32.mrb[0].mxu0
    %8482 = vdwg.mxu0
    %8483 = vmatprep.subr.bf16.mxu0 %v6813
    %8484 = vmatpush1.bf16.msra.mxu0 %v6812
    %8485 = vmatprep.subr.bf16.mxu0 %v6815
    %8486 = vmatpush1.bf16.msra.mxu0 %v6814
    %8487 = vmatprep.subr.bf16.mxu0 %v6817
    %8488 = vmatpush1.bf16.msra.mxu0 %v6816
    %8489 = vmatprep.subr.bf16.mxu0 %v6819
    %8490 = vmatpush1.bf16.msra.mxu0 %v6818
    %8491 = vmatprep.subr.bf16.mxu0 %v6821
    %8492 = vmatpush1.bf16.msra.mxu0 %v6820
    %8493 = vmatprep.subr.bf16.mxu0 %v6823
    %8494 = vmatpush1.bf16.msra.mxu0 %v6822
    %8495 = vmatprep.subr.bf16.mxu0 %v6825
    %8496 = vmatpush1.bf16.msra.mxu0 %v6824
    %8497 = vmatprep.subr.bf16.mxu0 %v6827
    %8498 = vmatpush1.bf16.msra.mxu0 %v6826
    %8499 = vmatprep.subr.bf16.mxu0 %v6829
    %8500 = vmatpush1.bf16.msra.mxu0 %v6828
    %8501 = vmatprep.subr.bf16.mxu0 %v6831
    %8502 = vmatpush1.bf16.msra.mxu0 %v6830
    %8503 = vmatprep.subr.bf16.mxu0 %v6833
    %8504 = vmatpush1.bf16.msra.mxu0 %v6832
    %8505 = vmatprep.subr.bf16.mxu0 %v6835
    %8506 = vmatpush1.bf16.msra.mxu0 %v6834
    %8507 = vmatprep.subr.bf16.mxu0 %v6837
    %8508 = vmatpush1.bf16.msra.mxu0 %v6836
    %8509 = vmatprep.subr.bf16.mxu0 %v6839
    %8510 = vmatpush1.bf16.msra.mxu0 %v6838
    %8511 = vmatprep.subr.bf16.mxu0 %v6841
    %8512 = vmatpush1.bf16.msra.mxu0 %v6840
    %8513 = vmatprep.subr.bf16.mxu0 %v6843
    %8514 = vmatpush1.bf16.msra.mxu0 %v6842
    %8515 = vmatprep.mubr.bf16.mxu0 %v3231
    %8516 = vmatmul.mubr.bf16.gmra.mrb[0].mxu0 %v3230
    %v8517 = vpop.f32.mrb[0].mxu0
    %v8518 = vadd.f32 %v8477, %v8517
    %v8519 = vpop.f32.mrb[0].mxu0
    %v8520 = vadd.f32 %v8479, %v8519
    %v8521 = vpop.f32.mrb[0].mxu0
    %v8522 = vpop.f32.mrb[0].mxu0
    %8523 = vdwg.mxu0
    %8524 = vmatprep.subr.bf16.mxu0 %v6845
    %8525 = vmatpush1.bf16.msra.mxu0 %v6844
    %8526 = vmatprep.subr.bf16.mxu0 %v6847
    %8527 = vmatpush1.bf16.msra.mxu0 %v6846
    %8528 = vmatprep.subr.bf16.mxu0 %v6849
    %8529 = vmatpush1.bf16.msra.mxu0 %v6848
    %8530 = vmatprep.subr.bf16.mxu0 %v6851
    %8531 = vmatpush1.bf16.msra.mxu0 %v6850
    %8532 = vmatprep.subr.bf16.mxu0 %v6853
    %8533 = vmatpush1.bf16.msra.mxu0 %v6852
    %8534 = vmatprep.subr.bf16.mxu0 %v6855
    %8535 = vmatpush1.bf16.msra.mxu0 %v6854
    %8536 = vmatprep.subr.bf16.mxu0 %v6857
    %8537 = vmatpush1.bf16.msra.mxu0 %v6856
    %8538 = vmatprep.subr.bf16.mxu0 %v6859
    %8539 = vmatpush1.bf16.msra.mxu0 %v6858
    %8540 = vmatprep.subr.bf16.mxu0 %v6861
    %8541 = vmatpush1.bf16.msra.mxu0 %v6860
    %8542 = vmatprep.subr.bf16.mxu0 %v6863
    %8543 = vmatpush1.bf16.msra.mxu0 %v6862
    %8544 = vmatprep.subr.bf16.mxu0 %v6865
    %8545 = vmatpush1.bf16.msra.mxu0 %v6864
    %8546 = vmatprep.subr.bf16.mxu0 %v6867
    %8547 = vmatpush1.bf16.msra.mxu0 %v6866
    %8548 = vmatprep.subr.bf16.mxu0 %v6869
    %8549 = vmatpush1.bf16.msra.mxu0 %v6868
    %8550 = vmatprep.subr.bf16.mxu0 %v6871
    %8551 = vmatpush1.bf16.msra.mxu0 %v6870
    %8552 = vmatprep.subr.bf16.mxu0 %v6873
    %8553 = vmatpush1.bf16.msra.mxu0 %v6872
    %8554 = vmatprep.subr.bf16.mxu0 %v6875
    %8555 = vmatpush1.bf16.msra.mxu0 %v6874
    %8556 = vmatprep.mubr.bf16.mxu0 %v3233
    %8557 = vmatmul.mubr.bf16.gmra.mrb[0].mxu0 %v3232
    %v8558 = vpop.f32.mrb[0].mxu0
    %v8559 = vadd.f32 %v8518, %v8558
    %v8560 = vpop.f32.mrb[0].mxu0
    %v8561 = vadd.f32 %v8520, %v8560
    %v8562 = vpop.f32.mrb[0].mxu0
    %v8563 = vpop.f32.mrb[0].mxu0
    %8564 = vdwg.mxu0
    %8565 = vmatprep.subr.bf16.mxu0 %v6877
    %8566 = vmatpush1.bf16.msra.mxu0 %v6876
    %8567 = vmatprep.subr.bf16.mxu0 %v6879
    %8568 = vmatpush1.bf16.msra.mxu0 %v6878
    %8569 = vmatprep.subr.bf16.mxu0 %v6881
    %8570 = vmatpush1.bf16.msra.mxu0 %v6880
    %8571 = vmatprep.subr.bf16.mxu0 %v6883
    %8572 = vmatpush1.bf16.msra.mxu0 %v6882
    %8573 = vmatprep.subr.bf16.mxu0 %v6885
    %8574 = vmatpush1.bf16.msra.mxu0 %v6884
    %8575 = vmatprep.subr.bf16.mxu0 %v6887
    %8576 = vmatpush1.bf16.msra.mxu0 %v6886
    %8577 = vmatprep.subr.bf16.mxu0 %v6889
    %8578 = vmatpush1.bf16.msra.mxu0 %v6888
    %8579 = vmatprep.subr.bf16.mxu0 %v6891
    %8580 = vmatpush1.bf16.msra.mxu0 %v6890
    %8581 = vmatprep.subr.bf16.mxu0 %v6893
    %8582 = vmatpush1.bf16.msra.mxu0 %v6892
    %8583 = vmatprep.subr.bf16.mxu0 %v6895
    %8584 = vmatpush1.bf16.msra.mxu0 %v6894
    %8585 = vmatprep.subr.bf16.mxu0 %v6897
    %8586 = vmatpush1.bf16.msra.mxu0 %v6896
    %8587 = vmatprep.subr.bf16.mxu0 %v6899
    %8588 = vmatpush1.bf16.msra.mxu0 %v6898
    %8589 = vmatprep.subr.bf16.mxu0 %v6901
    %8590 = vmatpush1.bf16.msra.mxu0 %v6900
    %8591 = vmatprep.subr.bf16.mxu0 %v6903
    %8592 = vmatpush1.bf16.msra.mxu0 %v6902
    %8593 = vmatprep.subr.bf16.mxu0 %v6905
    %8594 = vmatpush1.bf16.msra.mxu0 %v6904
    %8595 = vmatprep.subr.bf16.mxu0 %v6907
    %8596 = vmatpush1.bf16.msra.mxu0 %v6906
    %8597 = vmatprep.mubr.bf16.mxu0 %v3235
    %8598 = vmatmul.mubr.bf16.gmra.mrb[0].mxu0 %v3234
    %v8599 = vpop.f32.mrb[0].mxu0
    %v8600 = vadd.f32 %v8559, %v8599
    %v8601 = vpop.f32.mrb[0].mxu0
    %v8602 = vadd.f32 %v8561, %v8601
    %v8603 = vpop.f32.mrb[0].mxu0
    %v8604 = vpop.f32.mrb[0].mxu0
    %8605 = vdwg.mxu0
    %8606 = vmatprep.subr.bf16.mxu0 %v6909
    %8607 = vmatpush1.bf16.msra.mxu0 %v6908
    %8608 = vmatprep.subr.bf16.mxu0 %v6911
    %8609 = vmatpush1.bf16.msra.mxu0 %v6910
    %8610 = vmatprep.subr.bf16.mxu0 %v6913
    %8611 = vmatpush1.bf16.msra.mxu0 %v6912
    %8612 = vmatprep.subr.bf16.mxu0 %v6915
    %8613 = vmatpush1.bf16.msra.mxu0 %v6914
    %8614 = vmatprep.subr.bf16.mxu0 %v6917
    %8615 = vmatpush1.bf16.msra.mxu0 %v6916
    %8616 = vmatprep.subr.bf16.mxu0 %v6919
    %8617 = vmatpush1.bf16.msra.mxu0 %v6918
    %8618 = vmatprep.subr.bf16.mxu0 %v6921
    %8619 = vmatpush1.bf16.msra.mxu0 %v6920
    %8620 = vmatprep.subr.bf16.mxu0 %v6923
    %8621 = vmatpush1.bf16.msra.mxu0 %v6922
    %8622 = vmatprep.subr.bf16.mxu0 %v6925
    %8623 = vmatpush1.bf16.msra.mxu0 %v6924
    %8624 = vmatprep.subr.bf16.mxu0 %v6927
    %8625 = vmatpush1.bf16.msra.mxu0 %v6926
    %8626 = vmatprep.subr.bf16.mxu0 %v6929
    %8627 = vmatpush1.bf16.msra.mxu0 %v6928
    %8628 = vmatprep.subr.bf16.mxu0 %v6931
    %8629 = vmatpush1.bf16.msra.mxu0 %v6930
    %8630 = vmatprep.subr.bf16.mxu0 %v6933
    %8631 = vmatpush1.bf16.msra.mxu0 %v6932
    %8632 = vmatprep.subr.bf16.mxu0 %v6935
    %8633 = vmatpush1.bf16.msra.mxu0 %v6934
    %8634 = vmatprep.subr.bf16.mxu0 %v6937
    %8635 = vmatpush1.bf16.msra.mxu0 %v6936
    %8636 = vmatprep.subr.bf16.mxu0 %v6939
    %8637 = vmatpush1.bf16.msra.mxu0 %v6938
    %8638 = vmatprep.mubr.bf16.mxu0 %v3237
    %8639 = vmatmul.mubr.bf16.gmra.mrb[0].mxu0 %v3236
    %v8640 = vpop.f32.mrb[0].mxu0
    %v8641 = vadd.f32 %v8600, %v8640
    %v8642 = vpop.f32.mrb[0].mxu0
    %v8643 = vadd.f32 %v8602, %v8642
    %v8644 = vpop.f32.mrb[0].mxu0
    %v8645 = vpop.f32.mrb[0].mxu0
    %8646 = vdwg.mxu0
    %8647 = vmatprep.subr.bf16.mxu0 %v6941
    %8648 = vmatpush1.bf16.msra.mxu0 %v6940
    %8649 = vmatprep.subr.bf16.mxu0 %v6943
    %8650 = vmatpush1.bf16.msra.mxu0 %v6942
    %8651 = vmatprep.subr.bf16.mxu0 %v6945
    %8652 = vmatpush1.bf16.msra.mxu0 %v6944
    %8653 = vmatprep.subr.bf16.mxu0 %v6947
    %8654 = vmatpush1.bf16.msra.mxu0 %v6946
    %8655 = vmatprep.subr.bf16.mxu0 %v6949
    %8656 = vmatpush1.bf16.msra.mxu0 %v6948
    %8657 = vmatprep.subr.bf16.mxu0 %v6951
    %8658 = vmatpush1.bf16.msra.mxu0 %v6950
    %8659 = vmatprep.subr.bf16.mxu0 %v6953
    %8660 = vmatpush1.bf16.msra.mxu0 %v6952
    %8661 = vmatprep.subr.bf16.mxu0 %v6955
    %8662 = vmatpush1.bf16.msra.mxu0 %v6954
    %8663 = vmatprep.subr.bf16.mxu0 %v6957
    %8664 = vmatpush1.bf16.msra.mxu0 %v6956
    %8665 = vmatprep.subr.bf16.mxu0 %v6959
    %8666 = vmatpush1.bf16.msra.mxu0 %v6958
    %8667 = vmatprep.subr.bf16.mxu0 %v6961
    %8668 = vmatpush1.bf16.msra.mxu0 %v6960
    %8669 = vmatprep.subr.bf16.mxu0 %v6963
    %8670 = vmatpush1.bf16.msra.mxu0 %v6962
    %8671 = vmatprep.subr.bf16.mxu0 %v6965
    %8672 = vmatpush1.bf16.msra.mxu0 %v6964
    %8673 = vmatprep.subr.bf16.mxu0 %v6967
    %8674 = vmatpush1.bf16.msra.mxu0 %v6966
    %8675 = vmatprep.subr.bf16.mxu0 %v6969
    %8676 = vmatpush1.bf16.msra.mxu0 %v6968
    %8677 = vmatprep.subr.bf16.mxu0 %v6971
    %8678 = vmatpush1.bf16.msra.mxu0 %v6970
    %8679 = vmatprep.mubr.bf16.mxu0 %v3239
    %8680 = vmatmul.mubr.bf16.gmra.mrb[0].mxu0 %v3238
    %v8681 = vpop.f32.mrb[0].mxu0
    %v8682 = vadd.f32 %v8641, %v8681
    %v8683 = vpop.f32.mrb[0].mxu0
    %v8684 = vadd.f32 %v8643, %v8683
    %v8685 = vpop.f32.mrb[0].mxu0
    %v8686 = vpop.f32.mrb[0].mxu0
    %8687 = vdwg.mxu0
    %8688 = vmatprep.subr.bf16.mxu0 %v6973
    %8689 = vmatpush1.bf16.msra.mxu0 %v6972
    %8690 = vmatprep.subr.bf16.mxu0 %v6975
    %8691 = vmatpush1.bf16.msra.mxu0 %v6974
    %8692 = vmatprep.subr.bf16.mxu0 %v6977
    %8693 = vmatpush1.bf16.msra.mxu0 %v6976
    %8694 = vmatprep.subr.bf16.mxu0 %v6979
    %8695 = vmatpush1.bf16.msra.mxu0 %v6978
    %8696 = vmatprep.subr.bf16.mxu0 %v6981
    %8697 = vmatpush1.bf16.msra.mxu0 %v6980
    %8698 = vmatprep.subr.bf16.mxu0 %v6983
    %8699 = vmatpush1.bf16.msra.mxu0 %v6982
    %8700 = vmatprep.subr.bf16.mxu0 %v6985
    %8701 = vmatpush1.bf16.msra.mxu0 %v6984
    %8702 = vmatprep.subr.bf16.mxu0 %v6987
    %8703 = vmatpush1.bf16.msra.mxu0 %v6986
    %8704 = vmatprep.subr.bf16.mxu0 %v6989
    %8705 = vmatpush1.bf16.msra.mxu0 %v6988
    %8706 = vmatprep.subr.bf16.mxu0 %v6991
    %8707 = vmatpush1.bf16.msra.mxu0 %v6990
    %8708 = vmatprep.subr.bf16.mxu0 %v6993
    %8709 = vmatpush1.bf16.msra.mxu0 %v6992
    %8710 = vmatprep.subr.bf16.mxu0 %v6995
    %8711 = vmatpush1.bf16.msra.mxu0 %v6994
    %8712 = vmatprep.subr.bf16.mxu0 %v6997
    %8713 = vmatpush1.bf16.msra.mxu0 %v6996
    %8714 = vmatprep.subr.bf16.mxu0 %v6999
    %8715 = vmatpush1.bf16.msra.mxu0 %v6998
    %8716 = vmatprep.subr.bf16.mxu0 %v7001
    %8717 = vmatpush1.bf16.msra.mxu0 %v7000
    %8718 = vmatprep.subr.bf16.mxu0 %v7003
    %8719 = vmatpush1.bf16.msra.mxu0 %v7002
    %8720 = vmatprep.mubr.bf16.mxu0 %v3241
    %8721 = vmatmul.mubr.bf16.gmra.mrb[0].mxu0 %v3240
    %v8722 = vpop.f32.mrb[0].mxu0
    %v8723 = vadd.f32 %v8682, %v8722
    %v8724 = vpop.f32.mrb[0].mxu0
    %v8725 = vadd.f32 %v8684, %v8724
    %v8726 = vpop.f32.mrb[0].mxu0
    %v8727 = vpop.f32.mrb[0].mxu0
    %8728 = vdwg.mxu0
    %8729 = vmatprep.subr.bf16.mxu0 %v7005
    %8730 = vmatpush1.bf16.msra.mxu0 %v7004
    %8731 = vmatprep.subr.bf16.mxu0 %v7007
    %8732 = vmatpush1.bf16.msra.mxu0 %v7006
    %8733 = vmatprep.subr.bf16.mxu0 %v7009
    %8734 = vmatpush1.bf16.msra.mxu0 %v7008
    %8735 = vmatprep.subr.bf16.mxu0 %v7011
    %8736 = vmatpush1.bf16.msra.mxu0 %v7010
    %8737 = vmatprep.subr.bf16.mxu0 %v7013
    %8738 = vmatpush1.bf16.msra.mxu0 %v7012
    %8739 = vmatprep.subr.bf16.mxu0 %v7015
    %8740 = vmatpush1.bf16.msra.mxu0 %v7014
    %8741 = vmatprep.subr.bf16.mxu0 %v7017
    %8742 = vmatpush1.bf16.msra.mxu0 %v7016
    %8743 = vmatprep.subr.bf16.mxu0 %v7019
    %8744 = vmatpush1.bf16.msra.mxu0 %v7018
    %8745 = vmatprep.subr.bf16.mxu0 %v7021
    %8746 = vmatpush1.bf16.msra.mxu0 %v7020
    %8747 = vmatprep.subr.bf16.mxu0 %v7023
    %8748 = vmatpush1.bf16.msra.mxu0 %v7022
    %8749 = vmatprep.subr.bf16.mxu0 %v7025
    %8750 = vmatpush1.bf16.msra.mxu0 %v7024
    %8751 = vmatprep.subr.bf16.mxu0 %v7027
    %8752 = vmatpush1.bf16.msra.mxu0 %v7026
    %8753 = vmatprep.subr.bf16.mxu0 %v7029
    %8754 = vmatpush1.bf16.msra.mxu0 %v7028
    %8755 = vmatprep.subr.bf16.mxu0 %v7031
    %8756 = vmatpush1.bf16.msra.mxu0 %v7030
    %8757 = vmatprep.subr.bf16.mxu0 %v7033
    %8758 = vmatpush1.bf16.msra.mxu0 %v7032
    %8759 = vmatprep.subr.bf16.mxu0 %v7035
    %8760 = vmatpush1.bf16.msra.mxu0 %v7034
    %8761 = vmatprep.mubr.bf16.mxu0 %v3243
    %8762 = vmatmul.mubr.bf16.gmra.mrb[0].mxu0 %v3242
    %v8763 = vpop.f32.mrb[0].mxu0
    %v8764 = vadd.f32 %v8723, %v8763
    %v8765 = vpop.f32.mrb[0].mxu0
    %v8766 = vadd.f32 %v8725, %v8765
    %v8767 = vpop.f32.mrb[0].mxu0
    %v8768 = vpop.f32.mrb[0].mxu0
    %8769 = vdwg.mxu0
    %8770 = vmatprep.subr.bf16.mxu0 %v7037
    %8771 = vmatpush1.bf16.msra.mxu0 %v7036
    %8772 = vmatprep.subr.bf16.mxu0 %v7039
    %8773 = vmatpush1.bf16.msra.mxu0 %v7038
    %8774 = vmatprep.subr.bf16.mxu0 %v7041
    %8775 = vmatpush1.bf16.msra.mxu0 %v7040
    %8776 = vmatprep.subr.bf16.mxu0 %v7043
    %8777 = vmatpush1.bf16.msra.mxu0 %v7042
    %8778 = vmatprep.subr.bf16.mxu0 %v7045
    %8779 = vmatpush1.bf16.msra.mxu0 %v7044
    %8780 = vmatprep.subr.bf16.mxu0 %v7047
    %8781 = vmatpush1.bf16.msra.mxu0 %v7046
    %8782 = vmatprep.subr.bf16.mxu0 %v7049
    %8783 = vmatpush1.bf16.msra.mxu0 %v7048
    %8784 = vmatprep.subr.bf16.mxu0 %v7051
    %8785 = vmatpush1.bf16.msra.mxu0 %v7050
    %8786 = vmatprep.subr.bf16.mxu0 %v7053
    %8787 = vmatpush1.bf16.msra.mxu0 %v7052
    %8788 = vmatprep.subr.bf16.mxu0 %v7055
    %8789 = vmatpush1.bf16.msra.mxu0 %v7054
    %8790 = vmatprep.subr.bf16.mxu0 %v7057
    %8791 = vmatpush1.bf16.msra.mxu0 %v7056
    %8792 = vmatprep.subr.bf16.mxu0 %v7059
    %8793 = vmatpush1.bf16.msra.mxu0 %v7058
    %8794 = vmatprep.subr.bf16.mxu0 %v7061
    %8795 = vmatpush1.bf16.msra.mxu0 %v7060
    %8796 = vmatprep.subr.bf16.mxu0 %v7063
    %8797 = vmatpush1.bf16.msra.mxu0 %v7062
    %8798 = vmatprep.subr.bf16.mxu0 %v7065
    %8799 = vmatpush1.bf16.msra.mxu0 %v7064
    %8800 = vmatprep.subr.bf16.mxu0 %v7067
    %8801 = vmatpush1.bf16.msra.mxu0 %v7066
    %8802 = vmatprep.mubr.bf16.mxu0 %v3245
    %8803 = vmatmul.mubr.bf16.gmra.mrb[0].mxu0 %v3244
    %v8804 = vpop.f32.mrb[0].mxu0
    %v8805 = vadd.f32 %v8764, %v8804
    %v8806 = vpop.f32.mrb[0].mxu0
    %v8807 = vadd.f32 %v8766, %v8806
    %v8808 = vpop.f32.mrb[0].mxu0
    %v8809 = vpop.f32.mrb[0].mxu0
    %8810 = vdwg.mxu0
    %8811 = vmatprep.subr.bf16.mxu0 %v7069
    %8812 = vmatpush1.bf16.msra.mxu0 %v7068
    %8813 = vmatprep.subr.bf16.mxu0 %v7071
    %8814 = vmatpush1.bf16.msra.mxu0 %v7070
    %8815 = vmatprep.subr.bf16.mxu0 %v7073
    %8816 = vmatpush1.bf16.msra.mxu0 %v7072
    %8817 = vmatprep.subr.bf16.mxu0 %v7075
    %8818 = vmatpush1.bf16.msra.mxu0 %v7074
    %8819 = vmatprep.subr.bf16.mxu0 %v7077
    %8820 = vmatpush1.bf16.msra.mxu0 %v7076
    %8821 = vmatprep.subr.bf16.mxu0 %v7079
    %8822 = vmatpush1.bf16.msra.mxu0 %v7078
    %8823 = vmatprep.subr.bf16.mxu0 %v7081
    %8824 = vmatpush1.bf16.msra.mxu0 %v7080
    %8825 = vmatprep.subr.bf16.mxu0 %v7083
    %8826 = vmatpush1.bf16.msra.mxu0 %v7082
    %8827 = vmatprep.subr.bf16.mxu0 %v7085
    %8828 = vmatpush1.bf16.msra.mxu0 %v7084
    %8829 = vmatprep.subr.bf16.mxu0 %v7087
    %8830 = vmatpush1.bf16.msra.mxu0 %v7086
    %8831 = vmatprep.subr.bf16.mxu0 %v7089
    %8832 = vmatpush1.bf16.msra.mxu0 %v7088
    %8833 = vmatprep.subr.bf16.mxu0 %v7091
    %8834 = vmatpush1.bf16.msra.mxu0 %v7090
    %8835 = vmatprep.subr.bf16.mxu0 %v7093
    %8836 = vmatpush1.bf16.msra.mxu0 %v7092
    %8837 = vmatprep.subr.bf16.mxu0 %v7095
    %8838 = vmatpush1.bf16.msra.mxu0 %v7094
    %8839 = vmatprep.subr.bf16.mxu0 %v7097
    %8840 = vmatpush1.bf16.msra.mxu0 %v7096
    %8841 = vmatprep.subr.bf16.mxu0 %v7099
    %8842 = vmatpush1.bf16.msra.mxu0 %v7098
    %8843 = vmatprep.mubr.bf16.mxu0 %v3247
    %8844 = vmatmul.mubr.bf16.gmra.mrb[0].mxu0 %v3246
    %v8845 = vpop.f32.mrb[0].mxu0
    %v8846 = vadd.f32 %v8805, %v8845
    %v8847 = vpop.f32.mrb[0].mxu0
    %v8848 = vadd.f32 %v8807, %v8847
    %v8849 = vpop.f32.mrb[0].mxu0
    %v8850 = vpop.f32.mrb[0].mxu0
    %8851 = vdwg.mxu0
    %vm8852 = vcmp.gt.f32.partialorder %v8846, 0.0
    %vm8853 = vcmp.gt.f32.partialorder %v8848, 0.0
    %v8854 = vmul.f32 %v8846, 1.442695
    %v8855 = vpow.pop %v8854
    %v8856 = vmul.f32 %v8848, 1.442695
    %v8857 = vpow.pop %v8856
    %v8858 = vsub.f32 %v8855, 1.0
    %v8859 = vsub.f32 %v8857, 1.0
    %v8860 = vmul.f32 %v8858, 1.6732632
    %v8861 = vmul.f32 %v8859, 1.6732632
    %v8862 = vsel %vm8852, %v8846, %v8860
    %v8863 = vsel %vm8853, %v8848, %v8861
    %v8864 = vmul.f32 %v8862, 1.050701
    %v8865 = vmul.f32 %v8863, 1.050701
    %v8866 = vpack.c.bf16 %v8864, %v8864
    %v8867 = vpack.c.bf16 %v8865, %v8865
    %v8868 = vld [vmem:[#allocation10] sm:$0xf]
    %v8869 = vld [vmem:[#allocation10 + $0x4] sm:$0xf]
    %v8870 = vld [vmem:[#allocation10 + $0x8] sm:$0xf]
    %v8871 = vld [vmem:[#allocation10 + $0xc] sm:$0xf]
    %v8872 = vld [vmem:[#allocation10 + $0x10] sm:$0xf]
    %v8873 = vld [vmem:[#allocation10 + $0x14] sm:$0xf]
    %v8874 = vld [vmem:[#allocation10 + $0x18] sm:$0xf]
    %v8875 = vld [vmem:[#allocation10 + $0x1c] sm:$0xf]
    %v8876 = vld [vmem:[#allocation10 + $0x20] sm:$0xf]
    %v8877 = vld [vmem:[#allocation10 + $0x24] sm:$0xf]
    %v8878 = vld [vmem:[#allocation10 + $0x28] sm:$0xf]
    %v8879 = vld [vmem:[#allocation10 + $0x2c] sm:$0xf]
    %v8880 = vld [vmem:[#allocation10 + $0x30] sm:$0xf]
    %v8881 = vld [vmem:[#allocation10 + $0x34] sm:$0xf]
    %v8882 = vld [vmem:[#allocation10 + $0x38] sm:$0xf]
    %v8883 = vld [vmem:[#allocation10 + $0x3c] sm:$0xf]
    %v8884 = vld [vmem:[#allocation10 + $0x40] sm:$0xf]
    %v8885 = vld [vmem:[#allocation10 + $0x44] sm:$0xf]
    %v8886 = vld [vmem:[#allocation10 + $0x48] sm:$0xf]
    %v8887 = vld [vmem:[#allocation10 + $0x4c] sm:$0xf]
    %v8888 = vld [vmem:[#allocation10 + $0x50] sm:$0xf]
    %v8889 = vld [vmem:[#allocation10 + $0x54] sm:$0xf]
    %v8890 = vld [vmem:[#allocation10 + $0x58] sm:$0xf]
    %v8891 = vld [vmem:[#allocation10 + $0x5c] sm:$0xf]
    %v8892 = vld [vmem:[#allocation10 + $0x60] sm:$0xf]
    %v8893 = vld [vmem:[#allocation10 + $0x64] sm:$0xf]
    %v8894 = vld [vmem:[#allocation10 + $0x68] sm:$0xf]
    %v8895 = vld [vmem:[#allocation10 + $0x6c] sm:$0xf]
    %v8896 = vld [vmem:[#allocation10 + $0x70] sm:$0xf]
    %v8897 = vld [vmem:[#allocation10 + $0x74] sm:$0xf]
    %v8898 = vld [vmem:[#allocation10 + $0x78] sm:$0xf]
    %v8899 = vld [vmem:[#allocation10 + $0x7c] sm:$0xf]
    %v8900 = vld [vmem:[#allocation12] sm:$0x1]
    %v8902 = vlaneseq
    %v8903 = vshrl.u32 %v8902, 7
    %v8904 = vsub.s32 0, %v8903
    %v8905 = vrot.slane %v8900, %v8904
    %v8939 = vunpack.c.l.b16 %v8868
    %v8940 = vunpack.c.l.b16 %v8869
    %v8941 = vunpack.c.l.b16 %v8870
    %v8942 = vunpack.c.l.b16 %v8871
    %v8943 = vunpack.c.l.b16 %v8872
    %v8944 = vunpack.c.l.b16 %v8873
    %v8945 = vunpack.c.l.b16 %v8874
    %v8946 = vunpack.c.l.b16 %v8875
    %v8947 = vunpack.c.l.b16 %v8876
    %v8948 = vunpack.c.l.b16 %v8877
    %v8949 = vunpack.c.l.b16 %v8878
    %v8950 = vunpack.c.l.b16 %v8879
    %v8951 = vunpack.c.l.b16 %v8880
    %v8952 = vunpack.c.l.b16 %v8881
    %v8953 = vunpack.c.l.b16 %v8882
    %v8954 = vunpack.c.l.b16 %v8883
    %v8955 = vunpack.c.l.b16 %v8884
    %v8956 = vunpack.c.l.b16 %v8885
    %v8957 = vunpack.c.l.b16 %v8886
    %v8958 = vunpack.c.l.b16 %v8887
    %v8959 = vunpack.c.l.b16 %v8888
    %v8960 = vunpack.c.l.b16 %v8889
    %v8961 = vunpack.c.l.b16 %v8890
    %v8962 = vunpack.c.l.b16 %v8891
    %v8963 = vunpack.c.l.b16 %v8892
    %v8964 = vunpack.c.l.b16 %v8893
    %v8965 = vunpack.c.l.b16 %v8894
    %v8966 = vunpack.c.l.b16 %v8895
    %v8967 = vunpack.c.l.b16 %v8896
    %v8968 = vunpack.c.l.b16 %v8897
    %v8969 = vunpack.c.l.b16 %v8898
    %v8970 = vunpack.c.l.b16 %v8899
    %v8971 = vpack.c.b16 %v8940, %v8939
    %v8972 = vpack.c.b16 %v8942, %v8941
    %v8973 = vpack.c.b16 %v8944, %v8943
    %v8974 = vpack.c.b16 %v8946, %v8945
    %v8975 = vpack.c.b16 %v8948, %v8947
    %v8976 = vpack.c.b16 %v8950, %v8949
    %v8977 = vpack.c.b16 %v8952, %v8951
    %v8978 = vpack.c.b16 %v8954, %v8953
    %v8979 = vpack.c.b16 %v8956, %v8955
    %v8980 = vpack.c.b16 %v8958, %v8957
    %v8981 = vpack.c.b16 %v8960, %v8959
    %v8982 = vpack.c.b16 %v8962, %v8961
    %v8983 = vpack.c.b16 %v8964, %v8963
    %v8984 = vpack.c.b16 %v8966, %v8965
    %v8985 = vpack.c.b16 %v8968, %v8967
    %v8986 = vpack.c.b16 %v8970, %v8969
    %9003 = vmatprep.subr.bf16.mxu0 0
    %9004 = vmatpush1.bf16.msra.mxu0 %v8971
    %9005 = vmatprep.subr.bf16.mxu0 0
    %9006 = vmatpush1.bf16.msra.mxu0 %v8972
    %9007 = vmatprep.subr.bf16.mxu0 0
    %9008 = vmatpush1.bf16.msra.mxu0 %v8973
    %9009 = vmatprep.subr.bf16.mxu0 0
    %9010 = vmatpush1.bf16.msra.mxu0 %v8974
    %9011 = vmatprep.subr.bf16.mxu0 0
    %9012 = vmatpush1.bf16.msra.mxu0 %v8975
    %9013 = vmatprep.subr.bf16.mxu0 0
    %9014 = vmatpush1.bf16.msra.mxu0 %v8976
    %9015 = vmatprep.subr.bf16.mxu0 0
    %9016 = vmatpush1.bf16.msra.mxu0 %v8977
    %9017 = vmatprep.subr.bf16.mxu0 0
    %9018 = vmatpush1.bf16.msra.mxu0 %v8978
    %9019 = vmatprep.subr.bf16.mxu0 0
    %9020 = vmatpush1.bf16.msra.mxu0 %v8979
    %9021 = vmatprep.subr.bf16.mxu0 0
    %9022 = vmatpush1.bf16.msra.mxu0 %v8980
    %9023 = vmatprep.subr.bf16.mxu0 0
    %9024 = vmatpush1.bf16.msra.mxu0 %v8981
    %9025 = vmatprep.subr.bf16.mxu0 0
    %9026 = vmatpush1.bf16.msra.mxu0 %v8982
    %9027 = vmatprep.subr.bf16.mxu0 0
    %9028 = vmatpush1.bf16.msra.mxu0 %v8983
    %9029 = vmatprep.subr.bf16.mxu0 0
    %9030 = vmatpush1.bf16.msra.mxu0 %v8984
    %9031 = vmatprep.subr.bf16.mxu0 0
    %9032 = vmatpush1.bf16.msra.mxu0 %v8985
    %9033 = vmatprep.subr.bf16.mxu0 0
    %9034 = vmatpush1.bf16.msra.mxu0 %v8986
    %9035 = vmatprep.mubr.bf16.mxu0 %v8867
    %9036 = vmatmul.mubr.bf16.gmra.mrb[0].mxu0 %v8866
    %v9037 = vpop.f32.mrb[0].mxu0
    %v9038 = vadd.f32 %v8905, %v9037
    %v9039 = vpop.f32.mrb[0].mxu0
    %v9040 = vpop.f32.mrb[0].mxu0
    %v9041 = vpop.f32.mrb[0].mxu0
    %9042 = vdwg.mxu0
    %9043 = vst [vmem:[%s8] sm:$0xff] %v9038
    // Predicated region
    $region62: #{mydensenet_forward.1} parent=1 // pred_check
      _
    $region63: #{mydensenet_forward.1} parent=1 // pred_check_branch
      %9045 = sbr.rel (0) target = $region65
    $region64: #{mydensenet_forward.1} parent=1 // pred_region
      _
    $region65: #{mydensenet_forward.1} parent=1 // pred_fallthru
      _
    // Predicated region
    $region66: #{mydensenet_forward.1} parent=1 // pred_check
      _
    $region67: #{mydensenet_forward.1} parent=1 // pred_check_branch
      %9047 = sbr.rel (0) target = $region69
    $region68: #{mydensenet_forward.1} parent=1 // pred_region
      _
    $region69: #{mydensenet_forward.1} parent=1 // pred_fallthru
      _
    %9048 = vsyncpa [#allocation3], 1
    %9049 = vsyncpa [#allocation5], 1
    %9050 = vsyncpa [#allocation8], 1
    %9051 = vsyncpa [#allocation11], 1

</llo_original>
